<compile_context>
chip_gen: v7x
topology: tpu7x:2x2x1
jax: 0.10.0
libtpu: 0.0.40
codegen_flags: <defaults>
</compile_context>

<pallas_src>
import jax
import jax.numpy as jnp
from jax.experimental import pallas as pl
from jax.experimental.pallas import tpu as pltpu


# ----------------------------- in-kernel helpers -----------------------------

def _erf(z):
    # Abramowitz & Stegun 7.1.26 rational approximation, |err| < 1.5e-7.
    # (exact-erf GELU semantics without relying on an erf lowering in Mosaic)
    a1, a2, a3, a4, a5 = (0.254829592, -0.284496736, 1.421413741,
                          -1.453152027, 1.061405429)
    p = 0.3275911
    az = jnp.abs(z)
    t = 1.0 / (1.0 + p * az)
    poly = ((((a5 * t + a4) * t + a3) * t + a2) * t + a1) * t
    e = 1.0 - poly * jnp.exp(-az * az)
    return jnp.where(z >= 0, e, -e)


def _gelu_exact(x):
    return 0.5 * x * (1.0 + _erf(x * 0.7071067811865476))


# --------------------------------- kernel ------------------------------------

def convnext_block_kernel(x_ref, wdw_ref, bdw_ref, lnw_ref, lnb_ref,
                          w1_ref, b1_ref, w2_ref, b2_ref, o_ref):
    # x_ref: (1, H, W, C) block in NHWC, o_ref: (1, H, W, C)
    _, H, W, C = x_ref.shape

    x = x_ref[0].astype(jnp.float32)                      # (H, W, C)

    # ---- depthwise 7x7 conv, padding=3, groups=C ----
    xw = jnp.pad(x, ((0, 0), (3, 3), (0, 0)))             # (H, W+6, C)
    acc = jnp.zeros((H, W, C), jnp.float32)
    for kx in range(7):
        # one sublane slice per kx (7 total), then pad H (cheap slab concat)
        col = jnp.pad(xw[:, kx:kx + W, :], ((3, 3), (0, 0), (0, 0)))  # (H+6,W,C)
        for ky in range(7):
            acc = acc + col[ky:ky + H, :, :] * wdw_ref[ky * 7 + kx]   # (C,) bcast
    acc = acc + bdw_ref[...]                               # (1, C) broadcast

    # ---- LayerNorm over channels (channels_last, eps=1e-6, biased var) ----
    mean = jnp.mean(acc, axis=-1, keepdims=True)
    cen = acc - mean
    var = jnp.mean(cen * cen, axis=-1, keepdims=True)
    y = cen * jax.lax.rsqrt(var + 1e-6)
    y = y * lnw_ref[...] + lnb_ref[...]                    # (H, W, C)

    # ---- pwconv1 (Linear C -> 4C) + exact GELU ----
    y2 = y.reshape(H * W, C)                               # M = H*W
    h1 = jnp.dot(y2, w1_ref[...], preferred_element_type=jnp.float32)
    h1 = _gelu_exact(h1 + b1_ref[...])                     # (HW, 4C)

    # ---- pwconv2 (Linear 4C -> C); gamma (layer scale) folded into w2/b2 ----
    br = jnp.dot(h1, w2_ref[...], preferred_element_type=jnp.float32)
    br = br + b2_ref[...]                                  # (HW, C)

    # ---- residual add (drop_path = Identity) ----
    out = x.reshape(H * W, C) + br
    o_ref[0] = out.reshape(H, W, C).astype(o_ref.dtype)


# -------------------------------- wrapper -------------------------------------

def convnext_block(x_nchw, dw_w, dw_b, ln_w, ln_b, W1, b1, W2, b2, gamma):
    """Forward pass of ConvNeXt Block. Inputs use PyTorch parameter layouts:
       dw_w (C,1,7,7), dw_b (C,), ln_w/ln_b (C,), W1 (4C,C), b1 (4C,),
       W2 (C,4C), b2 (C,), gamma (C,). x is NCHW."""
    N, C, H, W = x_nchw.shape
    C4 = W1.shape[0]

    x_nhwc = jnp.transpose(x_nchw, (0, 2, 3, 1))

    # depthwise weight -> (49, C) with row index ky*7+kx
    wdw = jnp.transpose(dw_w[:, 0], (1, 2, 0)).reshape(7 * 7, C)
    # pwconv1: y @ W1.T  ->  store as (C, 4C)
    w1_k = jnp.transpose(W1)
    # pwconv2 with gamma folded:  gamma * (h @ W2.T + b2) = h @ (W2*g).T + g*b2
    w2_k = jnp.transpose(W2 * gamma[:, None])              # (4C, C)
    b2_k = (b2 * gamma)[None, :]                           # (1, C)

    flops = N * H * W * (2 * 49 * C + 2 * C * C4 + 2 * C4 * C + 12 * C)
    bytes_accessed = 4 * (2 * N * H * W * C + 49 * C + 4 * C
                          + 2 * C * C4 + C4 + C)
    cost = pl.CostEstimate(flops=flops,
                           transcendentals=N * H * W * C4,
                           bytes_accessed=bytes_accessed)

    out_nhwc = pl.pallas_call(
        convnext_block_kernel,
        out_shape=jax.ShapeDtypeStruct((N, H, W, C), jnp.float32),
        grid_spec=pltpu.PrefetchScalarGridSpec(
            num_scalar_prefetch=0,
            grid=(N,),
            in_specs=[
                pl.BlockSpec((1, H, W, C), lambda n: (n, 0, 0, 0)),  # x
                pl.BlockSpec((49, C),      lambda n: (0, 0)),        # dw weight
                pl.BlockSpec((1, C),       lambda n: (0, 0)),        # dw bias
                pl.BlockSpec((1, C),       lambda n: (0, 0)),        # ln weight
                pl.BlockSpec((1, C),       lambda n: (0, 0)),        # ln bias
                pl.BlockSpec((C, C4),      lambda n: (0, 0)),        # pwconv1 W
                pl.BlockSpec((1, C4),      lambda n: (0, 0)),        # pwconv1 b
                pl.BlockSpec((C4, C),      lambda n: (0, 0)),        # pwconv2 W (gamma-folded)
                pl.BlockSpec((1, C),       lambda n: (0, 0)),        # pwconv2 b (gamma-folded)
            ],
            out_specs=pl.BlockSpec((1, H, W, C), lambda n: (n, 0, 0, 0)),
        ),
        compiler_params=pltpu.CompilerParams(
            dimension_semantics=("parallel",)),
        cost_estimate=cost,
    )(x_nhwc, wdw, dw_b[None, :], ln_w[None, :], ln_b[None, :],
      w1_k, b1[None, :], w2_k, b2_k)

    return jnp.transpose(out_nhwc, (0, 3, 1, 2))           # back to NCHW


# ------------------------------- reference ------------------------------------

def reference(x_nchw, dw_w, dw_b, ln_w, ln_b, W1, b1, W2, b2, gamma, eps=1e-6):
    C = x_nchw.shape[1]
    x = jnp.transpose(x_nchw, (0, 2, 3, 1))                # NHWC
    wdw_hwio = jnp.transpose(dw_w, (2, 3, 1, 0))           # (7,7,1,C)
    h = jax.lax.conv_general_dilated(
        x, wdw_hwio, (1, 1), ((3, 3), (3, 3)),
        dimension_numbers=('NHWC', 'HWIO', 'NHWC'),
        feature_group_count=C) + dw_b
    mean = h.mean(-1, keepdims=True)
    var = ((h - mean) ** 2).mean(-1, keepdims=True)
    h = (h - mean) / jnp.sqrt(var + eps) * ln_w + ln_b
    h = h @ W1.T + b1
    h = 0.5 * h * (1.0 + jax.lax.erf(h / jnp.sqrt(2.0).astype(h.dtype)))
    h = h @ W2.T + b2
    h = gamma * h
    out = x + h
    return jnp.transpose(out, (0, 3, 1, 2))                # NCHW


# --------------------------------- main ---------------------------------------

if __name__ == "__main__":
    # Block(dim=128): channels kept at 128 so the channel (lane) dim is dense.
    N, dim, H, W = 2, 128, 16, 16
    C4 = 4 * dim

    key = jax.random.PRNGKey(0)
    ks = jax.random.split(key, 12)

    dw_w = jax.random.normal(ks[0], (dim, 1, 7, 7), jnp.float32) * 0.05
    dw_b = jax.random.normal(ks[1], (dim,), jnp.float32) * 0.1
    ln_w = jax.random.uniform(ks[2], (dim,), jnp.float32, 0.5, 1.5)
    ln_b = jax.random.normal(ks[3], (dim,), jnp.float32) * 0.1
    W1 = jax.random.normal(ks[4], (C4, dim), jnp.float32) * (1.0 / jnp.sqrt(dim))
    b1 = jax.random.normal(ks[5], (C4,), jnp.float32) * 0.05
    W2 = jax.random.normal(ks[6], (dim, C4), jnp.float32) * (1.0 / jnp.sqrt(C4))
    b2 = jax.random.normal(ks[7], (dim,), jnp.float32) * 0.05
    # layer-scale parameter (init would be 1e-6*ones; use non-trivial values
    # so the branch actually contributes to the check)
    gamma = jax.random.normal(ks[8], (dim,), jnp.float32) * 0.1

    x = jax.random.normal(ks[9], (N, dim, H, W), jnp.float32)

    out = convnext_block(x, dw_w, dw_b, ln_w, ln_b, W1, b1, W2, b2, gamma)
    out = jax.block_until_ready(out)

    ref = reference(x, dw_w, dw_b, ln_w, ln_b, W1, b1, W2, b2, gamma)
    assert out.shape == (N, dim, H, W)
    max_err = float(jnp.max(jnp.abs(out - ref)))
    assert jnp.allclose(out, ref, atol=2e-3, rtol=2e-3), max_err

    print("KERNEL_OK")
</pallas_src>

<mosaic_0001>
module attributes {stable_mosaic.version = 11 : i64} {
  func.func @convnext_block_kernel(%arg0: i32, %arg1: memref<1x16x16x128xf32, #tpu.memory_space<vmem>>, %arg2: memref<49x128xf32, #tpu.memory_space<vmem>>, %arg3: memref<1x128xf32, #tpu.memory_space<vmem>>, %arg4: memref<1x128xf32, #tpu.memory_space<vmem>>, %arg5: memref<1x128xf32, #tpu.memory_space<vmem>>, %arg6: memref<128x512xf32, #tpu.memory_space<vmem>>, %arg7: memref<1x512xf32, #tpu.memory_space<vmem>>, %arg8: memref<512x128xf32, #tpu.memory_space<vmem>>, %arg9: memref<1x128xf32, #tpu.memory_space<vmem>>, %arg10: memref<1x16x16x128xf32, #tpu.memory_space<vmem>>) attributes {dimension_semantics = [#tpu.dimension_semantics<parallel>], iteration_bounds = array<i64: 2>, scalar_prefetch = 0 : i64, scratch_operands = 0 : i64, tpu.core_type = #tpu.core_type<tc>, window_params = [{transform_indices = @transform_0, window_bounds = array<i64: 1, 16, 16, 128>}, {pipeline_mode = #tpu.pipeline_mode<synchronous>, transform_indices = @transform_1, window_bounds = array<i64: 49, 128>}, {pipeline_mode = #tpu.pipeline_mode<synchronous>, transform_indices = @transform_2, window_bounds = array<i64: 1, 128>}, {pipeline_mode = #tpu.pipeline_mode<synchronous>, transform_indices = @transform_3, window_bounds = array<i64: 1, 128>}, {pipeline_mode = #tpu.pipeline_mode<synchronous>, transform_indices = @transform_4, window_bounds = array<i64: 1, 128>}, {pipeline_mode = #tpu.pipeline_mode<synchronous>, transform_indices = @transform_5, window_bounds = array<i64: 128, 512>}, {pipeline_mode = #tpu.pipeline_mode<synchronous>, transform_indices = @transform_6, window_bounds = array<i64: 1, 512>}, {pipeline_mode = #tpu.pipeline_mode<synchronous>, transform_indices = @transform_7, window_bounds = array<i64: 512, 128>}, {pipeline_mode = #tpu.pipeline_mode<synchronous>, transform_indices = @transform_8, window_bounds = array<i64: 1, 128>}, {transform_indices = @transform_9, window_bounds = array<i64: 1, 16, 16, 128>}]} {
    %c0 = arith.constant 0 : index
    %c0_0 = arith.constant 0 : index
    %c0_1 = arith.constant 0 : index
    %c0_2 = arith.constant 0 : index
    %0 = vector.load %arg1[%c0, %c0_0, %c0_1, %c0_2] : memref<1x16x16x128xf32, #tpu.memory_space<vmem>>, vector<1x16x16x128xf32>
    %1 = vector.shape_cast %0 : vector<1x16x16x128xf32> to vector<16x16x128xf32>
    %c0_i32 = arith.constant 0 : i32
    %2 = arith.sitofp %c0_i32 : i32 to f32
    %3 = vector.broadcast %2 : f32 to vector<16x3x128xf32>
    %4 = tpu.concatenate %3, %1 in 1 : vector<16x3x128xf32>, vector<16x16x128xf32> -> vector<16x19x128xf32>
    %5 = vector.broadcast %2 : f32 to vector<16x3x128xf32>
    %6 = tpu.concatenate %4, %5 in 1 : vector<16x19x128xf32>, vector<16x3x128xf32> -> vector<16x22x128xf32>
    %cst = arith.constant 0.000000e+00 : f32
    %7 = vector.broadcast %cst : f32 to vector<16x16x128xf32>
    %8 = vector.extract_strided_slice %6 {offsets = [0, 0, 0], sizes = [16, 16, 128], strides = [1, 1, 1]} : vector<16x22x128xf32> to vector<16x16x128xf32>
    %c0_i32_3 = arith.constant 0 : i32
    %9 = arith.sitofp %c0_i32_3 : i32 to f32
    %10 = vector.broadcast %9 : f32 to vector<3x16x128xf32>
    %11 = tpu.concatenate %10, %8 in 0 : vector<3x16x128xf32>, vector<16x16x128xf32> -> vector<19x16x128xf32>
    %12 = vector.broadcast %9 : f32 to vector<3x16x128xf32>
    %13 = tpu.concatenate %11, %12 in 0 : vector<19x16x128xf32>, vector<3x16x128xf32> -> vector<22x16x128xf32>
    %14 = vector.extract_strided_slice %13 {offsets = [0, 0, 0], sizes = [16, 16, 128], strides = [1, 1, 1]} : vector<22x16x128xf32> to vector<16x16x128xf32>
    %c0_4 = arith.constant 0 : index
    %c0_5 = arith.constant 0 : index
    %15 = vector.load %arg2[%c0_4, %c0_5] : memref<49x128xf32, #tpu.memory_space<vmem>>, vector<1x128xf32>
    %16 = vector.shape_cast %15 : vector<1x128xf32> to vector<128xf32>
    %17 = vector.shape_cast %16 : vector<128xf32> to vector<1x1x128xf32>
    %18 = vector.broadcast %17 : vector<1x1x128xf32> to vector<16x16x128xf32>
    %19 = arith.mulf %14, %18 : vector<16x16x128xf32>
    %20 = arith.addf %7, %19 : vector<16x16x128xf32>
    %21 = vector.extract_strided_slice %13 {offsets = [1, 0, 0], sizes = [16, 16, 128], strides = [1, 1, 1]} : vector<22x16x128xf32> to vector<16x16x128xf32>
    %c7 = arith.constant 7 : index
    %c0_6 = arith.constant 0 : index
    %22 = vector.load %arg2[%c7, %c0_6] : memref<49x128xf32, #tpu.memory_space<vmem>>, vector<1x128xf32>
    %23 = vector.shape_cast %22 : vector<1x128xf32> to vector<128xf32>
    %24 = vector.shape_cast %23 : vector<128xf32> to vector<1x1x128xf32>
    %25 = vector.broadcast %24 : vector<1x1x128xf32> to vector<16x16x128xf32>
    %26 = arith.mulf %21, %25 : vector<16x16x128xf32>
    %27 = arith.addf %20, %26 : vector<16x16x128xf32>
    %28 = vector.extract_strided_slice %13 {offsets = [2, 0, 0], sizes = [16, 16, 128], strides = [1, 1, 1]} : vector<22x16x128xf32> to vector<16x16x128xf32>
    %c14 = arith.constant 14 : index
    %c0_7 = arith.constant 0 : index
    %29 = vector.load %arg2[%c14, %c0_7] : memref<49x128xf32, #tpu.memory_space<vmem>>, vector<1x128xf32>
    %30 = vector.shape_cast %29 : vector<1x128xf32> to vector<128xf32>
    %31 = vector.shape_cast %30 : vector<128xf32> to vector<1x1x128xf32>
    %32 = vector.broadcast %31 : vector<1x1x128xf32> to vector<16x16x128xf32>
    %33 = arith.mulf %28, %32 : vector<16x16x128xf32>
    %34 = arith.addf %27, %33 : vector<16x16x128xf32>
    %35 = vector.extract_strided_slice %13 {offsets = [3, 0, 0], sizes = [16, 16, 128], strides = [1, 1, 1]} : vector<22x16x128xf32> to vector<16x16x128xf32>
    %c21 = arith.constant 21 : index
    %c0_8 = arith.constant 0 : index
    %36 = vector.load %arg2[%c21, %c0_8] : memref<49x128xf32, #tpu.memory_space<vmem>>, vector<1x128xf32>
    %37 = vector.shape_cast %36 : vector<1x128xf32> to vector<128xf32>
    %38 = vector.shape_cast %37 : vector<128xf32> to vector<1x1x128xf32>
    %39 = vector.broadcast %38 : vector<1x1x128xf32> to vector<16x16x128xf32>
    %40 = arith.mulf %35, %39 : vector<16x16x128xf32>
    %41 = arith.addf %34, %40 : vector<16x16x128xf32>
    %42 = vector.extract_strided_slice %13 {offsets = [4, 0, 0], sizes = [16, 16, 128], strides = [1, 1, 1]} : vector<22x16x128xf32> to vector<16x16x128xf32>
    %c28 = arith.constant 28 : index
    %c0_9 = arith.constant 0 : index
    %43 = vector.load %arg2[%c28, %c0_9] : memref<49x128xf32, #tpu.memory_space<vmem>>, vector<1x128xf32>
    %44 = vector.shape_cast %43 : vector<1x128xf32> to vector<128xf32>
    %45 = vector.shape_cast %44 : vector<128xf32> to vector<1x1x128xf32>
    %46 = vector.broadcast %45 : vector<1x1x128xf32> to vector<16x16x128xf32>
    %47 = arith.mulf %42, %46 : vector<16x16x128xf32>
    %48 = arith.addf %41, %47 : vector<16x16x128xf32>
    %49 = vector.extract_strided_slice %13 {offsets = [5, 0, 0], sizes = [16, 16, 128], strides = [1, 1, 1]} : vector<22x16x128xf32> to vector<16x16x128xf32>
    %c35 = arith.constant 35 : index
    %c0_10 = arith.constant 0 : index
    %50 = vector.load %arg2[%c35, %c0_10] : memref<49x128xf32, #tpu.memory_space<vmem>>, vector<1x128xf32>
    %51 = vector.shape_cast %50 : vector<1x128xf32> to vector<128xf32>
    %52 = vector.shape_cast %51 : vector<128xf32> to vector<1x1x128xf32>
    %53 = vector.broadcast %52 : vector<1x1x128xf32> to vector<16x16x128xf32>
    %54 = arith.mulf %49, %53 : vector<16x16x128xf32>
    %55 = arith.addf %48, %54 : vector<16x16x128xf32>
    %56 = vector.extract_strided_slice %13 {offsets = [6, 0, 0], sizes = [16, 16, 128], strides = [1, 1, 1]} : vector<22x16x128xf32> to vector<16x16x128xf32>
    %c42 = arith.constant 42 : index
    %c0_11 = arith.constant 0 : index
    %57 = vector.load %arg2[%c42, %c0_11] : memref<49x128xf32, #tpu.memory_space<vmem>>, vector<1x128xf32>
    %58 = vector.shape_cast %57 : vector<1x128xf32> to vector<128xf32>
    %59 = vector.shape_cast %58 : vector<128xf32> to vector<1x1x128xf32>
    %60 = vector.broadcast %59 : vector<1x1x128xf32> to vector<16x16x128xf32>
    %61 = arith.mulf %56, %60 : vector<16x16x128xf32>
    %62 = arith.addf %55, %61 : vector<16x16x128xf32>
    %63 = vector.extract_strided_slice %6 {offsets = [0, 1, 0], sizes = [16, 16, 128], strides = [1, 1, 1]} : vector<16x22x128xf32> to vector<16x16x128xf32>
    %c0_i32_12 = arith.constant 0 : i32
    %64 = arith.sitofp %c0_i32_12 : i32 to f32
    %65 = vector.broadcast %64 : f32 to vector<3x16x128xf32>
    %66 = tpu.concatenate %65, %63 in 0 : vector<3x16x128xf32>, vector<16x16x128xf32> -> vector<19x16x128xf32>
    %67 = vector.broadcast %64 : f32 to vector<3x16x128xf32>
    %68 = tpu.concatenate %66, %67 in 0 : vector<19x16x128xf32>, vector<3x16x128xf32> -> vector<22x16x128xf32>
    %69 = vector.extract_strided_slice %68 {offsets = [0, 0, 0], sizes = [16, 16, 128], strides = [1, 1, 1]} : vector<22x16x128xf32> to vector<16x16x128xf32>
    %c1 = arith.constant 1 : index
    %c0_13 = arith.constant 0 : index
    %70 = vector.load %arg2[%c1, %c0_13] : memref<49x128xf32, #tpu.memory_space<vmem>>, vector<1x128xf32>
    %71 = vector.shape_cast %70 : vector<1x128xf32> to vector<128xf32>
    %72 = vector.shape_cast %71 : vector<128xf32> to vector<1x1x128xf32>
    %73 = vector.broadcast %72 : vector<1x1x128xf32> to vector<16x16x128xf32>
    %74 = arith.mulf %69, %73 : vector<16x16x128xf32>
    %75 = arith.addf %62, %74 : vector<16x16x128xf32>
    %76 = vector.extract_strided_slice %68 {offsets = [1, 0, 0], sizes = [16, 16, 128], strides = [1, 1, 1]} : vector<22x16x128xf32> to vector<16x16x128xf32>
    %c8 = arith.constant 8 : index
    %c0_14 = arith.constant 0 : index
    %77 = vector.load %arg2[%c8, %c0_14] : memref<49x128xf32, #tpu.memory_space<vmem>>, vector<1x128xf32>
    %78 = vector.shape_cast %77 : vector<1x128xf32> to vector<128xf32>
    %79 = vector.shape_cast %78 : vector<128xf32> to vector<1x1x128xf32>
    %80 = vector.broadcast %79 : vector<1x1x128xf32> to vector<16x16x128xf32>
    %81 = arith.mulf %76, %80 : vector<16x16x128xf32>
    %82 = arith.addf %75, %81 : vector<16x16x128xf32>
    %83 = vector.extract_strided_slice %68 {offsets = [2, 0, 0], sizes = [16, 16, 128], strides = [1, 1, 1]} : vector<22x16x128xf32> to vector<16x16x128xf32>
    %c15 = arith.constant 15 : index
    %c0_15 = arith.constant 0 : index
    %84 = vector.load %arg2[%c15, %c0_15] : memref<49x128xf32, #tpu.memory_space<vmem>>, vector<1x128xf32>
    %85 = vector.shape_cast %84 : vector<1x128xf32> to vector<128xf32>
    %86 = vector.shape_cast %85 : vector<128xf32> to vector<1x1x128xf32>
    %87 = vector.broadcast %86 : vector<1x1x128xf32> to vector<16x16x128xf32>
    %88 = arith.mulf %83, %87 : vector<16x16x128xf32>
    %89 = arith.addf %82, %88 : vector<16x16x128xf32>
    %90 = vector.extract_strided_slice %68 {offsets = [3, 0, 0], sizes = [16, 16, 128], strides = [1, 1, 1]} : vector<22x16x128xf32> to vector<16x16x128xf32>
    %c22 = arith.constant 22 : index
    %c0_16 = arith.constant 0 : index
    %91 = vector.load %arg2[%c22, %c0_16] : memref<49x128xf32, #tpu.memory_space<vmem>>, vector<1x128xf32>
    %92 = vector.shape_cast %91 : vector<1x128xf32> to vector<128xf32>
    %93 = vector.shape_cast %92 : vector<128xf32> to vector<1x1x128xf32>
    %94 = vector.broadcast %93 : vector<1x1x128xf32> to vector<16x16x128xf32>
    %95 = arith.mulf %90, %94 : vector<16x16x128xf32>
    %96 = arith.addf %89, %95 : vector<16x16x128xf32>
    %97 = vector.extract_strided_slice %68 {offsets = [4, 0, 0], sizes = [16, 16, 128], strides = [1, 1, 1]} : vector<22x16x128xf32> to vector<16x16x128xf32>
    %c29 = arith.constant 29 : index
    %c0_17 = arith.constant 0 : index
    %98 = vector.load %arg2[%c29, %c0_17] : memref<49x128xf32, #tpu.memory_space<vmem>>, vector<1x128xf32>
    %99 = vector.shape_cast %98 : vector<1x128xf32> to vector<128xf32>
    %100 = vector.shape_cast %99 : vector<128xf32> to vector<1x1x128xf32>
    %101 = vector.broadcast %100 : vector<1x1x128xf32> to vector<16x16x128xf32>
    %102 = arith.mulf %97, %101 : vector<16x16x128xf32>
    %103 = arith.addf %96, %102 : vector<16x16x128xf32>
    %104 = vector.extract_strided_slice %68 {offsets = [5, 0, 0], sizes = [16, 16, 128], strides = [1, 1, 1]} : vector<22x16x128xf32> to vector<16x16x128xf32>
    %c36 = arith.constant 36 : index
    %c0_18 = arith.constant 0 : index
    %105 = vector.load %arg2[%c36, %c0_18] : memref<49x128xf32, #tpu.memory_space<vmem>>, vector<1x128xf32>
    %106 = vector.shape_cast %105 : vector<1x128xf32> to vector<128xf32>
    %107 = vector.shape_cast %106 : vector<128xf32> to vector<1x1x128xf32>
    %108 = vector.broadcast %107 : vector<1x1x128xf32> to vector<16x16x128xf32>
    %109 = arith.mulf %104, %108 : vector<16x16x128xf32>
    %110 = arith.addf %103, %109 : vector<16x16x128xf32>
    %111 = vector.extract_strided_slice %68 {offsets = [6, 0, 0], sizes = [16, 16, 128], strides = [1, 1, 1]} : vector<22x16x128xf32> to vector<16x16x128xf32>
    %c43 = arith.constant 43 : index
    %c0_19 = arith.constant 0 : index
    %112 = vector.load %arg2[%c43, %c0_19] : memref<49x128xf32, #tpu.memory_space<vmem>>, vector<1x128xf32>
    %113 = vector.shape_cast %112 : vector<1x128xf32> to vector<128xf32>
    %114 = vector.shape_cast %113 : vector<128xf32> to vector<1x1x128xf32>
    %115 = vector.broadcast %114 : vector<1x1x128xf32> to vector<16x16x128xf32>
    %116 = arith.mulf %111, %115 : vector<16x16x128xf32>
    %117 = arith.addf %110, %116 : vector<16x16x128xf32>
    %118 = vector.extract_strided_slice %6 {offsets = [0, 2, 0], sizes = [16, 16, 128], strides = [1, 1, 1]} : vector<16x22x128xf32> to vector<16x16x128xf32>
    %c0_i32_20 = arith.constant 0 : i32
    %119 = arith.sitofp %c0_i32_20 : i32 to f32
    %120 = vector.broadcast %119 : f32 to vector<3x16x128xf32>
    %121 = tpu.concatenate %120, %118 in 0 : vector<3x16x128xf32>, vector<16x16x128xf32> -> vector<19x16x128xf32>
    %122 = vector.broadcast %119 : f32 to vector<3x16x128xf32>
    %123 = tpu.concatenate %121, %122 in 0 : vector<19x16x128xf32>, vector<3x16x128xf32> -> vector<22x16x128xf32>
    %124 = vector.extract_strided_slice %123 {offsets = [0, 0, 0], sizes = [16, 16, 128], strides = [1, 1, 1]} : vector<22x16x128xf32> to vector<16x16x128xf32>
    %c2 = arith.constant 2 : index
    %c0_21 = arith.constant 0 : index
    %125 = vector.load %arg2[%c2, %c0_21] : memref<49x128xf32, #tpu.memory_space<vmem>>, vector<1x128xf32>
    %126 = vector.shape_cast %125 : vector<1x128xf32> to vector<128xf32>
    %127 = vector.shape_cast %126 : vector<128xf32> to vector<1x1x128xf32>
    %128 = vector.broadcast %127 : vector<1x1x128xf32> to vector<16x16x128xf32>
    %129 = arith.mulf %124, %128 : vector<16x16x128xf32>
    %130 = arith.addf %117, %129 : vector<16x16x128xf32>
    %131 = vector.extract_strided_slice %123 {offsets = [1, 0, 0], sizes = [16, 16, 128], strides = [1, 1, 1]} : vector<22x16x128xf32> to vector<16x16x128xf32>
    %c9 = arith.constant 9 : index
    %c0_22 = arith.constant 0 : index
    %132 = vector.load %arg2[%c9, %c0_22] : memref<49x128xf32, #tpu.memory_space<vmem>>, vector<1x128xf32>
    %133 = vector.shape_cast %132 : vector<1x128xf32> to vector<128xf32>
    %134 = vector.shape_cast %133 : vector<128xf32> to vector<1x1x128xf32>
    %135 = vector.broadcast %134 : vector<1x1x128xf32> to vector<16x16x128xf32>
    %136 = arith.mulf %131, %135 : vector<16x16x128xf32>
    %137 = arith.addf %130, %136 : vector<16x16x128xf32>
    %138 = vector.extract_strided_slice %123 {offsets = [2, 0, 0], sizes = [16, 16, 128], strides = [1, 1, 1]} : vector<22x16x128xf32> to vector<16x16x128xf32>
    %c16 = arith.constant 16 : index
    %c0_23 = arith.constant 0 : index
    %139 = vector.load %arg2[%c16, %c0_23] : memref<49x128xf32, #tpu.memory_space<vmem>>, vector<1x128xf32>
    %140 = vector.shape_cast %139 : vector<1x128xf32> to vector<128xf32>
    %141 = vector.shape_cast %140 : vector<128xf32> to vector<1x1x128xf32>
    %142 = vector.broadcast %141 : vector<1x1x128xf32> to vector<16x16x128xf32>
    %143 = arith.mulf %138, %142 : vector<16x16x128xf32>
    %144 = arith.addf %137, %143 : vector<16x16x128xf32>
    %145 = vector.extract_strided_slice %123 {offsets = [3, 0, 0], sizes = [16, 16, 128], strides = [1, 1, 1]} : vector<22x16x128xf32> to vector<16x16x128xf32>
    %c23 = arith.constant 23 : index
    %c0_24 = arith.constant 0 : index
    %146 = vector.load %arg2[%c23, %c0_24] : memref<49x128xf32, #tpu.memory_space<vmem>>, vector<1x128xf32>
    %147 = vector.shape_cast %146 : vector<1x128xf32> to vector<128xf32>
    %148 = vector.shape_cast %147 : vector<128xf32> to vector<1x1x128xf32>
    %149 = vector.broadcast %148 : vector<1x1x128xf32> to vector<16x16x128xf32>
    %150 = arith.mulf %145, %149 : vector<16x16x128xf32>
    %151 = arith.addf %144, %150 : vector<16x16x128xf32>
    %152 = vector.extract_strided_slice %123 {offsets = [4, 0, 0], sizes = [16, 16, 128], strides = [1, 1, 1]} : vector<22x16x128xf32> to vector<16x16x128xf32>
    %c30 = arith.constant 30 : index
    %c0_25 = arith.constant 0 : index
    %153 = vector.load %arg2[%c30, %c0_25] : memref<49x128xf32, #tpu.memory_space<vmem>>, vector<1x128xf32>
    %154 = vector.shape_cast %153 : vector<1x128xf32> to vector<128xf32>
    %155 = vector.shape_cast %154 : vector<128xf32> to vector<1x1x128xf32>
    %156 = vector.broadcast %155 : vector<1x1x128xf32> to vector<16x16x128xf32>
    %157 = arith.mulf %152, %156 : vector<16x16x128xf32>
    %158 = arith.addf %151, %157 : vector<16x16x128xf32>
    %159 = vector.extract_strided_slice %123 {offsets = [5, 0, 0], sizes = [16, 16, 128], strides = [1, 1, 1]} : vector<22x16x128xf32> to vector<16x16x128xf32>
    %c37 = arith.constant 37 : index
    %c0_26 = arith.constant 0 : index
    %160 = vector.load %arg2[%c37, %c0_26] : memref<49x128xf32, #tpu.memory_space<vmem>>, vector<1x128xf32>
    %161 = vector.shape_cast %160 : vector<1x128xf32> to vector<128xf32>
    %162 = vector.shape_cast %161 : vector<128xf32> to vector<1x1x128xf32>
    %163 = vector.broadcast %162 : vector<1x1x128xf32> to vector<16x16x128xf32>
    %164 = arith.mulf %159, %163 : vector<16x16x128xf32>
    %165 = arith.addf %158, %164 : vector<16x16x128xf32>
    %166 = vector.extract_strided_slice %123 {offsets = [6, 0, 0], sizes = [16, 16, 128], strides = [1, 1, 1]} : vector<22x16x128xf32> to vector<16x16x128xf32>
    %c44 = arith.constant 44 : index
    %c0_27 = arith.constant 0 : index
    %167 = vector.load %arg2[%c44, %c0_27] : memref<49x128xf32, #tpu.memory_space<vmem>>, vector<1x128xf32>
    %168 = vector.shape_cast %167 : vector<1x128xf32> to vector<128xf32>
    %169 = vector.shape_cast %168 : vector<128xf32> to vector<1x1x128xf32>
    %170 = vector.broadcast %169 : vector<1x1x128xf32> to vector<16x16x128xf32>
    %171 = arith.mulf %166, %170 : vector<16x16x128xf32>
    %172 = arith.addf %165, %171 : vector<16x16x128xf32>
    %173 = vector.extract_strided_slice %6 {offsets = [0, 3, 0], sizes = [16, 16, 128], strides = [1, 1, 1]} : vector<16x22x128xf32> to vector<16x16x128xf32>
    %c0_i32_28 = arith.constant 0 : i32
    %174 = arith.sitofp %c0_i32_28 : i32 to f32
    %175 = vector.broadcast %174 : f32 to vector<3x16x128xf32>
    %176 = tpu.concatenate %175, %173 in 0 : vector<3x16x128xf32>, vector<16x16x128xf32> -> vector<19x16x128xf32>
    %177 = vector.broadcast %174 : f32 to vector<3x16x128xf32>
    %178 = tpu.concatenate %176, %177 in 0 : vector<19x16x128xf32>, vector<3x16x128xf32> -> vector<22x16x128xf32>
    %179 = vector.extract_strided_slice %178 {offsets = [0, 0, 0], sizes = [16, 16, 128], strides = [1, 1, 1]} : vector<22x16x128xf32> to vector<16x16x128xf32>
    %c3 = arith.constant 3 : index
    %c0_29 = arith.constant 0 : index
    %180 = vector.load %arg2[%c3, %c0_29] : memref<49x128xf32, #tpu.memory_space<vmem>>, vector<1x128xf32>
    %181 = vector.shape_cast %180 : vector<1x128xf32> to vector<128xf32>
    %182 = vector.shape_cast %181 : vector<128xf32> to vector<1x1x128xf32>
    %183 = vector.broadcast %182 : vector<1x1x128xf32> to vector<16x16x128xf32>
    %184 = arith.mulf %179, %183 : vector<16x16x128xf32>
    %185 = arith.addf %172, %184 : vector<16x16x128xf32>
    %186 = vector.extract_strided_slice %178 {offsets = [1, 0, 0], sizes = [16, 16, 128], strides = [1, 1, 1]} : vector<22x16x128xf32> to vector<16x16x128xf32>
    %c10 = arith.constant 10 : index
    %c0_30 = arith.constant 0 : index
    %187 = vector.load %arg2[%c10, %c0_30] : memref<49x128xf32, #tpu.memory_space<vmem>>, vector<1x128xf32>
    %188 = vector.shape_cast %187 : vector<1x128xf32> to vector<128xf32>
    %189 = vector.shape_cast %188 : vector<128xf32> to vector<1x1x128xf32>
    %190 = vector.broadcast %189 : vector<1x1x128xf32> to vector<16x16x128xf32>
    %191 = arith.mulf %186, %190 : vector<16x16x128xf32>
    %192 = arith.addf %185, %191 : vector<16x16x128xf32>
    %193 = vector.extract_strided_slice %178 {offsets = [2, 0, 0], sizes = [16, 16, 128], strides = [1, 1, 1]} : vector<22x16x128xf32> to vector<16x16x128xf32>
    %c17 = arith.constant 17 : index
    %c0_31 = arith.constant 0 : index
    %194 = vector.load %arg2[%c17, %c0_31] : memref<49x128xf32, #tpu.memory_space<vmem>>, vector<1x128xf32>
    %195 = vector.shape_cast %194 : vector<1x128xf32> to vector<128xf32>
    %196 = vector.shape_cast %195 : vector<128xf32> to vector<1x1x128xf32>
    %197 = vector.broadcast %196 : vector<1x1x128xf32> to vector<16x16x128xf32>
    %198 = arith.mulf %193, %197 : vector<16x16x128xf32>
    %199 = arith.addf %192, %198 : vector<16x16x128xf32>
    %200 = vector.extract_strided_slice %178 {offsets = [3, 0, 0], sizes = [16, 16, 128], strides = [1, 1, 1]} : vector<22x16x128xf32> to vector<16x16x128xf32>
    %c24 = arith.constant 24 : index
    %c0_32 = arith.constant 0 : index
    %201 = vector.load %arg2[%c24, %c0_32] : memref<49x128xf32, #tpu.memory_space<vmem>>, vector<1x128xf32>
    %202 = vector.shape_cast %201 : vector<1x128xf32> to vector<128xf32>
    %203 = vector.shape_cast %202 : vector<128xf32> to vector<1x1x128xf32>
    %204 = vector.broadcast %203 : vector<1x1x128xf32> to vector<16x16x128xf32>
    %205 = arith.mulf %200, %204 : vector<16x16x128xf32>
    %206 = arith.addf %199, %205 : vector<16x16x128xf32>
    %207 = vector.extract_strided_slice %178 {offsets = [4, 0, 0], sizes = [16, 16, 128], strides = [1, 1, 1]} : vector<22x16x128xf32> to vector<16x16x128xf32>
    %c31 = arith.constant 31 : index
    %c0_33 = arith.constant 0 : index
    %208 = vector.load %arg2[%c31, %c0_33] : memref<49x128xf32, #tpu.memory_space<vmem>>, vector<1x128xf32>
    %209 = vector.shape_cast %208 : vector<1x128xf32> to vector<128xf32>
    %210 = vector.shape_cast %209 : vector<128xf32> to vector<1x1x128xf32>
    %211 = vector.broadcast %210 : vector<1x1x128xf32> to vector<16x16x128xf32>
    %212 = arith.mulf %207, %211 : vector<16x16x128xf32>
    %213 = arith.addf %206, %212 : vector<16x16x128xf32>
    %214 = vector.extract_strided_slice %178 {offsets = [5, 0, 0], sizes = [16, 16, 128], strides = [1, 1, 1]} : vector<22x16x128xf32> to vector<16x16x128xf32>
    %c38 = arith.constant 38 : index
    %c0_34 = arith.constant 0 : index
    %215 = vector.load %arg2[%c38, %c0_34] : memref<49x128xf32, #tpu.memory_space<vmem>>, vector<1x128xf32>
    %216 = vector.shape_cast %215 : vector<1x128xf32> to vector<128xf32>
    %217 = vector.shape_cast %216 : vector<128xf32> to vector<1x1x128xf32>
    %218 = vector.broadcast %217 : vector<1x1x128xf32> to vector<16x16x128xf32>
    %219 = arith.mulf %214, %218 : vector<16x16x128xf32>
    %220 = arith.addf %213, %219 : vector<16x16x128xf32>
    %221 = vector.extract_strided_slice %178 {offsets = [6, 0, 0], sizes = [16, 16, 128], strides = [1, 1, 1]} : vector<22x16x128xf32> to vector<16x16x128xf32>
    %c45 = arith.constant 45 : index
    %c0_35 = arith.constant 0 : index
    %222 = vector.load %arg2[%c45, %c0_35] : memref<49x128xf32, #tpu.memory_space<vmem>>, vector<1x128xf32>
    %223 = vector.shape_cast %222 : vector<1x128xf32> to vector<128xf32>
    %224 = vector.shape_cast %223 : vector<128xf32> to vector<1x1x128xf32>
    %225 = vector.broadcast %224 : vector<1x1x128xf32> to vector<16x16x128xf32>
    %226 = arith.mulf %221, %225 : vector<16x16x128xf32>
    %227 = arith.addf %220, %226 : vector<16x16x128xf32>
    %228 = vector.extract_strided_slice %6 {offsets = [0, 4, 0], sizes = [16, 16, 128], strides = [1, 1, 1]} : vector<16x22x128xf32> to vector<16x16x128xf32>
    %c0_i32_36 = arith.constant 0 : i32
    %229 = arith.sitofp %c0_i32_36 : i32 to f32
    %230 = vector.broadcast %229 : f32 to vector<3x16x128xf32>
    %231 = tpu.concatenate %230, %228 in 0 : vector<3x16x128xf32>, vector<16x16x128xf32> -> vector<19x16x128xf32>
    %232 = vector.broadcast %229 : f32 to vector<3x16x128xf32>
    %233 = tpu.concatenate %231, %232 in 0 : vector<19x16x128xf32>, vector<3x16x128xf32> -> vector<22x16x128xf32>
    %234 = vector.extract_strided_slice %233 {offsets = [0, 0, 0], sizes = [16, 16, 128], strides = [1, 1, 1]} : vector<22x16x128xf32> to vector<16x16x128xf32>
    %c4 = arith.constant 4 : index
    %c0_37 = arith.constant 0 : index
    %235 = vector.load %arg2[%c4, %c0_37] : memref<49x128xf32, #tpu.memory_space<vmem>>, vector<1x128xf32>
    %236 = vector.shape_cast %235 : vector<1x128xf32> to vector<128xf32>
    %237 = vector.shape_cast %236 : vector<128xf32> to vector<1x1x128xf32>
    %238 = vector.broadcast %237 : vector<1x1x128xf32> to vector<16x16x128xf32>
    %239 = arith.mulf %234, %238 : vector<16x16x128xf32>
    %240 = arith.addf %227, %239 : vector<16x16x128xf32>
    %241 = vector.extract_strided_slice %233 {offsets = [1, 0, 0], sizes = [16, 16, 128], strides = [1, 1, 1]} : vector<22x16x128xf32> to vector<16x16x128xf32>
    %c11 = arith.constant 11 : index
    %c0_38 = arith.constant 0 : index
    %242 = vector.load %arg2[%c11, %c0_38] : memref<49x128xf32, #tpu.memory_space<vmem>>, vector<1x128xf32>
    %243 = vector.shape_cast %242 : vector<1x128xf32> to vector<128xf32>
    %244 = vector.shape_cast %243 : vector<128xf32> to vector<1x1x128xf32>
    %245 = vector.broadcast %244 : vector<1x1x128xf32> to vector<16x16x128xf32>
    %246 = arith.mulf %241, %245 : vector<16x16x128xf32>
    %247 = arith.addf %240, %246 : vector<16x16x128xf32>
    %248 = vector.extract_strided_slice %233 {offsets = [2, 0, 0], sizes = [16, 16, 128], strides = [1, 1, 1]} : vector<22x16x128xf32> to vector<16x16x128xf32>
    %c18 = arith.constant 18 : index
    %c0_39 = arith.constant 0 : index
    %249 = vector.load %arg2[%c18, %c0_39] : memref<49x128xf32, #tpu.memory_space<vmem>>, vector<1x128xf32>
    %250 = vector.shape_cast %249 : vector<1x128xf32> to vector<128xf32>
    %251 = vector.shape_cast %250 : vector<128xf32> to vector<1x1x128xf32>
    %252 = vector.broadcast %251 : vector<1x1x128xf32> to vector<16x16x128xf32>
    %253 = arith.mulf %248, %252 : vector<16x16x128xf32>
    %254 = arith.addf %247, %253 : vector<16x16x128xf32>
    %255 = vector.extract_strided_slice %233 {offsets = [3, 0, 0], sizes = [16, 16, 128], strides = [1, 1, 1]} : vector<22x16x128xf32> to vector<16x16x128xf32>
    %c25 = arith.constant 25 : index
    %c0_40 = arith.constant 0 : index
    %256 = vector.load %arg2[%c25, %c0_40] : memref<49x128xf32, #tpu.memory_space<vmem>>, vector<1x128xf32>
    %257 = vector.shape_cast %256 : vector<1x128xf32> to vector<128xf32>
    %258 = vector.shape_cast %257 : vector<128xf32> to vector<1x1x128xf32>
    %259 = vector.broadcast %258 : vector<1x1x128xf32> to vector<16x16x128xf32>
    %260 = arith.mulf %255, %259 : vector<16x16x128xf32>
    %261 = arith.addf %254, %260 : vector<16x16x128xf32>
    %262 = vector.extract_strided_slice %233 {offsets = [4, 0, 0], sizes = [16, 16, 128], strides = [1, 1, 1]} : vector<22x16x128xf32> to vector<16x16x128xf32>
    %c32 = arith.constant 32 : index
    %c0_41 = arith.constant 0 : index
    %263 = vector.load %arg2[%c32, %c0_41] : memref<49x128xf32, #tpu.memory_space<vmem>>, vector<1x128xf32>
    %264 = vector.shape_cast %263 : vector<1x128xf32> to vector<128xf32>
    %265 = vector.shape_cast %264 : vector<128xf32> to vector<1x1x128xf32>
    %266 = vector.broadcast %265 : vector<1x1x128xf32> to vector<16x16x128xf32>
    %267 = arith.mulf %262, %266 : vector<16x16x128xf32>
    %268 = arith.addf %261, %267 : vector<16x16x128xf32>
    %269 = vector.extract_strided_slice %233 {offsets = [5, 0, 0], sizes = [16, 16, 128], strides = [1, 1, 1]} : vector<22x16x128xf32> to vector<16x16x128xf32>
    %c39 = arith.constant 39 : index
    %c0_42 = arith.constant 0 : index
    %270 = vector.load %arg2[%c39, %c0_42] : memref<49x128xf32, #tpu.memory_space<vmem>>, vector<1x128xf32>
    %271 = vector.shape_cast %270 : vector<1x128xf32> to vector<128xf32>
    %272 = vector.shape_cast %271 : vector<128xf32> to vector<1x1x128xf32>
    %273 = vector.broadcast %272 : vector<1x1x128xf32> to vector<16x16x128xf32>
    %274 = arith.mulf %269, %273 : vector<16x16x128xf32>
    %275 = arith.addf %268, %274 : vector<16x16x128xf32>
    %276 = vector.extract_strided_slice %233 {offsets = [6, 0, 0], sizes = [16, 16, 128], strides = [1, 1, 1]} : vector<22x16x128xf32> to vector<16x16x128xf32>
    %c46 = arith.constant 46 : index
    %c0_43 = arith.constant 0 : index
    %277 = vector.load %arg2[%c46, %c0_43] : memref<49x128xf32, #tpu.memory_space<vmem>>, vector<1x128xf32>
    %278 = vector.shape_cast %277 : vector<1x128xf32> to vector<128xf32>
    %279 = vector.shape_cast %278 : vector<128xf32> to vector<1x1x128xf32>
    %280 = vector.broadcast %279 : vector<1x1x128xf32> to vector<16x16x128xf32>
    %281 = arith.mulf %276, %280 : vector<16x16x128xf32>
    %282 = arith.addf %275, %281 : vector<16x16x128xf32>
    %283 = vector.extract_strided_slice %6 {offsets = [0, 5, 0], sizes = [16, 16, 128], strides = [1, 1, 1]} : vector<16x22x128xf32> to vector<16x16x128xf32>
    %c0_i32_44 = arith.constant 0 : i32
    %284 = arith.sitofp %c0_i32_44 : i32 to f32
    %285 = vector.broadcast %284 : f32 to vector<3x16x128xf32>
    %286 = tpu.concatenate %285, %283 in 0 : vector<3x16x128xf32>, vector<16x16x128xf32> -> vector<19x16x128xf32>
    %287 = vector.broadcast %284 : f32 to vector<3x16x128xf32>
    %288 = tpu.concatenate %286, %287 in 0 : vector<19x16x128xf32>, vector<3x16x128xf32> -> vector<22x16x128xf32>
    %289 = vector.extract_strided_slice %288 {offsets = [0, 0, 0], sizes = [16, 16, 128], strides = [1, 1, 1]} : vector<22x16x128xf32> to vector<16x16x128xf32>
    %c5 = arith.constant 5 : index
    %c0_45 = arith.constant 0 : index
    %290 = vector.load %arg2[%c5, %c0_45] : memref<49x128xf32, #tpu.memory_space<vmem>>, vector<1x128xf32>
    %291 = vector.shape_cast %290 : vector<1x128xf32> to vector<128xf32>
    %292 = vector.shape_cast %291 : vector<128xf32> to vector<1x1x128xf32>
    %293 = vector.broadcast %292 : vector<1x1x128xf32> to vector<16x16x128xf32>
    %294 = arith.mulf %289, %293 : vector<16x16x128xf32>
    %295 = arith.addf %282, %294 : vector<16x16x128xf32>
    %296 = vector.extract_strided_slice %288 {offsets = [1, 0, 0], sizes = [16, 16, 128], strides = [1, 1, 1]} : vector<22x16x128xf32> to vector<16x16x128xf32>
    %c12 = arith.constant 12 : index
    %c0_46 = arith.constant 0 : index
    %297 = vector.load %arg2[%c12, %c0_46] : memref<49x128xf32, #tpu.memory_space<vmem>>, vector<1x128xf32>
    %298 = vector.shape_cast %297 : vector<1x128xf32> to vector<128xf32>
    %299 = vector.shape_cast %298 : vector<128xf32> to vector<1x1x128xf32>
    %300 = vector.broadcast %299 : vector<1x1x128xf32> to vector<16x16x128xf32>
    %301 = arith.mulf %296, %300 : vector<16x16x128xf32>
    %302 = arith.addf %295, %301 : vector<16x16x128xf32>
    %303 = vector.extract_strided_slice %288 {offsets = [2, 0, 0], sizes = [16, 16, 128], strides = [1, 1, 1]} : vector<22x16x128xf32> to vector<16x16x128xf32>
    %c19 = arith.constant 19 : index
    %c0_47 = arith.constant 0 : index
    %304 = vector.load %arg2[%c19, %c0_47] : memref<49x128xf32, #tpu.memory_space<vmem>>, vector<1x128xf32>
    %305 = vector.shape_cast %304 : vector<1x128xf32> to vector<128xf32>
    %306 = vector.shape_cast %305 : vector<128xf32> to vector<1x1x128xf32>
    %307 = vector.broadcast %306 : vector<1x1x128xf32> to vector<16x16x128xf32>
    %308 = arith.mulf %303, %307 : vector<16x16x128xf32>
    %309 = arith.addf %302, %308 : vector<16x16x128xf32>
    %310 = vector.extract_strided_slice %288 {offsets = [3, 0, 0], sizes = [16, 16, 128], strides = [1, 1, 1]} : vector<22x16x128xf32> to vector<16x16x128xf32>
    %c26 = arith.constant 26 : index
    %c0_48 = arith.constant 0 : index
    %311 = vector.load %arg2[%c26, %c0_48] : memref<49x128xf32, #tpu.memory_space<vmem>>, vector<1x128xf32>
    %312 = vector.shape_cast %311 : vector<1x128xf32> to vector<128xf32>
    %313 = vector.shape_cast %312 : vector<128xf32> to vector<1x1x128xf32>
    %314 = vector.broadcast %313 : vector<1x1x128xf32> to vector<16x16x128xf32>
    %315 = arith.mulf %310, %314 : vector<16x16x128xf32>
    %316 = arith.addf %309, %315 : vector<16x16x128xf32>
    %317 = vector.extract_strided_slice %288 {offsets = [4, 0, 0], sizes = [16, 16, 128], strides = [1, 1, 1]} : vector<22x16x128xf32> to vector<16x16x128xf32>
    %c33 = arith.constant 33 : index
    %c0_49 = arith.constant 0 : index
    %318 = vector.load %arg2[%c33, %c0_49] : memref<49x128xf32, #tpu.memory_space<vmem>>, vector<1x128xf32>
    %319 = vector.shape_cast %318 : vector<1x128xf32> to vector<128xf32>
    %320 = vector.shape_cast %319 : vector<128xf32> to vector<1x1x128xf32>
    %321 = vector.broadcast %320 : vector<1x1x128xf32> to vector<16x16x128xf32>
    %322 = arith.mulf %317, %321 : vector<16x16x128xf32>
    %323 = arith.addf %316, %322 : vector<16x16x128xf32>
    %324 = vector.extract_strided_slice %288 {offsets = [5, 0, 0], sizes = [16, 16, 128], strides = [1, 1, 1]} : vector<22x16x128xf32> to vector<16x16x128xf32>
    %c40 = arith.constant 40 : index
    %c0_50 = arith.constant 0 : index
    %325 = vector.load %arg2[%c40, %c0_50] : memref<49x128xf32, #tpu.memory_space<vmem>>, vector<1x128xf32>
    %326 = vector.shape_cast %325 : vector<1x128xf32> to vector<128xf32>
    %327 = vector.shape_cast %326 : vector<128xf32> to vector<1x1x128xf32>
    %328 = vector.broadcast %327 : vector<1x1x128xf32> to vector<16x16x128xf32>
    %329 = arith.mulf %324, %328 : vector<16x16x128xf32>
    %330 = arith.addf %323, %329 : vector<16x16x128xf32>
    %331 = vector.extract_strided_slice %288 {offsets = [6, 0, 0], sizes = [16, 16, 128], strides = [1, 1, 1]} : vector<22x16x128xf32> to vector<16x16x128xf32>
    %c47 = arith.constant 47 : index
    %c0_51 = arith.constant 0 : index
    %332 = vector.load %arg2[%c47, %c0_51] : memref<49x128xf32, #tpu.memory_space<vmem>>, vector<1x128xf32>
    %333 = vector.shape_cast %332 : vector<1x128xf32> to vector<128xf32>
    %334 = vector.shape_cast %333 : vector<128xf32> to vector<1x1x128xf32>
    %335 = vector.broadcast %334 : vector<1x1x128xf32> to vector<16x16x128xf32>
    %336 = arith.mulf %331, %335 : vector<16x16x128xf32>
    %337 = arith.addf %330, %336 : vector<16x16x128xf32>
    %338 = vector.extract_strided_slice %6 {offsets = [0, 6, 0], sizes = [16, 16, 128], strides = [1, 1, 1]} : vector<16x22x128xf32> to vector<16x16x128xf32>
    %c0_i32_52 = arith.constant 0 : i32
    %339 = arith.sitofp %c0_i32_52 : i32 to f32
    %340 = vector.broadcast %339 : f32 to vector<3x16x128xf32>
    %341 = tpu.concatenate %340, %338 in 0 : vector<3x16x128xf32>, vector<16x16x128xf32> -> vector<19x16x128xf32>
    %342 = vector.broadcast %339 : f32 to vector<3x16x128xf32>
    %343 = tpu.concatenate %341, %342 in 0 : vector<19x16x128xf32>, vector<3x16x128xf32> -> vector<22x16x128xf32>
    %344 = vector.extract_strided_slice %343 {offsets = [0, 0, 0], sizes = [16, 16, 128], strides = [1, 1, 1]} : vector<22x16x128xf32> to vector<16x16x128xf32>
    %c6 = arith.constant 6 : index
    %c0_53 = arith.constant 0 : index
    %345 = vector.load %arg2[%c6, %c0_53] : memref<49x128xf32, #tpu.memory_space<vmem>>, vector<1x128xf32>
    %346 = vector.shape_cast %345 : vector<1x128xf32> to vector<128xf32>
    %347 = vector.shape_cast %346 : vector<128xf32> to vector<1x1x128xf32>
    %348 = vector.broadcast %347 : vector<1x1x128xf32> to vector<16x16x128xf32>
    %349 = arith.mulf %344, %348 : vector<16x16x128xf32>
    %350 = arith.addf %337, %349 : vector<16x16x128xf32>
    %351 = vector.extract_strided_slice %343 {offsets = [1, 0, 0], sizes = [16, 16, 128], strides = [1, 1, 1]} : vector<22x16x128xf32> to vector<16x16x128xf32>
    %c13 = arith.constant 13 : index
    %c0_54 = arith.constant 0 : index
    %352 = vector.load %arg2[%c13, %c0_54] : memref<49x128xf32, #tpu.memory_space<vmem>>, vector<1x128xf32>
    %353 = vector.shape_cast %352 : vector<1x128xf32> to vector<128xf32>
    %354 = vector.shape_cast %353 : vector<128xf32> to vector<1x1x128xf32>
    %355 = vector.broadcast %354 : vector<1x1x128xf32> to vector<16x16x128xf32>
    %356 = arith.mulf %351, %355 : vector<16x16x128xf32>
    %357 = arith.addf %350, %356 : vector<16x16x128xf32>
    %358 = vector.extract_strided_slice %343 {offsets = [2, 0, 0], sizes = [16, 16, 128], strides = [1, 1, 1]} : vector<22x16x128xf32> to vector<16x16x128xf32>
    %c20 = arith.constant 20 : index
    %c0_55 = arith.constant 0 : index
    %359 = vector.load %arg2[%c20, %c0_55] : memref<49x128xf32, #tpu.memory_space<vmem>>, vector<1x128xf32>
    %360 = vector.shape_cast %359 : vector<1x128xf32> to vector<128xf32>
    %361 = vector.shape_cast %360 : vector<128xf32> to vector<1x1x128xf32>
    %362 = vector.broadcast %361 : vector<1x1x128xf32> to vector<16x16x128xf32>
    %363 = arith.mulf %358, %362 : vector<16x16x128xf32>
    %364 = arith.addf %357, %363 : vector<16x16x128xf32>
    %365 = vector.extract_strided_slice %343 {offsets = [3, 0, 0], sizes = [16, 16, 128], strides = [1, 1, 1]} : vector<22x16x128xf32> to vector<16x16x128xf32>
    %c27 = arith.constant 27 : index
    %c0_56 = arith.constant 0 : index
    %366 = vector.load %arg2[%c27, %c0_56] : memref<49x128xf32, #tpu.memory_space<vmem>>, vector<1x128xf32>
    %367 = vector.shape_cast %366 : vector<1x128xf32> to vector<128xf32>
    %368 = vector.shape_cast %367 : vector<128xf32> to vector<1x1x128xf32>
    %369 = vector.broadcast %368 : vector<1x1x128xf32> to vector<16x16x128xf32>
    %370 = arith.mulf %365, %369 : vector<16x16x128xf32>
    %371 = arith.addf %364, %370 : vector<16x16x128xf32>
    %372 = vector.extract_strided_slice %343 {offsets = [4, 0, 0], sizes = [16, 16, 128], strides = [1, 1, 1]} : vector<22x16x128xf32> to vector<16x16x128xf32>
    %c34 = arith.constant 34 : index
    %c0_57 = arith.constant 0 : index
    %373 = vector.load %arg2[%c34, %c0_57] : memref<49x128xf32, #tpu.memory_space<vmem>>, vector<1x128xf32>
    %374 = vector.shape_cast %373 : vector<1x128xf32> to vector<128xf32>
    %375 = vector.shape_cast %374 : vector<128xf32> to vector<1x1x128xf32>
    %376 = vector.broadcast %375 : vector<1x1x128xf32> to vector<16x16x128xf32>
    %377 = arith.mulf %372, %376 : vector<16x16x128xf32>
    %378 = arith.addf %371, %377 : vector<16x16x128xf32>
    %379 = vector.extract_strided_slice %343 {offsets = [5, 0, 0], sizes = [16, 16, 128], strides = [1, 1, 1]} : vector<22x16x128xf32> to vector<16x16x128xf32>
    %c41 = arith.constant 41 : index
    %c0_58 = arith.constant 0 : index
    %380 = vector.load %arg2[%c41, %c0_58] : memref<49x128xf32, #tpu.memory_space<vmem>>, vector<1x128xf32>
    %381 = vector.shape_cast %380 : vector<1x128xf32> to vector<128xf32>
    %382 = vector.shape_cast %381 : vector<128xf32> to vector<1x1x128xf32>
    %383 = vector.broadcast %382 : vector<1x1x128xf32> to vector<16x16x128xf32>
    %384 = arith.mulf %379, %383 : vector<16x16x128xf32>
    %385 = arith.addf %378, %384 : vector<16x16x128xf32>
    %386 = vector.extract_strided_slice %343 {offsets = [6, 0, 0], sizes = [16, 16, 128], strides = [1, 1, 1]} : vector<22x16x128xf32> to vector<16x16x128xf32>
    %c48 = arith.constant 48 : index
    %c0_59 = arith.constant 0 : index
    %387 = vector.load %arg2[%c48, %c0_59] : memref<49x128xf32, #tpu.memory_space<vmem>>, vector<1x128xf32>
    %388 = vector.shape_cast %387 : vector<1x128xf32> to vector<128xf32>
    %389 = vector.shape_cast %388 : vector<128xf32> to vector<1x1x128xf32>
    %390 = vector.broadcast %389 : vector<1x1x128xf32> to vector<16x16x128xf32>
    %391 = arith.mulf %386, %390 : vector<16x16x128xf32>
    %392 = arith.addf %385, %391 : vector<16x16x128xf32>
    %c0_60 = arith.constant 0 : index
    %c0_61 = arith.constant 0 : index
    %393 = vector.load %arg3[%c0_60, %c0_61] : memref<1x128xf32, #tpu.memory_space<vmem>>, vector<1x128xf32>
    %394 = vector.shape_cast %393 : vector<1x128xf32> to vector<1x1x128xf32>
    %395 = vector.broadcast %394 : vector<1x1x128xf32> to vector<16x16x128xf32>
    %396 = arith.addf %392, %395 : vector<16x16x128xf32>
    %cst_62 = arith.constant dense<0.000000e+00> : vector<16x16xf32>
    %397 = vector.multi_reduction <add>, %396, %cst_62 [2] : vector<16x16x128xf32> to vector<16x16xf32>
    %398 = vector.shape_cast %397 : vector<16x16xf32> to vector<16x16x1xf32>
    %cst_63 = arith.constant 1.280000e+02 : f32
    %399 = vector.broadcast %cst_63 : f32 to vector<16x16x1xf32>
    %400 = arith.divf %398, %399 : vector<16x16x1xf32>
    %401 = vector.broadcast %400 : vector<16x16x1xf32> to vector<16x16x128xf32>
    %402 = arith.subf %396, %401 : vector<16x16x128xf32>
    %403 = arith.mulf %402, %402 : vector<16x16x128xf32>
    %cst_64 = arith.constant dense<0.000000e+00> : vector<16x16xf32>
    %404 = vector.multi_reduction <add>, %403, %cst_64 [2] : vector<16x16x128xf32> to vector<16x16xf32>
    %405 = vector.shape_cast %404 : vector<16x16xf32> to vector<16x16x1xf32>
    %cst_65 = arith.constant 1.280000e+02 : f32
    %406 = vector.broadcast %cst_65 : f32 to vector<16x16x1xf32>
    %407 = arith.divf %405, %406 : vector<16x16x1xf32>
    %cst_66 = arith.constant 9.99999997E-7 : f32
    %408 = vector.broadcast %cst_66 : f32 to vector<16x16x1xf32>
    %409 = arith.addf %407, %408 : vector<16x16x1xf32>
    %410 = math.rsqrt %409 : vector<16x16x1xf32>
    %411 = vector.broadcast %410 : vector<16x16x1xf32> to vector<16x16x128xf32>
    %412 = arith.mulf %402, %411 : vector<16x16x128xf32>
    %c0_67 = arith.constant 0 : index
    %c0_68 = arith.constant 0 : index
    %413 = vector.load %arg4[%c0_67, %c0_68] : memref<1x128xf32, #tpu.memory_space<vmem>>, vector<1x128xf32>
    %414 = vector.shape_cast %413 : vector<1x128xf32> to vector<1x1x128xf32>
    %415 = vector.broadcast %414 : vector<1x1x128xf32> to vector<16x16x128xf32>
    %416 = arith.mulf %412, %415 : vector<16x16x128xf32>
    %c0_69 = arith.constant 0 : index
    %c0_70 = arith.constant 0 : index
    %417 = vector.load %arg5[%c0_69, %c0_70] : memref<1x128xf32, #tpu.memory_space<vmem>>, vector<1x128xf32>
    %418 = vector.shape_cast %417 : vector<1x128xf32> to vector<1x1x128xf32>
    %419 = vector.broadcast %418 : vector<1x1x128xf32> to vector<16x16x128xf32>
    %420 = arith.addf %416, %419 : vector<16x16x128xf32>
    %421 = vector.shape_cast %420 : vector<16x16x128xf32> to vector<256x128xf32>
    %c0_71 = arith.constant 0 : index
    %c0_72 = arith.constant 0 : index
    %422 = vector.load %arg6[%c0_71, %c0_72] : memref<128x512xf32, #tpu.memory_space<vmem>>, vector<128x512xf32>
    %cst_73 = arith.constant dense<0.000000e+00> : vector<256x512xf32>
    %423 = tpu.matmul %421, %422, %cst_73 {dimension_numbers = #tpu.dot_dimension_numbers<[1], [0], [0], [1], [0, 0, 1, 1], [], []>} : vector<256x128xf32>, vector<128x512xf32>, vector<256x512xf32> -> vector<256x512xf32>
    %c0_74 = arith.constant 0 : index
    %c0_75 = arith.constant 0 : index
    %424 = vector.load %arg7[%c0_74, %c0_75] : memref<1x512xf32, #tpu.memory_space<vmem>>, vector<1x512xf32>
    %425 = vector.broadcast %424 : vector<1x512xf32> to vector<256x512xf32>
    %426 = arith.addf %423, %425 : vector<256x512xf32>
    %cst_76 = arith.constant 5.000000e-01 : f32
    %427 = vector.broadcast %cst_76 : f32 to vector<256x512xf32>
    %428 = arith.mulf %427, %426 : vector<256x512xf32>
    %cst_77 = arith.constant 0.707106769 : f32
    %429 = vector.broadcast %cst_77 : f32 to vector<256x512xf32>
    %430 = arith.mulf %426, %429 : vector<256x512xf32>
    %431 = math.absf %430 : vector<256x512xf32>
    %cst_78 = arith.constant 0.327591091 : f32
    %432 = vector.broadcast %cst_78 : f32 to vector<256x512xf32>
    %433 = arith.mulf %432, %431 : vector<256x512xf32>
    %cst_79 = arith.constant 1.000000e+00 : f32
    %434 = vector.broadcast %cst_79 : f32 to vector<256x512xf32>
    %435 = arith.addf %434, %433 : vector<256x512xf32>
    %cst_80 = arith.constant 1.000000e+00 : f32
    %436 = vector.broadcast %cst_80 : f32 to vector<256x512xf32>
    %437 = arith.divf %436, %435 : vector<256x512xf32>
    %cst_81 = arith.constant 1.06140542 : f32
    %438 = vector.broadcast %cst_81 : f32 to vector<256x512xf32>
    %439 = arith.mulf %438, %437 : vector<256x512xf32>
    %cst_82 = arith.constant -1.45315206 : f32
    %440 = vector.broadcast %cst_82 : f32 to vector<256x512xf32>
    %441 = arith.addf %439, %440 : vector<256x512xf32>
    %442 = arith.mulf %441, %437 : vector<256x512xf32>
    %cst_83 = arith.constant 1.42141378 : f32
    %443 = vector.broadcast %cst_83 : f32 to vector<256x512xf32>
    %444 = arith.addf %442, %443 : vector<256x512xf32>
    %445 = arith.mulf %444, %437 : vector<256x512xf32>
    %cst_84 = arith.constant -0.284496725 : f32
    %446 = vector.broadcast %cst_84 : f32 to vector<256x512xf32>
    %447 = arith.addf %445, %446 : vector<256x512xf32>
    %448 = arith.mulf %447, %437 : vector<256x512xf32>
    %cst_85 = arith.constant 0.254829586 : f32
    %449 = vector.broadcast %cst_85 : f32 to vector<256x512xf32>
    %450 = arith.addf %448, %449 : vector<256x512xf32>
    %451 = arith.mulf %450, %437 : vector<256x512xf32>
    %cst_86 = arith.constant 0.000000e+00 : f32
    %452 = vector.broadcast %cst_86 : f32 to vector<256x512xf32>
    %453 = arith.subf %452, %431 : vector<256x512xf32>
    %454 = arith.mulf %453, %431 : vector<256x512xf32>
    %455 = math.exp %454 : vector<256x512xf32>
    %456 = arith.mulf %451, %455 : vector<256x512xf32>
    %cst_87 = arith.constant 1.000000e+00 : f32
    %457 = vector.broadcast %cst_87 : f32 to vector<256x512xf32>
    %458 = arith.subf %457, %456 : vector<256x512xf32>
    %cst_88 = arith.constant 0.000000e+00 : f32
    %459 = vector.broadcast %cst_88 : f32 to vector<256x512xf32>
    %460 = arith.cmpf oge, %430, %459 : vector<256x512xf32>
    %cst_89 = arith.constant 0.000000e+00 : f32
    %461 = vector.broadcast %cst_89 : f32 to vector<256x512xf32>
    %462 = arith.subf %461, %458 : vector<256x512xf32>
    %463 = arith.select %460, %458, %462 : vector<256x512xi1>, vector<256x512xf32>
    %cst_90 = arith.constant 1.000000e+00 : f32
    %464 = vector.broadcast %cst_90 : f32 to vector<256x512xf32>
    %465 = arith.addf %464, %463 : vector<256x512xf32>
    %466 = arith.mulf %428, %465 : vector<256x512xf32>
    %c0_91 = arith.constant 0 : index
    %c0_92 = arith.constant 0 : index
    %467 = vector.load %arg8[%c0_91, %c0_92] : memref<512x128xf32, #tpu.memory_space<vmem>>, vector<512x128xf32>
    %cst_93 = arith.constant dense<0.000000e+00> : vector<256x128xf32>
    %468 = tpu.matmul %466, %467, %cst_93 {dimension_numbers = #tpu.dot_dimension_numbers<[1], [0], [0], [1], [0, 0, 1, 1], [], []>} : vector<256x512xf32>, vector<512x128xf32>, vector<256x128xf32> -> vector<256x128xf32>
    %c0_94 = arith.constant 0 : index
    %c0_95 = arith.constant 0 : index
    %469 = vector.load %arg9[%c0_94, %c0_95] : memref<1x128xf32, #tpu.memory_space<vmem>>, vector<1x128xf32>
    %470 = vector.broadcast %469 : vector<1x128xf32> to vector<256x128xf32>
    %471 = arith.addf %468, %470 : vector<256x128xf32>
    %472 = vector.shape_cast %1 : vector<16x16x128xf32> to vector<256x128xf32>
    %473 = arith.addf %472, %471 : vector<256x128xf32>
    %474 = vector.shape_cast %473 : vector<256x128xf32> to vector<16x16x128xf32>
    %c0_96 = arith.constant 0 : index
    %c0_97 = arith.constant 0 : index
    %c0_98 = arith.constant 0 : index
    %c0_99 = arith.constant 0 : index
    %475 = vector.load %arg10[%c0_96, %c0_97, %c0_98, %c0_99] : memref<1x16x16x128xf32, #tpu.memory_space<vmem>>, vector<1x16x16x128xf32>
    %476 = vector.shape_cast %475 : vector<1x16x16x128xf32> to vector<16x16x128xf32>
    %477 = vector.shape_cast %474 : vector<16x16x128xf32> to vector<1x16x16x128xf32>
    tpu.vector_store %arg10[%c0_96, %c0_97, %c0_98, %c0_99], %477 {strides = array<i32>} : memref<1x16x16x128xf32, #tpu.memory_space<vmem>>, vector<1x16x16x128xf32>,
    return
  }
  func.func @transform_0(%arg0: i32) -> (i32, i32, i32, i32) {
    %c0_i32 = arith.constant 0 : i32
    %c0_i32_0 = arith.constant 0 : i32
    %c0_i32_1 = arith.constant 0 : i32
    %c0_i32_2 = arith.constant 0 : i32
    return %arg0, %c0_i32, %c0_i32_0, %c0_i32_1 : i32, i32, i32, i32
  }
  func.func @transform_1(%arg0: i32) -> (i32, i32) {
    %c0_i32 = arith.constant 0 : i32
    %c0_i32_0 = arith.constant 0 : i32
    %c0_i32_1 = arith.constant 0 : i32
    return %c0_i32, %c0_i32_0 : i32, i32
  }
  func.func @transform_2(%arg0: i32) -> (i32, i32) {
    %c0_i32 = arith.constant 0 : i32
    %c0_i32_0 = arith.constant 0 : i32
    %c0_i32_1 = arith.constant 0 : i32
    return %c0_i32, %c0_i32_0 : i32, i32
  }
  func.func @transform_3(%arg0: i32) -> (i32, i32) {
    %c0_i32 = arith.constant 0 : i32
    %c0_i32_0 = arith.constant 0 : i32
    %c0_i32_1 = arith.constant 0 : i32
    return %c0_i32, %c0_i32_0 : i32, i32
  }
  func.func @transform_4(%arg0: i32) -> (i32, i32) {
    %c0_i32 = arith.constant 0 : i32
    %c0_i32_0 = arith.constant 0 : i32
    %c0_i32_1 = arith.constant 0 : i32
    return %c0_i32, %c0_i32_0 : i32, i32
  }
  func.func @transform_5(%arg0: i32) -> (i32, i32) {
    %c0_i32 = arith.constant 0 : i32
    %c0_i32_0 = arith.constant 0 : i32
    %c0_i32_1 = arith.constant 0 : i32
    return %c0_i32, %c0_i32_0 : i32, i32
  }
  func.func @transform_6(%arg0: i32) -> (i32, i32) {
    %c0_i32 = arith.constant 0 : i32
    %c0_i32_0 = arith.constant 0 : i32
    %c0_i32_1 = arith.constant 0 : i32
    return %c0_i32, %c0_i32_0 : i32, i32
  }
  func.func @transform_7(%arg0: i32) -> (i32, i32) {
    %c0_i32 = arith.constant 0 : i32
    %c0_i32_0 = arith.constant 0 : i32
    %c0_i32_1 = arith.constant 0 : i32
    return %c0_i32, %c0_i32_0 : i32, i32
  }
  func.func @transform_8(%arg0: i32) -> (i32, i32) {
    %c0_i32 = arith.constant 0 : i32
    %c0_i32_0 = arith.constant 0 : i32
    %c0_i32_1 = arith.constant 0 : i32
    return %c0_i32, %c0_i32_0 : i32, i32
  }
  func.func @transform_9(%arg0: i32) -> (i32, i32, i32, i32) {
    %c0_i32 = arith.constant 0 : i32
    %c0_i32_0 = arith.constant 0 : i32
    %c0_i32_1 = arith.constant 0 : i32
    %c0_i32_2 = arith.constant 0 : i32
    return %arg0, %c0_i32, %c0_i32_0, %c0_i32_1 : i32, i32, i32, i32
  }
}

</mosaic_0001>

<llo_original>
// kernel: tpu_custom_call.1
$region0: #{tpu_custom_call.1}
  #allocation0 [shape = 'u32[]', space=smem, size = 0x4, offset = 0x4, fixed_abs, tag = 'smem constant byte address 0x4 - core index']
  #allocation1 [shape = 'u32[144,128]{1,0:T(1,128)}', space=vmem, size = 0x12000, scoped, tag = 'internal scratch']
  %s0 = inlined_call_operand.hbm [shape: f32[2,16,16,128], index: 0, kind: input, shape index: {}]
  %s1 = inlined_call_operand.hbm [shape: f32[49,128], index: 1, kind: input, shape index: {}]
  %s2 = inlined_call_operand.vmem [shape: f32[1,128], index: 2, kind: input, shape index: {}]
  %s3 = inlined_call_operand.vmem [shape: f32[1,128], index: 3, kind: input, shape index: {}]
  %s4 = inlined_call_operand.vmem [shape: f32[1,128], index: 4, kind: input, shape index: {}]
  %s5 = inlined_call_operand.hbm [shape: f32[128,512], index: 5, kind: input, shape index: {}]
  %s6 = inlined_call_operand.vmem [shape: f32[1,512], index: 6, kind: input, shape index: {}]
  %s7 = inlined_call_operand.hbm [shape: f32[512,128], index: 7, kind: input, shape index: {}]
  %s8 = inlined_call_operand.vmem [shape: f32[1,128], index: 8, kind: input, shape index: {}]
  %s9 = inlined_call_operand.hbm [shape: f32[2,16,16,128], index: 9, kind: output, shape index: {}]
  %s10 = sld [smem:[#allocation0]]
  $region85: #{tpu_custom_call.1} parent=0
    _
  %s12 = ssub.s32 1, %s10
  %s13 = scalar_select 0, %s12, %s10
  $region1: #{tpu_custom_call.1} parent=0
    #allocation2 [shape = 'u8[262144]{0}', space=vmem, size = 0x40000, scoped, tag = 'input window, operand 0']
    #allocation3 [shape = 's32[2]{0}', space=sflag, size = 0x8, scoped, tag = 'scoped memory for tpu_custom_call.1']
    #allocation4 [shape = 's32[2]{0}', space=sflag, size = 0x8, scoped, tag = 'scoped memory for tpu_custom_call.1']
    #allocation5 [shape = 'u8[28672]{0}', space=vmem, size = 0x7000, scoped, tag = 'input window, operand 1, single buffered']
    #allocation6 [shape = 's32[1]{0}', space=sflag, size = 0x4, scoped, tag = 'scoped memory for tpu_custom_call.1']
    #allocation7 [shape = 'u8[262144]{0}', space=vmem, size = 0x40000, scoped, tag = 'input window, operand 5, single buffered']
    #allocation8 [shape = 'u8[262144]{0}', space=vmem, size = 0x40000, scoped, tag = 'input window, operand 7, single buffered']
    #allocation9 [shape = 's32[1]{0}', space=sflag, size = 0x4, scoped, tag = 'scoped memory for tpu_custom_call.1']
    #allocation10 [shape = 'u8[262144]{0}', space=vmem, size = 0x40000, scoped, tag = 'output window, operand 0']
    %14 = vsyncpa [#allocation3], 0
    %s15 = scalar_lea.sflag [#allocation3], 1
    %16 = vsyncpa %s15, 0
    %17 = vsyncpa [#allocation6], 0
    %18 = vsyncpa [#allocation9], 0
    %19 = vsyncpa [#allocation4], 0
    %s20 = scalar_lea.sflag [#allocation4], 1
    %21 = vsyncpa %s20, 0
    loop: start=0, step=1, limit=4
    $region2: #{tpu_custom_call.1} parent=1 // loop_pre_header
      _
    $region3: #{tpu_custom_call.1} parent=1 // loop_header
      %s23 = sphi 0, %s27
      %p24 = scmp.ge.s32.totalorder %s23, 4
      %s33 = sphi 0, %s35
      %s36 = sphi 0, %s33
      %s37 = sphi 0, %s36
      %s53 = sphi 0, %s37
      %s57 = sphi 0, %s57
      %s59 = sphi 0, %s57
      %s60 = sphi 0, %s59
      %s74 = sphi 0, %s60
      %s78 = sphi 0, %s78
      %s80 = sphi 0, %s78
      %s81 = sphi 0, %s80
      %s95 = sphi 0, %s81
      %s99 = sphi 0, %s99
      %s101 = sphi 0, %s99
      %s102 = sphi 0, %s101
      %s116 = sphi 0, %s102
      %s120 = sphi 0, %s120
      %s122 = sphi 0, %s120
      %s123 = sphi 0, %s122
      %s137 = sphi 0, %s123
      %s141 = sphi 0, %s141
      %s143 = sphi 0, %s141
      %s144 = sphi 0, %s143
      %s158 = sphi 0, %s144
      %s162 = sphi 0, %s162
      %s164 = sphi 0, %s162
      %s165 = sphi 0, %s164
      %s179 = sphi 0, %s165
      %s183 = sphi 0, %s183
      %s185 = sphi 0, %s183
      %s186 = sphi 0, %s185
      %s200 = sphi 0, %s186
      %s204 = sphi 0, %s204
      %s206 = sphi 0, %s204
      %s207 = sphi 0, %s206
      %s221 = sphi 0, %s207
      %s227 = sphi 0, %s229
      %s230 = sphi 0, %s227
      %s231 = sphi 0, %s230
      %s247 = sphi 0, %s231
    $region4: #{tpu_custom_call.1} parent=1 // loop_header_branch
      %26 = sbr.rel (%p24) target = $region8
    $region5: #{tpu_custom_call.1} parent=1 // loop_body
      %s28 = ssub.s32 %s23, 1
      %s29 = ssub.s32 %s23, 2
      %s30 = sadd.s32 %s23, 1
      %s31 = ssub.s32 %s23, %s30
      %p32 = scmp.eq.s32.totalorder %s31, 0
      %s34 = sadd.s32 %s33, 1
      %s35 = scalar_select %p32, %s33, %s34
      %p38 = pneg %p32
      %p39 = scmp.eq.s32.totalorder %s23, 1
      %p40 = por %p38, %p39
      %p41 = scmp.ne.s32.totalorder %s33, %s36
      %p42 = scmp.eq.s32.totalorder %s23, 0
      %p43 = por %p41, %p42
      %p44 = scmp.ne.s32.totalorder %s33, %s36
      %p45 = scmp.eq.s32.totalorder %s28, 1
      %p46 = por %p44, %p45
      %p47 = scmp.ne.s32.totalorder %s36, %s37
      %p48 = scmp.eq.s32.totalorder %s28, 0
      %p49 = por %p47, %p48
      %p50 = scmp.ne.s32.totalorder %s36, %s37
      %p51 = scmp.eq.s32.totalorder %s29, 1
      %p52 = por %p50, %p51
      %p54 = scmp.ne.s32.totalorder %s37, %s53
      %p55 = scmp.eq.s32.totalorder %s29, 0
      %p56 = por %p54, %p55
      %s58 = sadd.s32 %s57, 1
      %p61 = scmp.eq.s32.totalorder %s23, 1
      %p62 = scmp.ne.s32.totalorder %s57, %s59
      %p63 = scmp.eq.s32.totalorder %s23, 0
      %p64 = por %p62, %p63
      %p65 = scmp.ne.s32.totalorder %s57, %s59
      %p66 = scmp.eq.s32.totalorder %s28, 1
      %p67 = por %p65, %p66
      %p68 = scmp.ne.s32.totalorder %s59, %s60
      %p69 = scmp.eq.s32.totalorder %s28, 0
      %p70 = por %p68, %p69
      %p71 = scmp.ne.s32.totalorder %s59, %s60
      %p72 = scmp.eq.s32.totalorder %s29, 1
      %p73 = por %p71, %p72
      %p75 = scmp.ne.s32.totalorder %s60, %s74
      %p76 = scmp.eq.s32.totalorder %s29, 0
      %p77 = por %p75, %p76
      %s79 = sadd.s32 %s78, 1
      %p82 = scmp.eq.s32.totalorder %s23, 1
      %p83 = scmp.ne.s32.totalorder %s78, %s80
      %p84 = scmp.eq.s32.totalorder %s23, 0
      %p85 = por %p83, %p84
      %p86 = scmp.ne.s32.totalorder %s78, %s80
      %p87 = scmp.eq.s32.totalorder %s28, 1
      %p88 = por %p86, %p87
      %p89 = scmp.ne.s32.totalorder %s80, %s81
      %p90 = scmp.eq.s32.totalorder %s28, 0
      %p91 = por %p89, %p90
      %p92 = scmp.ne.s32.totalorder %s80, %s81
      %p93 = scmp.eq.s32.totalorder %s29, 1
      %p94 = por %p92, %p93
      %p96 = scmp.ne.s32.totalorder %s81, %s95
      %p97 = scmp.eq.s32.totalorder %s29, 0
      %p98 = por %p96, %p97
      %s100 = sadd.s32 %s99, 1
      %p103 = scmp.eq.s32.totalorder %s23, 1
      %p104 = scmp.ne.s32.totalorder %s99, %s101
      %p105 = scmp.eq.s32.totalorder %s23, 0
      %p106 = por %p104, %p105
      %p107 = scmp.ne.s32.totalorder %s99, %s101
      %p108 = scmp.eq.s32.totalorder %s28, 1
      %p109 = por %p107, %p108
      %p110 = scmp.ne.s32.totalorder %s101, %s102
      %p111 = scmp.eq.s32.totalorder %s28, 0
      %p112 = por %p110, %p111
      %p113 = scmp.ne.s32.totalorder %s101, %s102
      %p114 = scmp.eq.s32.totalorder %s29, 1
      %p115 = por %p113, %p114
      %p117 = scmp.ne.s32.totalorder %s102, %s116
      %p118 = scmp.eq.s32.totalorder %s29, 0
      %p119 = por %p117, %p118
      %s121 = sadd.s32 %s120, 1
      %p124 = scmp.eq.s32.totalorder %s23, 1
      %p125 = scmp.ne.s32.totalorder %s120, %s122
      %p126 = scmp.eq.s32.totalorder %s23, 0
      %p127 = por %p125, %p126
      %p128 = scmp.ne.s32.totalorder %s120, %s122
      %p129 = scmp.eq.s32.totalorder %s28, 1
      %p130 = por %p128, %p129
      %p131 = scmp.ne.s32.totalorder %s122, %s123
      %p132 = scmp.eq.s32.totalorder %s28, 0
      %p133 = por %p131, %p132
      %p134 = scmp.ne.s32.totalorder %s122, %s123
      %p135 = scmp.eq.s32.totalorder %s29, 1
      %p136 = por %p134, %p135
      %p138 = scmp.ne.s32.totalorder %s123, %s137
      %p139 = scmp.eq.s32.totalorder %s29, 0
      %p140 = por %p138, %p139
      %s142 = sadd.s32 %s141, 1
      %p145 = scmp.eq.s32.totalorder %s23, 1
      %p146 = scmp.ne.s32.totalorder %s141, %s143
      %p147 = scmp.eq.s32.totalorder %s23, 0
      %p148 = por %p146, %p147
      %p149 = scmp.ne.s32.totalorder %s141, %s143
      %p150 = scmp.eq.s32.totalorder %s28, 1
      %p151 = por %p149, %p150
      %p152 = scmp.ne.s32.totalorder %s143, %s144
      %p153 = scmp.eq.s32.totalorder %s28, 0
      %p154 = por %p152, %p153
      %p155 = scmp.ne.s32.totalorder %s143, %s144
      %p156 = scmp.eq.s32.totalorder %s29, 1
      %p157 = por %p155, %p156
      %p159 = scmp.ne.s32.totalorder %s144, %s158
      %p160 = scmp.eq.s32.totalorder %s29, 0
      %p161 = por %p159, %p160
      %s163 = sadd.s32 %s162, 1
      %p166 = scmp.eq.s32.totalorder %s23, 1
      %p167 = scmp.ne.s32.totalorder %s162, %s164
      %p168 = scmp.eq.s32.totalorder %s23, 0
      %p169 = por %p167, %p168
      %p170 = scmp.ne.s32.totalorder %s162, %s164
      %p171 = scmp.eq.s32.totalorder %s28, 1
      %p172 = por %p170, %p171
      %p173 = scmp.ne.s32.totalorder %s164, %s165
      %p174 = scmp.eq.s32.totalorder %s28, 0
      %p175 = por %p173, %p174
      %p176 = scmp.ne.s32.totalorder %s164, %s165
      %p177 = scmp.eq.s32.totalorder %s29, 1
      %p178 = por %p176, %p177
      %p180 = scmp.ne.s32.totalorder %s165, %s179
      %p181 = scmp.eq.s32.totalorder %s29, 0
      %p182 = por %p180, %p181
      %s184 = sadd.s32 %s183, 1
      %p187 = scmp.eq.s32.totalorder %s23, 1
      %p188 = scmp.ne.s32.totalorder %s183, %s185
      %p189 = scmp.eq.s32.totalorder %s23, 0
      %p190 = por %p188, %p189
      %p191 = scmp.ne.s32.totalorder %s183, %s185
      %p192 = scmp.eq.s32.totalorder %s28, 1
      %p193 = por %p191, %p192
      %p194 = scmp.ne.s32.totalorder %s185, %s186
      %p195 = scmp.eq.s32.totalorder %s28, 0
      %p196 = por %p194, %p195
      %p197 = scmp.ne.s32.totalorder %s185, %s186
      %p198 = scmp.eq.s32.totalorder %s29, 1
      %p199 = por %p197, %p198
      %p201 = scmp.ne.s32.totalorder %s186, %s200
      %p202 = scmp.eq.s32.totalorder %s29, 0
      %p203 = por %p201, %p202
      %s205 = sadd.s32 %s204, 1
      %p208 = scmp.eq.s32.totalorder %s23, 1
      %p209 = scmp.ne.s32.totalorder %s204, %s206
      %p210 = scmp.eq.s32.totalorder %s23, 0
      %p211 = por %p209, %p210
      %p212 = scmp.ne.s32.totalorder %s204, %s206
      %p213 = scmp.eq.s32.totalorder %s28, 1
      %p214 = por %p212, %p213
      %p215 = scmp.ne.s32.totalorder %s206, %s207
      %p216 = scmp.eq.s32.totalorder %s28, 0
      %p217 = por %p215, %p216
      %p218 = scmp.ne.s32.totalorder %s206, %s207
      %p219 = scmp.eq.s32.totalorder %s29, 1
      %p220 = por %p218, %p219
      %p222 = scmp.ne.s32.totalorder %s207, %s221
      %p223 = scmp.eq.s32.totalorder %s29, 0
      %p224 = por %p222, %p223
      %s225 = ssub.s32 %s23, %s30
      %p226 = scmp.eq.s32.totalorder %s225, 0
      %s228 = sadd.s32 %s227, 1
      %s229 = scalar_select %p226, %s227, %s228
      %p232 = pneg %p226
      %p233 = scmp.eq.s32.totalorder %s23, 1
      %p234 = por %p232, %p233
      %p235 = scmp.ne.s32.totalorder %s227, %s230
      %p236 = scmp.eq.s32.totalorder %s23, 0
      %p237 = por %p235, %p236
      %p238 = scmp.ne.s32.totalorder %s227, %s230
      %p239 = scmp.eq.s32.totalorder %s28, 1
      %p240 = por %p238, %p239
      %p241 = scmp.ne.s32.totalorder %s230, %s231
      %p242 = scmp.eq.s32.totalorder %s28, 0
      %p243 = por %p241, %p242
      %p244 = scmp.ne.s32.totalorder %s230, %s231
      %p245 = scmp.eq.s32.totalorder %s29, 1
      %p246 = por %p244, %p245
      %p248 = scmp.ne.s32.totalorder %s231, %s247
      %p249 = scmp.eq.s32.totalorder %s29, 0
      %p250 = por %p248, %p249
      %p251 = scmp.le.s32.totalorder 1, %s23
      %p252 = scmp.lt.s32.totalorder %s23, 3
      %p253 = pnand %p251, %p252
      %p254 = pneg %p253
      // Predicated region
      $region9: #{tpu_custom_call.1} parent=5 // pred_check
        _
      $region10: #{tpu_custom_call.1} parent=5 // pred_check_branch
        %256 = sbr.rel (%p253) target = $region12
      $region11: #{tpu_custom_call.1} parent=5 // pred_region
        %s257 = ssub.s32 %s23, 1
        // Predicated region
        $region13: #{tpu_custom_call.1} parent=11 // pred_check
          %p258 = pneg %p70
        $region14: #{tpu_custom_call.1} parent=11 // pred_check_branch
          %260 = sbr.rel (%p258) target = $region16
        $region15: #{tpu_custom_call.1} parent=11 // pred_region
          %s262 = ssub.s32 896, 896
          %263 = vsyncadd [#allocation6], %s262
          %s264 = sshll.u32 [#allocation5], 4
          %s265 = int_to_ptr.vmem [resolvable:$true] %s264
          %270 = dma.hbm_to_vmem [thread:$0]  %s1, 896, %s265, [#allocation6], 128, 128, 8
        $region16: #{tpu_custom_call.1} parent=11 // pred_fallthru
          _
        // Predicated region
        $region17: #{tpu_custom_call.1} parent=11 // pred_check
          %p271 = pneg %p91
        $region18: #{tpu_custom_call.1} parent=11 // pred_check_branch
          %273 = sbr.rel (%p271) target = $region20
        $region19: #{tpu_custom_call.1} parent=11 // pred_region
          _
        $region20: #{tpu_custom_call.1} parent=11 // pred_fallthru
          _
        // Predicated region
        $region21: #{tpu_custom_call.1} parent=11 // pred_check
          %p274 = pneg %p112
        $region22: #{tpu_custom_call.1} parent=11 // pred_check_branch
          %276 = sbr.rel (%p274) target = $region24
        $region23: #{tpu_custom_call.1} parent=11 // pred_region
          _
        $region24: #{tpu_custom_call.1} parent=11 // pred_fallthru
          _
        // Predicated region
        $region25: #{tpu_custom_call.1} parent=11 // pred_check
          %p277 = pneg %p133
        $region26: #{tpu_custom_call.1} parent=11 // pred_check_branch
          %279 = sbr.rel (%p277) target = $region28
        $region27: #{tpu_custom_call.1} parent=11 // pred_region
          _
        $region28: #{tpu_custom_call.1} parent=11 // pred_fallthru
          _
        // Predicated region
        $region29: #{tpu_custom_call.1} parent=11 // pred_check
          %p280 = pneg %p154
        $region30: #{tpu_custom_call.1} parent=11 // pred_check_branch
          %282 = sbr.rel (%p280) target = $region32
        $region31: #{tpu_custom_call.1} parent=11 // pred_region
          %s284 = ssub.s32 8192, 8192
          %285 = vsyncadd [#allocation6], %s284
          %s286 = sshll.u32 [#allocation7], 4
          %s287 = int_to_ptr.vmem [resolvable:$true] %s286
          %292 = dma.hbm_to_vmem [thread:$0]  %s5, 8192, %s287, [#allocation6], 512, 512, 32
        $region32: #{tpu_custom_call.1} parent=11 // pred_fallthru
          _
        // Predicated region
        $region33: #{tpu_custom_call.1} parent=11 // pred_check
          %p293 = pneg %p175
        $region34: #{tpu_custom_call.1} parent=11 // pred_check_branch
          %295 = sbr.rel (%p293) target = $region36
        $region35: #{tpu_custom_call.1} parent=11 // pred_region
          _
        $region36: #{tpu_custom_call.1} parent=11 // pred_fallthru
          _
        // Predicated region
        $region37: #{tpu_custom_call.1} parent=11 // pred_check
          %p296 = pneg %p196
        $region38: #{tpu_custom_call.1} parent=11 // pred_check_branch
          %298 = sbr.rel (%p296) target = $region40
        $region39: #{tpu_custom_call.1} parent=11 // pred_region
          %s300 = ssub.s32 8192, 8192
          %301 = vsyncadd [#allocation9], %s300
          %s302 = sshll.u32 [#allocation8], 4
          %s303 = int_to_ptr.vmem [resolvable:$true] %s302
          %308 = dma.hbm_to_vmem [thread:$0]  %s7, 8192, %s303, [#allocation9], 128, 128, 8
        $region40: #{tpu_custom_call.1} parent=11 // pred_fallthru
          _
        // Predicated region
        $region41: #{tpu_custom_call.1} parent=11 // pred_check
          %p309 = pneg %p217
        $region42: #{tpu_custom_call.1} parent=11 // pred_check_branch
          %311 = sbr.rel (%p309) target = $region44
        $region43: #{tpu_custom_call.1} parent=11 // pred_region
          _
        $region44: #{tpu_custom_call.1} parent=11 // pred_fallthru
          _
      $region12: #{tpu_custom_call.1} parent=5 // pred_fallthru
        _
      %p312 = scmp.lt.s32.totalorder %s23, 2
      // Predicated region
      $region45: #{tpu_custom_call.1} parent=5 // pred_check
        %p313 = pneg %p312
      $region46: #{tpu_custom_call.1} parent=5 // pred_check_branch
        %315 = sbr.rel (%p313) target = $region48
      $region47: #{tpu_custom_call.1} parent=5 // pred_region
        // Predicated region
        $region49: #{tpu_custom_call.1} parent=47 // pred_check
          %p316 = pneg %p43
        $region50: #{tpu_custom_call.1} parent=47 // pred_check_branch
          %318 = sbr.rel (%p316) target = $region52
        $region51: #{tpu_custom_call.1} parent=47 // pred_region
          %s319 = sand.u32 %s33, 1
          %s320 = scalar_lea.sflag [#allocation3], %s319
          %s321 = sand.u32 %s33, 1
          %s322 = smul.addr %s321, 256
          %s323 = scalar_lea.vmem [#allocation2], %s322
          %s325 = ssub.s32 4096, 4096
          %326 = vsyncadd %s320, %s325
          %s327 = smul.addr %s23, 32
          %s328 = smul.addr %s327, 128
          %s329 = scalar_lea.hbm %s0, %s328
          %s330 = sshll.u32 %s323, 4
          %s331 = int_to_ptr.vmem [resolvable:$true] %s330
          %336 = dma.hbm_to_vmem [thread:$0]  %s329, 4096, %s331, %s320, 128, 128, 8
        $region52: #{tpu_custom_call.1} parent=47 // pred_fallthru
          _
      $region48: #{tpu_custom_call.1} parent=5 // pred_fallthru
        _
      %p337 = scmp.le.s32.totalorder 1, %s23
      %p338 = scmp.lt.s32.totalorder %s23, 3
      %p339 = pnand %p337, %p338
      %p340 = pneg %p339
      // Predicated region
      $region53: #{tpu_custom_call.1} parent=5 // pred_check
        _
      $region54: #{tpu_custom_call.1} parent=5 // pred_check_branch
        %342 = sbr.rel (%p339) target = $region56
      $region55: #{tpu_custom_call.1} parent=5 // pred_region
        %s343 = ssub.s32 %s23, 1
        %s344 = sand.u32 %s36, 1
        %s345 = scalar_lea.sflag [#allocation3], %s344
        %s346 = sand.u32 %s36, 1
        %s347 = smul.addr %s346, 256
        %s348 = scalar_lea.vmem [#allocation2], %s347
        // Predicated region
        $region57: #{tpu_custom_call.1} parent=55 // pred_check
          %p349 = pneg %p49
        $region58: #{tpu_custom_call.1} parent=55 // pred_check_branch
          %351 = sbr.rel (%p349) target = $region60
        $region59: #{tpu_custom_call.1} parent=55 // pred_region
          %352 = dma.done %s345, 4096
        $region60: #{tpu_custom_call.1} parent=55 // pred_fallthru
          _
        // Predicated region
        $region61: #{tpu_custom_call.1} parent=55 // pred_check
          %p353 = pneg %p70
        $region62: #{tpu_custom_call.1} parent=55 // pred_check_branch
          %355 = sbr.rel (%p353) target = $region64
        $region63: #{tpu_custom_call.1} parent=55 // pred_region
          %356 = dma.done [#allocation6], 896
        $region64: #{tpu_custom_call.1} parent=55 // pred_fallthru
          _
        // Predicated region
        $region65: #{tpu_custom_call.1} parent=55 // pred_check
          %p357 = pneg %p154
        $region66: #{tpu_custom_call.1} parent=55 // pred_check_branch
          %359 = sbr.rel (%p357) target = $region68
        $region67: #{tpu_custom_call.1} parent=55 // pred_region
          %360 = dma.done [#allocation6], 8192
        $region68: #{tpu_custom_call.1} parent=55 // pred_fallthru
          _
        // Predicated region
        $region69: #{tpu_custom_call.1} parent=55 // pred_check
          %p361 = pneg %p196
        $region70: #{tpu_custom_call.1} parent=55 // pred_check_branch
          %363 = sbr.rel (%p361) target = $region72
        $region71: #{tpu_custom_call.1} parent=55 // pred_region
          %364 = dma.done [#allocation9], 8192
        $region72: #{tpu_custom_call.1} parent=55 // pred_fallthru
          _
        %s365 = sand.u32 %s36, 1
        %s366 = scalar_lea.sflag [#allocation3], %s365
        %s367 = sand.u32 %s36, 1
        %s368 = smul.addr %s367, 256
        %s369 = scalar_lea.vmem [#allocation2], %s368
        %p370 = pneg %p49
        %p371 = pneg %p46
        %p372 = pneg %p70
        %p373 = pneg %p67
        %p374 = pneg %p91
        %p375 = pneg %p88
        %p376 = pneg %p112
        %p377 = pneg %p109
        %p378 = pneg %p133
        %p379 = pneg %p130
        %p380 = pneg %p154
        %p381 = pneg %p151
        %p382 = pneg %p175
        %p383 = pneg %p172
        %p384 = pneg %p196
        %p385 = pneg %p193
        %p386 = pneg %p217
        %p387 = pneg %p214
        %p388 = pneg %p243
        %p389 = pneg %p240
        %s390 = sand.u32 %s230, 1
        %s391 = scalar_lea.sflag [#allocation4], %s390
        %s392 = sand.u32 %s230, 1
        %s393 = smul.addr %s392, 256
        %s394 = scalar_lea.vmem [#allocation10], %s393
        %v395 = vld [vmem:[%s348] sm:$0xff]
        %v396 = vld [vmem:[%s348 + $0x8] sm:$0xff]
        %v397 = vld [vmem:[%s348 + $0x10] sm:$0xff]
        %v398 = vld [vmem:[%s348 + $0x18] sm:$0xff]
        %v399 = vld [vmem:[%s348 + $0x20] sm:$0xff]
        %v400 = vld [vmem:[%s348 + $0x28] sm:$0xff]
        %v401 = vld [vmem:[%s348 + $0x30] sm:$0xff]
        %v402 = vld [vmem:[%s348 + $0x38] sm:$0xff]
        %v403 = vld [vmem:[%s348 + $0x40] sm:$0xff]
        %v404 = vld [vmem:[%s348 + $0x48] sm:$0xff]
        %v405 = vld [vmem:[%s348 + $0x50] sm:$0xff]
        %v406 = vld [vmem:[%s348 + $0x58] sm:$0xff]
        %v407 = vld [vmem:[%s348 + $0x60] sm:$0xff]
        %v408 = vld [vmem:[%s348 + $0x68] sm:$0xff]
        %v409 = vld [vmem:[%s348 + $0x70] sm:$0xff]
        %v410 = vld [vmem:[%s348 + $0x78] sm:$0xff]
        %v411 = vld [vmem:[%s348 + $0x80] sm:$0xff]
        %v412 = vld [vmem:[%s348 + $0x88] sm:$0xff]
        %v413 = vld [vmem:[%s348 + $0x90] sm:$0xff]
        %v414 = vld [vmem:[%s348 + $0x98] sm:$0xff]
        %v415 = vld [vmem:[%s348 + $0xa0] sm:$0xff]
        %v416 = vld [vmem:[%s348 + $0xa8] sm:$0xff]
        %v417 = vld [vmem:[%s348 + $0xb0] sm:$0xff]
        %v418 = vld [vmem:[%s348 + $0xb8] sm:$0xff]
        %v419 = vld [vmem:[%s348 + $0xc0] sm:$0xff]
        %v420 = vld [vmem:[%s348 + $0xc8] sm:$0xff]
        %v421 = vld [vmem:[%s348 + $0xd0] sm:$0xff]
        %v422 = vld [vmem:[%s348 + $0xd8] sm:$0xff]
        %v423 = vld [vmem:[%s348 + $0xe0] sm:$0xff]
        %v424 = vld [vmem:[%s348 + $0xe8] sm:$0xff]
        %v425 = vld [vmem:[%s348 + $0xf0] sm:$0xff]
        %v426 = vld [vmem:[%s348 + $0xf8] sm:$0xff]
        %vm459 = vcmask 1042432
        %v460 = vrot.slane %v395, 5
        %v461 = vrot.slane %v396, 5
        %v462 = vsel %vm459, %v460, %v461
        %v463 = vrot.slane %v397, 5
        %v464 = vrot.slane %v398, 5
        %v465 = vsel %vm459, %v463, %v464
        %v466 = vrot.slane %v399, 5
        %v467 = vrot.slane %v400, 5
        %v468 = vsel %vm459, %v466, %v467
        %v469 = vrot.slane %v401, 5
        %v470 = vrot.slane %v402, 5
        %v471 = vsel %vm459, %v469, %v470
        %v472 = vrot.slane %v403, 5
        %v473 = vrot.slane %v404, 5
        %v474 = vsel %vm459, %v472, %v473
        %v475 = vrot.slane %v405, 5
        %v476 = vrot.slane %v406, 5
        %v477 = vsel %vm459, %v475, %v476
        %v478 = vrot.slane %v407, 5
        %v479 = vrot.slane %v408, 5
        %v480 = vsel %vm459, %v478, %v479
        %v481 = vrot.slane %v409, 5
        %v482 = vrot.slane %v410, 5
        %v483 = vsel %vm459, %v481, %v482
        %v484 = vrot.slane %v411, 5
        %v485 = vrot.slane %v412, 5
        %v486 = vsel %vm459, %v484, %v485
        %v487 = vrot.slane %v413, 5
        %v488 = vrot.slane %v414, 5
        %v489 = vsel %vm459, %v487, %v488
        %v490 = vrot.slane %v415, 5
        %v491 = vrot.slane %v416, 5
        %v492 = vsel %vm459, %v490, %v491
        %v493 = vrot.slane %v417, 5
        %v494 = vrot.slane %v418, 5
        %v495 = vsel %vm459, %v493, %v494
        %v496 = vrot.slane %v419, 5
        %v497 = vrot.slane %v420, 5
        %v498 = vsel %vm459, %v496, %v497
        %v499 = vrot.slane %v421, 5
        %v500 = vrot.slane %v422, 5
        %v501 = vsel %vm459, %v499, %v500
        %v502 = vrot.slane %v423, 5
        %v503 = vrot.slane %v424, 5
        %v504 = vsel %vm459, %v502, %v503
        %v505 = vrot.slane %v425, 5
        %v506 = vrot.slane %v426, 5
        %v507 = vsel %vm459, %v505, %v506
        %v556 = vsel %vm459, 0.0, %v460
        %v557 = vsel %vm459, 0.0, %v463
        %v558 = vsel %vm459, 0.0, %v466
        %v559 = vsel %vm459, 0.0, %v469
        %v560 = vsel %vm459, 0.0, %v472
        %v561 = vsel %vm459, 0.0, %v475
        %v562 = vsel %vm459, 0.0, %v478
        %v563 = vsel %vm459, 0.0, %v481
        %v564 = vsel %vm459, 0.0, %v484
        %v565 = vsel %vm459, 0.0, %v487
        %v566 = vsel %vm459, 0.0, %v490
        %v567 = vsel %vm459, 0.0, %v493
        %v568 = vsel %vm459, 0.0, %v496
        %v569 = vsel %vm459, 0.0, %v499
        %v570 = vsel %vm459, 0.0, %v502
        %v571 = vsel %vm459, 0.0, %v505
        %v572 = vsel %vm459, %v461, 0.0
        %v573 = vsel %vm459, %v464, 0.0
        %v574 = vsel %vm459, %v467, 0.0
        %v575 = vsel %vm459, %v470, 0.0
        %v576 = vsel %vm459, %v473, 0.0
        %v577 = vsel %vm459, %v476, 0.0
        %v578 = vsel %vm459, %v479, 0.0
        %v579 = vsel %vm459, %v482, 0.0
        %v580 = vsel %vm459, %v485, 0.0
        %v581 = vsel %vm459, %v488, 0.0
        %v582 = vsel %vm459, %v491, 0.0
        %v583 = vsel %vm459, %v494, 0.0
        %v584 = vsel %vm459, %v497, 0.0
        %v585 = vsel %vm459, %v500, 0.0
        %v586 = vsel %vm459, %v503, 0.0
        %v587 = vsel %vm459, %v506, 0.0
        %v588 = vld [vmem:[#allocation5] sm:$0x1]
        %v589 = vlaneseq
        %v590 = vshrl.u32 %v589, 7
        %v591 = vsub.s32 0, %v590
        %v592 = vrot.slane %v588, %v591
        %v593 = vmul.f32 %v592, 0.0
        %v594 = vmul.f32 %v556, %v592
        %v595 = vmul.f32 %v462, %v592
        %v596 = vmul.f32 %v557, %v592
        %v597 = vmul.f32 %v465, %v592
        %v598 = vmul.f32 %v558, %v592
        %v599 = vmul.f32 %v468, %v592
        %v600 = vmul.f32 %v559, %v592
        %v601 = vmul.f32 %v471, %v592
        %v602 = vmul.f32 %v560, %v592
        %v603 = vmul.f32 %v474, %v592
        %v604 = vmul.f32 %v561, %v592
        %v605 = vmul.f32 %v477, %v592
        %v606 = vmul.f32 %v562, %v592
        %v607 = vmul.f32 %v480, %v592
        %v608 = vmul.f32 %v563, %v592
        %v609 = vmul.f32 %v483, %v592
        %v610 = vmul.f32 %v564, %v592
        %v611 = vmul.f32 %v486, %v592
        %v612 = vmul.f32 %v565, %v592
        %v613 = vmul.f32 %v489, %v592
        %v614 = vmul.f32 %v566, %v592
        %v615 = vmul.f32 %v492, %v592
        %v616 = vmul.f32 %v567, %v592
        %v617 = vmul.f32 %v495, %v592
        %v618 = vmul.f32 %v568, %v592
        %v619 = vmul.f32 %v498, %v592
        %v620 = vadd.f32 %v593, 0.0
        %v621 = vadd.f32 %v594, 0.0
        %v622 = vadd.f32 %v595, 0.0
        %v623 = vadd.f32 %v596, 0.0
        %v624 = vadd.f32 %v597, 0.0
        %v625 = vadd.f32 %v598, 0.0
        %v626 = vadd.f32 %v599, 0.0
        %v627 = vadd.f32 %v600, 0.0
        %v628 = vadd.f32 %v601, 0.0
        %v629 = vadd.f32 %v602, 0.0
        %v630 = vadd.f32 %v603, 0.0
        %v631 = vadd.f32 %v604, 0.0
        %v632 = vadd.f32 %v605, 0.0
        %v633 = vadd.f32 %v606, 0.0
        %v634 = vadd.f32 %v607, 0.0
        %v635 = vadd.f32 %v608, 0.0
        %v636 = vadd.f32 %v609, 0.0
        %v637 = vadd.f32 %v610, 0.0
        %v638 = vadd.f32 %v611, 0.0
        %v639 = vadd.f32 %v612, 0.0
        %v640 = vadd.f32 %v613, 0.0
        %v641 = vadd.f32 %v614, 0.0
        %v642 = vadd.f32 %v615, 0.0
        %v643 = vadd.f32 %v616, 0.0
        %v644 = vadd.f32 %v617, 0.0
        %v645 = vadd.f32 %v618, 0.0
        %v646 = vadd.f32 %v619, 0.0
        %v647 = vld [vmem:[#allocation5 + $0x7] sm:$0x1]
        %v648 = vlaneseq
        %v649 = vshrl.u32 %v648, 7
        %v650 = vsub.s32 0, %v649
        %v651 = vrot.slane %v647, %v650
        %v652 = vmul.f32 %v651, 0.0
        %v653 = vmul.f32 %v556, %v651
        %v654 = vmul.f32 %v462, %v651
        %v655 = vmul.f32 %v557, %v651
        %v656 = vmul.f32 %v465, %v651
        %v657 = vmul.f32 %v558, %v651
        %v658 = vmul.f32 %v468, %v651
        %v659 = vmul.f32 %v559, %v651
        %v660 = vmul.f32 %v471, %v651
        %v661 = vmul.f32 %v560, %v651
        %v662 = vmul.f32 %v474, %v651
        %v663 = vmul.f32 %v561, %v651
        %v664 = vmul.f32 %v477, %v651
        %v665 = vmul.f32 %v562, %v651
        %v666 = vmul.f32 %v480, %v651
        %v667 = vmul.f32 %v563, %v651
        %v668 = vmul.f32 %v483, %v651
        %v669 = vmul.f32 %v564, %v651
        %v670 = vmul.f32 %v486, %v651
        %v671 = vmul.f32 %v565, %v651
        %v672 = vmul.f32 %v489, %v651
        %v673 = vmul.f32 %v566, %v651
        %v674 = vmul.f32 %v492, %v651
        %v675 = vmul.f32 %v567, %v651
        %v676 = vmul.f32 %v495, %v651
        %v677 = vmul.f32 %v568, %v651
        %v678 = vmul.f32 %v498, %v651
        %v679 = vmul.f32 %v569, %v651
        %v680 = vmul.f32 %v501, %v651
        %v681 = vadd.f32 %v620, %v652
        %v682 = vadd.f32 %v620, %v653
        %v683 = vadd.f32 %v620, %v654
        %v684 = vadd.f32 %v621, %v655
        %v685 = vadd.f32 %v622, %v656
        %v686 = vadd.f32 %v623, %v657
        %v687 = vadd.f32 %v624, %v658
        %v688 = vadd.f32 %v625, %v659
        %v689 = vadd.f32 %v626, %v660
        %v690 = vadd.f32 %v627, %v661
        %v691 = vadd.f32 %v628, %v662
        %v692 = vadd.f32 %v629, %v663
        %v693 = vadd.f32 %v630, %v664
        %v694 = vadd.f32 %v631, %v665
        %v695 = vadd.f32 %v632, %v666
        %v696 = vadd.f32 %v633, %v667
        %v697 = vadd.f32 %v634, %v668
        %v698 = vadd.f32 %v635, %v669
        %v699 = vadd.f32 %v636, %v670
        %v700 = vadd.f32 %v637, %v671
        %v701 = vadd.f32 %v638, %v672
        %v702 = vadd.f32 %v639, %v673
        %v703 = vadd.f32 %v640, %v674
        %v704 = vadd.f32 %v641, %v675
        %v705 = vadd.f32 %v642, %v676
        %v706 = vadd.f32 %v643, %v677
        %v707 = vadd.f32 %v644, %v678
        %v708 = vadd.f32 %v645, %v679
        %v709 = vadd.f32 %v646, %v680
        %v710 = vld [vmem:[#allocation5 + $0xe] sm:$0x1]
        %v711 = vlaneseq
        %v712 = vshrl.u32 %v711, 7
        %v713 = vsub.s32 0, %v712
        %v714 = vrot.slane %v710, %v713
        %v715 = vmul.f32 %v714, 0.0
        %v716 = vmul.f32 %v556, %v714
        %v717 = vmul.f32 %v462, %v714
        %v718 = vmul.f32 %v557, %v714
        %v719 = vmul.f32 %v465, %v714
        %v720 = vmul.f32 %v558, %v714
        %v721 = vmul.f32 %v468, %v714
        %v722 = vmul.f32 %v559, %v714
        %v723 = vmul.f32 %v471, %v714
        %v724 = vmul.f32 %v560, %v714
        %v725 = vmul.f32 %v474, %v714
        %v726 = vmul.f32 %v561, %v714
        %v727 = vmul.f32 %v477, %v714
        %v728 = vmul.f32 %v562, %v714
        %v729 = vmul.f32 %v480, %v714
        %v730 = vmul.f32 %v563, %v714
        %v731 = vmul.f32 %v483, %v714
        %v732 = vmul.f32 %v564, %v714
        %v733 = vmul.f32 %v486, %v714
        %v734 = vmul.f32 %v565, %v714
        %v735 = vmul.f32 %v489, %v714
        %v736 = vmul.f32 %v566, %v714
        %v737 = vmul.f32 %v492, %v714
        %v738 = vmul.f32 %v567, %v714
        %v739 = vmul.f32 %v495, %v714
        %v740 = vmul.f32 %v568, %v714
        %v741 = vmul.f32 %v498, %v714
        %v742 = vmul.f32 %v569, %v714
        %v743 = vmul.f32 %v501, %v714
        %v744 = vmul.f32 %v570, %v714
        %v745 = vmul.f32 %v504, %v714
        %v746 = vadd.f32 %v681, %v715
        %v747 = vadd.f32 %v681, %v716
        %v748 = vadd.f32 %v681, %v717
        %v749 = vadd.f32 %v682, %v718
        %v750 = vadd.f32 %v683, %v719
        %v751 = vadd.f32 %v684, %v720
        %v752 = vadd.f32 %v685, %v721
        %v753 = vadd.f32 %v686, %v722
        %v754 = vadd.f32 %v687, %v723
        %v755 = vadd.f32 %v688, %v724
        %v756 = vadd.f32 %v689, %v725
        %v757 = vadd.f32 %v690, %v726
        %v758 = vadd.f32 %v691, %v727
        %v759 = vadd.f32 %v692, %v728
        %v760 = vadd.f32 %v693, %v729
        %v761 = vadd.f32 %v694, %v730
        %v762 = vadd.f32 %v695, %v731
        %v763 = vadd.f32 %v696, %v732
        %v764 = vadd.f32 %v697, %v733
        %v765 = vadd.f32 %v698, %v734
        %v766 = vadd.f32 %v699, %v735
        %v767 = vadd.f32 %v700, %v736
        %v768 = vadd.f32 %v701, %v737
        %v769 = vadd.f32 %v702, %v738
        %v770 = vadd.f32 %v703, %v739
        %v771 = vadd.f32 %v704, %v740
        %v772 = vadd.f32 %v705, %v741
        %v773 = vadd.f32 %v706, %v742
        %v774 = vadd.f32 %v707, %v743
        %v775 = vadd.f32 %v708, %v744
        %v776 = vadd.f32 %v709, %v745
        %v777 = vld [vmem:[#allocation5 + $0x15] sm:$0x1]
        %v778 = vlaneseq
        %v779 = vshrl.u32 %v778, 7
        %v780 = vsub.s32 0, %v779
        %v781 = vrot.slane %v777, %v780
        %v782 = vmul.f32 %v556, %v781
        %v783 = vmul.f32 %v462, %v781
        %v784 = vmul.f32 %v557, %v781
        %v785 = vmul.f32 %v465, %v781
        %v786 = vmul.f32 %v558, %v781
        %v787 = vmul.f32 %v468, %v781
        %v788 = vmul.f32 %v559, %v781
        %v789 = vmul.f32 %v471, %v781
        %v790 = vmul.f32 %v560, %v781
        %v791 = vmul.f32 %v474, %v781
        %v792 = vmul.f32 %v561, %v781
        %v793 = vmul.f32 %v477, %v781
        %v794 = vmul.f32 %v562, %v781
        %v795 = vmul.f32 %v480, %v781
        %v796 = vmul.f32 %v563, %v781
        %v797 = vmul.f32 %v483, %v781
        %v798 = vmul.f32 %v564, %v781
        %v799 = vmul.f32 %v486, %v781
        %v800 = vmul.f32 %v565, %v781
        %v801 = vmul.f32 %v489, %v781
        %v802 = vmul.f32 %v566, %v781
        %v803 = vmul.f32 %v492, %v781
        %v804 = vmul.f32 %v567, %v781
        %v805 = vmul.f32 %v495, %v781
        %v806 = vmul.f32 %v568, %v781
        %v807 = vmul.f32 %v498, %v781
        %v808 = vmul.f32 %v569, %v781
        %v809 = vmul.f32 %v501, %v781
        %v810 = vmul.f32 %v570, %v781
        %v811 = vmul.f32 %v504, %v781
        %v812 = vmul.f32 %v571, %v781
        %v813 = vmul.f32 %v507, %v781
        %v814 = vadd.f32 %v746, %v782
        %v815 = vadd.f32 %v746, %v783
        %v816 = vadd.f32 %v747, %v784
        %v817 = vadd.f32 %v748, %v785
        %v818 = vadd.f32 %v749, %v786
        %v819 = vadd.f32 %v750, %v787
        %v820 = vadd.f32 %v751, %v788
        %v821 = vadd.f32 %v752, %v789
        %v822 = vadd.f32 %v753, %v790
        %v823 = vadd.f32 %v754, %v791
        %v824 = vadd.f32 %v755, %v792
        %v825 = vadd.f32 %v756, %v793
        %v826 = vadd.f32 %v757, %v794
        %v827 = vadd.f32 %v758, %v795
        %v828 = vadd.f32 %v759, %v796
        %v829 = vadd.f32 %v760, %v797
        %v830 = vadd.f32 %v761, %v798
        %v831 = vadd.f32 %v762, %v799
        %v832 = vadd.f32 %v763, %v800
        %v833 = vadd.f32 %v764, %v801
        %v834 = vadd.f32 %v765, %v802
        %v835 = vadd.f32 %v766, %v803
        %v836 = vadd.f32 %v767, %v804
        %v837 = vadd.f32 %v768, %v805
        %v838 = vadd.f32 %v769, %v806
        %v839 = vadd.f32 %v770, %v807
        %v840 = vadd.f32 %v771, %v808
        %v841 = vadd.f32 %v772, %v809
        %v842 = vadd.f32 %v773, %v810
        %v843 = vadd.f32 %v774, %v811
        %v844 = vadd.f32 %v775, %v812
        %v845 = vadd.f32 %v776, %v813
        %v846 = vld [vmem:[#allocation5 + $0x1c] sm:$0x1]
        %v847 = vlaneseq
        %v848 = vshrl.u32 %v847, 7
        %v849 = vsub.s32 0, %v848
        %v850 = vrot.slane %v846, %v849
        %v851 = vmul.f32 %v557, %v850
        %v852 = vmul.f32 %v465, %v850
        %v853 = vmul.f32 %v558, %v850
        %v854 = vmul.f32 %v468, %v850
        %v855 = vmul.f32 %v559, %v850
        %v856 = vmul.f32 %v471, %v850
        %v857 = vmul.f32 %v560, %v850
        %v858 = vmul.f32 %v474, %v850
        %v859 = vmul.f32 %v561, %v850
        %v860 = vmul.f32 %v477, %v850
        %v861 = vmul.f32 %v562, %v850
        %v862 = vmul.f32 %v480, %v850
        %v863 = vmul.f32 %v563, %v850
        %v864 = vmul.f32 %v483, %v850
        %v865 = vmul.f32 %v564, %v850
        %v866 = vmul.f32 %v486, %v850
        %v867 = vmul.f32 %v565, %v850
        %v868 = vmul.f32 %v489, %v850
        %v869 = vmul.f32 %v566, %v850
        %v870 = vmul.f32 %v492, %v850
        %v871 = vmul.f32 %v567, %v850
        %v872 = vmul.f32 %v495, %v850
        %v873 = vmul.f32 %v568, %v850
        %v874 = vmul.f32 %v498, %v850
        %v875 = vmul.f32 %v569, %v850
        %v876 = vmul.f32 %v501, %v850
        %v877 = vmul.f32 %v570, %v850
        %v878 = vmul.f32 %v504, %v850
        %v879 = vmul.f32 %v571, %v850
        %v880 = vmul.f32 %v507, %v850
        %v881 = vmul.f32 %v850, 0.0
        %v882 = vadd.f32 %v814, %v851
        %v883 = vadd.f32 %v815, %v852
        %v884 = vadd.f32 %v816, %v853
        %v885 = vadd.f32 %v817, %v854
        %v886 = vadd.f32 %v818, %v855
        %v887 = vadd.f32 %v819, %v856
        %v888 = vadd.f32 %v820, %v857
        %v889 = vadd.f32 %v821, %v858
        %v890 = vadd.f32 %v822, %v859
        %v891 = vadd.f32 %v823, %v860
        %v892 = vadd.f32 %v824, %v861
        %v893 = vadd.f32 %v825, %v862
        %v894 = vadd.f32 %v826, %v863
        %v895 = vadd.f32 %v827, %v864
        %v896 = vadd.f32 %v828, %v865
        %v897 = vadd.f32 %v829, %v866
        %v898 = vadd.f32 %v830, %v867
        %v899 = vadd.f32 %v831, %v868
        %v900 = vadd.f32 %v832, %v869
        %v901 = vadd.f32 %v833, %v870
        %v902 = vadd.f32 %v834, %v871
        %v903 = vadd.f32 %v835, %v872
        %v904 = vadd.f32 %v836, %v873
        %v905 = vadd.f32 %v837, %v874
        %v906 = vadd.f32 %v838, %v875
        %v907 = vadd.f32 %v839, %v876
        %v908 = vadd.f32 %v840, %v877
        %v909 = vadd.f32 %v841, %v878
        %v910 = vadd.f32 %v842, %v879
        %v911 = vadd.f32 %v843, %v880
        %v912 = vadd.f32 %v844, %v881
        %v913 = vadd.f32 %v845, %v881
        %v914 = vld [vmem:[#allocation5 + $0x23] sm:$0x1]
        %v915 = vlaneseq
        %v916 = vshrl.u32 %v915, 7
        %v917 = vsub.s32 0, %v916
        %v918 = vrot.slane %v914, %v917
        %v919 = vmul.f32 %v558, %v918
        %v920 = vmul.f32 %v468, %v918
        %v921 = vmul.f32 %v559, %v918
        %v922 = vmul.f32 %v471, %v918
        %v923 = vmul.f32 %v560, %v918
        %v924 = vmul.f32 %v474, %v918
        %v925 = vmul.f32 %v561, %v918
        %v926 = vmul.f32 %v477, %v918
        %v927 = vmul.f32 %v562, %v918
        %v928 = vmul.f32 %v480, %v918
        %v929 = vmul.f32 %v563, %v918
        %v930 = vmul.f32 %v483, %v918
        %v931 = vmul.f32 %v564, %v918
        %v932 = vmul.f32 %v486, %v918
        %v933 = vmul.f32 %v565, %v918
        %v934 = vmul.f32 %v489, %v918
        %v935 = vmul.f32 %v566, %v918
        %v936 = vmul.f32 %v492, %v918
        %v937 = vmul.f32 %v567, %v918
        %v938 = vmul.f32 %v495, %v918
        %v939 = vmul.f32 %v568, %v918
        %v940 = vmul.f32 %v498, %v918
        %v941 = vmul.f32 %v569, %v918
        %v942 = vmul.f32 %v501, %v918
        %v943 = vmul.f32 %v570, %v918
        %v944 = vmul.f32 %v504, %v918
        %v945 = vmul.f32 %v571, %v918
        %v946 = vmul.f32 %v507, %v918
        %v947 = vmul.f32 %v918, 0.0
        %v948 = vadd.f32 %v882, %v919
        %v949 = vadd.f32 %v883, %v920
        %v950 = vadd.f32 %v884, %v921
        %v951 = vadd.f32 %v885, %v922
        %v952 = vadd.f32 %v886, %v923
        %v953 = vadd.f32 %v887, %v924
        %v954 = vadd.f32 %v888, %v925
        %v955 = vadd.f32 %v889, %v926
        %v956 = vadd.f32 %v890, %v927
        %v957 = vadd.f32 %v891, %v928
        %v958 = vadd.f32 %v892, %v929
        %v959 = vadd.f32 %v893, %v930
        %v960 = vadd.f32 %v894, %v931
        %v961 = vadd.f32 %v895, %v932
        %v962 = vadd.f32 %v896, %v933
        %v963 = vadd.f32 %v897, %v934
        %v964 = vadd.f32 %v898, %v935
        %v965 = vadd.f32 %v899, %v936
        %v966 = vadd.f32 %v900, %v937
        %v967 = vadd.f32 %v901, %v938
        %v968 = vadd.f32 %v902, %v939
        %v969 = vadd.f32 %v903, %v940
        %v970 = vadd.f32 %v904, %v941
        %v971 = vadd.f32 %v905, %v942
        %v972 = vadd.f32 %v906, %v943
        %v973 = vadd.f32 %v907, %v944
        %v974 = vadd.f32 %v908, %v945
        %v975 = vadd.f32 %v909, %v946
        %v976 = vadd.f32 %v910, %v947
        %v977 = vadd.f32 %v911, %v947
        %v978 = vadd.f32 %v912, %v947
        %v979 = vadd.f32 %v913, %v947
        %v980 = vld [vmem:[#allocation5 + $0x2a] sm:$0x1]
        %v981 = vlaneseq
        %v982 = vshrl.u32 %v981, 7
        %v983 = vsub.s32 0, %v982
        %v984 = vrot.slane %v980, %v983
        %v985 = vmul.f32 %v559, %v984
        %v986 = vmul.f32 %v471, %v984
        %v987 = vmul.f32 %v560, %v984
        %v988 = vmul.f32 %v474, %v984
        %v989 = vmul.f32 %v561, %v984
        %v990 = vmul.f32 %v477, %v984
        %v991 = vmul.f32 %v562, %v984
        %v992 = vmul.f32 %v480, %v984
        %v993 = vmul.f32 %v563, %v984
        %v994 = vmul.f32 %v483, %v984
        %v995 = vmul.f32 %v564, %v984
        %v996 = vmul.f32 %v486, %v984
        %v997 = vmul.f32 %v565, %v984
        %v998 = vmul.f32 %v489, %v984
        %v999 = vmul.f32 %v566, %v984
        %v1000 = vmul.f32 %v492, %v984
        %v1001 = vmul.f32 %v567, %v984
        %v1002 = vmul.f32 %v495, %v984
        %v1003 = vmul.f32 %v568, %v984
        %v1004 = vmul.f32 %v498, %v984
        %v1005 = vmul.f32 %v569, %v984
        %v1006 = vmul.f32 %v501, %v984
        %v1007 = vmul.f32 %v570, %v984
        %v1008 = vmul.f32 %v504, %v984
        %v1009 = vmul.f32 %v571, %v984
        %v1010 = vmul.f32 %v507, %v984
        %v1011 = vmul.f32 %v984, 0.0
        %v1012 = vadd.f32 %v948, %v985
        %v1013 = vadd.f32 %v949, %v986
        %v1014 = vadd.f32 %v950, %v987
        %v1015 = vadd.f32 %v951, %v988
        %v1016 = vadd.f32 %v952, %v989
        %v1017 = vadd.f32 %v953, %v990
        %v1018 = vadd.f32 %v954, %v991
        %v1019 = vadd.f32 %v955, %v992
        %v1020 = vadd.f32 %v956, %v993
        %v1021 = vadd.f32 %v957, %v994
        %v1022 = vadd.f32 %v958, %v995
        %v1023 = vadd.f32 %v959, %v996
        %v1024 = vadd.f32 %v960, %v997
        %v1025 = vadd.f32 %v961, %v998
        %v1026 = vadd.f32 %v962, %v999
        %v1027 = vadd.f32 %v963, %v1000
        %v1028 = vadd.f32 %v964, %v1001
        %v1029 = vadd.f32 %v965, %v1002
        %v1030 = vadd.f32 %v966, %v1003
        %v1031 = vadd.f32 %v967, %v1004
        %v1032 = vadd.f32 %v968, %v1005
        %v1033 = vadd.f32 %v969, %v1006
        %v1034 = vadd.f32 %v970, %v1007
        %v1035 = vadd.f32 %v971, %v1008
        %v1036 = vadd.f32 %v972, %v1009
        %v1037 = vadd.f32 %v973, %v1010
        %v1038 = vadd.f32 %v974, %v1011
        %v1039 = vadd.f32 %v975, %v1011
        %v1040 = vadd.f32 %v976, %v1011
        %v1041 = vadd.f32 %v977, %v1011
        %v1042 = vadd.f32 %v978, %v1011
        %v1043 = vadd.f32 %v979, %v1011
        %vm1076 = vcmask 1046528
        %v1077 = vrot.slane %v556, 1
        %v1078 = vrot.slane %v462, 1
        %v1079 = vsel %vm1076, %v1077, %v1078
        %v1080 = vrot.slane %v572, 1
        %v1081 = vsel %vm1076, %v1078, %v1080
        %v1082 = vrot.slane %v557, 1
        %v1083 = vrot.slane %v465, 1
        %v1084 = vsel %vm1076, %v1082, %v1083
        %v1085 = vrot.slane %v573, 1
        %v1086 = vsel %vm1076, %v1083, %v1085
        %v1087 = vrot.slane %v558, 1
        %v1088 = vrot.slane %v468, 1
        %v1089 = vsel %vm1076, %v1087, %v1088
        %v1090 = vrot.slane %v574, 1
        %v1091 = vsel %vm1076, %v1088, %v1090
        %v1092 = vrot.slane %v559, 1
        %v1093 = vrot.slane %v471, 1
        %v1094 = vsel %vm1076, %v1092, %v1093
        %v1095 = vrot.slane %v575, 1
        %v1096 = vsel %vm1076, %v1093, %v1095
        %v1097 = vrot.slane %v560, 1
        %v1098 = vrot.slane %v474, 1
        %v1099 = vsel %vm1076, %v1097, %v1098
        %v1100 = vrot.slane %v576, 1
        %v1101 = vsel %vm1076, %v1098, %v1100
        %v1102 = vrot.slane %v561, 1
        %v1103 = vrot.slane %v477, 1
        %v1104 = vsel %vm1076, %v1102, %v1103
        %v1105 = vrot.slane %v577, 1
        %v1106 = vsel %vm1076, %v1103, %v1105
        %v1107 = vrot.slane %v562, 1
        %v1108 = vrot.slane %v480, 1
        %v1109 = vsel %vm1076, %v1107, %v1108
        %v1110 = vrot.slane %v578, 1
        %v1111 = vsel %vm1076, %v1108, %v1110
        %v1112 = vrot.slane %v563, 1
        %v1113 = vrot.slane %v483, 1
        %v1114 = vsel %vm1076, %v1112, %v1113
        %v1115 = vrot.slane %v579, 1
        %v1116 = vsel %vm1076, %v1113, %v1115
        %v1117 = vrot.slane %v564, 1
        %v1118 = vrot.slane %v486, 1
        %v1119 = vsel %vm1076, %v1117, %v1118
        %v1120 = vrot.slane %v580, 1
        %v1121 = vsel %vm1076, %v1118, %v1120
        %v1122 = vrot.slane %v565, 1
        %v1123 = vrot.slane %v489, 1
        %v1124 = vsel %vm1076, %v1122, %v1123
        %v1125 = vrot.slane %v581, 1
        %v1126 = vsel %vm1076, %v1123, %v1125
        %v1127 = vrot.slane %v566, 1
        %v1128 = vrot.slane %v492, 1
        %v1129 = vsel %vm1076, %v1127, %v1128
        %v1130 = vrot.slane %v582, 1
        %v1131 = vsel %vm1076, %v1128, %v1130
        %v1132 = vrot.slane %v567, 1
        %v1133 = vrot.slane %v495, 1
        %v1134 = vsel %vm1076, %v1132, %v1133
        %v1135 = vrot.slane %v583, 1
        %v1136 = vsel %vm1076, %v1133, %v1135
        %v1137 = vrot.slane %v568, 1
        %v1138 = vrot.slane %v498, 1
        %v1139 = vsel %vm1076, %v1137, %v1138
        %v1140 = vrot.slane %v584, 1
        %v1141 = vsel %vm1076, %v1138, %v1140
        %v1142 = vrot.slane %v569, 1
        %v1143 = vrot.slane %v501, 1
        %v1144 = vsel %vm1076, %v1142, %v1143
        %v1145 = vrot.slane %v585, 1
        %v1146 = vsel %vm1076, %v1143, %v1145
        %v1147 = vrot.slane %v570, 1
        %v1148 = vrot.slane %v504, 1
        %v1149 = vsel %vm1076, %v1147, %v1148
        %v1150 = vrot.slane %v586, 1
        %v1151 = vsel %vm1076, %v1148, %v1150
        %v1152 = vrot.slane %v571, 1
        %v1153 = vrot.slane %v507, 1
        %v1154 = vsel %vm1076, %v1152, %v1153
        %v1155 = vrot.slane %v587, 1
        %v1156 = vsel %vm1076, %v1153, %v1155
        %v1189 = vld [vmem:[#allocation5 + $0x1] sm:$0x1]
        %v1190 = vlaneseq
        %v1191 = vshrl.u32 %v1190, 7
        %v1192 = vsub.s32 0, %v1191
        %v1193 = vrot.slane %v1189, %v1192
        %v1194 = vmul.f32 %v1193, 0.0
        %v1195 = vmul.f32 %v1079, %v1193
        %v1196 = vmul.f32 %v1081, %v1193
        %v1197 = vmul.f32 %v1084, %v1193
        %v1198 = vmul.f32 %v1086, %v1193
        %v1199 = vmul.f32 %v1089, %v1193
        %v1200 = vmul.f32 %v1091, %v1193
        %v1201 = vmul.f32 %v1094, %v1193
        %v1202 = vmul.f32 %v1096, %v1193
        %v1203 = vmul.f32 %v1099, %v1193
        %v1204 = vmul.f32 %v1101, %v1193
        %v1205 = vmul.f32 %v1104, %v1193
        %v1206 = vmul.f32 %v1106, %v1193
        %v1207 = vmul.f32 %v1109, %v1193
        %v1208 = vmul.f32 %v1111, %v1193
        %v1209 = vmul.f32 %v1114, %v1193
        %v1210 = vmul.f32 %v1116, %v1193
        %v1211 = vmul.f32 %v1119, %v1193
        %v1212 = vmul.f32 %v1121, %v1193
        %v1213 = vmul.f32 %v1124, %v1193
        %v1214 = vmul.f32 %v1126, %v1193
        %v1215 = vmul.f32 %v1129, %v1193
        %v1216 = vmul.f32 %v1131, %v1193
        %v1217 = vmul.f32 %v1134, %v1193
        %v1218 = vmul.f32 %v1136, %v1193
        %v1219 = vmul.f32 %v1139, %v1193
        %v1220 = vmul.f32 %v1141, %v1193
        %v1221 = vadd.f32 %v1012, %v1194
        %v1222 = vadd.f32 %v1013, %v1194
        %v1223 = vadd.f32 %v1014, %v1194
        %v1224 = vadd.f32 %v1015, %v1194
        %v1225 = vadd.f32 %v1016, %v1194
        %v1226 = vadd.f32 %v1017, %v1194
        %v1227 = vadd.f32 %v1018, %v1195
        %v1228 = vadd.f32 %v1019, %v1196
        %v1229 = vadd.f32 %v1020, %v1197
        %v1230 = vadd.f32 %v1021, %v1198
        %v1231 = vadd.f32 %v1022, %v1199
        %v1232 = vadd.f32 %v1023, %v1200
        %v1233 = vadd.f32 %v1024, %v1201
        %v1234 = vadd.f32 %v1025, %v1202
        %v1235 = vadd.f32 %v1026, %v1203
        %v1236 = vadd.f32 %v1027, %v1204
        %v1237 = vadd.f32 %v1028, %v1205
        %v1238 = vadd.f32 %v1029, %v1206
        %v1239 = vadd.f32 %v1030, %v1207
        %v1240 = vadd.f32 %v1031, %v1208
        %v1241 = vadd.f32 %v1032, %v1209
        %v1242 = vadd.f32 %v1033, %v1210
        %v1243 = vadd.f32 %v1034, %v1211
        %v1244 = vadd.f32 %v1035, %v1212
        %v1245 = vadd.f32 %v1036, %v1213
        %v1246 = vadd.f32 %v1037, %v1214
        %v1247 = vadd.f32 %v1038, %v1215
        %v1248 = vadd.f32 %v1039, %v1216
        %v1249 = vadd.f32 %v1040, %v1217
        %v1250 = vadd.f32 %v1041, %v1218
        %v1251 = vadd.f32 %v1042, %v1219
        %v1252 = vadd.f32 %v1043, %v1220
        %v1253 = vld [vmem:[#allocation5 + $0x8] sm:$0x1]
        %v1254 = vlaneseq
        %v1255 = vshrl.u32 %v1254, 7
        %v1256 = vsub.s32 0, %v1255
        %v1257 = vrot.slane %v1253, %v1256
        %v1258 = vmul.f32 %v1257, 0.0
        %v1259 = vmul.f32 %v1079, %v1257
        %v1260 = vmul.f32 %v1081, %v1257
        %v1261 = vmul.f32 %v1084, %v1257
        %v1262 = vmul.f32 %v1086, %v1257
        %v1263 = vmul.f32 %v1089, %v1257
        %v1264 = vmul.f32 %v1091, %v1257
        %v1265 = vmul.f32 %v1094, %v1257
        %v1266 = vmul.f32 %v1096, %v1257
        %v1267 = vmul.f32 %v1099, %v1257
        %v1268 = vmul.f32 %v1101, %v1257
        %v1269 = vmul.f32 %v1104, %v1257
        %v1270 = vmul.f32 %v1106, %v1257
        %v1271 = vmul.f32 %v1109, %v1257
        %v1272 = vmul.f32 %v1111, %v1257
        %v1273 = vmul.f32 %v1114, %v1257
        %v1274 = vmul.f32 %v1116, %v1257
        %v1275 = vmul.f32 %v1119, %v1257
        %v1276 = vmul.f32 %v1121, %v1257
        %v1277 = vmul.f32 %v1124, %v1257
        %v1278 = vmul.f32 %v1126, %v1257
        %v1279 = vmul.f32 %v1129, %v1257
        %v1280 = vmul.f32 %v1131, %v1257
        %v1281 = vmul.f32 %v1134, %v1257
        %v1282 = vmul.f32 %v1136, %v1257
        %v1283 = vmul.f32 %v1139, %v1257
        %v1284 = vmul.f32 %v1141, %v1257
        %v1285 = vmul.f32 %v1144, %v1257
        %v1286 = vmul.f32 %v1146, %v1257
        %v1287 = vadd.f32 %v1221, %v1258
        %v1288 = vadd.f32 %v1222, %v1258
        %v1289 = vadd.f32 %v1223, %v1258
        %v1290 = vadd.f32 %v1224, %v1258
        %v1291 = vadd.f32 %v1225, %v1259
        %v1292 = vadd.f32 %v1226, %v1260
        %v1293 = vadd.f32 %v1227, %v1261
        %v1294 = vadd.f32 %v1228, %v1262
        %v1295 = vadd.f32 %v1229, %v1263
        %v1296 = vadd.f32 %v1230, %v1264
        %v1297 = vadd.f32 %v1231, %v1265
        %v1298 = vadd.f32 %v1232, %v1266
        %v1299 = vadd.f32 %v1233, %v1267
        %v1300 = vadd.f32 %v1234, %v1268
        %v1301 = vadd.f32 %v1235, %v1269
        %v1302 = vadd.f32 %v1236, %v1270
        %v1303 = vadd.f32 %v1237, %v1271
        %v1304 = vadd.f32 %v1238, %v1272
        %v1305 = vadd.f32 %v1239, %v1273
        %v1306 = vadd.f32 %v1240, %v1274
        %v1307 = vadd.f32 %v1241, %v1275
        %v1308 = vadd.f32 %v1242, %v1276
        %v1309 = vadd.f32 %v1243, %v1277
        %v1310 = vadd.f32 %v1244, %v1278
        %v1311 = vadd.f32 %v1245, %v1279
        %v1312 = vadd.f32 %v1246, %v1280
        %v1313 = vadd.f32 %v1247, %v1281
        %v1314 = vadd.f32 %v1248, %v1282
        %v1315 = vadd.f32 %v1249, %v1283
        %v1316 = vadd.f32 %v1250, %v1284
        %v1317 = vadd.f32 %v1251, %v1285
        %v1318 = vadd.f32 %v1252, %v1286
        %v1319 = vld [vmem:[#allocation5 + $0xf] sm:$0x1]
        %v1320 = vlaneseq
        %v1321 = vshrl.u32 %v1320, 7
        %v1322 = vsub.s32 0, %v1321
        %v1323 = vrot.slane %v1319, %v1322
        %v1324 = vmul.f32 %v1323, 0.0
        %v1325 = vmul.f32 %v1079, %v1323
        %v1326 = vmul.f32 %v1081, %v1323
        %v1327 = vmul.f32 %v1084, %v1323
        %v1328 = vmul.f32 %v1086, %v1323
        %v1329 = vmul.f32 %v1089, %v1323
        %v1330 = vmul.f32 %v1091, %v1323
        %v1331 = vmul.f32 %v1094, %v1323
        %v1332 = vmul.f32 %v1096, %v1323
        %v1333 = vmul.f32 %v1099, %v1323
        %v1334 = vmul.f32 %v1101, %v1323
        %v1335 = vmul.f32 %v1104, %v1323
        %v1336 = vmul.f32 %v1106, %v1323
        %v1337 = vmul.f32 %v1109, %v1323
        %v1338 = vmul.f32 %v1111, %v1323
        %v1339 = vmul.f32 %v1114, %v1323
        %v1340 = vmul.f32 %v1116, %v1323
        %v1341 = vmul.f32 %v1119, %v1323
        %v1342 = vmul.f32 %v1121, %v1323
        %v1343 = vmul.f32 %v1124, %v1323
        %v1344 = vmul.f32 %v1126, %v1323
        %v1345 = vmul.f32 %v1129, %v1323
        %v1346 = vmul.f32 %v1131, %v1323
        %v1347 = vmul.f32 %v1134, %v1323
        %v1348 = vmul.f32 %v1136, %v1323
        %v1349 = vmul.f32 %v1139, %v1323
        %v1350 = vmul.f32 %v1141, %v1323
        %v1351 = vmul.f32 %v1144, %v1323
        %v1352 = vmul.f32 %v1146, %v1323
        %v1353 = vmul.f32 %v1149, %v1323
        %v1354 = vmul.f32 %v1151, %v1323
        %v1355 = vadd.f32 %v1287, %v1324
        %v1356 = vadd.f32 %v1288, %v1324
        %v1357 = vadd.f32 %v1289, %v1325
        %v1358 = vadd.f32 %v1290, %v1326
        %v1359 = vadd.f32 %v1291, %v1327
        %v1360 = vadd.f32 %v1292, %v1328
        %v1361 = vadd.f32 %v1293, %v1329
        %v1362 = vadd.f32 %v1294, %v1330
        %v1363 = vadd.f32 %v1295, %v1331
        %v1364 = vadd.f32 %v1296, %v1332
        %v1365 = vadd.f32 %v1297, %v1333
        %v1366 = vadd.f32 %v1298, %v1334
        %v1367 = vadd.f32 %v1299, %v1335
        %v1368 = vadd.f32 %v1300, %v1336
        %v1369 = vadd.f32 %v1301, %v1337
        %v1370 = vadd.f32 %v1302, %v1338
        %v1371 = vadd.f32 %v1303, %v1339
        %v1372 = vadd.f32 %v1304, %v1340
        %v1373 = vadd.f32 %v1305, %v1341
        %v1374 = vadd.f32 %v1306, %v1342
        %v1375 = vadd.f32 %v1307, %v1343
        %v1376 = vadd.f32 %v1308, %v1344
        %v1377 = vadd.f32 %v1309, %v1345
        %v1378 = vadd.f32 %v1310, %v1346
        %v1379 = vadd.f32 %v1311, %v1347
        %v1380 = vadd.f32 %v1312, %v1348
        %v1381 = vadd.f32 %v1313, %v1349
        %v1382 = vadd.f32 %v1314, %v1350
        %v1383 = vadd.f32 %v1315, %v1351
        %v1384 = vadd.f32 %v1316, %v1352
        %v1385 = vadd.f32 %v1317, %v1353
        %v1386 = vadd.f32 %v1318, %v1354
        %v1387 = vld [vmem:[#allocation5 + $0x16] sm:$0x1]
        %v1388 = vlaneseq
        %v1389 = vshrl.u32 %v1388, 7
        %v1390 = vsub.s32 0, %v1389
        %v1391 = vrot.slane %v1387, %v1390
        %v1392 = vmul.f32 %v1079, %v1391
        %v1393 = vmul.f32 %v1081, %v1391
        %v1394 = vmul.f32 %v1084, %v1391
        %v1395 = vmul.f32 %v1086, %v1391
        %v1396 = vmul.f32 %v1089, %v1391
        %v1397 = vmul.f32 %v1091, %v1391
        %v1398 = vmul.f32 %v1094, %v1391
        %v1399 = vmul.f32 %v1096, %v1391
        %v1400 = vmul.f32 %v1099, %v1391
        %v1401 = vmul.f32 %v1101, %v1391
        %v1402 = vmul.f32 %v1104, %v1391
        %v1403 = vmul.f32 %v1106, %v1391
        %v1404 = vmul.f32 %v1109, %v1391
        %v1405 = vmul.f32 %v1111, %v1391
        %v1406 = vmul.f32 %v1114, %v1391
        %v1407 = vmul.f32 %v1116, %v1391
        %v1408 = vmul.f32 %v1119, %v1391
        %v1409 = vmul.f32 %v1121, %v1391
        %v1410 = vmul.f32 %v1124, %v1391
        %v1411 = vmul.f32 %v1126, %v1391
        %v1412 = vmul.f32 %v1129, %v1391
        %v1413 = vmul.f32 %v1131, %v1391
        %v1414 = vmul.f32 %v1134, %v1391
        %v1415 = vmul.f32 %v1136, %v1391
        %v1416 = vmul.f32 %v1139, %v1391
        %v1417 = vmul.f32 %v1141, %v1391
        %v1418 = vmul.f32 %v1144, %v1391
        %v1419 = vmul.f32 %v1146, %v1391
        %v1420 = vmul.f32 %v1149, %v1391
        %v1421 = vmul.f32 %v1151, %v1391
        %v1422 = vmul.f32 %v1154, %v1391
        %v1423 = vmul.f32 %v1156, %v1391
        %v1424 = vadd.f32 %v1355, %v1392
        %v1425 = vadd.f32 %v1356, %v1393
        %v1426 = vadd.f32 %v1357, %v1394
        %v1427 = vadd.f32 %v1358, %v1395
        %v1428 = vadd.f32 %v1359, %v1396
        %v1429 = vadd.f32 %v1360, %v1397
        %v1430 = vadd.f32 %v1361, %v1398
        %v1431 = vadd.f32 %v1362, %v1399
        %v1432 = vadd.f32 %v1363, %v1400
        %v1433 = vadd.f32 %v1364, %v1401
        %v1434 = vadd.f32 %v1365, %v1402
        %v1435 = vadd.f32 %v1366, %v1403
        %v1436 = vadd.f32 %v1367, %v1404
        %v1437 = vadd.f32 %v1368, %v1405
        %v1438 = vadd.f32 %v1369, %v1406
        %v1439 = vadd.f32 %v1370, %v1407
        %v1440 = vadd.f32 %v1371, %v1408
        %v1441 = vadd.f32 %v1372, %v1409
        %v1442 = vadd.f32 %v1373, %v1410
        %v1443 = vadd.f32 %v1374, %v1411
        %v1444 = vadd.f32 %v1375, %v1412
        %v1445 = vadd.f32 %v1376, %v1413
        %v1446 = vadd.f32 %v1377, %v1414
        %v1447 = vadd.f32 %v1378, %v1415
        %v1448 = vadd.f32 %v1379, %v1416
        %v1449 = vadd.f32 %v1380, %v1417
        %v1450 = vadd.f32 %v1381, %v1418
        %v1451 = vadd.f32 %v1382, %v1419
        %v1452 = vadd.f32 %v1383, %v1420
        %v1453 = vadd.f32 %v1384, %v1421
        %v1454 = vadd.f32 %v1385, %v1422
        %v1455 = vadd.f32 %v1386, %v1423
        %v1456 = vld [vmem:[#allocation5 + $0x1d] sm:$0x1]
        %v1457 = vlaneseq
        %v1458 = vshrl.u32 %v1457, 7
        %v1459 = vsub.s32 0, %v1458
        %v1460 = vrot.slane %v1456, %v1459
        %v1461 = vmul.f32 %v1084, %v1460
        %v1462 = vmul.f32 %v1086, %v1460
        %v1463 = vmul.f32 %v1089, %v1460
        %v1464 = vmul.f32 %v1091, %v1460
        %v1465 = vmul.f32 %v1094, %v1460
        %v1466 = vmul.f32 %v1096, %v1460
        %v1467 = vmul.f32 %v1099, %v1460
        %v1468 = vmul.f32 %v1101, %v1460
        %v1469 = vmul.f32 %v1104, %v1460
        %v1470 = vmul.f32 %v1106, %v1460
        %v1471 = vmul.f32 %v1109, %v1460
        %v1472 = vmul.f32 %v1111, %v1460
        %v1473 = vmul.f32 %v1114, %v1460
        %v1474 = vmul.f32 %v1116, %v1460
        %v1475 = vmul.f32 %v1119, %v1460
        %v1476 = vmul.f32 %v1121, %v1460
        %v1477 = vmul.f32 %v1124, %v1460
        %v1478 = vmul.f32 %v1126, %v1460
        %v1479 = vmul.f32 %v1129, %v1460
        %v1480 = vmul.f32 %v1131, %v1460
        %v1481 = vmul.f32 %v1134, %v1460
        %v1482 = vmul.f32 %v1136, %v1460
        %v1483 = vmul.f32 %v1139, %v1460
        %v1484 = vmul.f32 %v1141, %v1460
        %v1485 = vmul.f32 %v1144, %v1460
        %v1486 = vmul.f32 %v1146, %v1460
        %v1487 = vmul.f32 %v1149, %v1460
        %v1488 = vmul.f32 %v1151, %v1460
        %v1489 = vmul.f32 %v1154, %v1460
        %v1490 = vmul.f32 %v1156, %v1460
        %v1491 = vmul.f32 %v1460, 0.0
        %v1492 = vadd.f32 %v1424, %v1461
        %v1493 = vadd.f32 %v1425, %v1462
        %v1494 = vadd.f32 %v1426, %v1463
        %v1495 = vadd.f32 %v1427, %v1464
        %v1496 = vadd.f32 %v1428, %v1465
        %v1497 = vadd.f32 %v1429, %v1466
        %v1498 = vadd.f32 %v1430, %v1467
        %v1499 = vadd.f32 %v1431, %v1468
        %v1500 = vadd.f32 %v1432, %v1469
        %v1501 = vadd.f32 %v1433, %v1470
        %v1502 = vadd.f32 %v1434, %v1471
        %v1503 = vadd.f32 %v1435, %v1472
        %v1504 = vadd.f32 %v1436, %v1473
        %v1505 = vadd.f32 %v1437, %v1474
        %v1506 = vadd.f32 %v1438, %v1475
        %v1507 = vadd.f32 %v1439, %v1476
        %v1508 = vadd.f32 %v1440, %v1477
        %v1509 = vadd.f32 %v1441, %v1478
        %v1510 = vadd.f32 %v1442, %v1479
        %v1511 = vadd.f32 %v1443, %v1480
        %v1512 = vadd.f32 %v1444, %v1481
        %v1513 = vadd.f32 %v1445, %v1482
        %v1514 = vadd.f32 %v1446, %v1483
        %v1515 = vadd.f32 %v1447, %v1484
        %v1516 = vadd.f32 %v1448, %v1485
        %v1517 = vadd.f32 %v1449, %v1486
        %v1518 = vadd.f32 %v1450, %v1487
        %v1519 = vadd.f32 %v1451, %v1488
        %v1520 = vadd.f32 %v1452, %v1489
        %v1521 = vadd.f32 %v1453, %v1490
        %v1522 = vadd.f32 %v1454, %v1491
        %v1523 = vadd.f32 %v1455, %v1491
        %v1524 = vld [vmem:[#allocation5 + $0x24] sm:$0x1]
        %v1525 = vlaneseq
        %v1526 = vshrl.u32 %v1525, 7
        %v1527 = vsub.s32 0, %v1526
        %v1528 = vrot.slane %v1524, %v1527
        %v1529 = vmul.f32 %v1089, %v1528
        %v1530 = vmul.f32 %v1091, %v1528
        %v1531 = vmul.f32 %v1094, %v1528
        %v1532 = vmul.f32 %v1096, %v1528
        %v1533 = vmul.f32 %v1099, %v1528
        %v1534 = vmul.f32 %v1101, %v1528
        %v1535 = vmul.f32 %v1104, %v1528
        %v1536 = vmul.f32 %v1106, %v1528
        %v1537 = vmul.f32 %v1109, %v1528
        %v1538 = vmul.f32 %v1111, %v1528
        %v1539 = vmul.f32 %v1114, %v1528
        %v1540 = vmul.f32 %v1116, %v1528
        %v1541 = vmul.f32 %v1119, %v1528
        %v1542 = vmul.f32 %v1121, %v1528
        %v1543 = vmul.f32 %v1124, %v1528
        %v1544 = vmul.f32 %v1126, %v1528
        %v1545 = vmul.f32 %v1129, %v1528
        %v1546 = vmul.f32 %v1131, %v1528
        %v1547 = vmul.f32 %v1134, %v1528
        %v1548 = vmul.f32 %v1136, %v1528
        %v1549 = vmul.f32 %v1139, %v1528
        %v1550 = vmul.f32 %v1141, %v1528
        %v1551 = vmul.f32 %v1144, %v1528
        %v1552 = vmul.f32 %v1146, %v1528
        %v1553 = vmul.f32 %v1149, %v1528
        %v1554 = vmul.f32 %v1151, %v1528
        %v1555 = vmul.f32 %v1154, %v1528
        %v1556 = vmul.f32 %v1156, %v1528
        %v1557 = vmul.f32 %v1528, 0.0
        %v1558 = vadd.f32 %v1492, %v1529
        %v1559 = vadd.f32 %v1493, %v1530
        %v1560 = vadd.f32 %v1494, %v1531
        %v1561 = vadd.f32 %v1495, %v1532
        %v1562 = vadd.f32 %v1496, %v1533
        %v1563 = vadd.f32 %v1497, %v1534
        %v1564 = vadd.f32 %v1498, %v1535
        %v1565 = vadd.f32 %v1499, %v1536
        %v1566 = vadd.f32 %v1500, %v1537
        %v1567 = vadd.f32 %v1501, %v1538
        %v1568 = vadd.f32 %v1502, %v1539
        %v1569 = vadd.f32 %v1503, %v1540
        %v1570 = vadd.f32 %v1504, %v1541
        %v1571 = vadd.f32 %v1505, %v1542
        %v1572 = vadd.f32 %v1506, %v1543
        %v1573 = vadd.f32 %v1507, %v1544
        %v1574 = vadd.f32 %v1508, %v1545
        %v1575 = vadd.f32 %v1509, %v1546
        %v1576 = vadd.f32 %v1510, %v1547
        %v1577 = vadd.f32 %v1511, %v1548
        %v1578 = vadd.f32 %v1512, %v1549
        %v1579 = vadd.f32 %v1513, %v1550
        %v1580 = vadd.f32 %v1514, %v1551
        %v1581 = vadd.f32 %v1515, %v1552
        %v1582 = vadd.f32 %v1516, %v1553
        %v1583 = vadd.f32 %v1517, %v1554
        %v1584 = vadd.f32 %v1518, %v1555
        %v1585 = vadd.f32 %v1519, %v1556
        %v1586 = vadd.f32 %v1520, %v1557
        %v1587 = vadd.f32 %v1521, %v1557
        %v1588 = vadd.f32 %v1522, %v1557
        %v1589 = vadd.f32 %v1523, %v1557
        %v1590 = vld [vmem:[#allocation5 + $0x2b] sm:$0x1]
        %v1591 = vlaneseq
        %v1592 = vshrl.u32 %v1591, 7
        %v1593 = vsub.s32 0, %v1592
        %v1594 = vrot.slane %v1590, %v1593
        %v1595 = vmul.f32 %v1094, %v1594
        %v1596 = vmul.f32 %v1096, %v1594
        %v1597 = vmul.f32 %v1099, %v1594
        %v1598 = vmul.f32 %v1101, %v1594
        %v1599 = vmul.f32 %v1104, %v1594
        %v1600 = vmul.f32 %v1106, %v1594
        %v1601 = vmul.f32 %v1109, %v1594
        %v1602 = vmul.f32 %v1111, %v1594
        %v1603 = vmul.f32 %v1114, %v1594
        %v1604 = vmul.f32 %v1116, %v1594
        %v1605 = vmul.f32 %v1119, %v1594
        %v1606 = vmul.f32 %v1121, %v1594
        %v1607 = vmul.f32 %v1124, %v1594
        %v1608 = vmul.f32 %v1126, %v1594
        %v1609 = vmul.f32 %v1129, %v1594
        %v1610 = vmul.f32 %v1131, %v1594
        %v1611 = vmul.f32 %v1134, %v1594
        %v1612 = vmul.f32 %v1136, %v1594
        %v1613 = vmul.f32 %v1139, %v1594
        %v1614 = vmul.f32 %v1141, %v1594
        %v1615 = vmul.f32 %v1144, %v1594
        %v1616 = vmul.f32 %v1146, %v1594
        %v1617 = vmul.f32 %v1149, %v1594
        %v1618 = vmul.f32 %v1151, %v1594
        %v1619 = vmul.f32 %v1154, %v1594
        %v1620 = vmul.f32 %v1156, %v1594
        %v1621 = vmul.f32 %v1594, 0.0
        %v1622 = vadd.f32 %v1558, %v1595
        %v1623 = vadd.f32 %v1559, %v1596
        %v1624 = vadd.f32 %v1560, %v1597
        %v1625 = vadd.f32 %v1561, %v1598
        %v1626 = vadd.f32 %v1562, %v1599
        %v1627 = vadd.f32 %v1563, %v1600
        %v1628 = vadd.f32 %v1564, %v1601
        %v1629 = vadd.f32 %v1565, %v1602
        %v1630 = vadd.f32 %v1566, %v1603
        %v1631 = vadd.f32 %v1567, %v1604
        %v1632 = vadd.f32 %v1568, %v1605
        %v1633 = vadd.f32 %v1569, %v1606
        %v1634 = vadd.f32 %v1570, %v1607
        %v1635 = vadd.f32 %v1571, %v1608
        %v1636 = vadd.f32 %v1572, %v1609
        %v1637 = vadd.f32 %v1573, %v1610
        %v1638 = vadd.f32 %v1574, %v1611
        %v1639 = vadd.f32 %v1575, %v1612
        %v1640 = vadd.f32 %v1576, %v1613
        %v1641 = vadd.f32 %v1577, %v1614
        %v1642 = vadd.f32 %v1578, %v1615
        %v1643 = vadd.f32 %v1579, %v1616
        %v1644 = vadd.f32 %v1580, %v1617
        %v1645 = vadd.f32 %v1581, %v1618
        %v1646 = vadd.f32 %v1582, %v1619
        %v1647 = vadd.f32 %v1583, %v1620
        %v1648 = vadd.f32 %v1584, %v1621
        %v1649 = vadd.f32 %v1585, %v1621
        %v1650 = vadd.f32 %v1586, %v1621
        %v1651 = vadd.f32 %v1587, %v1621
        %v1652 = vadd.f32 %v1588, %v1621
        %v1653 = vadd.f32 %v1589, %v1621
        %vm1654 = vcmask 1045504
        %v1655 = vrot.slane %v556, 2
        %v1656 = vrot.slane %v462, 2
        %v1657 = vsel %vm1654, %v1655, %v1656
        %v1658 = vrot.slane %v572, 2
        %v1659 = vsel %vm1654, %v1656, %v1658
        %v1660 = vrot.slane %v557, 2
        %v1661 = vrot.slane %v465, 2
        %v1662 = vsel %vm1654, %v1660, %v1661
        %v1663 = vrot.slane %v573, 2
        %v1664 = vsel %vm1654, %v1661, %v1663
        %v1665 = vrot.slane %v558, 2
        %v1666 = vrot.slane %v468, 2
        %v1667 = vsel %vm1654, %v1665, %v1666
        %v1668 = vrot.slane %v574, 2
        %v1669 = vsel %vm1654, %v1666, %v1668
        %v1670 = vrot.slane %v559, 2
        %v1671 = vrot.slane %v471, 2
        %v1672 = vsel %vm1654, %v1670, %v1671
        %v1673 = vrot.slane %v575, 2
        %v1674 = vsel %vm1654, %v1671, %v1673
        %v1675 = vrot.slane %v560, 2
        %v1676 = vrot.slane %v474, 2
        %v1677 = vsel %vm1654, %v1675, %v1676
        %v1678 = vrot.slane %v576, 2
        %v1679 = vsel %vm1654, %v1676, %v1678
        %v1680 = vrot.slane %v561, 2
        %v1681 = vrot.slane %v477, 2
        %v1682 = vsel %vm1654, %v1680, %v1681
        %v1683 = vrot.slane %v577, 2
        %v1684 = vsel %vm1654, %v1681, %v1683
        %v1685 = vrot.slane %v562, 2
        %v1686 = vrot.slane %v480, 2
        %v1687 = vsel %vm1654, %v1685, %v1686
        %v1688 = vrot.slane %v578, 2
        %v1689 = vsel %vm1654, %v1686, %v1688
        %v1690 = vrot.slane %v563, 2
        %v1691 = vrot.slane %v483, 2
        %v1692 = vsel %vm1654, %v1690, %v1691
        %v1693 = vrot.slane %v579, 2
        %v1694 = vsel %vm1654, %v1691, %v1693
        %v1695 = vrot.slane %v564, 2
        %v1696 = vrot.slane %v486, 2
        %v1697 = vsel %vm1654, %v1695, %v1696
        %v1698 = vrot.slane %v580, 2
        %v1699 = vsel %vm1654, %v1696, %v1698
        %v1700 = vrot.slane %v565, 2
        %v1701 = vrot.slane %v489, 2
        %v1702 = vsel %vm1654, %v1700, %v1701
        %v1703 = vrot.slane %v581, 2
        %v1704 = vsel %vm1654, %v1701, %v1703
        %v1705 = vrot.slane %v566, 2
        %v1706 = vrot.slane %v492, 2
        %v1707 = vsel %vm1654, %v1705, %v1706
        %v1708 = vrot.slane %v582, 2
        %v1709 = vsel %vm1654, %v1706, %v1708
        %v1710 = vrot.slane %v567, 2
        %v1711 = vrot.slane %v495, 2
        %v1712 = vsel %vm1654, %v1710, %v1711
        %v1713 = vrot.slane %v583, 2
        %v1714 = vsel %vm1654, %v1711, %v1713
        %v1715 = vrot.slane %v568, 2
        %v1716 = vrot.slane %v498, 2
        %v1717 = vsel %vm1654, %v1715, %v1716
        %v1718 = vrot.slane %v584, 2
        %v1719 = vsel %vm1654, %v1716, %v1718
        %v1720 = vrot.slane %v569, 2
        %v1721 = vrot.slane %v501, 2
        %v1722 = vsel %vm1654, %v1720, %v1721
        %v1723 = vrot.slane %v585, 2
        %v1724 = vsel %vm1654, %v1721, %v1723
        %v1725 = vrot.slane %v570, 2
        %v1726 = vrot.slane %v504, 2
        %v1727 = vsel %vm1654, %v1725, %v1726
        %v1728 = vrot.slane %v586, 2
        %v1729 = vsel %vm1654, %v1726, %v1728
        %v1730 = vrot.slane %v571, 2
        %v1731 = vrot.slane %v507, 2
        %v1732 = vsel %vm1654, %v1730, %v1731
        %v1733 = vrot.slane %v587, 2
        %v1734 = vsel %vm1654, %v1731, %v1733
        %v1767 = vld [vmem:[#allocation5 + $0x2] sm:$0x1]
        %v1768 = vlaneseq
        %v1769 = vshrl.u32 %v1768, 7
        %v1770 = vsub.s32 0, %v1769
        %v1771 = vrot.slane %v1767, %v1770
        %v1772 = vmul.f32 %v1771, 0.0
        %v1773 = vmul.f32 %v1657, %v1771
        %v1774 = vmul.f32 %v1659, %v1771
        %v1775 = vmul.f32 %v1662, %v1771
        %v1776 = vmul.f32 %v1664, %v1771
        %v1777 = vmul.f32 %v1667, %v1771
        %v1778 = vmul.f32 %v1669, %v1771
        %v1779 = vmul.f32 %v1672, %v1771
        %v1780 = vmul.f32 %v1674, %v1771
        %v1781 = vmul.f32 %v1677, %v1771
        %v1782 = vmul.f32 %v1679, %v1771
        %v1783 = vmul.f32 %v1682, %v1771
        %v1784 = vmul.f32 %v1684, %v1771
        %v1785 = vmul.f32 %v1687, %v1771
        %v1786 = vmul.f32 %v1689, %v1771
        %v1787 = vmul.f32 %v1692, %v1771
        %v1788 = vmul.f32 %v1694, %v1771
        %v1789 = vmul.f32 %v1697, %v1771
        %v1790 = vmul.f32 %v1699, %v1771
        %v1791 = vmul.f32 %v1702, %v1771
        %v1792 = vmul.f32 %v1704, %v1771
        %v1793 = vmul.f32 %v1707, %v1771
        %v1794 = vmul.f32 %v1709, %v1771
        %v1795 = vmul.f32 %v1712, %v1771
        %v1796 = vmul.f32 %v1714, %v1771
        %v1797 = vmul.f32 %v1717, %v1771
        %v1798 = vmul.f32 %v1719, %v1771
        %v1799 = vadd.f32 %v1622, %v1772
        %v1800 = vadd.f32 %v1623, %v1772
        %v1801 = vadd.f32 %v1624, %v1772
        %v1802 = vadd.f32 %v1625, %v1772
        %v1803 = vadd.f32 %v1626, %v1772
        %v1804 = vadd.f32 %v1627, %v1772
        %v1805 = vadd.f32 %v1628, %v1773
        %v1806 = vadd.f32 %v1629, %v1774
        %v1807 = vadd.f32 %v1630, %v1775
        %v1808 = vadd.f32 %v1631, %v1776
        %v1809 = vadd.f32 %v1632, %v1777
        %v1810 = vadd.f32 %v1633, %v1778
        %v1811 = vadd.f32 %v1634, %v1779
        %v1812 = vadd.f32 %v1635, %v1780
        %v1813 = vadd.f32 %v1636, %v1781
        %v1814 = vadd.f32 %v1637, %v1782
        %v1815 = vadd.f32 %v1638, %v1783
        %v1816 = vadd.f32 %v1639, %v1784
        %v1817 = vadd.f32 %v1640, %v1785
        %v1818 = vadd.f32 %v1641, %v1786
        %v1819 = vadd.f32 %v1642, %v1787
        %v1820 = vadd.f32 %v1643, %v1788
        %v1821 = vadd.f32 %v1644, %v1789
        %v1822 = vadd.f32 %v1645, %v1790
        %v1823 = vadd.f32 %v1646, %v1791
        %v1824 = vadd.f32 %v1647, %v1792
        %v1825 = vadd.f32 %v1648, %v1793
        %v1826 = vadd.f32 %v1649, %v1794
        %v1827 = vadd.f32 %v1650, %v1795
        %v1828 = vadd.f32 %v1651, %v1796
        %v1829 = vadd.f32 %v1652, %v1797
        %v1830 = vadd.f32 %v1653, %v1798
        %v1831 = vld [vmem:[#allocation5 + $0x9] sm:$0x1]
        %v1832 = vlaneseq
        %v1833 = vshrl.u32 %v1832, 7
        %v1834 = vsub.s32 0, %v1833
        %v1835 = vrot.slane %v1831, %v1834
        %v1836 = vmul.f32 %v1835, 0.0
        %v1837 = vmul.f32 %v1657, %v1835
        %v1838 = vmul.f32 %v1659, %v1835
        %v1839 = vmul.f32 %v1662, %v1835
        %v1840 = vmul.f32 %v1664, %v1835
        %v1841 = vmul.f32 %v1667, %v1835
        %v1842 = vmul.f32 %v1669, %v1835
        %v1843 = vmul.f32 %v1672, %v1835
        %v1844 = vmul.f32 %v1674, %v1835
        %v1845 = vmul.f32 %v1677, %v1835
        %v1846 = vmul.f32 %v1679, %v1835
        %v1847 = vmul.f32 %v1682, %v1835
        %v1848 = vmul.f32 %v1684, %v1835
        %v1849 = vmul.f32 %v1687, %v1835
        %v1850 = vmul.f32 %v1689, %v1835
        %v1851 = vmul.f32 %v1692, %v1835
        %v1852 = vmul.f32 %v1694, %v1835
        %v1853 = vmul.f32 %v1697, %v1835
        %v1854 = vmul.f32 %v1699, %v1835
        %v1855 = vmul.f32 %v1702, %v1835
        %v1856 = vmul.f32 %v1704, %v1835
        %v1857 = vmul.f32 %v1707, %v1835
        %v1858 = vmul.f32 %v1709, %v1835
        %v1859 = vmul.f32 %v1712, %v1835
        %v1860 = vmul.f32 %v1714, %v1835
        %v1861 = vmul.f32 %v1717, %v1835
        %v1862 = vmul.f32 %v1719, %v1835
        %v1863 = vmul.f32 %v1722, %v1835
        %v1864 = vmul.f32 %v1724, %v1835
        %v1865 = vadd.f32 %v1799, %v1836
        %v1866 = vadd.f32 %v1800, %v1836
        %v1867 = vadd.f32 %v1801, %v1836
        %v1868 = vadd.f32 %v1802, %v1836
        %v1869 = vadd.f32 %v1803, %v1837
        %v1870 = vadd.f32 %v1804, %v1838
        %v1871 = vadd.f32 %v1805, %v1839
        %v1872 = vadd.f32 %v1806, %v1840
        %v1873 = vadd.f32 %v1807, %v1841
        %v1874 = vadd.f32 %v1808, %v1842
        %v1875 = vadd.f32 %v1809, %v1843
        %v1876 = vadd.f32 %v1810, %v1844
        %v1877 = vadd.f32 %v1811, %v1845
        %v1878 = vadd.f32 %v1812, %v1846
        %v1879 = vadd.f32 %v1813, %v1847
        %v1880 = vadd.f32 %v1814, %v1848
        %v1881 = vadd.f32 %v1815, %v1849
        %v1882 = vadd.f32 %v1816, %v1850
        %v1883 = vadd.f32 %v1817, %v1851
        %v1884 = vadd.f32 %v1818, %v1852
        %v1885 = vadd.f32 %v1819, %v1853
        %v1886 = vadd.f32 %v1820, %v1854
        %v1887 = vadd.f32 %v1821, %v1855
        %v1888 = vadd.f32 %v1822, %v1856
        %v1889 = vadd.f32 %v1823, %v1857
        %v1890 = vadd.f32 %v1824, %v1858
        %v1891 = vadd.f32 %v1825, %v1859
        %v1892 = vadd.f32 %v1826, %v1860
        %v1893 = vadd.f32 %v1827, %v1861
        %v1894 = vadd.f32 %v1828, %v1862
        %v1895 = vadd.f32 %v1829, %v1863
        %v1896 = vadd.f32 %v1830, %v1864
        %v1897 = vld [vmem:[#allocation5 + $0x10] sm:$0x1]
        %v1898 = vlaneseq
        %v1899 = vshrl.u32 %v1898, 7
        %v1900 = vsub.s32 0, %v1899
        %v1901 = vrot.slane %v1897, %v1900
        %v1902 = vmul.f32 %v1901, 0.0
        %v1903 = vmul.f32 %v1657, %v1901
        %v1904 = vmul.f32 %v1659, %v1901
        %v1905 = vmul.f32 %v1662, %v1901
        %v1906 = vmul.f32 %v1664, %v1901
        %v1907 = vmul.f32 %v1667, %v1901
        %v1908 = vmul.f32 %v1669, %v1901
        %v1909 = vmul.f32 %v1672, %v1901
        %v1910 = vmul.f32 %v1674, %v1901
        %v1911 = vmul.f32 %v1677, %v1901
        %v1912 = vmul.f32 %v1679, %v1901
        %v1913 = vmul.f32 %v1682, %v1901
        %v1914 = vmul.f32 %v1684, %v1901
        %v1915 = vmul.f32 %v1687, %v1901
        %v1916 = vmul.f32 %v1689, %v1901
        %v1917 = vmul.f32 %v1692, %v1901
        %v1918 = vmul.f32 %v1694, %v1901
        %v1919 = vmul.f32 %v1697, %v1901
        %v1920 = vmul.f32 %v1699, %v1901
        %v1921 = vmul.f32 %v1702, %v1901
        %v1922 = vmul.f32 %v1704, %v1901
        %v1923 = vmul.f32 %v1707, %v1901
        %v1924 = vmul.f32 %v1709, %v1901
        %v1925 = vmul.f32 %v1712, %v1901
        %v1926 = vmul.f32 %v1714, %v1901
        %v1927 = vmul.f32 %v1717, %v1901
        %v1928 = vmul.f32 %v1719, %v1901
        %v1929 = vmul.f32 %v1722, %v1901
        %v1930 = vmul.f32 %v1724, %v1901
        %v1931 = vmul.f32 %v1727, %v1901
        %v1932 = vmul.f32 %v1729, %v1901
        %v1933 = vadd.f32 %v1865, %v1902
        %v1934 = vadd.f32 %v1866, %v1902
        %v1935 = vadd.f32 %v1867, %v1903
        %v1936 = vadd.f32 %v1868, %v1904
        %v1937 = vadd.f32 %v1869, %v1905
        %v1938 = vadd.f32 %v1870, %v1906
        %v1939 = vadd.f32 %v1871, %v1907
        %v1940 = vadd.f32 %v1872, %v1908
        %v1941 = vadd.f32 %v1873, %v1909
        %v1942 = vadd.f32 %v1874, %v1910
        %v1943 = vadd.f32 %v1875, %v1911
        %v1944 = vadd.f32 %v1876, %v1912
        %v1945 = vadd.f32 %v1877, %v1913
        %v1946 = vadd.f32 %v1878, %v1914
        %v1947 = vadd.f32 %v1879, %v1915
        %v1948 = vadd.f32 %v1880, %v1916
        %v1949 = vadd.f32 %v1881, %v1917
        %v1950 = vadd.f32 %v1882, %v1918
        %v1951 = vadd.f32 %v1883, %v1919
        %v1952 = vadd.f32 %v1884, %v1920
        %v1953 = vadd.f32 %v1885, %v1921
        %v1954 = vadd.f32 %v1886, %v1922
        %v1955 = vadd.f32 %v1887, %v1923
        %v1956 = vadd.f32 %v1888, %v1924
        %v1957 = vadd.f32 %v1889, %v1925
        %v1958 = vadd.f32 %v1890, %v1926
        %v1959 = vadd.f32 %v1891, %v1927
        %v1960 = vadd.f32 %v1892, %v1928
        %v1961 = vadd.f32 %v1893, %v1929
        %v1962 = vadd.f32 %v1894, %v1930
        %v1963 = vadd.f32 %v1895, %v1931
        %v1964 = vadd.f32 %v1896, %v1932
        %v1965 = vld [vmem:[#allocation5 + $0x17] sm:$0x1]
        %v1966 = vlaneseq
        %v1967 = vshrl.u32 %v1966, 7
        %v1968 = vsub.s32 0, %v1967
        %v1969 = vrot.slane %v1965, %v1968
        %v1970 = vmul.f32 %v1657, %v1969
        %v1971 = vmul.f32 %v1659, %v1969
        %v1972 = vmul.f32 %v1662, %v1969
        %v1973 = vmul.f32 %v1664, %v1969
        %v1974 = vmul.f32 %v1667, %v1969
        %v1975 = vmul.f32 %v1669, %v1969
        %v1976 = vmul.f32 %v1672, %v1969
        %v1977 = vmul.f32 %v1674, %v1969
        %v1978 = vmul.f32 %v1677, %v1969
        %v1979 = vmul.f32 %v1679, %v1969
        %v1980 = vmul.f32 %v1682, %v1969
        %v1981 = vmul.f32 %v1684, %v1969
        %v1982 = vmul.f32 %v1687, %v1969
        %v1983 = vmul.f32 %v1689, %v1969
        %v1984 = vmul.f32 %v1692, %v1969
        %v1985 = vmul.f32 %v1694, %v1969
        %v1986 = vmul.f32 %v1697, %v1969
        %v1987 = vmul.f32 %v1699, %v1969
        %v1988 = vmul.f32 %v1702, %v1969
        %v1989 = vmul.f32 %v1704, %v1969
        %v1990 = vmul.f32 %v1707, %v1969
        %v1991 = vmul.f32 %v1709, %v1969
        %v1992 = vmul.f32 %v1712, %v1969
        %v1993 = vmul.f32 %v1714, %v1969
        %v1994 = vmul.f32 %v1717, %v1969
        %v1995 = vmul.f32 %v1719, %v1969
        %v1996 = vmul.f32 %v1722, %v1969
        %v1997 = vmul.f32 %v1724, %v1969
        %v1998 = vmul.f32 %v1727, %v1969
        %v1999 = vmul.f32 %v1729, %v1969
        %v2000 = vmul.f32 %v1732, %v1969
        %v2001 = vmul.f32 %v1734, %v1969
        %v2002 = vadd.f32 %v1933, %v1970
        %v2003 = vadd.f32 %v1934, %v1971
        %v2004 = vadd.f32 %v1935, %v1972
        %v2005 = vadd.f32 %v1936, %v1973
        %v2006 = vadd.f32 %v1937, %v1974
        %v2007 = vadd.f32 %v1938, %v1975
        %v2008 = vadd.f32 %v1939, %v1976
        %v2009 = vadd.f32 %v1940, %v1977
        %v2010 = vadd.f32 %v1941, %v1978
        %v2011 = vadd.f32 %v1942, %v1979
        %v2012 = vadd.f32 %v1943, %v1980
        %v2013 = vadd.f32 %v1944, %v1981
        %v2014 = vadd.f32 %v1945, %v1982
        %v2015 = vadd.f32 %v1946, %v1983
        %v2016 = vadd.f32 %v1947, %v1984
        %v2017 = vadd.f32 %v1948, %v1985
        %v2018 = vadd.f32 %v1949, %v1986
        %v2019 = vadd.f32 %v1950, %v1987
        %v2020 = vadd.f32 %v1951, %v1988
        %v2021 = vadd.f32 %v1952, %v1989
        %v2022 = vadd.f32 %v1953, %v1990
        %v2023 = vadd.f32 %v1954, %v1991
        %v2024 = vadd.f32 %v1955, %v1992
        %v2025 = vadd.f32 %v1956, %v1993
        %v2026 = vadd.f32 %v1957, %v1994
        %v2027 = vadd.f32 %v1958, %v1995
        %v2028 = vadd.f32 %v1959, %v1996
        %v2029 = vadd.f32 %v1960, %v1997
        %v2030 = vadd.f32 %v1961, %v1998
        %v2031 = vadd.f32 %v1962, %v1999
        %v2032 = vadd.f32 %v1963, %v2000
        %v2033 = vadd.f32 %v1964, %v2001
        %v2034 = vld [vmem:[#allocation5 + $0x1e] sm:$0x1]
        %v2035 = vlaneseq
        %v2036 = vshrl.u32 %v2035, 7
        %v2037 = vsub.s32 0, %v2036
        %v2038 = vrot.slane %v2034, %v2037
        %v2039 = vmul.f32 %v1662, %v2038
        %v2040 = vmul.f32 %v1664, %v2038
        %v2041 = vmul.f32 %v1667, %v2038
        %v2042 = vmul.f32 %v1669, %v2038
        %v2043 = vmul.f32 %v1672, %v2038
        %v2044 = vmul.f32 %v1674, %v2038
        %v2045 = vmul.f32 %v1677, %v2038
        %v2046 = vmul.f32 %v1679, %v2038
        %v2047 = vmul.f32 %v1682, %v2038
        %v2048 = vmul.f32 %v1684, %v2038
        %v2049 = vmul.f32 %v1687, %v2038
        %v2050 = vmul.f32 %v1689, %v2038
        %v2051 = vmul.f32 %v1692, %v2038
        %v2052 = vmul.f32 %v1694, %v2038
        %v2053 = vmul.f32 %v1697, %v2038
        %v2054 = vmul.f32 %v1699, %v2038
        %v2055 = vmul.f32 %v1702, %v2038
        %v2056 = vmul.f32 %v1704, %v2038
        %v2057 = vmul.f32 %v1707, %v2038
        %v2058 = vmul.f32 %v1709, %v2038
        %v2059 = vmul.f32 %v1712, %v2038
        %v2060 = vmul.f32 %v1714, %v2038
        %v2061 = vmul.f32 %v1717, %v2038
        %v2062 = vmul.f32 %v1719, %v2038
        %v2063 = vmul.f32 %v1722, %v2038
        %v2064 = vmul.f32 %v1724, %v2038
        %v2065 = vmul.f32 %v1727, %v2038
        %v2066 = vmul.f32 %v1729, %v2038
        %v2067 = vmul.f32 %v1732, %v2038
        %v2068 = vmul.f32 %v1734, %v2038
        %v2069 = vmul.f32 %v2038, 0.0
        %v2070 = vadd.f32 %v2002, %v2039
        %v2071 = vadd.f32 %v2003, %v2040
        %v2072 = vadd.f32 %v2004, %v2041
        %v2073 = vadd.f32 %v2005, %v2042
        %v2074 = vadd.f32 %v2006, %v2043
        %v2075 = vadd.f32 %v2007, %v2044
        %v2076 = vadd.f32 %v2008, %v2045
        %v2077 = vadd.f32 %v2009, %v2046
        %v2078 = vadd.f32 %v2010, %v2047
        %v2079 = vadd.f32 %v2011, %v2048
        %v2080 = vadd.f32 %v2012, %v2049
        %v2081 = vadd.f32 %v2013, %v2050
        %v2082 = vadd.f32 %v2014, %v2051
        %v2083 = vadd.f32 %v2015, %v2052
        %v2084 = vadd.f32 %v2016, %v2053
        %v2085 = vadd.f32 %v2017, %v2054
        %v2086 = vadd.f32 %v2018, %v2055
        %v2087 = vadd.f32 %v2019, %v2056
        %v2088 = vadd.f32 %v2020, %v2057
        %v2089 = vadd.f32 %v2021, %v2058
        %v2090 = vadd.f32 %v2022, %v2059
        %v2091 = vadd.f32 %v2023, %v2060
        %v2092 = vadd.f32 %v2024, %v2061
        %v2093 = vadd.f32 %v2025, %v2062
        %v2094 = vadd.f32 %v2026, %v2063
        %v2095 = vadd.f32 %v2027, %v2064
        %v2096 = vadd.f32 %v2028, %v2065
        %v2097 = vadd.f32 %v2029, %v2066
        %v2098 = vadd.f32 %v2030, %v2067
        %v2099 = vadd.f32 %v2031, %v2068
        %v2100 = vadd.f32 %v2032, %v2069
        %v2101 = vadd.f32 %v2033, %v2069
        %v2102 = vld [vmem:[#allocation5 + $0x25] sm:$0x1]
        %v2103 = vlaneseq
        %v2104 = vshrl.u32 %v2103, 7
        %v2105 = vsub.s32 0, %v2104
        %v2106 = vrot.slane %v2102, %v2105
        %v2107 = vmul.f32 %v1667, %v2106
        %v2108 = vmul.f32 %v1669, %v2106
        %v2109 = vmul.f32 %v1672, %v2106
        %v2110 = vmul.f32 %v1674, %v2106
        %v2111 = vmul.f32 %v1677, %v2106
        %v2112 = vmul.f32 %v1679, %v2106
        %v2113 = vmul.f32 %v1682, %v2106
        %v2114 = vmul.f32 %v1684, %v2106
        %v2115 = vmul.f32 %v1687, %v2106
        %v2116 = vmul.f32 %v1689, %v2106
        %v2117 = vmul.f32 %v1692, %v2106
        %v2118 = vmul.f32 %v1694, %v2106
        %v2119 = vmul.f32 %v1697, %v2106
        %v2120 = vmul.f32 %v1699, %v2106
        %v2121 = vmul.f32 %v1702, %v2106
        %v2122 = vmul.f32 %v1704, %v2106
        %v2123 = vmul.f32 %v1707, %v2106
        %v2124 = vmul.f32 %v1709, %v2106
        %v2125 = vmul.f32 %v1712, %v2106
        %v2126 = vmul.f32 %v1714, %v2106
        %v2127 = vmul.f32 %v1717, %v2106
        %v2128 = vmul.f32 %v1719, %v2106
        %v2129 = vmul.f32 %v1722, %v2106
        %v2130 = vmul.f32 %v1724, %v2106
        %v2131 = vmul.f32 %v1727, %v2106
        %v2132 = vmul.f32 %v1729, %v2106
        %v2133 = vmul.f32 %v1732, %v2106
        %v2134 = vmul.f32 %v1734, %v2106
        %v2135 = vmul.f32 %v2106, 0.0
        %v2136 = vadd.f32 %v2070, %v2107
        %v2137 = vadd.f32 %v2071, %v2108
        %v2138 = vadd.f32 %v2072, %v2109
        %v2139 = vadd.f32 %v2073, %v2110
        %v2140 = vadd.f32 %v2074, %v2111
        %v2141 = vadd.f32 %v2075, %v2112
        %v2142 = vadd.f32 %v2076, %v2113
        %v2143 = vadd.f32 %v2077, %v2114
        %v2144 = vadd.f32 %v2078, %v2115
        %v2145 = vadd.f32 %v2079, %v2116
        %v2146 = vadd.f32 %v2080, %v2117
        %v2147 = vadd.f32 %v2081, %v2118
        %v2148 = vadd.f32 %v2082, %v2119
        %v2149 = vadd.f32 %v2083, %v2120
        %v2150 = vadd.f32 %v2084, %v2121
        %v2151 = vadd.f32 %v2085, %v2122
        %v2152 = vadd.f32 %v2086, %v2123
        %v2153 = vadd.f32 %v2087, %v2124
        %v2154 = vadd.f32 %v2088, %v2125
        %v2155 = vadd.f32 %v2089, %v2126
        %v2156 = vadd.f32 %v2090, %v2127
        %v2157 = vadd.f32 %v2091, %v2128
        %v2158 = vadd.f32 %v2092, %v2129
        %v2159 = vadd.f32 %v2093, %v2130
        %v2160 = vadd.f32 %v2094, %v2131
        %v2161 = vadd.f32 %v2095, %v2132
        %v2162 = vadd.f32 %v2096, %v2133
        %v2163 = vadd.f32 %v2097, %v2134
        %v2164 = vadd.f32 %v2098, %v2135
        %v2165 = vadd.f32 %v2099, %v2135
        %v2166 = vadd.f32 %v2100, %v2135
        %v2167 = vadd.f32 %v2101, %v2135
        %v2168 = vld [vmem:[#allocation5 + $0x2c] sm:$0x1]
        %v2169 = vlaneseq
        %v2170 = vshrl.u32 %v2169, 7
        %v2171 = vsub.s32 0, %v2170
        %v2172 = vrot.slane %v2168, %v2171
        %v2173 = vmul.f32 %v1672, %v2172
        %v2174 = vmul.f32 %v1674, %v2172
        %v2175 = vmul.f32 %v1677, %v2172
        %v2176 = vmul.f32 %v1679, %v2172
        %v2177 = vmul.f32 %v1682, %v2172
        %v2178 = vmul.f32 %v1684, %v2172
        %v2179 = vmul.f32 %v1687, %v2172
        %v2180 = vmul.f32 %v1689, %v2172
        %v2181 = vmul.f32 %v1692, %v2172
        %v2182 = vmul.f32 %v1694, %v2172
        %v2183 = vmul.f32 %v1697, %v2172
        %v2184 = vmul.f32 %v1699, %v2172
        %v2185 = vmul.f32 %v1702, %v2172
        %v2186 = vmul.f32 %v1704, %v2172
        %v2187 = vmul.f32 %v1707, %v2172
        %v2188 = vmul.f32 %v1709, %v2172
        %v2189 = vmul.f32 %v1712, %v2172
        %v2190 = vmul.f32 %v1714, %v2172
        %v2191 = vmul.f32 %v1717, %v2172
        %v2192 = vmul.f32 %v1719, %v2172
        %v2193 = vmul.f32 %v1722, %v2172
        %v2194 = vmul.f32 %v1724, %v2172
        %v2195 = vmul.f32 %v1727, %v2172
        %v2196 = vmul.f32 %v1729, %v2172
        %v2197 = vmul.f32 %v1732, %v2172
        %v2198 = vmul.f32 %v1734, %v2172
        %v2199 = vmul.f32 %v2172, 0.0
        %v2200 = vadd.f32 %v2136, %v2173
        %v2201 = vadd.f32 %v2137, %v2174
        %v2202 = vadd.f32 %v2138, %v2175
        %v2203 = vadd.f32 %v2139, %v2176
        %v2204 = vadd.f32 %v2140, %v2177
        %v2205 = vadd.f32 %v2141, %v2178
        %v2206 = vadd.f32 %v2142, %v2179
        %v2207 = vadd.f32 %v2143, %v2180
        %v2208 = vadd.f32 %v2144, %v2181
        %v2209 = vadd.f32 %v2145, %v2182
        %v2210 = vadd.f32 %v2146, %v2183
        %v2211 = vadd.f32 %v2147, %v2184
        %v2212 = vadd.f32 %v2148, %v2185
        %v2213 = vadd.f32 %v2149, %v2186
        %v2214 = vadd.f32 %v2150, %v2187
        %v2215 = vadd.f32 %v2151, %v2188
        %v2216 = vadd.f32 %v2152, %v2189
        %v2217 = vadd.f32 %v2153, %v2190
        %v2218 = vadd.f32 %v2154, %v2191
        %v2219 = vadd.f32 %v2155, %v2192
        %v2220 = vadd.f32 %v2156, %v2193
        %v2221 = vadd.f32 %v2157, %v2194
        %v2222 = vadd.f32 %v2158, %v2195
        %v2223 = vadd.f32 %v2159, %v2196
        %v2224 = vadd.f32 %v2160, %v2197
        %v2225 = vadd.f32 %v2161, %v2198
        %v2226 = vadd.f32 %v2162, %v2199
        %v2227 = vadd.f32 %v2163, %v2199
        %v2228 = vadd.f32 %v2164, %v2199
        %v2229 = vadd.f32 %v2165, %v2199
        %v2230 = vadd.f32 %v2166, %v2199
        %v2231 = vadd.f32 %v2167, %v2199
        %vm2232 = vcmask 1044480
        %v2233 = vrot.slane %v556, 3
        %v2234 = vrot.slane %v462, 3
        %v2235 = vsel %vm2232, %v2233, %v2234
        %v2236 = vrot.slane %v572, 3
        %v2237 = vsel %vm2232, %v2234, %v2236
        %v2238 = vrot.slane %v557, 3
        %v2239 = vrot.slane %v465, 3
        %v2240 = vsel %vm2232, %v2238, %v2239
        %v2241 = vrot.slane %v573, 3
        %v2242 = vsel %vm2232, %v2239, %v2241
        %v2243 = vrot.slane %v558, 3
        %v2244 = vrot.slane %v468, 3
        %v2245 = vsel %vm2232, %v2243, %v2244
        %v2246 = vrot.slane %v574, 3
        %v2247 = vsel %vm2232, %v2244, %v2246
        %v2248 = vrot.slane %v559, 3
        %v2249 = vrot.slane %v471, 3
        %v2250 = vsel %vm2232, %v2248, %v2249
        %v2251 = vrot.slane %v575, 3
        %v2252 = vsel %vm2232, %v2249, %v2251
        %v2253 = vrot.slane %v560, 3
        %v2254 = vrot.slane %v474, 3
        %v2255 = vsel %vm2232, %v2253, %v2254
        %v2256 = vrot.slane %v576, 3
        %v2257 = vsel %vm2232, %v2254, %v2256
        %v2258 = vrot.slane %v561, 3
        %v2259 = vrot.slane %v477, 3
        %v2260 = vsel %vm2232, %v2258, %v2259
        %v2261 = vrot.slane %v577, 3
        %v2262 = vsel %vm2232, %v2259, %v2261
        %v2263 = vrot.slane %v562, 3
        %v2264 = vrot.slane %v480, 3
        %v2265 = vsel %vm2232, %v2263, %v2264
        %v2266 = vrot.slane %v578, 3
        %v2267 = vsel %vm2232, %v2264, %v2266
        %v2268 = vrot.slane %v563, 3
        %v2269 = vrot.slane %v483, 3
        %v2270 = vsel %vm2232, %v2268, %v2269
        %v2271 = vrot.slane %v579, 3
        %v2272 = vsel %vm2232, %v2269, %v2271
        %v2273 = vrot.slane %v564, 3
        %v2274 = vrot.slane %v486, 3
        %v2275 = vsel %vm2232, %v2273, %v2274
        %v2276 = vrot.slane %v580, 3
        %v2277 = vsel %vm2232, %v2274, %v2276
        %v2278 = vrot.slane %v565, 3
        %v2279 = vrot.slane %v489, 3
        %v2280 = vsel %vm2232, %v2278, %v2279
        %v2281 = vrot.slane %v581, 3
        %v2282 = vsel %vm2232, %v2279, %v2281
        %v2283 = vrot.slane %v566, 3
        %v2284 = vrot.slane %v492, 3
        %v2285 = vsel %vm2232, %v2283, %v2284
        %v2286 = vrot.slane %v582, 3
        %v2287 = vsel %vm2232, %v2284, %v2286
        %v2288 = vrot.slane %v567, 3
        %v2289 = vrot.slane %v495, 3
        %v2290 = vsel %vm2232, %v2288, %v2289
        %v2291 = vrot.slane %v583, 3
        %v2292 = vsel %vm2232, %v2289, %v2291
        %v2293 = vrot.slane %v568, 3
        %v2294 = vrot.slane %v498, 3
        %v2295 = vsel %vm2232, %v2293, %v2294
        %v2296 = vrot.slane %v584, 3
        %v2297 = vsel %vm2232, %v2294, %v2296
        %v2298 = vrot.slane %v569, 3
        %v2299 = vrot.slane %v501, 3
        %v2300 = vsel %vm2232, %v2298, %v2299
        %v2301 = vrot.slane %v585, 3
        %v2302 = vsel %vm2232, %v2299, %v2301
        %v2303 = vrot.slane %v570, 3
        %v2304 = vrot.slane %v504, 3
        %v2305 = vsel %vm2232, %v2303, %v2304
        %v2306 = vrot.slane %v586, 3
        %v2307 = vsel %vm2232, %v2304, %v2306
        %v2308 = vrot.slane %v571, 3
        %v2309 = vrot.slane %v507, 3
        %v2310 = vsel %vm2232, %v2308, %v2309
        %v2311 = vrot.slane %v587, 3
        %v2312 = vsel %vm2232, %v2309, %v2311
        %v2345 = vld [vmem:[#allocation5 + $0x3] sm:$0x1]
        %v2346 = vlaneseq
        %v2347 = vshrl.u32 %v2346, 7
        %v2348 = vsub.s32 0, %v2347
        %v2349 = vrot.slane %v2345, %v2348
        %v2350 = vmul.f32 %v2349, 0.0
        %v2351 = vmul.f32 %v2235, %v2349
        %v2352 = vmul.f32 %v2237, %v2349
        %v2353 = vmul.f32 %v2240, %v2349
        %v2354 = vmul.f32 %v2242, %v2349
        %v2355 = vmul.f32 %v2245, %v2349
        %v2356 = vmul.f32 %v2247, %v2349
        %v2357 = vmul.f32 %v2250, %v2349
        %v2358 = vmul.f32 %v2252, %v2349
        %v2359 = vmul.f32 %v2255, %v2349
        %v2360 = vmul.f32 %v2257, %v2349
        %v2361 = vmul.f32 %v2260, %v2349
        %v2362 = vmul.f32 %v2262, %v2349
        %v2363 = vmul.f32 %v2265, %v2349
        %v2364 = vmul.f32 %v2267, %v2349
        %v2365 = vmul.f32 %v2270, %v2349
        %v2366 = vmul.f32 %v2272, %v2349
        %v2367 = vmul.f32 %v2275, %v2349
        %v2368 = vmul.f32 %v2277, %v2349
        %v2369 = vmul.f32 %v2280, %v2349
        %v2370 = vmul.f32 %v2282, %v2349
        %v2371 = vmul.f32 %v2285, %v2349
        %v2372 = vmul.f32 %v2287, %v2349
        %v2373 = vmul.f32 %v2290, %v2349
        %v2374 = vmul.f32 %v2292, %v2349
        %v2375 = vmul.f32 %v2295, %v2349
        %v2376 = vmul.f32 %v2297, %v2349
        %v2377 = vadd.f32 %v2200, %v2350
        %v2378 = vadd.f32 %v2201, %v2350
        %v2379 = vadd.f32 %v2202, %v2350
        %v2380 = vadd.f32 %v2203, %v2350
        %v2381 = vadd.f32 %v2204, %v2350
        %v2382 = vadd.f32 %v2205, %v2350
        %v2383 = vadd.f32 %v2206, %v2351
        %v2384 = vadd.f32 %v2207, %v2352
        %v2385 = vadd.f32 %v2208, %v2353
        %v2386 = vadd.f32 %v2209, %v2354
        %v2387 = vadd.f32 %v2210, %v2355
        %v2388 = vadd.f32 %v2211, %v2356
        %v2389 = vadd.f32 %v2212, %v2357
        %v2390 = vadd.f32 %v2213, %v2358
        %v2391 = vadd.f32 %v2214, %v2359
        %v2392 = vadd.f32 %v2215, %v2360
        %v2393 = vadd.f32 %v2216, %v2361
        %v2394 = vadd.f32 %v2217, %v2362
        %v2395 = vadd.f32 %v2218, %v2363
        %v2396 = vadd.f32 %v2219, %v2364
        %v2397 = vadd.f32 %v2220, %v2365
        %v2398 = vadd.f32 %v2221, %v2366
        %v2399 = vadd.f32 %v2222, %v2367
        %v2400 = vadd.f32 %v2223, %v2368
        %v2401 = vadd.f32 %v2224, %v2369
        %v2402 = vadd.f32 %v2225, %v2370
        %v2403 = vadd.f32 %v2226, %v2371
        %v2404 = vadd.f32 %v2227, %v2372
        %v2405 = vadd.f32 %v2228, %v2373
        %v2406 = vadd.f32 %v2229, %v2374
        %v2407 = vadd.f32 %v2230, %v2375
        %v2408 = vadd.f32 %v2231, %v2376
        %v2409 = vld [vmem:[#allocation5 + $0xa] sm:$0x1]
        %v2410 = vlaneseq
        %v2411 = vshrl.u32 %v2410, 7
        %v2412 = vsub.s32 0, %v2411
        %v2413 = vrot.slane %v2409, %v2412
        %v2414 = vmul.f32 %v2413, 0.0
        %v2415 = vmul.f32 %v2235, %v2413
        %v2416 = vmul.f32 %v2237, %v2413
        %v2417 = vmul.f32 %v2240, %v2413
        %v2418 = vmul.f32 %v2242, %v2413
        %v2419 = vmul.f32 %v2245, %v2413
        %v2420 = vmul.f32 %v2247, %v2413
        %v2421 = vmul.f32 %v2250, %v2413
        %v2422 = vmul.f32 %v2252, %v2413
        %v2423 = vmul.f32 %v2255, %v2413
        %v2424 = vmul.f32 %v2257, %v2413
        %v2425 = vmul.f32 %v2260, %v2413
        %v2426 = vmul.f32 %v2262, %v2413
        %v2427 = vmul.f32 %v2265, %v2413
        %v2428 = vmul.f32 %v2267, %v2413
        %v2429 = vmul.f32 %v2270, %v2413
        %v2430 = vmul.f32 %v2272, %v2413
        %v2431 = vmul.f32 %v2275, %v2413
        %v2432 = vmul.f32 %v2277, %v2413
        %v2433 = vmul.f32 %v2280, %v2413
        %v2434 = vmul.f32 %v2282, %v2413
        %v2435 = vmul.f32 %v2285, %v2413
        %v2436 = vmul.f32 %v2287, %v2413
        %v2437 = vmul.f32 %v2290, %v2413
        %v2438 = vmul.f32 %v2292, %v2413
        %v2439 = vmul.f32 %v2295, %v2413
        %v2440 = vmul.f32 %v2297, %v2413
        %v2441 = vmul.f32 %v2300, %v2413
        %v2442 = vmul.f32 %v2302, %v2413
        %v2443 = vadd.f32 %v2377, %v2414
        %v2444 = vadd.f32 %v2378, %v2414
        %v2445 = vadd.f32 %v2379, %v2414
        %v2446 = vadd.f32 %v2380, %v2414
        %v2447 = vadd.f32 %v2381, %v2415
        %v2448 = vadd.f32 %v2382, %v2416
        %v2449 = vadd.f32 %v2383, %v2417
        %v2450 = vadd.f32 %v2384, %v2418
        %v2451 = vadd.f32 %v2385, %v2419
        %v2452 = vadd.f32 %v2386, %v2420
        %v2453 = vadd.f32 %v2387, %v2421
        %v2454 = vadd.f32 %v2388, %v2422
        %v2455 = vadd.f32 %v2389, %v2423
        %v2456 = vadd.f32 %v2390, %v2424
        %v2457 = vadd.f32 %v2391, %v2425
        %v2458 = vadd.f32 %v2392, %v2426
        %v2459 = vadd.f32 %v2393, %v2427
        %v2460 = vadd.f32 %v2394, %v2428
        %v2461 = vadd.f32 %v2395, %v2429
        %v2462 = vadd.f32 %v2396, %v2430
        %v2463 = vadd.f32 %v2397, %v2431
        %v2464 = vadd.f32 %v2398, %v2432
        %v2465 = vadd.f32 %v2399, %v2433
        %v2466 = vadd.f32 %v2400, %v2434
        %v2467 = vadd.f32 %v2401, %v2435
        %v2468 = vadd.f32 %v2402, %v2436
        %v2469 = vadd.f32 %v2403, %v2437
        %v2470 = vadd.f32 %v2404, %v2438
        %v2471 = vadd.f32 %v2405, %v2439
        %v2472 = vadd.f32 %v2406, %v2440
        %v2473 = vadd.f32 %v2407, %v2441
        %v2474 = vadd.f32 %v2408, %v2442
        %v2475 = vld [vmem:[#allocation5 + $0x11] sm:$0x1]
        %v2476 = vlaneseq
        %v2477 = vshrl.u32 %v2476, 7
        %v2478 = vsub.s32 0, %v2477
        %v2479 = vrot.slane %v2475, %v2478
        %v2480 = vmul.f32 %v2479, 0.0
        %v2481 = vmul.f32 %v2235, %v2479
        %v2482 = vmul.f32 %v2237, %v2479
        %v2483 = vmul.f32 %v2240, %v2479
        %v2484 = vmul.f32 %v2242, %v2479
        %v2485 = vmul.f32 %v2245, %v2479
        %v2486 = vmul.f32 %v2247, %v2479
        %v2487 = vmul.f32 %v2250, %v2479
        %v2488 = vmul.f32 %v2252, %v2479
        %v2489 = vmul.f32 %v2255, %v2479
        %v2490 = vmul.f32 %v2257, %v2479
        %v2491 = vmul.f32 %v2260, %v2479
        %v2492 = vmul.f32 %v2262, %v2479
        %v2493 = vmul.f32 %v2265, %v2479
        %v2494 = vmul.f32 %v2267, %v2479
        %v2495 = vmul.f32 %v2270, %v2479
        %v2496 = vmul.f32 %v2272, %v2479
        %v2497 = vmul.f32 %v2275, %v2479
        %v2498 = vmul.f32 %v2277, %v2479
        %v2499 = vmul.f32 %v2280, %v2479
        %v2500 = vmul.f32 %v2282, %v2479
        %v2501 = vmul.f32 %v2285, %v2479
        %v2502 = vmul.f32 %v2287, %v2479
        %v2503 = vmul.f32 %v2290, %v2479
        %v2504 = vmul.f32 %v2292, %v2479
        %v2505 = vmul.f32 %v2295, %v2479
        %v2506 = vmul.f32 %v2297, %v2479
        %v2507 = vmul.f32 %v2300, %v2479
        %v2508 = vmul.f32 %v2302, %v2479
        %v2509 = vmul.f32 %v2305, %v2479
        %v2510 = vmul.f32 %v2307, %v2479
        %v2511 = vadd.f32 %v2443, %v2480
        %v2512 = vadd.f32 %v2444, %v2480
        %v2513 = vadd.f32 %v2445, %v2481
        %v2514 = vadd.f32 %v2446, %v2482
        %v2515 = vadd.f32 %v2447, %v2483
        %v2516 = vadd.f32 %v2448, %v2484
        %v2517 = vadd.f32 %v2449, %v2485
        %v2518 = vadd.f32 %v2450, %v2486
        %v2519 = vadd.f32 %v2451, %v2487
        %v2520 = vadd.f32 %v2452, %v2488
        %v2521 = vadd.f32 %v2453, %v2489
        %v2522 = vadd.f32 %v2454, %v2490
        %v2523 = vadd.f32 %v2455, %v2491
        %v2524 = vadd.f32 %v2456, %v2492
        %v2525 = vadd.f32 %v2457, %v2493
        %v2526 = vadd.f32 %v2458, %v2494
        %v2527 = vadd.f32 %v2459, %v2495
        %v2528 = vadd.f32 %v2460, %v2496
        %v2529 = vadd.f32 %v2461, %v2497
        %v2530 = vadd.f32 %v2462, %v2498
        %v2531 = vadd.f32 %v2463, %v2499
        %v2532 = vadd.f32 %v2464, %v2500
        %v2533 = vadd.f32 %v2465, %v2501
        %v2534 = vadd.f32 %v2466, %v2502
        %v2535 = vadd.f32 %v2467, %v2503
        %v2536 = vadd.f32 %v2468, %v2504
        %v2537 = vadd.f32 %v2469, %v2505
        %v2538 = vadd.f32 %v2470, %v2506
        %v2539 = vadd.f32 %v2471, %v2507
        %v2540 = vadd.f32 %v2472, %v2508
        %v2541 = vadd.f32 %v2473, %v2509
        %v2542 = vadd.f32 %v2474, %v2510
        %v2543 = vld [vmem:[#allocation5 + $0x18] sm:$0x1]
        %v2544 = vlaneseq
        %v2545 = vshrl.u32 %v2544, 7
        %v2546 = vsub.s32 0, %v2545
        %v2547 = vrot.slane %v2543, %v2546
        %v2548 = vmul.f32 %v2235, %v2547
        %v2549 = vmul.f32 %v2237, %v2547
        %v2550 = vmul.f32 %v2240, %v2547
        %v2551 = vmul.f32 %v2242, %v2547
        %v2552 = vmul.f32 %v2245, %v2547
        %v2553 = vmul.f32 %v2247, %v2547
        %v2554 = vmul.f32 %v2250, %v2547
        %v2555 = vmul.f32 %v2252, %v2547
        %v2556 = vmul.f32 %v2255, %v2547
        %v2557 = vmul.f32 %v2257, %v2547
        %v2558 = vmul.f32 %v2260, %v2547
        %v2559 = vmul.f32 %v2262, %v2547
        %v2560 = vmul.f32 %v2265, %v2547
        %v2561 = vmul.f32 %v2267, %v2547
        %v2562 = vmul.f32 %v2270, %v2547
        %v2563 = vmul.f32 %v2272, %v2547
        %v2564 = vmul.f32 %v2275, %v2547
        %v2565 = vmul.f32 %v2277, %v2547
        %v2566 = vmul.f32 %v2280, %v2547
        %v2567 = vmul.f32 %v2282, %v2547
        %v2568 = vmul.f32 %v2285, %v2547
        %v2569 = vmul.f32 %v2287, %v2547
        %v2570 = vmul.f32 %v2290, %v2547
        %v2571 = vmul.f32 %v2292, %v2547
        %v2572 = vmul.f32 %v2295, %v2547
        %v2573 = vmul.f32 %v2297, %v2547
        %v2574 = vmul.f32 %v2300, %v2547
        %v2575 = vmul.f32 %v2302, %v2547
        %v2576 = vmul.f32 %v2305, %v2547
        %v2577 = vmul.f32 %v2307, %v2547
        %v2578 = vmul.f32 %v2310, %v2547
        %v2579 = vmul.f32 %v2312, %v2547
        %v2580 = vadd.f32 %v2511, %v2548
        %v2581 = vadd.f32 %v2512, %v2549
        %v2582 = vadd.f32 %v2513, %v2550
        %v2583 = vadd.f32 %v2514, %v2551
        %v2584 = vadd.f32 %v2515, %v2552
        %v2585 = vadd.f32 %v2516, %v2553
        %v2586 = vadd.f32 %v2517, %v2554
        %v2587 = vadd.f32 %v2518, %v2555
        %v2588 = vadd.f32 %v2519, %v2556
        %v2589 = vadd.f32 %v2520, %v2557
        %v2590 = vadd.f32 %v2521, %v2558
        %v2591 = vadd.f32 %v2522, %v2559
        %v2592 = vadd.f32 %v2523, %v2560
        %v2593 = vadd.f32 %v2524, %v2561
        %v2594 = vadd.f32 %v2525, %v2562
        %v2595 = vadd.f32 %v2526, %v2563
        %v2596 = vadd.f32 %v2527, %v2564
        %v2597 = vadd.f32 %v2528, %v2565
        %v2598 = vadd.f32 %v2529, %v2566
        %v2599 = vadd.f32 %v2530, %v2567
        %v2600 = vadd.f32 %v2531, %v2568
        %v2601 = vadd.f32 %v2532, %v2569
        %v2602 = vadd.f32 %v2533, %v2570
        %v2603 = vadd.f32 %v2534, %v2571
        %v2604 = vadd.f32 %v2535, %v2572
        %v2605 = vadd.f32 %v2536, %v2573
        %v2606 = vadd.f32 %v2537, %v2574
        %v2607 = vadd.f32 %v2538, %v2575
        %v2608 = vadd.f32 %v2539, %v2576
        %v2609 = vadd.f32 %v2540, %v2577
        %v2610 = vadd.f32 %v2541, %v2578
        %v2611 = vadd.f32 %v2542, %v2579
        %v2612 = vld [vmem:[#allocation5 + $0x1f] sm:$0x1]
        %v2613 = vlaneseq
        %v2614 = vshrl.u32 %v2613, 7
        %v2615 = vsub.s32 0, %v2614
        %v2616 = vrot.slane %v2612, %v2615
        %v2617 = vmul.f32 %v2240, %v2616
        %v2618 = vmul.f32 %v2242, %v2616
        %v2619 = vmul.f32 %v2245, %v2616
        %v2620 = vmul.f32 %v2247, %v2616
        %v2621 = vmul.f32 %v2250, %v2616
        %v2622 = vmul.f32 %v2252, %v2616
        %v2623 = vmul.f32 %v2255, %v2616
        %v2624 = vmul.f32 %v2257, %v2616
        %v2625 = vmul.f32 %v2260, %v2616
        %v2626 = vmul.f32 %v2262, %v2616
        %v2627 = vmul.f32 %v2265, %v2616
        %v2628 = vmul.f32 %v2267, %v2616
        %v2629 = vmul.f32 %v2270, %v2616
        %v2630 = vmul.f32 %v2272, %v2616
        %v2631 = vmul.f32 %v2275, %v2616
        %v2632 = vmul.f32 %v2277, %v2616
        %v2633 = vmul.f32 %v2280, %v2616
        %v2634 = vmul.f32 %v2282, %v2616
        %v2635 = vmul.f32 %v2285, %v2616
        %v2636 = vmul.f32 %v2287, %v2616
        %v2637 = vmul.f32 %v2290, %v2616
        %v2638 = vmul.f32 %v2292, %v2616
        %v2639 = vmul.f32 %v2295, %v2616
        %v2640 = vmul.f32 %v2297, %v2616
        %v2641 = vmul.f32 %v2300, %v2616
        %v2642 = vmul.f32 %v2302, %v2616
        %v2643 = vmul.f32 %v2305, %v2616
        %v2644 = vmul.f32 %v2307, %v2616
        %v2645 = vmul.f32 %v2310, %v2616
        %v2646 = vmul.f32 %v2312, %v2616
        %v2647 = vmul.f32 %v2616, 0.0
        %v2648 = vadd.f32 %v2580, %v2617
        %v2649 = vadd.f32 %v2581, %v2618
        %v2650 = vadd.f32 %v2582, %v2619
        %v2651 = vadd.f32 %v2583, %v2620
        %v2652 = vadd.f32 %v2584, %v2621
        %v2653 = vadd.f32 %v2585, %v2622
        %v2654 = vadd.f32 %v2586, %v2623
        %v2655 = vadd.f32 %v2587, %v2624
        %v2656 = vadd.f32 %v2588, %v2625
        %v2657 = vadd.f32 %v2589, %v2626
        %v2658 = vadd.f32 %v2590, %v2627
        %v2659 = vadd.f32 %v2591, %v2628
        %v2660 = vadd.f32 %v2592, %v2629
        %v2661 = vadd.f32 %v2593, %v2630
        %v2662 = vadd.f32 %v2594, %v2631
        %v2663 = vadd.f32 %v2595, %v2632
        %v2664 = vadd.f32 %v2596, %v2633
        %v2665 = vadd.f32 %v2597, %v2634
        %v2666 = vadd.f32 %v2598, %v2635
        %v2667 = vadd.f32 %v2599, %v2636
        %v2668 = vadd.f32 %v2600, %v2637
        %v2669 = vadd.f32 %v2601, %v2638
        %v2670 = vadd.f32 %v2602, %v2639
        %v2671 = vadd.f32 %v2603, %v2640
        %v2672 = vadd.f32 %v2604, %v2641
        %v2673 = vadd.f32 %v2605, %v2642
        %v2674 = vadd.f32 %v2606, %v2643
        %v2675 = vadd.f32 %v2607, %v2644
        %v2676 = vadd.f32 %v2608, %v2645
        %v2677 = vadd.f32 %v2609, %v2646
        %v2678 = vadd.f32 %v2610, %v2647
        %v2679 = vadd.f32 %v2611, %v2647
        %v2680 = vld [vmem:[#allocation5 + $0x26] sm:$0x1]
        %v2681 = vlaneseq
        %v2682 = vshrl.u32 %v2681, 7
        %v2683 = vsub.s32 0, %v2682
        %v2684 = vrot.slane %v2680, %v2683
        %v2685 = vmul.f32 %v2245, %v2684
        %v2686 = vmul.f32 %v2247, %v2684
        %v2687 = vmul.f32 %v2250, %v2684
        %v2688 = vmul.f32 %v2252, %v2684
        %v2689 = vmul.f32 %v2255, %v2684
        %v2690 = vmul.f32 %v2257, %v2684
        %v2691 = vmul.f32 %v2260, %v2684
        %v2692 = vmul.f32 %v2262, %v2684
        %v2693 = vmul.f32 %v2265, %v2684
        %v2694 = vmul.f32 %v2267, %v2684
        %v2695 = vmul.f32 %v2270, %v2684
        %v2696 = vmul.f32 %v2272, %v2684
        %v2697 = vmul.f32 %v2275, %v2684
        %v2698 = vmul.f32 %v2277, %v2684
        %v2699 = vmul.f32 %v2280, %v2684
        %v2700 = vmul.f32 %v2282, %v2684
        %v2701 = vmul.f32 %v2285, %v2684
        %v2702 = vmul.f32 %v2287, %v2684
        %v2703 = vmul.f32 %v2290, %v2684
        %v2704 = vmul.f32 %v2292, %v2684
        %v2705 = vmul.f32 %v2295, %v2684
        %v2706 = vmul.f32 %v2297, %v2684
        %v2707 = vmul.f32 %v2300, %v2684
        %v2708 = vmul.f32 %v2302, %v2684
        %v2709 = vmul.f32 %v2305, %v2684
        %v2710 = vmul.f32 %v2307, %v2684
        %v2711 = vmul.f32 %v2310, %v2684
        %v2712 = vmul.f32 %v2312, %v2684
        %v2713 = vmul.f32 %v2684, 0.0
        %v2714 = vadd.f32 %v2648, %v2685
        %v2715 = vadd.f32 %v2649, %v2686
        %v2716 = vadd.f32 %v2650, %v2687
        %v2717 = vadd.f32 %v2651, %v2688
        %v2718 = vadd.f32 %v2652, %v2689
        %v2719 = vadd.f32 %v2653, %v2690
        %v2720 = vadd.f32 %v2654, %v2691
        %v2721 = vadd.f32 %v2655, %v2692
        %v2722 = vadd.f32 %v2656, %v2693
        %v2723 = vadd.f32 %v2657, %v2694
        %v2724 = vadd.f32 %v2658, %v2695
        %v2725 = vadd.f32 %v2659, %v2696
        %v2726 = vadd.f32 %v2660, %v2697
        %v2727 = vadd.f32 %v2661, %v2698
        %v2728 = vadd.f32 %v2662, %v2699
        %v2729 = vadd.f32 %v2663, %v2700
        %v2730 = vadd.f32 %v2664, %v2701
        %v2731 = vadd.f32 %v2665, %v2702
        %v2732 = vadd.f32 %v2666, %v2703
        %v2733 = vadd.f32 %v2667, %v2704
        %v2734 = vadd.f32 %v2668, %v2705
        %v2735 = vadd.f32 %v2669, %v2706
        %v2736 = vadd.f32 %v2670, %v2707
        %v2737 = vadd.f32 %v2671, %v2708
        %v2738 = vadd.f32 %v2672, %v2709
        %v2739 = vadd.f32 %v2673, %v2710
        %v2740 = vadd.f32 %v2674, %v2711
        %v2741 = vadd.f32 %v2675, %v2712
        %v2742 = vadd.f32 %v2676, %v2713
        %v2743 = vadd.f32 %v2677, %v2713
        %v2744 = vadd.f32 %v2678, %v2713
        %v2745 = vadd.f32 %v2679, %v2713
        %v2746 = vld [vmem:[#allocation5 + $0x2d] sm:$0x1]
        %v2747 = vlaneseq
        %v2748 = vshrl.u32 %v2747, 7
        %v2749 = vsub.s32 0, %v2748
        %v2750 = vrot.slane %v2746, %v2749
        %v2751 = vmul.f32 %v2250, %v2750
        %v2752 = vmul.f32 %v2252, %v2750
        %v2753 = vmul.f32 %v2255, %v2750
        %v2754 = vmul.f32 %v2257, %v2750
        %v2755 = vmul.f32 %v2260, %v2750
        %v2756 = vmul.f32 %v2262, %v2750
        %v2757 = vmul.f32 %v2265, %v2750
        %v2758 = vmul.f32 %v2267, %v2750
        %v2759 = vmul.f32 %v2270, %v2750
        %v2760 = vmul.f32 %v2272, %v2750
        %v2761 = vmul.f32 %v2275, %v2750
        %v2762 = vmul.f32 %v2277, %v2750
        %v2763 = vmul.f32 %v2280, %v2750
        %v2764 = vmul.f32 %v2282, %v2750
        %v2765 = vmul.f32 %v2285, %v2750
        %v2766 = vmul.f32 %v2287, %v2750
        %v2767 = vmul.f32 %v2290, %v2750
        %v2768 = vmul.f32 %v2292, %v2750
        %v2769 = vmul.f32 %v2295, %v2750
        %v2770 = vmul.f32 %v2297, %v2750
        %v2771 = vmul.f32 %v2300, %v2750
        %v2772 = vmul.f32 %v2302, %v2750
        %v2773 = vmul.f32 %v2305, %v2750
        %v2774 = vmul.f32 %v2307, %v2750
        %v2775 = vmul.f32 %v2310, %v2750
        %v2776 = vmul.f32 %v2312, %v2750
        %v2777 = vmul.f32 %v2750, 0.0
        %v2778 = vadd.f32 %v2714, %v2751
        %v2779 = vadd.f32 %v2715, %v2752
        %v2780 = vadd.f32 %v2716, %v2753
        %v2781 = vadd.f32 %v2717, %v2754
        %v2782 = vadd.f32 %v2718, %v2755
        %v2783 = vadd.f32 %v2719, %v2756
        %v2784 = vadd.f32 %v2720, %v2757
        %v2785 = vadd.f32 %v2721, %v2758
        %v2786 = vadd.f32 %v2722, %v2759
        %v2787 = vadd.f32 %v2723, %v2760
        %v2788 = vadd.f32 %v2724, %v2761
        %v2789 = vadd.f32 %v2725, %v2762
        %v2790 = vadd.f32 %v2726, %v2763
        %v2791 = vadd.f32 %v2727, %v2764
        %v2792 = vadd.f32 %v2728, %v2765
        %v2793 = vadd.f32 %v2729, %v2766
        %v2794 = vadd.f32 %v2730, %v2767
        %v2795 = vadd.f32 %v2731, %v2768
        %v2796 = vadd.f32 %v2732, %v2769
        %v2797 = vadd.f32 %v2733, %v2770
        %v2798 = vadd.f32 %v2734, %v2771
        %v2799 = vadd.f32 %v2735, %v2772
        %v2800 = vadd.f32 %v2736, %v2773
        %v2801 = vadd.f32 %v2737, %v2774
        %v2802 = vadd.f32 %v2738, %v2775
        %v2803 = vadd.f32 %v2739, %v2776
        %v2804 = vadd.f32 %v2740, %v2777
        %v2805 = vadd.f32 %v2741, %v2777
        %v2806 = vadd.f32 %v2742, %v2777
        %v2807 = vadd.f32 %v2743, %v2777
        %v2808 = vadd.f32 %v2744, %v2777
        %v2809 = vadd.f32 %v2745, %v2777
        %vm2810 = vcmask 1043456
        %v2811 = vrot.slane %v556, 4
        %v2812 = vrot.slane %v462, 4
        %v2813 = vsel %vm2810, %v2811, %v2812
        %v2814 = vrot.slane %v572, 4
        %v2815 = vsel %vm2810, %v2812, %v2814
        %v2816 = vrot.slane %v557, 4
        %v2817 = vrot.slane %v465, 4
        %v2818 = vsel %vm2810, %v2816, %v2817
        %v2819 = vrot.slane %v573, 4
        %v2820 = vsel %vm2810, %v2817, %v2819
        %v2821 = vrot.slane %v558, 4
        %v2822 = vrot.slane %v468, 4
        %v2823 = vsel %vm2810, %v2821, %v2822
        %v2824 = vrot.slane %v574, 4
        %v2825 = vsel %vm2810, %v2822, %v2824
        %v2826 = vrot.slane %v559, 4
        %v2827 = vrot.slane %v471, 4
        %v2828 = vsel %vm2810, %v2826, %v2827
        %v2829 = vrot.slane %v575, 4
        %v2830 = vsel %vm2810, %v2827, %v2829
        %v2831 = vrot.slane %v560, 4
        %v2832 = vrot.slane %v474, 4
        %v2833 = vsel %vm2810, %v2831, %v2832
        %v2834 = vrot.slane %v576, 4
        %v2835 = vsel %vm2810, %v2832, %v2834
        %v2836 = vrot.slane %v561, 4
        %v2837 = vrot.slane %v477, 4
        %v2838 = vsel %vm2810, %v2836, %v2837
        %v2839 = vrot.slane %v577, 4
        %v2840 = vsel %vm2810, %v2837, %v2839
        %v2841 = vrot.slane %v562, 4
        %v2842 = vrot.slane %v480, 4
        %v2843 = vsel %vm2810, %v2841, %v2842
        %v2844 = vrot.slane %v578, 4
        %v2845 = vsel %vm2810, %v2842, %v2844
        %v2846 = vrot.slane %v563, 4
        %v2847 = vrot.slane %v483, 4
        %v2848 = vsel %vm2810, %v2846, %v2847
        %v2849 = vrot.slane %v579, 4
        %v2850 = vsel %vm2810, %v2847, %v2849
        %v2851 = vrot.slane %v564, 4
        %v2852 = vrot.slane %v486, 4
        %v2853 = vsel %vm2810, %v2851, %v2852
        %v2854 = vrot.slane %v580, 4
        %v2855 = vsel %vm2810, %v2852, %v2854
        %v2856 = vrot.slane %v565, 4
        %v2857 = vrot.slane %v489, 4
        %v2858 = vsel %vm2810, %v2856, %v2857
        %v2859 = vrot.slane %v581, 4
        %v2860 = vsel %vm2810, %v2857, %v2859
        %v2861 = vrot.slane %v566, 4
        %v2862 = vrot.slane %v492, 4
        %v2863 = vsel %vm2810, %v2861, %v2862
        %v2864 = vrot.slane %v582, 4
        %v2865 = vsel %vm2810, %v2862, %v2864
        %v2866 = vrot.slane %v567, 4
        %v2867 = vrot.slane %v495, 4
        %v2868 = vsel %vm2810, %v2866, %v2867
        %v2869 = vrot.slane %v583, 4
        %v2870 = vsel %vm2810, %v2867, %v2869
        %v2871 = vrot.slane %v568, 4
        %v2872 = vrot.slane %v498, 4
        %v2873 = vsel %vm2810, %v2871, %v2872
        %v2874 = vrot.slane %v584, 4
        %v2875 = vsel %vm2810, %v2872, %v2874
        %v2876 = vrot.slane %v569, 4
        %v2877 = vrot.slane %v501, 4
        %v2878 = vsel %vm2810, %v2876, %v2877
        %v2879 = vrot.slane %v585, 4
        %v2880 = vsel %vm2810, %v2877, %v2879
        %v2881 = vrot.slane %v570, 4
        %v2882 = vrot.slane %v504, 4
        %v2883 = vsel %vm2810, %v2881, %v2882
        %v2884 = vrot.slane %v586, 4
        %v2885 = vsel %vm2810, %v2882, %v2884
        %v2886 = vrot.slane %v571, 4
        %v2887 = vrot.slane %v507, 4
        %v2888 = vsel %vm2810, %v2886, %v2887
        %v2889 = vrot.slane %v587, 4
        %v2890 = vsel %vm2810, %v2887, %v2889
        %v2923 = vld [vmem:[#allocation5 + $0x4] sm:$0x1]
        %v2924 = vlaneseq
        %v2925 = vshrl.u32 %v2924, 7
        %v2926 = vsub.s32 0, %v2925
        %v2927 = vrot.slane %v2923, %v2926
        %v2928 = vmul.f32 %v2927, 0.0
        %v2929 = vmul.f32 %v2813, %v2927
        %v2930 = vmul.f32 %v2815, %v2927
        %v2931 = vmul.f32 %v2818, %v2927
        %v2932 = vmul.f32 %v2820, %v2927
        %v2933 = vmul.f32 %v2823, %v2927
        %v2934 = vmul.f32 %v2825, %v2927
        %v2935 = vmul.f32 %v2828, %v2927
        %v2936 = vmul.f32 %v2830, %v2927
        %v2937 = vmul.f32 %v2833, %v2927
        %v2938 = vmul.f32 %v2835, %v2927
        %v2939 = vmul.f32 %v2838, %v2927
        %v2940 = vmul.f32 %v2840, %v2927
        %v2941 = vmul.f32 %v2843, %v2927
        %v2942 = vmul.f32 %v2845, %v2927
        %v2943 = vmul.f32 %v2848, %v2927
        %v2944 = vmul.f32 %v2850, %v2927
        %v2945 = vmul.f32 %v2853, %v2927
        %v2946 = vmul.f32 %v2855, %v2927
        %v2947 = vmul.f32 %v2858, %v2927
        %v2948 = vmul.f32 %v2860, %v2927
        %v2949 = vmul.f32 %v2863, %v2927
        %v2950 = vmul.f32 %v2865, %v2927
        %v2951 = vmul.f32 %v2868, %v2927
        %v2952 = vmul.f32 %v2870, %v2927
        %v2953 = vmul.f32 %v2873, %v2927
        %v2954 = vmul.f32 %v2875, %v2927
        %v2955 = vadd.f32 %v2778, %v2928
        %v2956 = vadd.f32 %v2779, %v2928
        %v2957 = vadd.f32 %v2780, %v2928
        %v2958 = vadd.f32 %v2781, %v2928
        %v2959 = vadd.f32 %v2782, %v2928
        %v2960 = vadd.f32 %v2783, %v2928
        %v2961 = vadd.f32 %v2784, %v2929
        %v2962 = vadd.f32 %v2785, %v2930
        %v2963 = vadd.f32 %v2786, %v2931
        %v2964 = vadd.f32 %v2787, %v2932
        %v2965 = vadd.f32 %v2788, %v2933
        %v2966 = vadd.f32 %v2789, %v2934
        %v2967 = vadd.f32 %v2790, %v2935
        %v2968 = vadd.f32 %v2791, %v2936
        %v2969 = vadd.f32 %v2792, %v2937
        %v2970 = vadd.f32 %v2793, %v2938
        %v2971 = vadd.f32 %v2794, %v2939
        %v2972 = vadd.f32 %v2795, %v2940
        %v2973 = vadd.f32 %v2796, %v2941
        %v2974 = vadd.f32 %v2797, %v2942
        %v2975 = vadd.f32 %v2798, %v2943
        %v2976 = vadd.f32 %v2799, %v2944
        %v2977 = vadd.f32 %v2800, %v2945
        %v2978 = vadd.f32 %v2801, %v2946
        %v2979 = vadd.f32 %v2802, %v2947
        %v2980 = vadd.f32 %v2803, %v2948
        %v2981 = vadd.f32 %v2804, %v2949
        %v2982 = vadd.f32 %v2805, %v2950
        %v2983 = vadd.f32 %v2806, %v2951
        %v2984 = vadd.f32 %v2807, %v2952
        %v2985 = vadd.f32 %v2808, %v2953
        %v2986 = vadd.f32 %v2809, %v2954
        %v2987 = vld [vmem:[#allocation5 + $0xb] sm:$0x1]
        %v2988 = vlaneseq
        %v2989 = vshrl.u32 %v2988, 7
        %v2990 = vsub.s32 0, %v2989
        %v2991 = vrot.slane %v2987, %v2990
        %v2992 = vmul.f32 %v2991, 0.0
        %v2993 = vmul.f32 %v2813, %v2991
        %v2994 = vmul.f32 %v2815, %v2991
        %v2995 = vmul.f32 %v2818, %v2991
        %v2996 = vmul.f32 %v2820, %v2991
        %v2997 = vmul.f32 %v2823, %v2991
        %v2998 = vmul.f32 %v2825, %v2991
        %v2999 = vmul.f32 %v2828, %v2991
        %v3000 = vmul.f32 %v2830, %v2991
        %v3001 = vmul.f32 %v2833, %v2991
        %v3002 = vmul.f32 %v2835, %v2991
        %v3003 = vmul.f32 %v2838, %v2991
        %v3004 = vmul.f32 %v2840, %v2991
        %v3005 = vmul.f32 %v2843, %v2991
        %v3006 = vmul.f32 %v2845, %v2991
        %v3007 = vmul.f32 %v2848, %v2991
        %v3008 = vmul.f32 %v2850, %v2991
        %v3009 = vmul.f32 %v2853, %v2991
        %v3010 = vmul.f32 %v2855, %v2991
        %v3011 = vmul.f32 %v2858, %v2991
        %v3012 = vmul.f32 %v2860, %v2991
        %v3013 = vmul.f32 %v2863, %v2991
        %v3014 = vmul.f32 %v2865, %v2991
        %v3015 = vmul.f32 %v2868, %v2991
        %v3016 = vmul.f32 %v2870, %v2991
        %v3017 = vmul.f32 %v2873, %v2991
        %v3018 = vmul.f32 %v2875, %v2991
        %v3019 = vmul.f32 %v2878, %v2991
        %v3020 = vmul.f32 %v2880, %v2991
        %v3021 = vadd.f32 %v2955, %v2992
        %v3022 = vadd.f32 %v2956, %v2992
        %v3023 = vadd.f32 %v2957, %v2992
        %v3024 = vadd.f32 %v2958, %v2992
        %v3025 = vadd.f32 %v2959, %v2993
        %v3026 = vadd.f32 %v2960, %v2994
        %v3027 = vadd.f32 %v2961, %v2995
        %v3028 = vadd.f32 %v2962, %v2996
        %v3029 = vadd.f32 %v2963, %v2997
        %v3030 = vadd.f32 %v2964, %v2998
        %v3031 = vadd.f32 %v2965, %v2999
        %v3032 = vadd.f32 %v2966, %v3000
        %v3033 = vadd.f32 %v2967, %v3001
        %v3034 = vadd.f32 %v2968, %v3002
        %v3035 = vadd.f32 %v2969, %v3003
        %v3036 = vadd.f32 %v2970, %v3004
        %v3037 = vadd.f32 %v2971, %v3005
        %v3038 = vadd.f32 %v2972, %v3006
        %v3039 = vadd.f32 %v2973, %v3007
        %v3040 = vadd.f32 %v2974, %v3008
        %v3041 = vadd.f32 %v2975, %v3009
        %v3042 = vadd.f32 %v2976, %v3010
        %v3043 = vadd.f32 %v2977, %v3011
        %v3044 = vadd.f32 %v2978, %v3012
        %v3045 = vadd.f32 %v2979, %v3013
        %v3046 = vadd.f32 %v2980, %v3014
        %v3047 = vadd.f32 %v2981, %v3015
        %v3048 = vadd.f32 %v2982, %v3016
        %v3049 = vadd.f32 %v2983, %v3017
        %v3050 = vadd.f32 %v2984, %v3018
        %v3051 = vadd.f32 %v2985, %v3019
        %v3052 = vadd.f32 %v2986, %v3020
        %v3053 = vld [vmem:[#allocation5 + $0x12] sm:$0x1]
        %v3054 = vlaneseq
        %v3055 = vshrl.u32 %v3054, 7
        %v3056 = vsub.s32 0, %v3055
        %v3057 = vrot.slane %v3053, %v3056
        %v3058 = vmul.f32 %v3057, 0.0
        %v3059 = vmul.f32 %v2813, %v3057
        %v3060 = vmul.f32 %v2815, %v3057
        %v3061 = vmul.f32 %v2818, %v3057
        %v3062 = vmul.f32 %v2820, %v3057
        %v3063 = vmul.f32 %v2823, %v3057
        %v3064 = vmul.f32 %v2825, %v3057
        %v3065 = vmul.f32 %v2828, %v3057
        %v3066 = vmul.f32 %v2830, %v3057
        %v3067 = vmul.f32 %v2833, %v3057
        %v3068 = vmul.f32 %v2835, %v3057
        %v3069 = vmul.f32 %v2838, %v3057
        %v3070 = vmul.f32 %v2840, %v3057
        %v3071 = vmul.f32 %v2843, %v3057
        %v3072 = vmul.f32 %v2845, %v3057
        %v3073 = vmul.f32 %v2848, %v3057
        %v3074 = vmul.f32 %v2850, %v3057
        %v3075 = vmul.f32 %v2853, %v3057
        %v3076 = vmul.f32 %v2855, %v3057
        %v3077 = vmul.f32 %v2858, %v3057
        %v3078 = vmul.f32 %v2860, %v3057
        %v3079 = vmul.f32 %v2863, %v3057
        %v3080 = vmul.f32 %v2865, %v3057
        %v3081 = vmul.f32 %v2868, %v3057
        %v3082 = vmul.f32 %v2870, %v3057
        %v3083 = vmul.f32 %v2873, %v3057
        %v3084 = vmul.f32 %v2875, %v3057
        %v3085 = vmul.f32 %v2878, %v3057
        %v3086 = vmul.f32 %v2880, %v3057
        %v3087 = vmul.f32 %v2883, %v3057
        %v3088 = vmul.f32 %v2885, %v3057
        %v3089 = vadd.f32 %v3021, %v3058
        %v3090 = vadd.f32 %v3022, %v3058
        %v3091 = vadd.f32 %v3023, %v3059
        %v3092 = vadd.f32 %v3024, %v3060
        %v3093 = vadd.f32 %v3025, %v3061
        %v3094 = vadd.f32 %v3026, %v3062
        %v3095 = vadd.f32 %v3027, %v3063
        %v3096 = vadd.f32 %v3028, %v3064
        %v3097 = vadd.f32 %v3029, %v3065
        %v3098 = vadd.f32 %v3030, %v3066
        %v3099 = vadd.f32 %v3031, %v3067
        %v3100 = vadd.f32 %v3032, %v3068
        %v3101 = vadd.f32 %v3033, %v3069
        %v3102 = vadd.f32 %v3034, %v3070
        %v3103 = vadd.f32 %v3035, %v3071
        %v3104 = vadd.f32 %v3036, %v3072
        %v3105 = vadd.f32 %v3037, %v3073
        %v3106 = vadd.f32 %v3038, %v3074
        %v3107 = vadd.f32 %v3039, %v3075
        %v3108 = vadd.f32 %v3040, %v3076
        %v3109 = vadd.f32 %v3041, %v3077
        %v3110 = vadd.f32 %v3042, %v3078
        %v3111 = vadd.f32 %v3043, %v3079
        %v3112 = vadd.f32 %v3044, %v3080
        %v3113 = vadd.f32 %v3045, %v3081
        %v3114 = vadd.f32 %v3046, %v3082
        %v3115 = vadd.f32 %v3047, %v3083
        %v3116 = vadd.f32 %v3048, %v3084
        %v3117 = vadd.f32 %v3049, %v3085
        %v3118 = vadd.f32 %v3050, %v3086
        %v3119 = vadd.f32 %v3051, %v3087
        %v3120 = vadd.f32 %v3052, %v3088
        %v3121 = vld [vmem:[#allocation5 + $0x19] sm:$0x1]
        %v3122 = vlaneseq
        %v3123 = vshrl.u32 %v3122, 7
        %v3124 = vsub.s32 0, %v3123
        %v3125 = vrot.slane %v3121, %v3124
        %v3126 = vmul.f32 %v2813, %v3125
        %v3127 = vmul.f32 %v2815, %v3125
        %v3128 = vmul.f32 %v2818, %v3125
        %v3129 = vmul.f32 %v2820, %v3125
        %v3130 = vmul.f32 %v2823, %v3125
        %v3131 = vmul.f32 %v2825, %v3125
        %v3132 = vmul.f32 %v2828, %v3125
        %v3133 = vmul.f32 %v2830, %v3125
        %v3134 = vmul.f32 %v2833, %v3125
        %v3135 = vmul.f32 %v2835, %v3125
        %v3136 = vmul.f32 %v2838, %v3125
        %v3137 = vmul.f32 %v2840, %v3125
        %v3138 = vmul.f32 %v2843, %v3125
        %v3139 = vmul.f32 %v2845, %v3125
        %v3140 = vmul.f32 %v2848, %v3125
        %v3141 = vmul.f32 %v2850, %v3125
        %v3142 = vmul.f32 %v2853, %v3125
        %v3143 = vmul.f32 %v2855, %v3125
        %v3144 = vmul.f32 %v2858, %v3125
        %v3145 = vmul.f32 %v2860, %v3125
        %v3146 = vmul.f32 %v2863, %v3125
        %v3147 = vmul.f32 %v2865, %v3125
        %v3148 = vmul.f32 %v2868, %v3125
        %v3149 = vmul.f32 %v2870, %v3125
        %v3150 = vmul.f32 %v2873, %v3125
        %v3151 = vmul.f32 %v2875, %v3125
        %v3152 = vmul.f32 %v2878, %v3125
        %v3153 = vmul.f32 %v2880, %v3125
        %v3154 = vmul.f32 %v2883, %v3125
        %v3155 = vmul.f32 %v2885, %v3125
        %v3156 = vmul.f32 %v2888, %v3125
        %v3157 = vmul.f32 %v2890, %v3125
        %v3158 = vadd.f32 %v3089, %v3126
        %v3159 = vadd.f32 %v3090, %v3127
        %v3160 = vadd.f32 %v3091, %v3128
        %v3161 = vadd.f32 %v3092, %v3129
        %v3162 = vadd.f32 %v3093, %v3130
        %v3163 = vadd.f32 %v3094, %v3131
        %v3164 = vadd.f32 %v3095, %v3132
        %v3165 = vadd.f32 %v3096, %v3133
        %v3166 = vadd.f32 %v3097, %v3134
        %v3167 = vadd.f32 %v3098, %v3135
        %v3168 = vadd.f32 %v3099, %v3136
        %v3169 = vadd.f32 %v3100, %v3137
        %v3170 = vadd.f32 %v3101, %v3138
        %v3171 = vadd.f32 %v3102, %v3139
        %v3172 = vadd.f32 %v3103, %v3140
        %v3173 = vadd.f32 %v3104, %v3141
        %v3174 = vadd.f32 %v3105, %v3142
        %v3175 = vadd.f32 %v3106, %v3143
        %v3176 = vadd.f32 %v3107, %v3144
        %v3177 = vadd.f32 %v3108, %v3145
        %v3178 = vadd.f32 %v3109, %v3146
        %v3179 = vadd.f32 %v3110, %v3147
        %v3180 = vadd.f32 %v3111, %v3148
        %v3181 = vadd.f32 %v3112, %v3149
        %v3182 = vadd.f32 %v3113, %v3150
        %v3183 = vadd.f32 %v3114, %v3151
        %v3184 = vadd.f32 %v3115, %v3152
        %v3185 = vadd.f32 %v3116, %v3153
        %v3186 = vadd.f32 %v3117, %v3154
        %v3187 = vadd.f32 %v3118, %v3155
        %v3188 = vadd.f32 %v3119, %v3156
        %v3189 = vadd.f32 %v3120, %v3157
        %v3190 = vld [vmem:[#allocation5 + $0x20] sm:$0x1]
        %v3191 = vlaneseq
        %v3192 = vshrl.u32 %v3191, 7
        %v3193 = vsub.s32 0, %v3192
        %v3194 = vrot.slane %v3190, %v3193
        %v3195 = vmul.f32 %v2818, %v3194
        %v3196 = vmul.f32 %v2820, %v3194
        %v3197 = vmul.f32 %v2823, %v3194
        %v3198 = vmul.f32 %v2825, %v3194
        %v3199 = vmul.f32 %v2828, %v3194
        %v3200 = vmul.f32 %v2830, %v3194
        %v3201 = vmul.f32 %v2833, %v3194
        %v3202 = vmul.f32 %v2835, %v3194
        %v3203 = vmul.f32 %v2838, %v3194
        %v3204 = vmul.f32 %v2840, %v3194
        %v3205 = vmul.f32 %v2843, %v3194
        %v3206 = vmul.f32 %v2845, %v3194
        %v3207 = vmul.f32 %v2848, %v3194
        %v3208 = vmul.f32 %v2850, %v3194
        %v3209 = vmul.f32 %v2853, %v3194
        %v3210 = vmul.f32 %v2855, %v3194
        %v3211 = vmul.f32 %v2858, %v3194
        %v3212 = vmul.f32 %v2860, %v3194
        %v3213 = vmul.f32 %v2863, %v3194
        %v3214 = vmul.f32 %v2865, %v3194
        %v3215 = vmul.f32 %v2868, %v3194
        %v3216 = vmul.f32 %v2870, %v3194
        %v3217 = vmul.f32 %v2873, %v3194
        %v3218 = vmul.f32 %v2875, %v3194
        %v3219 = vmul.f32 %v2878, %v3194
        %v3220 = vmul.f32 %v2880, %v3194
        %v3221 = vmul.f32 %v2883, %v3194
        %v3222 = vmul.f32 %v2885, %v3194
        %v3223 = vmul.f32 %v2888, %v3194
        %v3224 = vmul.f32 %v2890, %v3194
        %v3225 = vmul.f32 %v3194, 0.0
        %v3226 = vadd.f32 %v3158, %v3195
        %v3227 = vadd.f32 %v3159, %v3196
        %v3228 = vadd.f32 %v3160, %v3197
        %v3229 = vadd.f32 %v3161, %v3198
        %v3230 = vadd.f32 %v3162, %v3199
        %v3231 = vadd.f32 %v3163, %v3200
        %v3232 = vadd.f32 %v3164, %v3201
        %v3233 = vadd.f32 %v3165, %v3202
        %v3234 = vadd.f32 %v3166, %v3203
        %v3235 = vadd.f32 %v3167, %v3204
        %v3236 = vadd.f32 %v3168, %v3205
        %v3237 = vadd.f32 %v3169, %v3206
        %v3238 = vadd.f32 %v3170, %v3207
        %v3239 = vadd.f32 %v3171, %v3208
        %v3240 = vadd.f32 %v3172, %v3209
        %v3241 = vadd.f32 %v3173, %v3210
        %v3242 = vadd.f32 %v3174, %v3211
        %v3243 = vadd.f32 %v3175, %v3212
        %v3244 = vadd.f32 %v3176, %v3213
        %v3245 = vadd.f32 %v3177, %v3214
        %v3246 = vadd.f32 %v3178, %v3215
        %v3247 = vadd.f32 %v3179, %v3216
        %v3248 = vadd.f32 %v3180, %v3217
        %v3249 = vadd.f32 %v3181, %v3218
        %v3250 = vadd.f32 %v3182, %v3219
        %v3251 = vadd.f32 %v3183, %v3220
        %v3252 = vadd.f32 %v3184, %v3221
        %v3253 = vadd.f32 %v3185, %v3222
        %v3254 = vadd.f32 %v3186, %v3223
        %v3255 = vadd.f32 %v3187, %v3224
        %v3256 = vadd.f32 %v3188, %v3225
        %v3257 = vadd.f32 %v3189, %v3225
        %v3258 = vld [vmem:[#allocation5 + $0x27] sm:$0x1]
        %v3259 = vlaneseq
        %v3260 = vshrl.u32 %v3259, 7
        %v3261 = vsub.s32 0, %v3260
        %v3262 = vrot.slane %v3258, %v3261
        %v3263 = vmul.f32 %v2823, %v3262
        %v3264 = vmul.f32 %v2825, %v3262
        %v3265 = vmul.f32 %v2828, %v3262
        %v3266 = vmul.f32 %v2830, %v3262
        %v3267 = vmul.f32 %v2833, %v3262
        %v3268 = vmul.f32 %v2835, %v3262
        %v3269 = vmul.f32 %v2838, %v3262
        %v3270 = vmul.f32 %v2840, %v3262
        %v3271 = vmul.f32 %v2843, %v3262
        %v3272 = vmul.f32 %v2845, %v3262
        %v3273 = vmul.f32 %v2848, %v3262
        %v3274 = vmul.f32 %v2850, %v3262
        %v3275 = vmul.f32 %v2853, %v3262
        %v3276 = vmul.f32 %v2855, %v3262
        %v3277 = vmul.f32 %v2858, %v3262
        %v3278 = vmul.f32 %v2860, %v3262
        %v3279 = vmul.f32 %v2863, %v3262
        %v3280 = vmul.f32 %v2865, %v3262
        %v3281 = vmul.f32 %v2868, %v3262
        %v3282 = vmul.f32 %v2870, %v3262
        %v3283 = vmul.f32 %v2873, %v3262
        %v3284 = vmul.f32 %v2875, %v3262
        %v3285 = vmul.f32 %v2878, %v3262
        %v3286 = vmul.f32 %v2880, %v3262
        %v3287 = vmul.f32 %v2883, %v3262
        %v3288 = vmul.f32 %v2885, %v3262
        %v3289 = vmul.f32 %v2888, %v3262
        %v3290 = vmul.f32 %v2890, %v3262
        %v3291 = vmul.f32 %v3262, 0.0
        %v3292 = vadd.f32 %v3226, %v3263
        %v3293 = vadd.f32 %v3227, %v3264
        %v3294 = vadd.f32 %v3228, %v3265
        %v3295 = vadd.f32 %v3229, %v3266
        %v3296 = vadd.f32 %v3230, %v3267
        %v3297 = vadd.f32 %v3231, %v3268
        %v3298 = vadd.f32 %v3232, %v3269
        %v3299 = vadd.f32 %v3233, %v3270
        %v3300 = vadd.f32 %v3234, %v3271
        %v3301 = vadd.f32 %v3235, %v3272
        %v3302 = vadd.f32 %v3236, %v3273
        %v3303 = vadd.f32 %v3237, %v3274
        %v3304 = vadd.f32 %v3238, %v3275
        %v3305 = vadd.f32 %v3239, %v3276
        %v3306 = vadd.f32 %v3240, %v3277
        %v3307 = vadd.f32 %v3241, %v3278
        %v3308 = vadd.f32 %v3242, %v3279
        %v3309 = vadd.f32 %v3243, %v3280
        %v3310 = vadd.f32 %v3244, %v3281
        %v3311 = vadd.f32 %v3245, %v3282
        %v3312 = vadd.f32 %v3246, %v3283
        %v3313 = vadd.f32 %v3247, %v3284
        %v3314 = vadd.f32 %v3248, %v3285
        %v3315 = vadd.f32 %v3249, %v3286
        %v3316 = vadd.f32 %v3250, %v3287
        %v3317 = vadd.f32 %v3251, %v3288
        %v3318 = vadd.f32 %v3252, %v3289
        %v3319 = vadd.f32 %v3253, %v3290
        %v3320 = vadd.f32 %v3254, %v3291
        %v3321 = vadd.f32 %v3255, %v3291
        %v3322 = vadd.f32 %v3256, %v3291
        %v3323 = vadd.f32 %v3257, %v3291
        %v3324 = vld [vmem:[#allocation5 + $0x2e] sm:$0x1]
        %v3325 = vlaneseq
        %v3326 = vshrl.u32 %v3325, 7
        %v3327 = vsub.s32 0, %v3326
        %v3328 = vrot.slane %v3324, %v3327
        %v3329 = vmul.f32 %v2828, %v3328
        %v3330 = vmul.f32 %v2830, %v3328
        %v3331 = vmul.f32 %v2833, %v3328
        %v3332 = vmul.f32 %v2835, %v3328
        %v3333 = vmul.f32 %v2838, %v3328
        %v3334 = vmul.f32 %v2840, %v3328
        %v3335 = vmul.f32 %v2843, %v3328
        %v3336 = vmul.f32 %v2845, %v3328
        %v3337 = vmul.f32 %v2848, %v3328
        %v3338 = vmul.f32 %v2850, %v3328
        %v3339 = vmul.f32 %v2853, %v3328
        %v3340 = vmul.f32 %v2855, %v3328
        %v3341 = vmul.f32 %v2858, %v3328
        %v3342 = vmul.f32 %v2860, %v3328
        %v3343 = vmul.f32 %v2863, %v3328
        %v3344 = vmul.f32 %v2865, %v3328
        %v3345 = vmul.f32 %v2868, %v3328
        %v3346 = vmul.f32 %v2870, %v3328
        %v3347 = vmul.f32 %v2873, %v3328
        %v3348 = vmul.f32 %v2875, %v3328
        %v3349 = vmul.f32 %v2878, %v3328
        %v3350 = vmul.f32 %v2880, %v3328
        %v3351 = vmul.f32 %v2883, %v3328
        %v3352 = vmul.f32 %v2885, %v3328
        %v3353 = vmul.f32 %v2888, %v3328
        %v3354 = vmul.f32 %v2890, %v3328
        %v3355 = vmul.f32 %v3328, 0.0
        %v3356 = vadd.f32 %v3292, %v3329
        %v3357 = vadd.f32 %v3293, %v3330
        %v3358 = vadd.f32 %v3294, %v3331
        %v3359 = vadd.f32 %v3295, %v3332
        %v3360 = vadd.f32 %v3296, %v3333
        %v3361 = vadd.f32 %v3297, %v3334
        %v3362 = vadd.f32 %v3298, %v3335
        %v3363 = vadd.f32 %v3299, %v3336
        %v3364 = vadd.f32 %v3300, %v3337
        %v3365 = vadd.f32 %v3301, %v3338
        %v3366 = vadd.f32 %v3302, %v3339
        %v3367 = vadd.f32 %v3303, %v3340
        %v3368 = vadd.f32 %v3304, %v3341
        %v3369 = vadd.f32 %v3305, %v3342
        %v3370 = vadd.f32 %v3306, %v3343
        %v3371 = vadd.f32 %v3307, %v3344
        %v3372 = vadd.f32 %v3308, %v3345
        %v3373 = vadd.f32 %v3309, %v3346
        %v3374 = vadd.f32 %v3310, %v3347
        %v3375 = vadd.f32 %v3311, %v3348
        %v3376 = vadd.f32 %v3312, %v3349
        %v3377 = vadd.f32 %v3313, %v3350
        %v3378 = vadd.f32 %v3314, %v3351
        %v3379 = vadd.f32 %v3315, %v3352
        %v3380 = vadd.f32 %v3316, %v3353
        %v3381 = vadd.f32 %v3317, %v3354
        %v3382 = vadd.f32 %v3318, %v3355
        %v3383 = vadd.f32 %v3319, %v3355
        %v3384 = vadd.f32 %v3320, %v3355
        %v3385 = vadd.f32 %v3321, %v3355
        %v3386 = vadd.f32 %v3322, %v3355
        %v3387 = vadd.f32 %v3323, %v3355
        %v3388 = vrot.slane %v556, 5
        %v3389 = vrot.slane %v462, 5
        %v3390 = vsel %vm459, %v3388, %v3389
        %v3391 = vrot.slane %v572, 5
        %v3392 = vsel %vm459, %v3389, %v3391
        %v3393 = vrot.slane %v557, 5
        %v3394 = vrot.slane %v465, 5
        %v3395 = vsel %vm459, %v3393, %v3394
        %v3396 = vrot.slane %v573, 5
        %v3397 = vsel %vm459, %v3394, %v3396
        %v3398 = vrot.slane %v558, 5
        %v3399 = vrot.slane %v468, 5
        %v3400 = vsel %vm459, %v3398, %v3399
        %v3401 = vrot.slane %v574, 5
        %v3402 = vsel %vm459, %v3399, %v3401
        %v3403 = vrot.slane %v559, 5
        %v3404 = vrot.slane %v471, 5
        %v3405 = vsel %vm459, %v3403, %v3404
        %v3406 = vrot.slane %v575, 5
        %v3407 = vsel %vm459, %v3404, %v3406
        %v3408 = vrot.slane %v560, 5
        %v3409 = vrot.slane %v474, 5
        %v3410 = vsel %vm459, %v3408, %v3409
        %v3411 = vrot.slane %v576, 5
        %v3412 = vsel %vm459, %v3409, %v3411
        %v3413 = vrot.slane %v561, 5
        %v3414 = vrot.slane %v477, 5
        %v3415 = vsel %vm459, %v3413, %v3414
        %v3416 = vrot.slane %v577, 5
        %v3417 = vsel %vm459, %v3414, %v3416
        %v3418 = vrot.slane %v562, 5
        %v3419 = vrot.slane %v480, 5
        %v3420 = vsel %vm459, %v3418, %v3419
        %v3421 = vrot.slane %v578, 5
        %v3422 = vsel %vm459, %v3419, %v3421
        %v3423 = vrot.slane %v563, 5
        %v3424 = vrot.slane %v483, 5
        %v3425 = vsel %vm459, %v3423, %v3424
        %v3426 = vrot.slane %v579, 5
        %v3427 = vsel %vm459, %v3424, %v3426
        %v3428 = vrot.slane %v564, 5
        %v3429 = vrot.slane %v486, 5
        %v3430 = vsel %vm459, %v3428, %v3429
        %v3431 = vrot.slane %v580, 5
        %v3432 = vsel %vm459, %v3429, %v3431
        %v3433 = vrot.slane %v565, 5
        %v3434 = vrot.slane %v489, 5
        %v3435 = vsel %vm459, %v3433, %v3434
        %v3436 = vrot.slane %v581, 5
        %v3437 = vsel %vm459, %v3434, %v3436
        %v3438 = vrot.slane %v566, 5
        %v3439 = vrot.slane %v492, 5
        %v3440 = vsel %vm459, %v3438, %v3439
        %v3441 = vrot.slane %v582, 5
        %v3442 = vsel %vm459, %v3439, %v3441
        %v3443 = vrot.slane %v567, 5
        %v3444 = vrot.slane %v495, 5
        %v3445 = vsel %vm459, %v3443, %v3444
        %v3446 = vrot.slane %v583, 5
        %v3447 = vsel %vm459, %v3444, %v3446
        %v3448 = vrot.slane %v568, 5
        %v3449 = vrot.slane %v498, 5
        %v3450 = vsel %vm459, %v3448, %v3449
        %v3451 = vrot.slane %v584, 5
        %v3452 = vsel %vm459, %v3449, %v3451
        %v3453 = vrot.slane %v569, 5
        %v3454 = vrot.slane %v501, 5
        %v3455 = vsel %vm459, %v3453, %v3454
        %v3456 = vrot.slane %v585, 5
        %v3457 = vsel %vm459, %v3454, %v3456
        %v3458 = vrot.slane %v570, 5
        %v3459 = vrot.slane %v504, 5
        %v3460 = vsel %vm459, %v3458, %v3459
        %v3461 = vrot.slane %v586, 5
        %v3462 = vsel %vm459, %v3459, %v3461
        %v3463 = vrot.slane %v571, 5
        %v3464 = vrot.slane %v507, 5
        %v3465 = vsel %vm459, %v3463, %v3464
        %v3466 = vrot.slane %v587, 5
        %v3467 = vsel %vm459, %v3464, %v3466
        %v3500 = vld [vmem:[#allocation5 + $0x5] sm:$0x1]
        %v3501 = vlaneseq
        %v3502 = vshrl.u32 %v3501, 7
        %v3503 = vsub.s32 0, %v3502
        %v3504 = vrot.slane %v3500, %v3503
        %v3505 = vmul.f32 %v3504, 0.0
        %v3506 = vmul.f32 %v3390, %v3504
        %v3507 = vmul.f32 %v3392, %v3504
        %v3508 = vmul.f32 %v3395, %v3504
        %v3509 = vmul.f32 %v3397, %v3504
        %v3510 = vmul.f32 %v3400, %v3504
        %v3511 = vmul.f32 %v3402, %v3504
        %v3512 = vmul.f32 %v3405, %v3504
        %v3513 = vmul.f32 %v3407, %v3504
        %v3514 = vmul.f32 %v3410, %v3504
        %v3515 = vmul.f32 %v3412, %v3504
        %v3516 = vmul.f32 %v3415, %v3504
        %v3517 = vmul.f32 %v3417, %v3504
        %v3518 = vmul.f32 %v3420, %v3504
        %v3519 = vmul.f32 %v3422, %v3504
        %v3520 = vmul.f32 %v3425, %v3504
        %v3521 = vmul.f32 %v3427, %v3504
        %v3522 = vmul.f32 %v3430, %v3504
        %v3523 = vmul.f32 %v3432, %v3504
        %v3524 = vmul.f32 %v3435, %v3504
        %v3525 = vmul.f32 %v3437, %v3504
        %v3526 = vmul.f32 %v3440, %v3504
        %v3527 = vmul.f32 %v3442, %v3504
        %v3528 = vmul.f32 %v3445, %v3504
        %v3529 = vmul.f32 %v3447, %v3504
        %v3530 = vmul.f32 %v3450, %v3504
        %v3531 = vmul.f32 %v3452, %v3504
        %v3532 = vadd.f32 %v3356, %v3505
        %v3533 = vadd.f32 %v3357, %v3505
        %v3534 = vadd.f32 %v3358, %v3505
        %v3535 = vadd.f32 %v3359, %v3505
        %v3536 = vadd.f32 %v3360, %v3505
        %v3537 = vadd.f32 %v3361, %v3505
        %v3538 = vadd.f32 %v3362, %v3506
        %v3539 = vadd.f32 %v3363, %v3507
        %v3540 = vadd.f32 %v3364, %v3508
        %v3541 = vadd.f32 %v3365, %v3509
        %v3542 = vadd.f32 %v3366, %v3510
        %v3543 = vadd.f32 %v3367, %v3511
        %v3544 = vadd.f32 %v3368, %v3512
        %v3545 = vadd.f32 %v3369, %v3513
        %v3546 = vadd.f32 %v3370, %v3514
        %v3547 = vadd.f32 %v3371, %v3515
        %v3548 = vadd.f32 %v3372, %v3516
        %v3549 = vadd.f32 %v3373, %v3517
        %v3550 = vadd.f32 %v3374, %v3518
        %v3551 = vadd.f32 %v3375, %v3519
        %v3552 = vadd.f32 %v3376, %v3520
        %v3553 = vadd.f32 %v3377, %v3521
        %v3554 = vadd.f32 %v3378, %v3522
        %v3555 = vadd.f32 %v3379, %v3523
        %v3556 = vadd.f32 %v3380, %v3524
        %v3557 = vadd.f32 %v3381, %v3525
        %v3558 = vadd.f32 %v3382, %v3526
        %v3559 = vadd.f32 %v3383, %v3527
        %v3560 = vadd.f32 %v3384, %v3528
        %v3561 = vadd.f32 %v3385, %v3529
        %v3562 = vadd.f32 %v3386, %v3530
        %v3563 = vadd.f32 %v3387, %v3531
        %v3564 = vld [vmem:[#allocation5 + $0xc] sm:$0x1]
        %v3565 = vlaneseq
        %v3566 = vshrl.u32 %v3565, 7
        %v3567 = vsub.s32 0, %v3566
        %v3568 = vrot.slane %v3564, %v3567
        %v3569 = vmul.f32 %v3568, 0.0
        %v3570 = vmul.f32 %v3390, %v3568
        %v3571 = vmul.f32 %v3392, %v3568
        %v3572 = vmul.f32 %v3395, %v3568
        %v3573 = vmul.f32 %v3397, %v3568
        %v3574 = vmul.f32 %v3400, %v3568
        %v3575 = vmul.f32 %v3402, %v3568
        %v3576 = vmul.f32 %v3405, %v3568
        %v3577 = vmul.f32 %v3407, %v3568
        %v3578 = vmul.f32 %v3410, %v3568
        %v3579 = vmul.f32 %v3412, %v3568
        %v3580 = vmul.f32 %v3415, %v3568
        %v3581 = vmul.f32 %v3417, %v3568
        %v3582 = vmul.f32 %v3420, %v3568
        %v3583 = vmul.f32 %v3422, %v3568
        %v3584 = vmul.f32 %v3425, %v3568
        %v3585 = vmul.f32 %v3427, %v3568
        %v3586 = vmul.f32 %v3430, %v3568
        %v3587 = vmul.f32 %v3432, %v3568
        %v3588 = vmul.f32 %v3435, %v3568
        %v3589 = vmul.f32 %v3437, %v3568
        %v3590 = vmul.f32 %v3440, %v3568
        %v3591 = vmul.f32 %v3442, %v3568
        %v3592 = vmul.f32 %v3445, %v3568
        %v3593 = vmul.f32 %v3447, %v3568
        %v3594 = vmul.f32 %v3450, %v3568
        %v3595 = vmul.f32 %v3452, %v3568
        %v3596 = vmul.f32 %v3455, %v3568
        %v3597 = vmul.f32 %v3457, %v3568
        %v3598 = vadd.f32 %v3532, %v3569
        %v3599 = vadd.f32 %v3533, %v3569
        %v3600 = vadd.f32 %v3534, %v3569
        %v3601 = vadd.f32 %v3535, %v3569
        %v3602 = vadd.f32 %v3536, %v3570
        %v3603 = vadd.f32 %v3537, %v3571
        %v3604 = vadd.f32 %v3538, %v3572
        %v3605 = vadd.f32 %v3539, %v3573
        %v3606 = vadd.f32 %v3540, %v3574
        %v3607 = vadd.f32 %v3541, %v3575
        %v3608 = vadd.f32 %v3542, %v3576
        %v3609 = vadd.f32 %v3543, %v3577
        %v3610 = vadd.f32 %v3544, %v3578
        %v3611 = vadd.f32 %v3545, %v3579
        %v3612 = vadd.f32 %v3546, %v3580
        %v3613 = vadd.f32 %v3547, %v3581
        %v3614 = vadd.f32 %v3548, %v3582
        %v3615 = vadd.f32 %v3549, %v3583
        %v3616 = vadd.f32 %v3550, %v3584
        %v3617 = vadd.f32 %v3551, %v3585
        %v3618 = vadd.f32 %v3552, %v3586
        %v3619 = vadd.f32 %v3553, %v3587
        %v3620 = vadd.f32 %v3554, %v3588
        %v3621 = vadd.f32 %v3555, %v3589
        %v3622 = vadd.f32 %v3556, %v3590
        %v3623 = vadd.f32 %v3557, %v3591
        %v3624 = vadd.f32 %v3558, %v3592
        %v3625 = vadd.f32 %v3559, %v3593
        %v3626 = vadd.f32 %v3560, %v3594
        %v3627 = vadd.f32 %v3561, %v3595
        %v3628 = vadd.f32 %v3562, %v3596
        %v3629 = vadd.f32 %v3563, %v3597
        %v3630 = vld [vmem:[#allocation5 + $0x13] sm:$0x1]
        %v3631 = vlaneseq
        %v3632 = vshrl.u32 %v3631, 7
        %v3633 = vsub.s32 0, %v3632
        %v3634 = vrot.slane %v3630, %v3633
        %v3635 = vmul.f32 %v3634, 0.0
        %v3636 = vmul.f32 %v3390, %v3634
        %v3637 = vmul.f32 %v3392, %v3634
        %v3638 = vmul.f32 %v3395, %v3634
        %v3639 = vmul.f32 %v3397, %v3634
        %v3640 = vmul.f32 %v3400, %v3634
        %v3641 = vmul.f32 %v3402, %v3634
        %v3642 = vmul.f32 %v3405, %v3634
        %v3643 = vmul.f32 %v3407, %v3634
        %v3644 = vmul.f32 %v3410, %v3634
        %v3645 = vmul.f32 %v3412, %v3634
        %v3646 = vmul.f32 %v3415, %v3634
        %v3647 = vmul.f32 %v3417, %v3634
        %v3648 = vmul.f32 %v3420, %v3634
        %v3649 = vmul.f32 %v3422, %v3634
        %v3650 = vmul.f32 %v3425, %v3634
        %v3651 = vmul.f32 %v3427, %v3634
        %v3652 = vmul.f32 %v3430, %v3634
        %v3653 = vmul.f32 %v3432, %v3634
        %v3654 = vmul.f32 %v3435, %v3634
        %v3655 = vmul.f32 %v3437, %v3634
        %v3656 = vmul.f32 %v3440, %v3634
        %v3657 = vmul.f32 %v3442, %v3634
        %v3658 = vmul.f32 %v3445, %v3634
        %v3659 = vmul.f32 %v3447, %v3634
        %v3660 = vmul.f32 %v3450, %v3634
        %v3661 = vmul.f32 %v3452, %v3634
        %v3662 = vmul.f32 %v3455, %v3634
        %v3663 = vmul.f32 %v3457, %v3634
        %v3664 = vmul.f32 %v3460, %v3634
        %v3665 = vmul.f32 %v3462, %v3634
        %v3666 = vadd.f32 %v3598, %v3635
        %v3667 = vadd.f32 %v3599, %v3635
        %v3668 = vadd.f32 %v3600, %v3636
        %v3669 = vadd.f32 %v3601, %v3637
        %v3670 = vadd.f32 %v3602, %v3638
        %v3671 = vadd.f32 %v3603, %v3639
        %v3672 = vadd.f32 %v3604, %v3640
        %v3673 = vadd.f32 %v3605, %v3641
        %v3674 = vadd.f32 %v3606, %v3642
        %v3675 = vadd.f32 %v3607, %v3643
        %v3676 = vadd.f32 %v3608, %v3644
        %v3677 = vadd.f32 %v3609, %v3645
        %v3678 = vadd.f32 %v3610, %v3646
        %v3679 = vadd.f32 %v3611, %v3647
        %v3680 = vadd.f32 %v3612, %v3648
        %v3681 = vadd.f32 %v3613, %v3649
        %v3682 = vadd.f32 %v3614, %v3650
        %v3683 = vadd.f32 %v3615, %v3651
        %v3684 = vadd.f32 %v3616, %v3652
        %v3685 = vadd.f32 %v3617, %v3653
        %v3686 = vadd.f32 %v3618, %v3654
        %v3687 = vadd.f32 %v3619, %v3655
        %v3688 = vadd.f32 %v3620, %v3656
        %v3689 = vadd.f32 %v3621, %v3657
        %v3690 = vadd.f32 %v3622, %v3658
        %v3691 = vadd.f32 %v3623, %v3659
        %v3692 = vadd.f32 %v3624, %v3660
        %v3693 = vadd.f32 %v3625, %v3661
        %v3694 = vadd.f32 %v3626, %v3662
        %v3695 = vadd.f32 %v3627, %v3663
        %v3696 = vadd.f32 %v3628, %v3664
        %v3697 = vadd.f32 %v3629, %v3665
        %v3698 = vld [vmem:[#allocation5 + $0x1a] sm:$0x1]
        %v3699 = vlaneseq
        %v3700 = vshrl.u32 %v3699, 7
        %v3701 = vsub.s32 0, %v3700
        %v3702 = vrot.slane %v3698, %v3701
        %v3703 = vmul.f32 %v3390, %v3702
        %v3704 = vmul.f32 %v3392, %v3702
        %v3705 = vmul.f32 %v3395, %v3702
        %v3706 = vmul.f32 %v3397, %v3702
        %v3707 = vmul.f32 %v3400, %v3702
        %v3708 = vmul.f32 %v3402, %v3702
        %v3709 = vmul.f32 %v3405, %v3702
        %v3710 = vmul.f32 %v3407, %v3702
        %v3711 = vmul.f32 %v3410, %v3702
        %v3712 = vmul.f32 %v3412, %v3702
        %v3713 = vmul.f32 %v3415, %v3702
        %v3714 = vmul.f32 %v3417, %v3702
        %v3715 = vmul.f32 %v3420, %v3702
        %v3716 = vmul.f32 %v3422, %v3702
        %v3717 = vmul.f32 %v3425, %v3702
        %v3718 = vmul.f32 %v3427, %v3702
        %v3719 = vmul.f32 %v3430, %v3702
        %v3720 = vmul.f32 %v3432, %v3702
        %v3721 = vmul.f32 %v3435, %v3702
        %v3722 = vmul.f32 %v3437, %v3702
        %v3723 = vmul.f32 %v3440, %v3702
        %v3724 = vmul.f32 %v3442, %v3702
        %v3725 = vmul.f32 %v3445, %v3702
        %v3726 = vmul.f32 %v3447, %v3702
        %v3727 = vmul.f32 %v3450, %v3702
        %v3728 = vmul.f32 %v3452, %v3702
        %v3729 = vmul.f32 %v3455, %v3702
        %v3730 = vmul.f32 %v3457, %v3702
        %v3731 = vmul.f32 %v3460, %v3702
        %v3732 = vmul.f32 %v3462, %v3702
        %v3733 = vmul.f32 %v3465, %v3702
        %v3734 = vmul.f32 %v3467, %v3702
        %v3735 = vadd.f32 %v3666, %v3703
        %v3736 = vadd.f32 %v3667, %v3704
        %v3737 = vadd.f32 %v3668, %v3705
        %v3738 = vadd.f32 %v3669, %v3706
        %v3739 = vadd.f32 %v3670, %v3707
        %v3740 = vadd.f32 %v3671, %v3708
        %v3741 = vadd.f32 %v3672, %v3709
        %v3742 = vadd.f32 %v3673, %v3710
        %v3743 = vadd.f32 %v3674, %v3711
        %v3744 = vadd.f32 %v3675, %v3712
        %v3745 = vadd.f32 %v3676, %v3713
        %v3746 = vadd.f32 %v3677, %v3714
        %v3747 = vadd.f32 %v3678, %v3715
        %v3748 = vadd.f32 %v3679, %v3716
        %v3749 = vadd.f32 %v3680, %v3717
        %v3750 = vadd.f32 %v3681, %v3718
        %v3751 = vadd.f32 %v3682, %v3719
        %v3752 = vadd.f32 %v3683, %v3720
        %v3753 = vadd.f32 %v3684, %v3721
        %v3754 = vadd.f32 %v3685, %v3722
        %v3755 = vadd.f32 %v3686, %v3723
        %v3756 = vadd.f32 %v3687, %v3724
        %v3757 = vadd.f32 %v3688, %v3725
        %v3758 = vadd.f32 %v3689, %v3726
        %v3759 = vadd.f32 %v3690, %v3727
        %v3760 = vadd.f32 %v3691, %v3728
        %v3761 = vadd.f32 %v3692, %v3729
        %v3762 = vadd.f32 %v3693, %v3730
        %v3763 = vadd.f32 %v3694, %v3731
        %v3764 = vadd.f32 %v3695, %v3732
        %v3765 = vadd.f32 %v3696, %v3733
        %v3766 = vadd.f32 %v3697, %v3734
        %v3767 = vld [vmem:[#allocation5 + $0x21] sm:$0x1]
        %v3768 = vlaneseq
        %v3769 = vshrl.u32 %v3768, 7
        %v3770 = vsub.s32 0, %v3769
        %v3771 = vrot.slane %v3767, %v3770
        %v3772 = vmul.f32 %v3395, %v3771
        %v3773 = vmul.f32 %v3397, %v3771
        %v3774 = vmul.f32 %v3400, %v3771
        %v3775 = vmul.f32 %v3402, %v3771
        %v3776 = vmul.f32 %v3405, %v3771
        %v3777 = vmul.f32 %v3407, %v3771
        %v3778 = vmul.f32 %v3410, %v3771
        %v3779 = vmul.f32 %v3412, %v3771
        %v3780 = vmul.f32 %v3415, %v3771
        %v3781 = vmul.f32 %v3417, %v3771
        %v3782 = vmul.f32 %v3420, %v3771
        %v3783 = vmul.f32 %v3422, %v3771
        %v3784 = vmul.f32 %v3425, %v3771
        %v3785 = vmul.f32 %v3427, %v3771
        %v3786 = vmul.f32 %v3430, %v3771
        %v3787 = vmul.f32 %v3432, %v3771
        %v3788 = vmul.f32 %v3435, %v3771
        %v3789 = vmul.f32 %v3437, %v3771
        %v3790 = vmul.f32 %v3440, %v3771
        %v3791 = vmul.f32 %v3442, %v3771
        %v3792 = vmul.f32 %v3445, %v3771
        %v3793 = vmul.f32 %v3447, %v3771
        %v3794 = vmul.f32 %v3450, %v3771
        %v3795 = vmul.f32 %v3452, %v3771
        %v3796 = vmul.f32 %v3455, %v3771
        %v3797 = vmul.f32 %v3457, %v3771
        %v3798 = vmul.f32 %v3460, %v3771
        %v3799 = vmul.f32 %v3462, %v3771
        %v3800 = vmul.f32 %v3465, %v3771
        %v3801 = vmul.f32 %v3467, %v3771
        %v3802 = vmul.f32 %v3771, 0.0
        %v3803 = vadd.f32 %v3735, %v3772
        %v3804 = vadd.f32 %v3736, %v3773
        %v3805 = vadd.f32 %v3737, %v3774
        %v3806 = vadd.f32 %v3738, %v3775
        %v3807 = vadd.f32 %v3739, %v3776
        %v3808 = vadd.f32 %v3740, %v3777
        %v3809 = vadd.f32 %v3741, %v3778
        %v3810 = vadd.f32 %v3742, %v3779
        %v3811 = vadd.f32 %v3743, %v3780
        %v3812 = vadd.f32 %v3744, %v3781
        %v3813 = vadd.f32 %v3745, %v3782
        %v3814 = vadd.f32 %v3746, %v3783
        %v3815 = vadd.f32 %v3747, %v3784
        %v3816 = vadd.f32 %v3748, %v3785
        %v3817 = vadd.f32 %v3749, %v3786
        %v3818 = vadd.f32 %v3750, %v3787
        %v3819 = vadd.f32 %v3751, %v3788
        %v3820 = vadd.f32 %v3752, %v3789
        %v3821 = vadd.f32 %v3753, %v3790
        %v3822 = vadd.f32 %v3754, %v3791
        %v3823 = vadd.f32 %v3755, %v3792
        %v3824 = vadd.f32 %v3756, %v3793
        %v3825 = vadd.f32 %v3757, %v3794
        %v3826 = vadd.f32 %v3758, %v3795
        %v3827 = vadd.f32 %v3759, %v3796
        %v3828 = vadd.f32 %v3760, %v3797
        %v3829 = vadd.f32 %v3761, %v3798
        %v3830 = vadd.f32 %v3762, %v3799
        %v3831 = vadd.f32 %v3763, %v3800
        %v3832 = vadd.f32 %v3764, %v3801
        %v3833 = vadd.f32 %v3765, %v3802
        %v3834 = vadd.f32 %v3766, %v3802
        %v3835 = vld [vmem:[#allocation5 + $0x28] sm:$0x1]
        %v3836 = vlaneseq
        %v3837 = vshrl.u32 %v3836, 7
        %v3838 = vsub.s32 0, %v3837
        %v3839 = vrot.slane %v3835, %v3838
        %v3840 = vmul.f32 %v3400, %v3839
        %v3841 = vmul.f32 %v3402, %v3839
        %v3842 = vmul.f32 %v3405, %v3839
        %v3843 = vmul.f32 %v3407, %v3839
        %v3844 = vmul.f32 %v3410, %v3839
        %v3845 = vmul.f32 %v3412, %v3839
        %v3846 = vmul.f32 %v3415, %v3839
        %v3847 = vmul.f32 %v3417, %v3839
        %v3848 = vmul.f32 %v3420, %v3839
        %v3849 = vmul.f32 %v3422, %v3839
        %v3850 = vmul.f32 %v3425, %v3839
        %v3851 = vmul.f32 %v3427, %v3839
        %v3852 = vmul.f32 %v3430, %v3839
        %v3853 = vmul.f32 %v3432, %v3839
        %v3854 = vmul.f32 %v3435, %v3839
        %v3855 = vmul.f32 %v3437, %v3839
        %v3856 = vmul.f32 %v3440, %v3839
        %v3857 = vmul.f32 %v3442, %v3839
        %v3858 = vmul.f32 %v3445, %v3839
        %v3859 = vmul.f32 %v3447, %v3839
        %v3860 = vmul.f32 %v3450, %v3839
        %v3861 = vmul.f32 %v3452, %v3839
        %v3862 = vmul.f32 %v3455, %v3839
        %v3863 = vmul.f32 %v3457, %v3839
        %v3864 = vmul.f32 %v3460, %v3839
        %v3865 = vmul.f32 %v3462, %v3839
        %v3866 = vmul.f32 %v3465, %v3839
        %v3867 = vmul.f32 %v3467, %v3839
        %v3868 = vmul.f32 %v3839, 0.0
        %v3869 = vadd.f32 %v3803, %v3840
        %v3870 = vadd.f32 %v3804, %v3841
        %v3871 = vadd.f32 %v3805, %v3842
        %v3872 = vadd.f32 %v3806, %v3843
        %v3873 = vadd.f32 %v3807, %v3844
        %v3874 = vadd.f32 %v3808, %v3845
        %v3875 = vadd.f32 %v3809, %v3846
        %v3876 = vadd.f32 %v3810, %v3847
        %v3877 = vadd.f32 %v3811, %v3848
        %v3878 = vadd.f32 %v3812, %v3849
        %v3879 = vadd.f32 %v3813, %v3850
        %v3880 = vadd.f32 %v3814, %v3851
        %v3881 = vadd.f32 %v3815, %v3852
        %v3882 = vadd.f32 %v3816, %v3853
        %v3883 = vadd.f32 %v3817, %v3854
        %v3884 = vadd.f32 %v3818, %v3855
        %v3885 = vadd.f32 %v3819, %v3856
        %v3886 = vadd.f32 %v3820, %v3857
        %v3887 = vadd.f32 %v3821, %v3858
        %v3888 = vadd.f32 %v3822, %v3859
        %v3889 = vadd.f32 %v3823, %v3860
        %v3890 = vadd.f32 %v3824, %v3861
        %v3891 = vadd.f32 %v3825, %v3862
        %v3892 = vadd.f32 %v3826, %v3863
        %v3893 = vadd.f32 %v3827, %v3864
        %v3894 = vadd.f32 %v3828, %v3865
        %v3895 = vadd.f32 %v3829, %v3866
        %v3896 = vadd.f32 %v3830, %v3867
        %v3897 = vadd.f32 %v3831, %v3868
        %v3898 = vadd.f32 %v3832, %v3868
        %v3899 = vadd.f32 %v3833, %v3868
        %v3900 = vadd.f32 %v3834, %v3868
        %v3901 = vld [vmem:[#allocation5 + $0x2f] sm:$0x1]
        %v3902 = vlaneseq
        %v3903 = vshrl.u32 %v3902, 7
        %v3904 = vsub.s32 0, %v3903
        %v3905 = vrot.slane %v3901, %v3904
        %v3906 = vmul.f32 %v3405, %v3905
        %v3907 = vmul.f32 %v3407, %v3905
        %v3908 = vmul.f32 %v3410, %v3905
        %v3909 = vmul.f32 %v3412, %v3905
        %v3910 = vmul.f32 %v3415, %v3905
        %v3911 = vmul.f32 %v3417, %v3905
        %v3912 = vmul.f32 %v3420, %v3905
        %v3913 = vmul.f32 %v3422, %v3905
        %v3914 = vmul.f32 %v3425, %v3905
        %v3915 = vmul.f32 %v3427, %v3905
        %v3916 = vmul.f32 %v3430, %v3905
        %v3917 = vmul.f32 %v3432, %v3905
        %v3918 = vmul.f32 %v3435, %v3905
        %v3919 = vmul.f32 %v3437, %v3905
        %v3920 = vmul.f32 %v3440, %v3905
        %v3921 = vmul.f32 %v3442, %v3905
        %v3922 = vmul.f32 %v3445, %v3905
        %v3923 = vmul.f32 %v3447, %v3905
        %v3924 = vmul.f32 %v3450, %v3905
        %v3925 = vmul.f32 %v3452, %v3905
        %v3926 = vmul.f32 %v3455, %v3905
        %v3927 = vmul.f32 %v3457, %v3905
        %v3928 = vmul.f32 %v3460, %v3905
        %v3929 = vmul.f32 %v3462, %v3905
        %v3930 = vmul.f32 %v3465, %v3905
        %v3931 = vmul.f32 %v3467, %v3905
        %v3932 = vmul.f32 %v3905, 0.0
        %v3933 = vadd.f32 %v3869, %v3906
        %v3934 = vadd.f32 %v3870, %v3907
        %v3935 = vadd.f32 %v3871, %v3908
        %v3936 = vadd.f32 %v3872, %v3909
        %v3937 = vadd.f32 %v3873, %v3910
        %v3938 = vadd.f32 %v3874, %v3911
        %v3939 = vadd.f32 %v3875, %v3912
        %v3940 = vadd.f32 %v3876, %v3913
        %v3941 = vadd.f32 %v3877, %v3914
        %v3942 = vadd.f32 %v3878, %v3915
        %v3943 = vadd.f32 %v3879, %v3916
        %v3944 = vadd.f32 %v3880, %v3917
        %v3945 = vadd.f32 %v3881, %v3918
        %v3946 = vadd.f32 %v3882, %v3919
        %v3947 = vadd.f32 %v3883, %v3920
        %v3948 = vadd.f32 %v3884, %v3921
        %v3949 = vadd.f32 %v3885, %v3922
        %v3950 = vadd.f32 %v3886, %v3923
        %v3951 = vadd.f32 %v3887, %v3924
        %v3952 = vadd.f32 %v3888, %v3925
        %v3953 = vadd.f32 %v3889, %v3926
        %v3954 = vadd.f32 %v3890, %v3927
        %v3955 = vadd.f32 %v3891, %v3928
        %v3956 = vadd.f32 %v3892, %v3929
        %v3957 = vadd.f32 %v3893, %v3930
        %v3958 = vadd.f32 %v3894, %v3931
        %v3959 = vadd.f32 %v3895, %v3932
        %v3960 = vadd.f32 %v3896, %v3932
        %v3961 = vadd.f32 %v3897, %v3932
        %v3962 = vadd.f32 %v3898, %v3932
        %v3963 = vadd.f32 %v3899, %v3932
        %v3964 = vadd.f32 %v3900, %v3932
        %vm3965 = vcmask 1041408
        %v3966 = vrot.slane %v556, 6
        %v3967 = vrot.slane %v462, 6
        %v3968 = vsel %vm3965, %v3966, %v3967
        %v3969 = vrot.slane %v572, 6
        %v3970 = vsel %vm3965, %v3967, %v3969
        %v3971 = vrot.slane %v557, 6
        %v3972 = vrot.slane %v465, 6
        %v3973 = vsel %vm3965, %v3971, %v3972
        %v3974 = vrot.slane %v573, 6
        %v3975 = vsel %vm3965, %v3972, %v3974
        %v3976 = vrot.slane %v558, 6
        %v3977 = vrot.slane %v468, 6
        %v3978 = vsel %vm3965, %v3976, %v3977
        %v3979 = vrot.slane %v574, 6
        %v3980 = vsel %vm3965, %v3977, %v3979
        %v3981 = vrot.slane %v559, 6
        %v3982 = vrot.slane %v471, 6
        %v3983 = vsel %vm3965, %v3981, %v3982
        %v3984 = vrot.slane %v575, 6
        %v3985 = vsel %vm3965, %v3982, %v3984
        %v3986 = vrot.slane %v560, 6
        %v3987 = vrot.slane %v474, 6
        %v3988 = vsel %vm3965, %v3986, %v3987
        %v3989 = vrot.slane %v576, 6
        %v3990 = vsel %vm3965, %v3987, %v3989
        %v3991 = vrot.slane %v561, 6
        %v3992 = vrot.slane %v477, 6
        %v3993 = vsel %vm3965, %v3991, %v3992
        %v3994 = vrot.slane %v577, 6
        %v3995 = vsel %vm3965, %v3992, %v3994
        %v3996 = vrot.slane %v562, 6
        %v3997 = vrot.slane %v480, 6
        %v3998 = vsel %vm3965, %v3996, %v3997
        %v3999 = vrot.slane %v578, 6
        %v4000 = vsel %vm3965, %v3997, %v3999
        %v4001 = vrot.slane %v563, 6
        %v4002 = vrot.slane %v483, 6
        %v4003 = vsel %vm3965, %v4001, %v4002
        %v4004 = vrot.slane %v579, 6
        %v4005 = vsel %vm3965, %v4002, %v4004
        %v4006 = vrot.slane %v564, 6
        %v4007 = vrot.slane %v486, 6
        %v4008 = vsel %vm3965, %v4006, %v4007
        %v4009 = vrot.slane %v580, 6
        %v4010 = vsel %vm3965, %v4007, %v4009
        %v4011 = vrot.slane %v565, 6
        %v4012 = vrot.slane %v489, 6
        %v4013 = vsel %vm3965, %v4011, %v4012
        %v4014 = vrot.slane %v581, 6
        %v4015 = vsel %vm3965, %v4012, %v4014
        %v4016 = vrot.slane %v566, 6
        %v4017 = vrot.slane %v492, 6
        %v4018 = vsel %vm3965, %v4016, %v4017
        %v4019 = vrot.slane %v582, 6
        %v4020 = vsel %vm3965, %v4017, %v4019
        %v4021 = vrot.slane %v567, 6
        %v4022 = vrot.slane %v495, 6
        %v4023 = vsel %vm3965, %v4021, %v4022
        %v4024 = vrot.slane %v583, 6
        %v4025 = vsel %vm3965, %v4022, %v4024
        %v4026 = vrot.slane %v568, 6
        %v4027 = vrot.slane %v498, 6
        %v4028 = vsel %vm3965, %v4026, %v4027
        %v4029 = vrot.slane %v584, 6
        %v4030 = vsel %vm3965, %v4027, %v4029
        %v4031 = vrot.slane %v569, 6
        %v4032 = vrot.slane %v501, 6
        %v4033 = vsel %vm3965, %v4031, %v4032
        %v4034 = vrot.slane %v585, 6
        %v4035 = vsel %vm3965, %v4032, %v4034
        %v4036 = vrot.slane %v570, 6
        %v4037 = vrot.slane %v504, 6
        %v4038 = vsel %vm3965, %v4036, %v4037
        %v4039 = vrot.slane %v586, 6
        %v4040 = vsel %vm3965, %v4037, %v4039
        %v4041 = vrot.slane %v571, 6
        %v4042 = vrot.slane %v507, 6
        %v4043 = vsel %vm3965, %v4041, %v4042
        %v4044 = vrot.slane %v587, 6
        %v4045 = vsel %vm3965, %v4042, %v4044
        %v4078 = vld [vmem:[#allocation5 + $0x6] sm:$0x1]
        %v4079 = vlaneseq
        %v4080 = vshrl.u32 %v4079, 7
        %v4081 = vsub.s32 0, %v4080
        %v4082 = vrot.slane %v4078, %v4081
        %v4083 = vmul.f32 %v4082, 0.0
        %v4084 = vmul.f32 %v3968, %v4082
        %v4085 = vmul.f32 %v3970, %v4082
        %v4086 = vmul.f32 %v3973, %v4082
        %v4087 = vmul.f32 %v3975, %v4082
        %v4088 = vmul.f32 %v3978, %v4082
        %v4089 = vmul.f32 %v3980, %v4082
        %v4090 = vmul.f32 %v3983, %v4082
        %v4091 = vmul.f32 %v3985, %v4082
        %v4092 = vmul.f32 %v3988, %v4082
        %v4093 = vmul.f32 %v3990, %v4082
        %v4094 = vmul.f32 %v3993, %v4082
        %v4095 = vmul.f32 %v3995, %v4082
        %v4096 = vmul.f32 %v3998, %v4082
        %v4097 = vmul.f32 %v4000, %v4082
        %v4098 = vmul.f32 %v4003, %v4082
        %v4099 = vmul.f32 %v4005, %v4082
        %v4100 = vmul.f32 %v4008, %v4082
        %v4101 = vmul.f32 %v4010, %v4082
        %v4102 = vmul.f32 %v4013, %v4082
        %v4103 = vmul.f32 %v4015, %v4082
        %v4104 = vmul.f32 %v4018, %v4082
        %v4105 = vmul.f32 %v4020, %v4082
        %v4106 = vmul.f32 %v4023, %v4082
        %v4107 = vmul.f32 %v4025, %v4082
        %v4108 = vmul.f32 %v4028, %v4082
        %v4109 = vmul.f32 %v4030, %v4082
        %v4110 = vadd.f32 %v3933, %v4083
        %v4111 = vadd.f32 %v3934, %v4083
        %v4112 = vadd.f32 %v3935, %v4083
        %v4113 = vadd.f32 %v3936, %v4083
        %v4114 = vadd.f32 %v3937, %v4083
        %v4115 = vadd.f32 %v3938, %v4083
        %v4116 = vadd.f32 %v3939, %v4084
        %v4117 = vadd.f32 %v3940, %v4085
        %v4118 = vadd.f32 %v3941, %v4086
        %v4119 = vadd.f32 %v3942, %v4087
        %v4120 = vadd.f32 %v3943, %v4088
        %v4121 = vadd.f32 %v3944, %v4089
        %v4122 = vadd.f32 %v3945, %v4090
        %v4123 = vadd.f32 %v3946, %v4091
        %v4124 = vadd.f32 %v3947, %v4092
        %v4125 = vadd.f32 %v3948, %v4093
        %v4126 = vadd.f32 %v3949, %v4094
        %v4127 = vadd.f32 %v3950, %v4095
        %v4128 = vadd.f32 %v3951, %v4096
        %v4129 = vadd.f32 %v3952, %v4097
        %v4130 = vadd.f32 %v3953, %v4098
        %v4131 = vadd.f32 %v3954, %v4099
        %v4132 = vadd.f32 %v3955, %v4100
        %v4133 = vadd.f32 %v3956, %v4101
        %v4134 = vadd.f32 %v3957, %v4102
        %v4135 = vadd.f32 %v3958, %v4103
        %v4136 = vadd.f32 %v3959, %v4104
        %v4137 = vadd.f32 %v3960, %v4105
        %v4138 = vadd.f32 %v3961, %v4106
        %v4139 = vadd.f32 %v3962, %v4107
        %v4140 = vadd.f32 %v3963, %v4108
        %v4141 = vadd.f32 %v3964, %v4109
        %v4142 = vld [vmem:[#allocation5 + $0xd] sm:$0x1]
        %v4143 = vlaneseq
        %v4144 = vshrl.u32 %v4143, 7
        %v4145 = vsub.s32 0, %v4144
        %v4146 = vrot.slane %v4142, %v4145
        %v4147 = vmul.f32 %v4146, 0.0
        %v4148 = vmul.f32 %v3968, %v4146
        %v4149 = vmul.f32 %v3970, %v4146
        %v4150 = vmul.f32 %v3973, %v4146
        %v4151 = vmul.f32 %v3975, %v4146
        %v4152 = vmul.f32 %v3978, %v4146
        %v4153 = vmul.f32 %v3980, %v4146
        %v4154 = vmul.f32 %v3983, %v4146
        %v4155 = vmul.f32 %v3985, %v4146
        %v4156 = vmul.f32 %v3988, %v4146
        %v4157 = vmul.f32 %v3990, %v4146
        %v4158 = vmul.f32 %v3993, %v4146
        %v4159 = vmul.f32 %v3995, %v4146
        %v4160 = vmul.f32 %v3998, %v4146
        %v4161 = vmul.f32 %v4000, %v4146
        %v4162 = vmul.f32 %v4003, %v4146
        %v4163 = vmul.f32 %v4005, %v4146
        %v4164 = vmul.f32 %v4008, %v4146
        %v4165 = vmul.f32 %v4010, %v4146
        %v4166 = vmul.f32 %v4013, %v4146
        %v4167 = vmul.f32 %v4015, %v4146
        %v4168 = vmul.f32 %v4018, %v4146
        %v4169 = vmul.f32 %v4020, %v4146
        %v4170 = vmul.f32 %v4023, %v4146
        %v4171 = vmul.f32 %v4025, %v4146
        %v4172 = vmul.f32 %v4028, %v4146
        %v4173 = vmul.f32 %v4030, %v4146
        %v4174 = vmul.f32 %v4033, %v4146
        %v4175 = vmul.f32 %v4035, %v4146
        %v4176 = vadd.f32 %v4110, %v4147
        %v4177 = vadd.f32 %v4111, %v4147
        %v4178 = vadd.f32 %v4112, %v4147
        %v4179 = vadd.f32 %v4113, %v4147
        %v4180 = vadd.f32 %v4114, %v4148
        %v4181 = vadd.f32 %v4115, %v4149
        %v4182 = vadd.f32 %v4116, %v4150
        %v4183 = vadd.f32 %v4117, %v4151
        %v4184 = vadd.f32 %v4118, %v4152
        %v4185 = vadd.f32 %v4119, %v4153
        %v4186 = vadd.f32 %v4120, %v4154
        %v4187 = vadd.f32 %v4121, %v4155
        %v4188 = vadd.f32 %v4122, %v4156
        %v4189 = vadd.f32 %v4123, %v4157
        %v4190 = vadd.f32 %v4124, %v4158
        %v4191 = vadd.f32 %v4125, %v4159
        %v4192 = vadd.f32 %v4126, %v4160
        %v4193 = vadd.f32 %v4127, %v4161
        %v4194 = vadd.f32 %v4128, %v4162
        %v4195 = vadd.f32 %v4129, %v4163
        %v4196 = vadd.f32 %v4130, %v4164
        %v4197 = vadd.f32 %v4131, %v4165
        %v4198 = vadd.f32 %v4132, %v4166
        %v4199 = vadd.f32 %v4133, %v4167
        %v4200 = vadd.f32 %v4134, %v4168
        %v4201 = vadd.f32 %v4135, %v4169
        %v4202 = vadd.f32 %v4136, %v4170
        %v4203 = vadd.f32 %v4137, %v4171
        %v4204 = vadd.f32 %v4138, %v4172
        %v4205 = vadd.f32 %v4139, %v4173
        %v4206 = vadd.f32 %v4140, %v4174
        %v4207 = vadd.f32 %v4141, %v4175
        %v4208 = vld [vmem:[#allocation5 + $0x14] sm:$0x1]
        %v4209 = vlaneseq
        %v4210 = vshrl.u32 %v4209, 7
        %v4211 = vsub.s32 0, %v4210
        %v4212 = vrot.slane %v4208, %v4211
        %v4213 = vmul.f32 %v4212, 0.0
        %v4214 = vmul.f32 %v3968, %v4212
        %v4215 = vmul.f32 %v3970, %v4212
        %v4216 = vmul.f32 %v3973, %v4212
        %v4217 = vmul.f32 %v3975, %v4212
        %v4218 = vmul.f32 %v3978, %v4212
        %v4219 = vmul.f32 %v3980, %v4212
        %v4220 = vmul.f32 %v3983, %v4212
        %v4221 = vmul.f32 %v3985, %v4212
        %v4222 = vmul.f32 %v3988, %v4212
        %v4223 = vmul.f32 %v3990, %v4212
        %v4224 = vmul.f32 %v3993, %v4212
        %v4225 = vmul.f32 %v3995, %v4212
        %v4226 = vmul.f32 %v3998, %v4212
        %v4227 = vmul.f32 %v4000, %v4212
        %v4228 = vmul.f32 %v4003, %v4212
        %v4229 = vmul.f32 %v4005, %v4212
        %v4230 = vmul.f32 %v4008, %v4212
        %v4231 = vmul.f32 %v4010, %v4212
        %v4232 = vmul.f32 %v4013, %v4212
        %v4233 = vmul.f32 %v4015, %v4212
        %v4234 = vmul.f32 %v4018, %v4212
        %v4235 = vmul.f32 %v4020, %v4212
        %v4236 = vmul.f32 %v4023, %v4212
        %v4237 = vmul.f32 %v4025, %v4212
        %v4238 = vmul.f32 %v4028, %v4212
        %v4239 = vmul.f32 %v4030, %v4212
        %v4240 = vmul.f32 %v4033, %v4212
        %v4241 = vmul.f32 %v4035, %v4212
        %v4242 = vmul.f32 %v4038, %v4212
        %v4243 = vmul.f32 %v4040, %v4212
        %v4244 = vadd.f32 %v4176, %v4213
        %v4245 = vadd.f32 %v4177, %v4213
        %v4246 = vadd.f32 %v4178, %v4214
        %v4247 = vadd.f32 %v4179, %v4215
        %v4248 = vadd.f32 %v4180, %v4216
        %v4249 = vadd.f32 %v4181, %v4217
        %v4250 = vadd.f32 %v4182, %v4218
        %v4251 = vadd.f32 %v4183, %v4219
        %v4252 = vadd.f32 %v4184, %v4220
        %v4253 = vadd.f32 %v4185, %v4221
        %v4254 = vadd.f32 %v4186, %v4222
        %v4255 = vadd.f32 %v4187, %v4223
        %v4256 = vadd.f32 %v4188, %v4224
        %v4257 = vadd.f32 %v4189, %v4225
        %v4258 = vadd.f32 %v4190, %v4226
        %v4259 = vadd.f32 %v4191, %v4227
        %v4260 = vadd.f32 %v4192, %v4228
        %v4261 = vadd.f32 %v4193, %v4229
        %v4262 = vadd.f32 %v4194, %v4230
        %v4263 = vadd.f32 %v4195, %v4231
        %v4264 = vadd.f32 %v4196, %v4232
        %v4265 = vadd.f32 %v4197, %v4233
        %v4266 = vadd.f32 %v4198, %v4234
        %v4267 = vadd.f32 %v4199, %v4235
        %v4268 = vadd.f32 %v4200, %v4236
        %v4269 = vadd.f32 %v4201, %v4237
        %v4270 = vadd.f32 %v4202, %v4238
        %v4271 = vadd.f32 %v4203, %v4239
        %v4272 = vadd.f32 %v4204, %v4240
        %v4273 = vadd.f32 %v4205, %v4241
        %v4274 = vadd.f32 %v4206, %v4242
        %v4275 = vadd.f32 %v4207, %v4243
        %v4276 = vld [vmem:[#allocation5 + $0x1b] sm:$0x1]
        %v4277 = vlaneseq
        %v4278 = vshrl.u32 %v4277, 7
        %v4279 = vsub.s32 0, %v4278
        %v4280 = vrot.slane %v4276, %v4279
        %v4281 = vmul.f32 %v3968, %v4280
        %v4282 = vmul.f32 %v3970, %v4280
        %v4283 = vmul.f32 %v3973, %v4280
        %v4284 = vmul.f32 %v3975, %v4280
        %v4285 = vmul.f32 %v3978, %v4280
        %v4286 = vmul.f32 %v3980, %v4280
        %v4287 = vmul.f32 %v3983, %v4280
        %v4288 = vmul.f32 %v3985, %v4280
        %v4289 = vmul.f32 %v3988, %v4280
        %v4290 = vmul.f32 %v3990, %v4280
        %v4291 = vmul.f32 %v3993, %v4280
        %v4292 = vmul.f32 %v3995, %v4280
        %v4293 = vmul.f32 %v3998, %v4280
        %v4294 = vmul.f32 %v4000, %v4280
        %v4295 = vmul.f32 %v4003, %v4280
        %v4296 = vmul.f32 %v4005, %v4280
        %v4297 = vmul.f32 %v4008, %v4280
        %v4298 = vmul.f32 %v4010, %v4280
        %v4299 = vmul.f32 %v4013, %v4280
        %v4300 = vmul.f32 %v4015, %v4280
        %v4301 = vmul.f32 %v4018, %v4280
        %v4302 = vmul.f32 %v4020, %v4280
        %v4303 = vmul.f32 %v4023, %v4280
        %v4304 = vmul.f32 %v4025, %v4280
        %v4305 = vmul.f32 %v4028, %v4280
        %v4306 = vmul.f32 %v4030, %v4280
        %v4307 = vmul.f32 %v4033, %v4280
        %v4308 = vmul.f32 %v4035, %v4280
        %v4309 = vmul.f32 %v4038, %v4280
        %v4310 = vmul.f32 %v4040, %v4280
        %v4311 = vmul.f32 %v4043, %v4280
        %v4312 = vmul.f32 %v4045, %v4280
        %v4313 = vadd.f32 %v4244, %v4281
        %v4314 = vadd.f32 %v4245, %v4282
        %v4315 = vadd.f32 %v4246, %v4283
        %v4316 = vadd.f32 %v4247, %v4284
        %v4317 = vadd.f32 %v4248, %v4285
        %v4318 = vadd.f32 %v4249, %v4286
        %v4319 = vadd.f32 %v4250, %v4287
        %v4320 = vadd.f32 %v4251, %v4288
        %v4321 = vadd.f32 %v4252, %v4289
        %v4322 = vadd.f32 %v4253, %v4290
        %v4323 = vadd.f32 %v4254, %v4291
        %v4324 = vadd.f32 %v4255, %v4292
        %v4325 = vadd.f32 %v4256, %v4293
        %v4326 = vadd.f32 %v4257, %v4294
        %v4327 = vadd.f32 %v4258, %v4295
        %v4328 = vadd.f32 %v4259, %v4296
        %v4329 = vadd.f32 %v4260, %v4297
        %v4330 = vadd.f32 %v4261, %v4298
        %v4331 = vadd.f32 %v4262, %v4299
        %v4332 = vadd.f32 %v4263, %v4300
        %v4333 = vadd.f32 %v4264, %v4301
        %v4334 = vadd.f32 %v4265, %v4302
        %v4335 = vadd.f32 %v4266, %v4303
        %v4336 = vadd.f32 %v4267, %v4304
        %v4337 = vadd.f32 %v4268, %v4305
        %v4338 = vadd.f32 %v4269, %v4306
        %v4339 = vadd.f32 %v4270, %v4307
        %v4340 = vadd.f32 %v4271, %v4308
        %v4341 = vadd.f32 %v4272, %v4309
        %v4342 = vadd.f32 %v4273, %v4310
        %v4343 = vadd.f32 %v4274, %v4311
        %v4344 = vadd.f32 %v4275, %v4312
        %v4345 = vld [vmem:[#allocation5 + $0x22] sm:$0x1]
        %v4346 = vlaneseq
        %v4347 = vshrl.u32 %v4346, 7
        %v4348 = vsub.s32 0, %v4347
        %v4349 = vrot.slane %v4345, %v4348
        %v4350 = vmul.f32 %v3973, %v4349
        %v4351 = vmul.f32 %v3975, %v4349
        %v4352 = vmul.f32 %v3978, %v4349
        %v4353 = vmul.f32 %v3980, %v4349
        %v4354 = vmul.f32 %v3983, %v4349
        %v4355 = vmul.f32 %v3985, %v4349
        %v4356 = vmul.f32 %v3988, %v4349
        %v4357 = vmul.f32 %v3990, %v4349
        %v4358 = vmul.f32 %v3993, %v4349
        %v4359 = vmul.f32 %v3995, %v4349
        %v4360 = vmul.f32 %v3998, %v4349
        %v4361 = vmul.f32 %v4000, %v4349
        %v4362 = vmul.f32 %v4003, %v4349
        %v4363 = vmul.f32 %v4005, %v4349
        %v4364 = vmul.f32 %v4008, %v4349
        %v4365 = vmul.f32 %v4010, %v4349
        %v4366 = vmul.f32 %v4013, %v4349
        %v4367 = vmul.f32 %v4015, %v4349
        %v4368 = vmul.f32 %v4018, %v4349
        %v4369 = vmul.f32 %v4020, %v4349
        %v4370 = vmul.f32 %v4023, %v4349
        %v4371 = vmul.f32 %v4025, %v4349
        %v4372 = vmul.f32 %v4028, %v4349
        %v4373 = vmul.f32 %v4030, %v4349
        %v4374 = vmul.f32 %v4033, %v4349
        %v4375 = vmul.f32 %v4035, %v4349
        %v4376 = vmul.f32 %v4038, %v4349
        %v4377 = vmul.f32 %v4040, %v4349
        %v4378 = vmul.f32 %v4043, %v4349
        %v4379 = vmul.f32 %v4045, %v4349
        %v4380 = vmul.f32 %v4349, 0.0
        %v4381 = vadd.f32 %v4313, %v4350
        %v4382 = vadd.f32 %v4314, %v4351
        %v4383 = vadd.f32 %v4315, %v4352
        %v4384 = vadd.f32 %v4316, %v4353
        %v4385 = vadd.f32 %v4317, %v4354
        %v4386 = vadd.f32 %v4318, %v4355
        %v4387 = vadd.f32 %v4319, %v4356
        %v4388 = vadd.f32 %v4320, %v4357
        %v4389 = vadd.f32 %v4321, %v4358
        %v4390 = vadd.f32 %v4322, %v4359
        %v4391 = vadd.f32 %v4323, %v4360
        %v4392 = vadd.f32 %v4324, %v4361
        %v4393 = vadd.f32 %v4325, %v4362
        %v4394 = vadd.f32 %v4326, %v4363
        %v4395 = vadd.f32 %v4327, %v4364
        %v4396 = vadd.f32 %v4328, %v4365
        %v4397 = vadd.f32 %v4329, %v4366
        %v4398 = vadd.f32 %v4330, %v4367
        %v4399 = vadd.f32 %v4331, %v4368
        %v4400 = vadd.f32 %v4332, %v4369
        %v4401 = vadd.f32 %v4333, %v4370
        %v4402 = vadd.f32 %v4334, %v4371
        %v4403 = vadd.f32 %v4335, %v4372
        %v4404 = vadd.f32 %v4336, %v4373
        %v4405 = vadd.f32 %v4337, %v4374
        %v4406 = vadd.f32 %v4338, %v4375
        %v4407 = vadd.f32 %v4339, %v4376
        %v4408 = vadd.f32 %v4340, %v4377
        %v4409 = vadd.f32 %v4341, %v4378
        %v4410 = vadd.f32 %v4342, %v4379
        %v4411 = vadd.f32 %v4343, %v4380
        %v4412 = vadd.f32 %v4344, %v4380
        %v4413 = vld [vmem:[#allocation5 + $0x29] sm:$0x1]
        %v4414 = vlaneseq
        %v4415 = vshrl.u32 %v4414, 7
        %v4416 = vsub.s32 0, %v4415
        %v4417 = vrot.slane %v4413, %v4416
        %v4418 = vmul.f32 %v3978, %v4417
        %v4419 = vmul.f32 %v3980, %v4417
        %v4420 = vmul.f32 %v3983, %v4417
        %v4421 = vmul.f32 %v3985, %v4417
        %v4422 = vmul.f32 %v3988, %v4417
        %v4423 = vmul.f32 %v3990, %v4417
        %v4424 = vmul.f32 %v3993, %v4417
        %v4425 = vmul.f32 %v3995, %v4417
        %v4426 = vmul.f32 %v3998, %v4417
        %v4427 = vmul.f32 %v4000, %v4417
        %v4428 = vmul.f32 %v4003, %v4417
        %v4429 = vmul.f32 %v4005, %v4417
        %v4430 = vmul.f32 %v4008, %v4417
        %v4431 = vmul.f32 %v4010, %v4417
        %v4432 = vmul.f32 %v4013, %v4417
        %v4433 = vmul.f32 %v4015, %v4417
        %v4434 = vmul.f32 %v4018, %v4417
        %v4435 = vmul.f32 %v4020, %v4417
        %v4436 = vmul.f32 %v4023, %v4417
        %v4437 = vmul.f32 %v4025, %v4417
        %v4438 = vmul.f32 %v4028, %v4417
        %v4439 = vmul.f32 %v4030, %v4417
        %v4440 = vmul.f32 %v4033, %v4417
        %v4441 = vmul.f32 %v4035, %v4417
        %v4442 = vmul.f32 %v4038, %v4417
        %v4443 = vmul.f32 %v4040, %v4417
        %v4444 = vmul.f32 %v4043, %v4417
        %v4445 = vmul.f32 %v4045, %v4417
        %v4446 = vmul.f32 %v4417, 0.0
        %v4447 = vadd.f32 %v4381, %v4418
        %v4448 = vadd.f32 %v4382, %v4419
        %v4449 = vadd.f32 %v4383, %v4420
        %v4450 = vadd.f32 %v4384, %v4421
        %v4451 = vadd.f32 %v4385, %v4422
        %v4452 = vadd.f32 %v4386, %v4423
        %v4453 = vadd.f32 %v4387, %v4424
        %v4454 = vadd.f32 %v4388, %v4425
        %v4455 = vadd.f32 %v4389, %v4426
        %v4456 = vadd.f32 %v4390, %v4427
        %v4457 = vadd.f32 %v4391, %v4428
        %v4458 = vadd.f32 %v4392, %v4429
        %v4459 = vadd.f32 %v4393, %v4430
        %v4460 = vadd.f32 %v4394, %v4431
        %v4461 = vadd.f32 %v4395, %v4432
        %v4462 = vadd.f32 %v4396, %v4433
        %v4463 = vadd.f32 %v4397, %v4434
        %v4464 = vadd.f32 %v4398, %v4435
        %v4465 = vadd.f32 %v4399, %v4436
        %v4466 = vadd.f32 %v4400, %v4437
        %v4467 = vadd.f32 %v4401, %v4438
        %v4468 = vadd.f32 %v4402, %v4439
        %v4469 = vadd.f32 %v4403, %v4440
        %v4470 = vadd.f32 %v4404, %v4441
        %v4471 = vadd.f32 %v4405, %v4442
        %v4472 = vadd.f32 %v4406, %v4443
        %v4473 = vadd.f32 %v4407, %v4444
        %v4474 = vadd.f32 %v4408, %v4445
        %v4475 = vadd.f32 %v4409, %v4446
        %v4476 = vadd.f32 %v4410, %v4446
        %v4477 = vadd.f32 %v4411, %v4446
        %v4478 = vadd.f32 %v4412, %v4446
        %v4479 = vld [vmem:[#allocation5 + $0x30] sm:$0x1]
        %v4480 = vlaneseq
        %v4481 = vshrl.u32 %v4480, 7
        %v4482 = vsub.s32 0, %v4481
        %v4483 = vrot.slane %v4479, %v4482
        %v4484 = vmul.f32 %v3983, %v4483
        %v4485 = vmul.f32 %v3985, %v4483
        %v4486 = vmul.f32 %v3988, %v4483
        %v4487 = vmul.f32 %v3990, %v4483
        %v4488 = vmul.f32 %v3993, %v4483
        %v4489 = vmul.f32 %v3995, %v4483
        %v4490 = vmul.f32 %v3998, %v4483
        %v4491 = vmul.f32 %v4000, %v4483
        %v4492 = vmul.f32 %v4003, %v4483
        %v4493 = vmul.f32 %v4005, %v4483
        %v4494 = vmul.f32 %v4008, %v4483
        %v4495 = vmul.f32 %v4010, %v4483
        %v4496 = vmul.f32 %v4013, %v4483
        %v4497 = vmul.f32 %v4015, %v4483
        %v4498 = vmul.f32 %v4018, %v4483
        %v4499 = vmul.f32 %v4020, %v4483
        %v4500 = vmul.f32 %v4023, %v4483
        %v4501 = vmul.f32 %v4025, %v4483
        %v4502 = vmul.f32 %v4028, %v4483
        %v4503 = vmul.f32 %v4030, %v4483
        %v4504 = vmul.f32 %v4033, %v4483
        %v4505 = vmul.f32 %v4035, %v4483
        %v4506 = vmul.f32 %v4038, %v4483
        %v4507 = vmul.f32 %v4040, %v4483
        %v4508 = vmul.f32 %v4043, %v4483
        %v4509 = vmul.f32 %v4045, %v4483
        %v4510 = vmul.f32 %v4483, 0.0
        %v4511 = vadd.f32 %v4447, %v4484
        %v4512 = vadd.f32 %v4448, %v4485
        %v4513 = vadd.f32 %v4449, %v4486
        %v4514 = vadd.f32 %v4450, %v4487
        %v4515 = vadd.f32 %v4451, %v4488
        %v4516 = vadd.f32 %v4452, %v4489
        %v4517 = vadd.f32 %v4453, %v4490
        %v4518 = vadd.f32 %v4454, %v4491
        %v4519 = vadd.f32 %v4455, %v4492
        %v4520 = vadd.f32 %v4456, %v4493
        %v4521 = vadd.f32 %v4457, %v4494
        %v4522 = vadd.f32 %v4458, %v4495
        %v4523 = vadd.f32 %v4459, %v4496
        %v4524 = vadd.f32 %v4460, %v4497
        %v4525 = vadd.f32 %v4461, %v4498
        %v4526 = vadd.f32 %v4462, %v4499
        %v4527 = vadd.f32 %v4463, %v4500
        %v4528 = vadd.f32 %v4464, %v4501
        %v4529 = vadd.f32 %v4465, %v4502
        %v4530 = vadd.f32 %v4466, %v4503
        %v4531 = vadd.f32 %v4467, %v4504
        %v4532 = vadd.f32 %v4468, %v4505
        %v4533 = vadd.f32 %v4469, %v4506
        %v4534 = vadd.f32 %v4470, %v4507
        %v4535 = vadd.f32 %v4471, %v4508
        %v4536 = vadd.f32 %v4472, %v4509
        %v4537 = vadd.f32 %v4473, %v4510
        %v4538 = vadd.f32 %v4474, %v4510
        %v4539 = vadd.f32 %v4475, %v4510
        %v4540 = vadd.f32 %v4476, %v4510
        %v4541 = vadd.f32 %v4477, %v4510
        %v4542 = vadd.f32 %v4478, %v4510
        %v4543 = vld [vmem:[%s2] sm:$0x1]
        %v4545 = vlaneseq
        %v4546 = vshrl.u32 %v4545, 7
        %v4547 = vsub.s32 0, %v4546
        %v4548 = vrot.slane %v4543, %v4547
        %v4550 = vadd.f32 %v4511, %v4548
        %v4551 = vadd.f32 %v4512, %v4548
        %v4552 = vadd.f32 %v4513, %v4548
        %v4553 = vadd.f32 %v4514, %v4548
        %v4554 = vadd.f32 %v4515, %v4548
        %v4555 = vadd.f32 %v4516, %v4548
        %v4556 = vadd.f32 %v4517, %v4548
        %v4557 = vadd.f32 %v4518, %v4548
        %v4558 = vadd.f32 %v4519, %v4548
        %v4559 = vadd.f32 %v4520, %v4548
        %v4560 = vadd.f32 %v4521, %v4548
        %v4561 = vadd.f32 %v4522, %v4548
        %v4562 = vadd.f32 %v4523, %v4548
        %v4563 = vadd.f32 %v4524, %v4548
        %v4564 = vadd.f32 %v4525, %v4548
        %v4565 = vadd.f32 %v4526, %v4548
        %v4566 = vadd.f32 %v4527, %v4548
        %v4567 = vadd.f32 %v4528, %v4548
        %v4568 = vadd.f32 %v4529, %v4548
        %v4569 = vadd.f32 %v4530, %v4548
        %v4570 = vadd.f32 %v4531, %v4548
        %v4571 = vadd.f32 %v4532, %v4548
        %v4572 = vadd.f32 %v4533, %v4548
        %v4573 = vadd.f32 %v4534, %v4548
        %v4574 = vadd.f32 %v4535, %v4548
        %v4575 = vadd.f32 %v4536, %v4548
        %v4576 = vadd.f32 %v4537, %v4548
        %v4577 = vadd.f32 %v4538, %v4548
        %v4578 = vadd.f32 %v4539, %v4548
        %v4579 = vadd.f32 %v4540, %v4548
        %v4580 = vadd.f32 %v4541, %v4548
        %v4581 = vadd.f32 %v4542, %v4548
        %4582 = vadd.xlane.f32.xlu0 %v4550
        %v4583 = vpop.xlane.xlu0 %4582
        %4584 = vadd.xlane.f32.xlu0 %v4551
        %v4585 = vpop.xlane.xlu0 %4584
        %4586 = vadd.xlane.f32.xlu0 %v4552
        %v4587 = vpop.xlane.xlu0 %4586
        %4588 = vadd.xlane.f32.xlu0 %v4553
        %v4589 = vpop.xlane.xlu0 %4588
        %4590 = vadd.xlane.f32.xlu0 %v4554
        %v4591 = vpop.xlane.xlu0 %4590
        %4592 = vadd.xlane.f32.xlu0 %v4555
        %v4593 = vpop.xlane.xlu0 %4592
        %4594 = vadd.xlane.f32.xlu0 %v4556
        %v4595 = vpop.xlane.xlu0 %4594
        %4596 = vadd.xlane.f32.xlu0 %v4557
        %v4597 = vpop.xlane.xlu0 %4596
        %4598 = vadd.xlane.f32.xlu0 %v4558
        %v4599 = vpop.xlane.xlu0 %4598
        %4600 = vadd.xlane.f32.xlu0 %v4559
        %v4601 = vpop.xlane.xlu0 %4600
        %4602 = vadd.xlane.f32.xlu0 %v4560
        %v4603 = vpop.xlane.xlu0 %4602
        %4604 = vadd.xlane.f32.xlu0 %v4561
        %v4605 = vpop.xlane.xlu0 %4604
        %4606 = vadd.xlane.f32.xlu0 %v4562
        %v4607 = vpop.xlane.xlu0 %4606
        %4608 = vadd.xlane.f32.xlu0 %v4563
        %v4609 = vpop.xlane.xlu0 %4608
        %4610 = vadd.xlane.f32.xlu0 %v4564
        %v4611 = vpop.xlane.xlu0 %4610
        %4612 = vadd.xlane.f32.xlu0 %v4565
        %v4613 = vpop.xlane.xlu0 %4612
        %4614 = vadd.xlane.f32.xlu0 %v4566
        %v4615 = vpop.xlane.xlu0 %4614
        %4616 = vadd.xlane.f32.xlu0 %v4567
        %v4617 = vpop.xlane.xlu0 %4616
        %4618 = vadd.xlane.f32.xlu0 %v4568
        %v4619 = vpop.xlane.xlu0 %4618
        %4620 = vadd.xlane.f32.xlu0 %v4569
        %v4621 = vpop.xlane.xlu0 %4620
        %4622 = vadd.xlane.f32.xlu0 %v4570
        %v4623 = vpop.xlane.xlu0 %4622
        %4624 = vadd.xlane.f32.xlu0 %v4571
        %v4625 = vpop.xlane.xlu0 %4624
        %4626 = vadd.xlane.f32.xlu0 %v4572
        %v4627 = vpop.xlane.xlu0 %4626
        %4628 = vadd.xlane.f32.xlu0 %v4573
        %v4629 = vpop.xlane.xlu0 %4628
        %4630 = vadd.xlane.f32.xlu0 %v4574
        %v4631 = vpop.xlane.xlu0 %4630
        %4632 = vadd.xlane.f32.xlu0 %v4575
        %v4633 = vpop.xlane.xlu0 %4632
        %4634 = vadd.xlane.f32.xlu0 %v4576
        %v4635 = vpop.xlane.xlu0 %4634
        %4636 = vadd.xlane.f32.xlu0 %v4577
        %v4637 = vpop.xlane.xlu0 %4636
        %4638 = vadd.xlane.f32.xlu0 %v4578
        %v4639 = vpop.xlane.xlu0 %4638
        %4640 = vadd.xlane.f32.xlu0 %v4579
        %v4641 = vpop.xlane.xlu0 %4640
        %4642 = vadd.xlane.f32.xlu0 %v4580
        %v4643 = vpop.xlane.xlu0 %4642
        %4644 = vadd.xlane.f32.xlu0 %v4581
        %v4645 = vpop.xlane.xlu0 %4644
        %v4646 = vrcp.pop 128.0
        %v4647 = vmul.f32 %v4583, %v4646
        %v4648 = vmul.f32 %v4585, %v4646
        %v4649 = vmul.f32 %v4587, %v4646
        %v4650 = vmul.f32 %v4589, %v4646
        %v4651 = vmul.f32 %v4591, %v4646
        %v4652 = vmul.f32 %v4593, %v4646
        %v4653 = vmul.f32 %v4595, %v4646
        %v4654 = vmul.f32 %v4597, %v4646
        %v4655 = vmul.f32 %v4599, %v4646
        %v4656 = vmul.f32 %v4601, %v4646
        %v4657 = vmul.f32 %v4603, %v4646
        %v4658 = vmul.f32 %v4605, %v4646
        %v4659 = vmul.f32 %v4607, %v4646
        %v4660 = vmul.f32 %v4609, %v4646
        %v4661 = vmul.f32 %v4611, %v4646
        %v4662 = vmul.f32 %v4613, %v4646
        %v4663 = vmul.f32 %v4615, %v4646
        %v4664 = vmul.f32 %v4617, %v4646
        %v4665 = vmul.f32 %v4619, %v4646
        %v4666 = vmul.f32 %v4621, %v4646
        %v4667 = vmul.f32 %v4623, %v4646
        %v4668 = vmul.f32 %v4625, %v4646
        %v4669 = vmul.f32 %v4627, %v4646
        %v4670 = vmul.f32 %v4629, %v4646
        %v4671 = vmul.f32 %v4631, %v4646
        %v4672 = vmul.f32 %v4633, %v4646
        %v4673 = vmul.f32 %v4635, %v4646
        %v4674 = vmul.f32 %v4637, %v4646
        %v4675 = vmul.f32 %v4639, %v4646
        %v4676 = vmul.f32 %v4641, %v4646
        %v4677 = vmul.f32 %v4643, %v4646
        %v4678 = vmul.f32 %v4645, %v4646
        %v4679 = vsub.f32 %v4550, %v4647
        %v4680 = vsub.f32 %v4551, %v4648
        %v4681 = vsub.f32 %v4552, %v4649
        %v4682 = vsub.f32 %v4553, %v4650
        %v4683 = vsub.f32 %v4554, %v4651
        %v4684 = vsub.f32 %v4555, %v4652
        %v4685 = vsub.f32 %v4556, %v4653
        %v4686 = vsub.f32 %v4557, %v4654
        %v4687 = vsub.f32 %v4558, %v4655
        %v4688 = vsub.f32 %v4559, %v4656
        %v4689 = vsub.f32 %v4560, %v4657
        %v4690 = vsub.f32 %v4561, %v4658
        %v4691 = vsub.f32 %v4562, %v4659
        %v4692 = vsub.f32 %v4563, %v4660
        %v4693 = vsub.f32 %v4564, %v4661
        %v4694 = vsub.f32 %v4565, %v4662
        %v4695 = vsub.f32 %v4566, %v4663
        %v4696 = vsub.f32 %v4567, %v4664
        %v4697 = vsub.f32 %v4568, %v4665
        %v4698 = vsub.f32 %v4569, %v4666
        %v4699 = vsub.f32 %v4570, %v4667
        %v4700 = vsub.f32 %v4571, %v4668
        %v4701 = vsub.f32 %v4572, %v4669
        %v4702 = vsub.f32 %v4573, %v4670
        %v4703 = vsub.f32 %v4574, %v4671
        %v4704 = vsub.f32 %v4575, %v4672
        %v4705 = vsub.f32 %v4576, %v4673
        %v4706 = vsub.f32 %v4577, %v4674
        %v4707 = vsub.f32 %v4578, %v4675
        %v4708 = vsub.f32 %v4579, %v4676
        %v4709 = vsub.f32 %v4580, %v4677
        %v4710 = vsub.f32 %v4581, %v4678
        %v4711 = vmul.f32 %v4679, %v4679
        %v4712 = vmul.f32 %v4680, %v4680
        %v4713 = vmul.f32 %v4681, %v4681
        %v4714 = vmul.f32 %v4682, %v4682
        %v4715 = vmul.f32 %v4683, %v4683
        %v4716 = vmul.f32 %v4684, %v4684
        %v4717 = vmul.f32 %v4685, %v4685
        %v4718 = vmul.f32 %v4686, %v4686
        %v4719 = vmul.f32 %v4687, %v4687
        %v4720 = vmul.f32 %v4688, %v4688
        %v4721 = vmul.f32 %v4689, %v4689
        %v4722 = vmul.f32 %v4690, %v4690
        %v4723 = vmul.f32 %v4691, %v4691
        %v4724 = vmul.f32 %v4692, %v4692
        %v4725 = vmul.f32 %v4693, %v4693
        %v4726 = vmul.f32 %v4694, %v4694
        %v4727 = vmul.f32 %v4695, %v4695
        %v4728 = vmul.f32 %v4696, %v4696
        %v4729 = vmul.f32 %v4697, %v4697
        %v4730 = vmul.f32 %v4698, %v4698
        %v4731 = vmul.f32 %v4699, %v4699
        %v4732 = vmul.f32 %v4700, %v4700
        %v4733 = vmul.f32 %v4701, %v4701
        %v4734 = vmul.f32 %v4702, %v4702
        %v4735 = vmul.f32 %v4703, %v4703
        %v4736 = vmul.f32 %v4704, %v4704
        %v4737 = vmul.f32 %v4705, %v4705
        %v4738 = vmul.f32 %v4706, %v4706
        %v4739 = vmul.f32 %v4707, %v4707
        %v4740 = vmul.f32 %v4708, %v4708
        %v4741 = vmul.f32 %v4709, %v4709
        %v4742 = vmul.f32 %v4710, %v4710
        %4743 = vadd.xlane.f32.xlu0 %v4711
        %v4744 = vpop.xlane.xlu0 %4743
        %4745 = vadd.xlane.f32.xlu0 %v4712
        %v4746 = vpop.xlane.xlu0 %4745
        %4747 = vadd.xlane.f32.xlu0 %v4713
        %v4748 = vpop.xlane.xlu0 %4747
        %4749 = vadd.xlane.f32.xlu0 %v4714
        %v4750 = vpop.xlane.xlu0 %4749
        %4751 = vadd.xlane.f32.xlu0 %v4715
        %v4752 = vpop.xlane.xlu0 %4751
        %4753 = vadd.xlane.f32.xlu0 %v4716
        %v4754 = vpop.xlane.xlu0 %4753
        %4755 = vadd.xlane.f32.xlu0 %v4717
        %v4756 = vpop.xlane.xlu0 %4755
        %4757 = vadd.xlane.f32.xlu0 %v4718
        %v4758 = vpop.xlane.xlu0 %4757
        %4759 = vadd.xlane.f32.xlu0 %v4719
        %v4760 = vpop.xlane.xlu0 %4759
        %4761 = vadd.xlane.f32.xlu0 %v4720
        %v4762 = vpop.xlane.xlu0 %4761
        %4763 = vadd.xlane.f32.xlu0 %v4721
        %v4764 = vpop.xlane.xlu0 %4763
        %4765 = vadd.xlane.f32.xlu0 %v4722
        %v4766 = vpop.xlane.xlu0 %4765
        %4767 = vadd.xlane.f32.xlu0 %v4723
        %v4768 = vpop.xlane.xlu0 %4767
        %4769 = vadd.xlane.f32.xlu0 %v4724
        %v4770 = vpop.xlane.xlu0 %4769
        %4771 = vadd.xlane.f32.xlu0 %v4725
        %v4772 = vpop.xlane.xlu0 %4771
        %4773 = vadd.xlane.f32.xlu0 %v4726
        %v4774 = vpop.xlane.xlu0 %4773
        %4775 = vadd.xlane.f32.xlu0 %v4727
        %v4776 = vpop.xlane.xlu0 %4775
        %4777 = vadd.xlane.f32.xlu0 %v4728
        %v4778 = vpop.xlane.xlu0 %4777
        %4779 = vadd.xlane.f32.xlu0 %v4729
        %v4780 = vpop.xlane.xlu0 %4779
        %4781 = vadd.xlane.f32.xlu0 %v4730
        %v4782 = vpop.xlane.xlu0 %4781
        %4783 = vadd.xlane.f32.xlu0 %v4731
        %v4784 = vpop.xlane.xlu0 %4783
        %4785 = vadd.xlane.f32.xlu0 %v4732
        %v4786 = vpop.xlane.xlu0 %4785
        %4787 = vadd.xlane.f32.xlu0 %v4733
        %v4788 = vpop.xlane.xlu0 %4787
        %4789 = vadd.xlane.f32.xlu0 %v4734
        %v4790 = vpop.xlane.xlu0 %4789
        %4791 = vadd.xlane.f32.xlu0 %v4735
        %v4792 = vpop.xlane.xlu0 %4791
        %4793 = vadd.xlane.f32.xlu0 %v4736
        %v4794 = vpop.xlane.xlu0 %4793
        %4795 = vadd.xlane.f32.xlu0 %v4737
        %v4796 = vpop.xlane.xlu0 %4795
        %4797 = vadd.xlane.f32.xlu0 %v4738
        %v4798 = vpop.xlane.xlu0 %4797
        %4799 = vadd.xlane.f32.xlu0 %v4739
        %v4800 = vpop.xlane.xlu0 %4799
        %4801 = vadd.xlane.f32.xlu0 %v4740
        %v4802 = vpop.xlane.xlu0 %4801
        %4803 = vadd.xlane.f32.xlu0 %v4741
        %v4804 = vpop.xlane.xlu0 %4803
        %4805 = vadd.xlane.f32.xlu0 %v4742
        %v4806 = vpop.xlane.xlu0 %4805
        %v4807 = vmul.f32 %v4744, %v4646
        %v4808 = vmul.f32 %v4746, %v4646
        %v4809 = vmul.f32 %v4748, %v4646
        %v4810 = vmul.f32 %v4750, %v4646
        %v4811 = vmul.f32 %v4752, %v4646
        %v4812 = vmul.f32 %v4754, %v4646
        %v4813 = vmul.f32 %v4756, %v4646
        %v4814 = vmul.f32 %v4758, %v4646
        %v4815 = vmul.f32 %v4760, %v4646
        %v4816 = vmul.f32 %v4762, %v4646
        %v4817 = vmul.f32 %v4764, %v4646
        %v4818 = vmul.f32 %v4766, %v4646
        %v4819 = vmul.f32 %v4768, %v4646
        %v4820 = vmul.f32 %v4770, %v4646
        %v4821 = vmul.f32 %v4772, %v4646
        %v4822 = vmul.f32 %v4774, %v4646
        %v4823 = vmul.f32 %v4776, %v4646
        %v4824 = vmul.f32 %v4778, %v4646
        %v4825 = vmul.f32 %v4780, %v4646
        %v4826 = vmul.f32 %v4782, %v4646
        %v4827 = vmul.f32 %v4784, %v4646
        %v4828 = vmul.f32 %v4786, %v4646
        %v4829 = vmul.f32 %v4788, %v4646
        %v4830 = vmul.f32 %v4790, %v4646
        %v4831 = vmul.f32 %v4792, %v4646
        %v4832 = vmul.f32 %v4794, %v4646
        %v4833 = vmul.f32 %v4796, %v4646
        %v4834 = vmul.f32 %v4798, %v4646
        %v4835 = vmul.f32 %v4800, %v4646
        %v4836 = vmul.f32 %v4802, %v4646
        %v4837 = vmul.f32 %v4804, %v4646
        %v4838 = vmul.f32 %v4806, %v4646
        %v4839 = vadd.f32 %v4807, 1e-06
        %v4840 = vadd.f32 %v4808, 1e-06
        %v4841 = vadd.f32 %v4809, 1e-06
        %v4842 = vadd.f32 %v4810, 1e-06
        %v4843 = vadd.f32 %v4811, 1e-06
        %v4844 = vadd.f32 %v4812, 1e-06
        %v4845 = vadd.f32 %v4813, 1e-06
        %v4846 = vadd.f32 %v4814, 1e-06
        %v4847 = vadd.f32 %v4815, 1e-06
        %v4848 = vadd.f32 %v4816, 1e-06
        %v4849 = vadd.f32 %v4817, 1e-06
        %v4850 = vadd.f32 %v4818, 1e-06
        %v4851 = vadd.f32 %v4819, 1e-06
        %v4852 = vadd.f32 %v4820, 1e-06
        %v4853 = vadd.f32 %v4821, 1e-06
        %v4854 = vadd.f32 %v4822, 1e-06
        %v4855 = vadd.f32 %v4823, 1e-06
        %v4856 = vadd.f32 %v4824, 1e-06
        %v4857 = vadd.f32 %v4825, 1e-06
        %v4858 = vadd.f32 %v4826, 1e-06
        %v4859 = vadd.f32 %v4827, 1e-06
        %v4860 = vadd.f32 %v4828, 1e-06
        %v4861 = vadd.f32 %v4829, 1e-06
        %v4862 = vadd.f32 %v4830, 1e-06
        %v4863 = vadd.f32 %v4831, 1e-06
        %v4864 = vadd.f32 %v4832, 1e-06
        %v4865 = vadd.f32 %v4833, 1e-06
        %v4866 = vadd.f32 %v4834, 1e-06
        %v4867 = vadd.f32 %v4835, 1e-06
        %v4868 = vadd.f32 %v4836, 1e-06
        %v4869 = vadd.f32 %v4837, 1e-06
        %v4870 = vadd.f32 %v4838, 1e-06
        %v4871 = vrsqrt.pop %v4839
        %v4872 = vrsqrt.pop %v4840
        %v4873 = vrsqrt.pop %v4841
        %v4874 = vrsqrt.pop %v4842
        %v4875 = vrsqrt.pop %v4843
        %v4876 = vrsqrt.pop %v4844
        %v4877 = vrsqrt.pop %v4845
        %v4878 = vrsqrt.pop %v4846
        %v4879 = vrsqrt.pop %v4847
        %v4880 = vrsqrt.pop %v4848
        %v4881 = vrsqrt.pop %v4849
        %v4882 = vrsqrt.pop %v4850
        %v4883 = vrsqrt.pop %v4851
        %v4884 = vrsqrt.pop %v4852
        %v4885 = vrsqrt.pop %v4853
        %v4886 = vrsqrt.pop %v4854
        %v4887 = vrsqrt.pop %v4855
        %v4888 = vrsqrt.pop %v4856
        %v4889 = vrsqrt.pop %v4857
        %v4890 = vrsqrt.pop %v4858
        %v4891 = vrsqrt.pop %v4859
        %v4892 = vrsqrt.pop %v4860
        %v4893 = vrsqrt.pop %v4861
        %v4894 = vrsqrt.pop %v4862
        %v4895 = vrsqrt.pop %v4863
        %v4896 = vrsqrt.pop %v4864
        %v4897 = vrsqrt.pop %v4865
        %v4898 = vrsqrt.pop %v4866
        %v4899 = vrsqrt.pop %v4867
        %v4900 = vrsqrt.pop %v4868
        %v4901 = vrsqrt.pop %v4869
        %v4902 = vrsqrt.pop %v4870
        %v4903 = vmul.f32 %v4679, %v4871
        %v4904 = vmul.f32 %v4680, %v4872
        %v4905 = vmul.f32 %v4681, %v4873
        %v4906 = vmul.f32 %v4682, %v4874
        %v4907 = vmul.f32 %v4683, %v4875
        %v4908 = vmul.f32 %v4684, %v4876
        %v4909 = vmul.f32 %v4685, %v4877
        %v4910 = vmul.f32 %v4686, %v4878
        %v4911 = vmul.f32 %v4687, %v4879
        %v4912 = vmul.f32 %v4688, %v4880
        %v4913 = vmul.f32 %v4689, %v4881
        %v4914 = vmul.f32 %v4690, %v4882
        %v4915 = vmul.f32 %v4691, %v4883
        %v4916 = vmul.f32 %v4692, %v4884
        %v4917 = vmul.f32 %v4693, %v4885
        %v4918 = vmul.f32 %v4694, %v4886
        %v4919 = vmul.f32 %v4695, %v4887
        %v4920 = vmul.f32 %v4696, %v4888
        %v4921 = vmul.f32 %v4697, %v4889
        %v4922 = vmul.f32 %v4698, %v4890
        %v4923 = vmul.f32 %v4699, %v4891
        %v4924 = vmul.f32 %v4700, %v4892
        %v4925 = vmul.f32 %v4701, %v4893
        %v4926 = vmul.f32 %v4702, %v4894
        %v4927 = vmul.f32 %v4703, %v4895
        %v4928 = vmul.f32 %v4704, %v4896
        %v4929 = vmul.f32 %v4705, %v4897
        %v4930 = vmul.f32 %v4706, %v4898
        %v4931 = vmul.f32 %v4707, %v4899
        %v4932 = vmul.f32 %v4708, %v4900
        %v4933 = vmul.f32 %v4709, %v4901
        %v4934 = vmul.f32 %v4710, %v4902
        %v4935 = vld [vmem:[%s3] sm:$0x1]
        %v4937 = vlaneseq
        %v4938 = vshrl.u32 %v4937, 7
        %v4939 = vsub.s32 0, %v4938
        %v4940 = vrot.slane %v4935, %v4939
        %v4942 = vmul.f32 %v4903, %v4940
        %v4943 = vmul.f32 %v4904, %v4940
        %v4944 = vmul.f32 %v4905, %v4940
        %v4945 = vmul.f32 %v4906, %v4940
        %v4946 = vmul.f32 %v4907, %v4940
        %v4947 = vmul.f32 %v4908, %v4940
        %v4948 = vmul.f32 %v4909, %v4940
        %v4949 = vmul.f32 %v4910, %v4940
        %v4950 = vmul.f32 %v4911, %v4940
        %v4951 = vmul.f32 %v4912, %v4940
        %v4952 = vmul.f32 %v4913, %v4940
        %v4953 = vmul.f32 %v4914, %v4940
        %v4954 = vmul.f32 %v4915, %v4940
        %v4955 = vmul.f32 %v4916, %v4940
        %v4956 = vmul.f32 %v4917, %v4940
        %v4957 = vmul.f32 %v4918, %v4940
        %v4958 = vmul.f32 %v4919, %v4940
        %v4959 = vmul.f32 %v4920, %v4940
        %v4960 = vmul.f32 %v4921, %v4940
        %v4961 = vmul.f32 %v4922, %v4940
        %v4962 = vmul.f32 %v4923, %v4940
        %v4963 = vmul.f32 %v4924, %v4940
        %v4964 = vmul.f32 %v4925, %v4940
        %v4965 = vmul.f32 %v4926, %v4940
        %v4966 = vmul.f32 %v4927, %v4940
        %v4967 = vmul.f32 %v4928, %v4940
        %v4968 = vmul.f32 %v4929, %v4940
        %v4969 = vmul.f32 %v4930, %v4940
        %v4970 = vmul.f32 %v4931, %v4940
        %v4971 = vmul.f32 %v4932, %v4940
        %v4972 = vmul.f32 %v4933, %v4940
        %v4973 = vmul.f32 %v4934, %v4940
        %v4974 = vld [vmem:[%s4] sm:$0x1]
        %v4976 = vlaneseq
        %v4977 = vshrl.u32 %v4976, 7
        %v4978 = vsub.s32 0, %v4977
        %v4979 = vrot.slane %v4974, %v4978
        %v4981 = vadd.f32 %v4942, %v4979
        %v4982 = vadd.f32 %v4943, %v4979
        %v4983 = vadd.f32 %v4944, %v4979
        %v4984 = vadd.f32 %v4945, %v4979
        %v4985 = vadd.f32 %v4946, %v4979
        %v4986 = vadd.f32 %v4947, %v4979
        %v4987 = vadd.f32 %v4948, %v4979
        %v4988 = vadd.f32 %v4949, %v4979
        %v4989 = vadd.f32 %v4950, %v4979
        %v4990 = vadd.f32 %v4951, %v4979
        %v4991 = vadd.f32 %v4952, %v4979
        %v4992 = vadd.f32 %v4953, %v4979
        %v4993 = vadd.f32 %v4954, %v4979
        %v4994 = vadd.f32 %v4955, %v4979
        %v4995 = vadd.f32 %v4956, %v4979
        %v4996 = vadd.f32 %v4957, %v4979
        %v4997 = vadd.f32 %v4958, %v4979
        %v4998 = vadd.f32 %v4959, %v4979
        %v4999 = vadd.f32 %v4960, %v4979
        %v5000 = vadd.f32 %v4961, %v4979
        %v5001 = vadd.f32 %v4962, %v4979
        %v5002 = vadd.f32 %v4963, %v4979
        %v5003 = vadd.f32 %v4964, %v4979
        %v5004 = vadd.f32 %v4965, %v4979
        %v5005 = vadd.f32 %v4966, %v4979
        %v5006 = vadd.f32 %v4967, %v4979
        %v5007 = vadd.f32 %v4968, %v4979
        %v5008 = vadd.f32 %v4969, %v4979
        %v5009 = vadd.f32 %v4970, %v4979
        %v5010 = vadd.f32 %v4971, %v4979
        %v5011 = vadd.f32 %v4972, %v4979
        %v5012 = vadd.f32 %v4973, %v4979
        %v5013 = vld [vmem:[#allocation7] sm:$0xff]
        %v5014 = vld [vmem:[#allocation7 + $0x8] sm:$0xff]
        %v5015 = vld [vmem:[#allocation7 + $0x10] sm:$0xff]
        %v5016 = vld [vmem:[#allocation7 + $0x18] sm:$0xff]
        %v5017 = vld [vmem:[#allocation7 + $0x20] sm:$0xff]
        %v5018 = vld [vmem:[#allocation7 + $0x28] sm:$0xff]
        %v5019 = vld [vmem:[#allocation7 + $0x30] sm:$0xff]
        %v5020 = vld [vmem:[#allocation7 + $0x38] sm:$0xff]
        %v5021 = vld [vmem:[#allocation7 + $0x40] sm:$0xff]
        %v5022 = vld [vmem:[#allocation7 + $0x48] sm:$0xff]
        %v5023 = vld [vmem:[#allocation7 + $0x50] sm:$0xff]
        %v5024 = vld [vmem:[#allocation7 + $0x58] sm:$0xff]
        %v5025 = vld [vmem:[#allocation7 + $0x60] sm:$0xff]
        %v5026 = vld [vmem:[#allocation7 + $0x68] sm:$0xff]
        %v5027 = vld [vmem:[#allocation7 + $0x70] sm:$0xff]
        %v5028 = vld [vmem:[#allocation7 + $0x78] sm:$0xff]
        %v5029 = vld [vmem:[#allocation7 + $0x80] sm:$0xff]
        %v5030 = vld [vmem:[#allocation7 + $0x88] sm:$0xff]
        %v5031 = vld [vmem:[#allocation7 + $0x90] sm:$0xff]
        %v5032 = vld [vmem:[#allocation7 + $0x98] sm:$0xff]
        %v5033 = vld [vmem:[#allocation7 + $0xa0] sm:$0xff]
        %v5034 = vld [vmem:[#allocation7 + $0xa8] sm:$0xff]
        %v5035 = vld [vmem:[#allocation7 + $0xb0] sm:$0xff]
        %v5036 = vld [vmem:[#allocation7 + $0xb8] sm:$0xff]
        %v5037 = vld [vmem:[#allocation7 + $0xc0] sm:$0xff]
        %v5038 = vld [vmem:[#allocation7 + $0xc8] sm:$0xff]
        %v5039 = vld [vmem:[#allocation7 + $0xd0] sm:$0xff]
        %v5040 = vld [vmem:[#allocation7 + $0xd8] sm:$0xff]
        %v5041 = vld [vmem:[#allocation7 + $0xe0] sm:$0xff]
        %v5042 = vld [vmem:[#allocation7 + $0xe8] sm:$0xff]
        %v5043 = vld [vmem:[#allocation7 + $0xf0] sm:$0xff]
        %v5044 = vld [vmem:[#allocation7 + $0xf8] sm:$0xff]
        %v5045 = vld [vmem:[#allocation7 + $0x100] sm:$0xff]
        %v5046 = vld [vmem:[#allocation7 + $0x108] sm:$0xff]
        %v5047 = vld [vmem:[#allocation7 + $0x110] sm:$0xff]
        %v5048 = vld [vmem:[#allocation7 + $0x118] sm:$0xff]
        %v5049 = vld [vmem:[#allocation7 + $0x120] sm:$0xff]
        %v5050 = vld [vmem:[#allocation7 + $0x128] sm:$0xff]
        %v5051 = vld [vmem:[#allocation7 + $0x130] sm:$0xff]
        %v5052 = vld [vmem:[#allocation7 + $0x138] sm:$0xff]
        %v5053 = vld [vmem:[#allocation7 + $0x140] sm:$0xff]
        %v5054 = vld [vmem:[#allocation7 + $0x148] sm:$0xff]
        %v5055 = vld [vmem:[#allocation7 + $0x150] sm:$0xff]
        %v5056 = vld [vmem:[#allocation7 + $0x158] sm:$0xff]
        %v5057 = vld [vmem:[#allocation7 + $0x160] sm:$0xff]
        %v5058 = vld [vmem:[#allocation7 + $0x168] sm:$0xff]
        %v5059 = vld [vmem:[#allocation7 + $0x170] sm:$0xff]
        %v5060 = vld [vmem:[#allocation7 + $0x178] sm:$0xff]
        %v5061 = vld [vmem:[#allocation7 + $0x180] sm:$0xff]
        %v5062 = vld [vmem:[#allocation7 + $0x188] sm:$0xff]
        %v5063 = vld [vmem:[#allocation7 + $0x190] sm:$0xff]
        %v5064 = vld [vmem:[#allocation7 + $0x198] sm:$0xff]
        %v5065 = vld [vmem:[#allocation7 + $0x1a0] sm:$0xff]
        %v5066 = vld [vmem:[#allocation7 + $0x1a8] sm:$0xff]
        %v5067 = vld [vmem:[#allocation7 + $0x1b0] sm:$0xff]
        %v5068 = vld [vmem:[#allocation7 + $0x1b8] sm:$0xff]
        %v5069 = vld [vmem:[#allocation7 + $0x1c0] sm:$0xff]
        %v5070 = vld [vmem:[#allocation7 + $0x1c8] sm:$0xff]
        %v5071 = vld [vmem:[#allocation7 + $0x1d0] sm:$0xff]
        %v5072 = vld [vmem:[#allocation7 + $0x1d8] sm:$0xff]
        %v5073 = vld [vmem:[#allocation7 + $0x1e0] sm:$0xff]
        %v5074 = vld [vmem:[#allocation7 + $0x1e8] sm:$0xff]
        %v5075 = vld [vmem:[#allocation7 + $0x1f0] sm:$0xff]
        %v5076 = vld [vmem:[#allocation7 + $0x1f8] sm:$0xff]
        %v5077 = vld [vmem:[%s6] sm:$0xf]
        %v5079 = vlaneseq
        %v5080 = vshrl.u32 %v5079, 7
        %v5081 = vsub.s32 0, %v5080
        %v5082 = vrot.slane %v5077, %v5081
        %v5083 = vlaneseq
        %v5084 = vshrl.u32 %v5083, 7
        %v5085 = vsub.s32 1, %v5084
        %v5086 = vrot.slane %v5077, %v5085
        %v5087 = vlaneseq
        %v5088 = vshrl.u32 %v5087, 7
        %v5089 = vsub.s32 2, %v5088
        %v5090 = vrot.slane %v5077, %v5089
        %v5091 = vlaneseq
        %v5092 = vshrl.u32 %v5091, 7
        %v5093 = vsub.s32 3, %v5092
        %v5094 = vrot.slane %v5077, %v5093
        %5099 = vmatprep.subr.mxu0 %v5014
        %5100 = vmatpush1.msra.mxu0 %v5013
        %5101 = vmatprep.subr.mxu0 %v5018
        %5102 = vmatpush1.msra.mxu0 %v5017
        %5103 = vmatprep.subr.mxu0 %v5022
        %5104 = vmatpush1.msra.mxu0 %v5021
        %5105 = vmatprep.subr.mxu0 %v5026
        %5106 = vmatpush1.msra.mxu0 %v5025
        %5107 = vmatprep.subr.mxu0 %v5030
        %5108 = vmatpush1.msra.mxu0 %v5029
        %5109 = vmatprep.subr.mxu0 %v5034
        %5110 = vmatpush1.msra.mxu0 %v5033
        %5111 = vmatprep.subr.mxu0 %v5038
        %5112 = vmatpush1.msra.mxu0 %v5037
        %5113 = vmatprep.subr.mxu0 %v5042
        %5114 = vmatpush1.msra.mxu0 %v5041
        %5115 = vmatprep.subr.mxu0 %v5046
        %5116 = vmatpush1.msra.mxu0 %v5045
        %5117 = vmatprep.subr.mxu0 %v5050
        %5118 = vmatpush1.msra.mxu0 %v5049
        %5119 = vmatprep.subr.mxu0 %v5054
        %5120 = vmatpush1.msra.mxu0 %v5053
        %5121 = vmatprep.subr.mxu0 %v5058
        %5122 = vmatpush1.msra.mxu0 %v5057
        %5123 = vmatprep.subr.mxu0 %v5062
        %5124 = vmatpush1.msra.mxu0 %v5061
        %5125 = vmatprep.subr.mxu0 %v5066
        %5126 = vmatpush1.msra.mxu0 %v5065
        %5127 = vmatprep.subr.mxu0 %v5070
        %5128 = vmatpush1.msra.mxu0 %v5069
        %5129 = vmatprep.subr.mxu0 %v5074
        %5130 = vmatpush1.msra.mxu0 %v5073
        %5131 = vmatprep.subr.mxu0 0.0
        %5132 = vmatpush1.msra.mxu0 0.0
        %5133 = vmatprep.subr.mxu0 0.0
        %5134 = vmatpush1.msra.mxu0 0.0
        %5135 = vmatprep.subr.mxu0 0.0
        %5136 = vmatpush1.msra.mxu0 0.0
        %5137 = vmatprep.subr.mxu0 0.0
        %5138 = vmatpush1.msra.mxu0 0.0
        %5139 = vmatprep.subr.mxu0 0.0
        %5140 = vmatpush1.msra.mxu0 0.0
        %5141 = vmatprep.subr.mxu0 0.0
        %5142 = vmatpush1.msra.mxu0 0.0
        %5143 = vmatprep.subr.mxu0 0.0
        %5144 = vmatpush1.msra.mxu0 0.0
        %5145 = vmatprep.subr.mxu0 0.0
        %5146 = vmatpush1.msra.mxu0 0.0
        %5147 = vmatprep.subr.mxu0 0.0
        %5148 = vmatpush1.msra.mxu0 0.0
        %5149 = vmatprep.subr.mxu0 0.0
        %5150 = vmatpush1.msra.mxu0 0.0
        %5151 = vmatprep.subr.mxu0 0.0
        %5152 = vmatpush1.msra.mxu0 0.0
        %5153 = vmatprep.subr.mxu0 0.0
        %5154 = vmatpush1.msra.mxu0 0.0
        %5155 = vmatprep.subr.mxu0 0.0
        %5156 = vmatpush1.msra.mxu0 0.0
        %5157 = vmatprep.subr.mxu0 0.0
        %5158 = vmatpush1.msra.mxu0 0.0
        %5159 = vmatprep.subr.mxu0 0.0
        %5160 = vmatpush1.msra.mxu0 0.0
        %5161 = vmatprep.subr.mxu0 0.0
        %5162 = vmatpush1.msra.mxu0 0.0
        %5163 = vmatprep.mubr.f32.mxu0 0.0
        %5164 = vmatmul.mubr.f32.gmra.mrb[0].mxu0 %v4981
        %v5165 = vpop.f32.mrb[0].mxu0
        %v5166 = vadd.f32 %v5082, %v5165
        %v5167 = vpop.f32.mrb[0].mxu0
        %v5168 = vadd.f32 %v5086, %v5167
        %5169 = vmatprep.mubr.f32.mxu0 0.0
        %5170 = vmatmul.mubr.f32.gmra.mrb[0].mxu0 %v4982
        %v5171 = vpop.f32.mrb[0].mxu0
        %v5172 = vadd.f32 %v5082, %v5171
        %v5173 = vpop.f32.mrb[0].mxu0
        %v5174 = vadd.f32 %v5086, %v5173
        %5175 = vmatprep.mubr.f32.mxu0 0.0
        %5176 = vmatmul.mubr.f32.gmra.mrb[0].mxu0 %v4983
        %v5177 = vpop.f32.mrb[0].mxu0
        %v5178 = vadd.f32 %v5082, %v5177
        %v5179 = vpop.f32.mrb[0].mxu0
        %v5180 = vadd.f32 %v5086, %v5179
        %5181 = vmatprep.mubr.f32.mxu0 0.0
        %5182 = vmatmul.mubr.f32.gmra.mrb[0].mxu0 %v4984
        %v5183 = vpop.f32.mrb[0].mxu0
        %v5184 = vadd.f32 %v5082, %v5183
        %v5185 = vpop.f32.mrb[0].mxu0
        %v5186 = vadd.f32 %v5086, %v5185
        %5187 = vmatprep.mubr.f32.mxu0 0.0
        %5188 = vmatmul.mubr.f32.gmra.mrb[0].mxu0 %v4985
        %v5189 = vpop.f32.mrb[0].mxu0
        %v5190 = vadd.f32 %v5082, %v5189
        %v5191 = vpop.f32.mrb[0].mxu0
        %v5192 = vadd.f32 %v5086, %v5191
        %5193 = vmatprep.mubr.f32.mxu0 0.0
        %5194 = vmatmul.mubr.f32.gmra.mrb[0].mxu0 %v4986
        %v5195 = vpop.f32.mrb[0].mxu0
        %v5196 = vadd.f32 %v5082, %v5195
        %v5197 = vpop.f32.mrb[0].mxu0
        %v5198 = vadd.f32 %v5086, %v5197
        %5199 = vmatprep.mubr.f32.mxu0 0.0
        %5200 = vmatmul.mubr.f32.gmra.mrb[0].mxu0 %v4987
        %v5201 = vpop.f32.mrb[0].mxu0
        %v5202 = vadd.f32 %v5082, %v5201
        %v5203 = vpop.f32.mrb[0].mxu0
        %v5204 = vadd.f32 %v5086, %v5203
        %5205 = vmatprep.mubr.f32.mxu0 0.0
        %5206 = vmatmul.mubr.f32.gmra.mrb[0].mxu0 %v4988
        %v5207 = vpop.f32.mrb[0].mxu0
        %v5208 = vadd.f32 %v5082, %v5207
        %v5209 = vpop.f32.mrb[0].mxu0
        %v5210 = vadd.f32 %v5086, %v5209
        %5211 = vmatprep.mubr.f32.mxu0 0.0
        %5212 = vmatmul.mubr.f32.gmra.mrb[0].mxu0 %v4989
        %v5213 = vpop.f32.mrb[0].mxu0
        %v5214 = vadd.f32 %v5082, %v5213
        %v5215 = vpop.f32.mrb[0].mxu0
        %v5216 = vadd.f32 %v5086, %v5215
        %5217 = vmatprep.mubr.f32.mxu0 0.0
        %5218 = vmatmul.mubr.f32.gmra.mrb[0].mxu0 %v4990
        %v5219 = vpop.f32.mrb[0].mxu0
        %v5220 = vadd.f32 %v5082, %v5219
        %v5221 = vpop.f32.mrb[0].mxu0
        %v5222 = vadd.f32 %v5086, %v5221
        %5223 = vmatprep.mubr.f32.mxu0 0.0
        %5224 = vmatmul.mubr.f32.gmra.mrb[0].mxu0 %v4991
        %v5225 = vpop.f32.mrb[0].mxu0
        %v5226 = vadd.f32 %v5082, %v5225
        %v5227 = vpop.f32.mrb[0].mxu0
        %v5228 = vadd.f32 %v5086, %v5227
        %5229 = vmatprep.mubr.f32.mxu0 0.0
        %5230 = vmatmul.mubr.f32.gmra.mrb[0].mxu0 %v4992
        %v5231 = vpop.f32.mrb[0].mxu0
        %v5232 = vadd.f32 %v5082, %v5231
        %v5233 = vpop.f32.mrb[0].mxu0
        %v5234 = vadd.f32 %v5086, %v5233
        %5235 = vmatprep.mubr.f32.mxu0 0.0
        %5236 = vmatmul.mubr.f32.gmra.mrb[0].mxu0 %v4993
        %v5237 = vpop.f32.mrb[0].mxu0
        %v5238 = vadd.f32 %v5082, %v5237
        %v5239 = vpop.f32.mrb[0].mxu0
        %v5240 = vadd.f32 %v5086, %v5239
        %5241 = vmatprep.mubr.f32.mxu0 0.0
        %5242 = vmatmul.mubr.f32.gmra.mrb[0].mxu0 %v4994
        %v5243 = vpop.f32.mrb[0].mxu0
        %v5244 = vadd.f32 %v5082, %v5243
        %v5245 = vpop.f32.mrb[0].mxu0
        %v5246 = vadd.f32 %v5086, %v5245
        %5247 = vmatprep.mubr.f32.mxu0 0.0
        %5248 = vmatmul.mubr.f32.gmra.mrb[0].mxu0 %v4995
        %v5249 = vpop.f32.mrb[0].mxu0
        %v5250 = vadd.f32 %v5082, %v5249
        %v5251 = vpop.f32.mrb[0].mxu0
        %v5252 = vadd.f32 %v5086, %v5251
        %5253 = vmatprep.mubr.f32.mxu0 0.0
        %5254 = vmatmul.mubr.f32.gmra.mrb[0].mxu0 %v4996
        %v5255 = vpop.f32.mrb[0].mxu0
        %v5256 = vadd.f32 %v5082, %v5255
        %v5257 = vpop.f32.mrb[0].mxu0
        %v5258 = vadd.f32 %v5086, %v5257
        %5259 = vmatprep.mubr.f32.mxu0 0.0
        %5260 = vmatmul.mubr.f32.gmra.mrb[0].mxu0 %v4997
        %v5261 = vpop.f32.mrb[0].mxu0
        %v5262 = vadd.f32 %v5082, %v5261
        %v5263 = vpop.f32.mrb[0].mxu0
        %v5264 = vadd.f32 %v5086, %v5263
        %5265 = vmatprep.mubr.f32.mxu0 0.0
        %5266 = vmatmul.mubr.f32.gmra.mrb[0].mxu0 %v4998
        %v5267 = vpop.f32.mrb[0].mxu0
        %v5268 = vadd.f32 %v5082, %v5267
        %v5269 = vpop.f32.mrb[0].mxu0
        %v5270 = vadd.f32 %v5086, %v5269
        %5271 = vmatprep.mubr.f32.mxu0 0.0
        %5272 = vmatmul.mubr.f32.gmra.mrb[0].mxu0 %v4999
        %v5273 = vpop.f32.mrb[0].mxu0
        %v5274 = vadd.f32 %v5082, %v5273
        %v5275 = vpop.f32.mrb[0].mxu0
        %v5276 = vadd.f32 %v5086, %v5275
        %5277 = vmatprep.mubr.f32.mxu0 0.0
        %5278 = vmatmul.mubr.f32.gmra.mrb[0].mxu0 %v5000
        %v5279 = vpop.f32.mrb[0].mxu0
        %v5280 = vadd.f32 %v5082, %v5279
        %v5281 = vpop.f32.mrb[0].mxu0
        %v5282 = vadd.f32 %v5086, %v5281
        %5283 = vmatprep.mubr.f32.mxu0 0.0
        %5284 = vmatmul.mubr.f32.gmra.mrb[0].mxu0 %v5001
        %v5285 = vpop.f32.mrb[0].mxu0
        %v5286 = vadd.f32 %v5082, %v5285
        %v5287 = vpop.f32.mrb[0].mxu0
        %v5288 = vadd.f32 %v5086, %v5287
        %5289 = vmatprep.mubr.f32.mxu0 0.0
        %5290 = vmatmul.mubr.f32.gmra.mrb[0].mxu0 %v5002
        %v5291 = vpop.f32.mrb[0].mxu0
        %v5292 = vadd.f32 %v5082, %v5291
        %v5293 = vpop.f32.mrb[0].mxu0
        %v5294 = vadd.f32 %v5086, %v5293
        %5295 = vmatprep.mubr.f32.mxu0 0.0
        %5296 = vmatmul.mubr.f32.gmra.mrb[0].mxu0 %v5003
        %v5297 = vpop.f32.mrb[0].mxu0
        %v5298 = vadd.f32 %v5082, %v5297
        %v5299 = vpop.f32.mrb[0].mxu0
        %v5300 = vadd.f32 %v5086, %v5299
        %5301 = vmatprep.mubr.f32.mxu0 0.0
        %5302 = vmatmul.mubr.f32.gmra.mrb[0].mxu0 %v5004
        %v5303 = vpop.f32.mrb[0].mxu0
        %v5304 = vadd.f32 %v5082, %v5303
        %v5305 = vpop.f32.mrb[0].mxu0
        %v5306 = vadd.f32 %v5086, %v5305
        %5307 = vmatprep.mubr.f32.mxu0 0.0
        %5308 = vmatmul.mubr.f32.gmra.mrb[0].mxu0 %v5005
        %v5309 = vpop.f32.mrb[0].mxu0
        %v5310 = vadd.f32 %v5082, %v5309
        %v5311 = vpop.f32.mrb[0].mxu0
        %v5312 = vadd.f32 %v5086, %v5311
        %5313 = vmatprep.mubr.f32.mxu0 0.0
        %5314 = vmatmul.mubr.f32.gmra.mrb[0].mxu0 %v5006
        %v5315 = vpop.f32.mrb[0].mxu0
        %v5316 = vadd.f32 %v5082, %v5315
        %v5317 = vpop.f32.mrb[0].mxu0
        %v5318 = vadd.f32 %v5086, %v5317
        %5319 = vmatprep.mubr.f32.mxu0 0.0
        %5320 = vmatmul.mubr.f32.gmra.mrb[0].mxu0 %v5007
        %v5321 = vpop.f32.mrb[0].mxu0
        %v5322 = vadd.f32 %v5082, %v5321
        %v5323 = vpop.f32.mrb[0].mxu0
        %v5324 = vadd.f32 %v5086, %v5323
        %5325 = vmatprep.mubr.f32.mxu0 0.0
        %5326 = vmatmul.mubr.f32.gmra.mrb[0].mxu0 %v5008
        %v5327 = vpop.f32.mrb[0].mxu0
        %v5328 = vadd.f32 %v5082, %v5327
        %v5329 = vpop.f32.mrb[0].mxu0
        %v5330 = vadd.f32 %v5086, %v5329
        %5331 = vmatprep.mubr.f32.mxu0 0.0
        %5332 = vmatmul.mubr.f32.gmra.mrb[0].mxu0 %v5009
        %v5333 = vpop.f32.mrb[0].mxu0
        %v5334 = vadd.f32 %v5082, %v5333
        %v5335 = vpop.f32.mrb[0].mxu0
        %v5336 = vadd.f32 %v5086, %v5335
        %5337 = vmatprep.mubr.f32.mxu0 0.0
        %5338 = vmatmul.mubr.f32.gmra.mrb[0].mxu0 %v5010
        %v5339 = vpop.f32.mrb[0].mxu0
        %v5340 = vadd.f32 %v5082, %v5339
        %v5341 = vpop.f32.mrb[0].mxu0
        %v5342 = vadd.f32 %v5086, %v5341
        %5343 = vmatprep.mubr.f32.mxu0 0.0
        %5344 = vmatmul.mubr.f32.gmra.mrb[0].mxu0 %v5011
        %v5345 = vpop.f32.mrb[0].mxu0
        %v5346 = vadd.f32 %v5082, %v5345
        %v5347 = vpop.f32.mrb[0].mxu0
        %v5348 = vadd.f32 %v5086, %v5347
        %5349 = vmatprep.mubr.f32.mxu0 0.0
        %5350 = vmatmul.mubr.f32.gmra.mrb[0].mxu0 %v5012
        %v5351 = vpop.f32.mrb[0].mxu0
        %v5352 = vadd.f32 %v5082, %v5351
        %v5353 = vpop.f32.mrb[0].mxu0
        %v5354 = vadd.f32 %v5086, %v5353
        %5355 = vdwg.mxu0
        %5356 = vmatprep.subr.mxu0 %v5016
        %5357 = vmatpush1.msra.mxu0 %v5015
        %5358 = vmatprep.subr.mxu0 %v5020
        %5359 = vmatpush1.msra.mxu0 %v5019
        %5360 = vmatprep.subr.mxu0 %v5024
        %5361 = vmatpush1.msra.mxu0 %v5023
        %5362 = vmatprep.subr.mxu0 %v5028
        %5363 = vmatpush1.msra.mxu0 %v5027
        %5364 = vmatprep.subr.mxu0 %v5032
        %5365 = vmatpush1.msra.mxu0 %v5031
        %5366 = vmatprep.subr.mxu0 %v5036
        %5367 = vmatpush1.msra.mxu0 %v5035
        %5368 = vmatprep.subr.mxu0 %v5040
        %5369 = vmatpush1.msra.mxu0 %v5039
        %5370 = vmatprep.subr.mxu0 %v5044
        %5371 = vmatpush1.msra.mxu0 %v5043
        %5372 = vmatprep.subr.mxu0 %v5048
        %5373 = vmatpush1.msra.mxu0 %v5047
        %5374 = vmatprep.subr.mxu0 %v5052
        %5375 = vmatpush1.msra.mxu0 %v5051
        %5376 = vmatprep.subr.mxu0 %v5056
        %5377 = vmatpush1.msra.mxu0 %v5055
        %5378 = vmatprep.subr.mxu0 %v5060
        %5379 = vmatpush1.msra.mxu0 %v5059
        %5380 = vmatprep.subr.mxu0 %v5064
        %5381 = vmatpush1.msra.mxu0 %v5063
        %5382 = vmatprep.subr.mxu0 %v5068
        %5383 = vmatpush1.msra.mxu0 %v5067
        %5384 = vmatprep.subr.mxu0 %v5072
        %5385 = vmatpush1.msra.mxu0 %v5071
        %5386 = vmatprep.subr.mxu0 %v5076
        %5387 = vmatpush1.msra.mxu0 %v5075
        %5388 = vmatprep.subr.mxu0 0.0
        %5389 = vmatpush1.msra.mxu0 0.0
        %5390 = vmatprep.subr.mxu0 0.0
        %5391 = vmatpush1.msra.mxu0 0.0
        %5392 = vmatprep.subr.mxu0 0.0
        %5393 = vmatpush1.msra.mxu0 0.0
        %5394 = vmatprep.subr.mxu0 0.0
        %5395 = vmatpush1.msra.mxu0 0.0
        %5396 = vmatprep.subr.mxu0 0.0
        %5397 = vmatpush1.msra.mxu0 0.0
        %5398 = vmatprep.subr.mxu0 0.0
        %5399 = vmatpush1.msra.mxu0 0.0
        %5400 = vmatprep.subr.mxu0 0.0
        %5401 = vmatpush1.msra.mxu0 0.0
        %5402 = vmatprep.subr.mxu0 0.0
        %5403 = vmatpush1.msra.mxu0 0.0
        %5404 = vmatprep.subr.mxu0 0.0
        %5405 = vmatpush1.msra.mxu0 0.0
        %5406 = vmatprep.subr.mxu0 0.0
        %5407 = vmatpush1.msra.mxu0 0.0
        %5408 = vmatprep.subr.mxu0 0.0
        %5409 = vmatpush1.msra.mxu0 0.0
        %5410 = vmatprep.subr.mxu0 0.0
        %5411 = vmatpush1.msra.mxu0 0.0
        %5412 = vmatprep.subr.mxu0 0.0
        %5413 = vmatpush1.msra.mxu0 0.0
        %5414 = vmatprep.subr.mxu0 0.0
        %5415 = vmatpush1.msra.mxu0 0.0
        %5416 = vmatprep.subr.mxu0 0.0
        %5417 = vmatpush1.msra.mxu0 0.0
        %5418 = vmatprep.subr.mxu0 0.0
        %5419 = vmatpush1.msra.mxu0 0.0
        %5420 = vmatprep.mubr.f32.mxu0 0.0
        %5421 = vmatmul.mubr.f32.gmra.mrb[0].mxu0 %v4981
        %v5422 = vpop.f32.mrb[0].mxu0
        %v5423 = vadd.f32 %v5090, %v5422
        %v5424 = vpop.f32.mrb[0].mxu0
        %v5425 = vadd.f32 %v5094, %v5424
        %5426 = vmatprep.mubr.f32.mxu0 0.0
        %5427 = vmatmul.mubr.f32.gmra.mrb[0].mxu0 %v4982
        %v5428 = vpop.f32.mrb[0].mxu0
        %v5429 = vadd.f32 %v5090, %v5428
        %v5430 = vpop.f32.mrb[0].mxu0
        %v5431 = vadd.f32 %v5094, %v5430
        %5432 = vmatprep.mubr.f32.mxu0 0.0
        %5433 = vmatmul.mubr.f32.gmra.mrb[0].mxu0 %v4983
        %v5434 = vpop.f32.mrb[0].mxu0
        %v5435 = vadd.f32 %v5090, %v5434
        %v5436 = vpop.f32.mrb[0].mxu0
        %v5437 = vadd.f32 %v5094, %v5436
        %5438 = vmatprep.mubr.f32.mxu0 0.0
        %5439 = vmatmul.mubr.f32.gmra.mrb[0].mxu0 %v4984
        %v5440 = vpop.f32.mrb[0].mxu0
        %v5441 = vadd.f32 %v5090, %v5440
        %v5442 = vpop.f32.mrb[0].mxu0
        %v5443 = vadd.f32 %v5094, %v5442
        %5444 = vmatprep.mubr.f32.mxu0 0.0
        %5445 = vmatmul.mubr.f32.gmra.mrb[0].mxu0 %v4985
        %v5446 = vpop.f32.mrb[0].mxu0
        %v5447 = vadd.f32 %v5090, %v5446
        %v5448 = vpop.f32.mrb[0].mxu0
        %v5449 = vadd.f32 %v5094, %v5448
        %5450 = vmatprep.mubr.f32.mxu0 0.0
        %5451 = vmatmul.mubr.f32.gmra.mrb[0].mxu0 %v4986
        %v5452 = vpop.f32.mrb[0].mxu0
        %v5453 = vadd.f32 %v5090, %v5452
        %v5454 = vpop.f32.mrb[0].mxu0
        %v5455 = vadd.f32 %v5094, %v5454
        %5456 = vmatprep.mubr.f32.mxu0 0.0
        %5457 = vmatmul.mubr.f32.gmra.mrb[0].mxu0 %v4987
        %v5458 = vpop.f32.mrb[0].mxu0
        %v5459 = vadd.f32 %v5090, %v5458
        %v5460 = vpop.f32.mrb[0].mxu0
        %v5461 = vadd.f32 %v5094, %v5460
        %5462 = vmatprep.mubr.f32.mxu0 0.0
        %5463 = vmatmul.mubr.f32.gmra.mrb[0].mxu0 %v4988
        %v5464 = vpop.f32.mrb[0].mxu0
        %v5465 = vadd.f32 %v5090, %v5464
        %v5466 = vpop.f32.mrb[0].mxu0
        %v5467 = vadd.f32 %v5094, %v5466
        %5468 = vmatprep.mubr.f32.mxu0 0.0
        %5469 = vmatmul.mubr.f32.gmra.mrb[0].mxu0 %v4989
        %v5470 = vpop.f32.mrb[0].mxu0
        %v5471 = vadd.f32 %v5090, %v5470
        %v5472 = vpop.f32.mrb[0].mxu0
        %v5473 = vadd.f32 %v5094, %v5472
        %5474 = vmatprep.mubr.f32.mxu0 0.0
        %5475 = vmatmul.mubr.f32.gmra.mrb[0].mxu0 %v4990
        %v5476 = vpop.f32.mrb[0].mxu0
        %v5477 = vadd.f32 %v5090, %v5476
        %v5478 = vpop.f32.mrb[0].mxu0
        %v5479 = vadd.f32 %v5094, %v5478
        %5480 = vmatprep.mubr.f32.mxu0 0.0
        %5481 = vmatmul.mubr.f32.gmra.mrb[0].mxu0 %v4991
        %v5482 = vpop.f32.mrb[0].mxu0
        %v5483 = vadd.f32 %v5090, %v5482
        %v5484 = vpop.f32.mrb[0].mxu0
        %v5485 = vadd.f32 %v5094, %v5484
        %5486 = vmatprep.mubr.f32.mxu0 0.0
        %5487 = vmatmul.mubr.f32.gmra.mrb[0].mxu0 %v4992
        %v5488 = vpop.f32.mrb[0].mxu0
        %v5489 = vadd.f32 %v5090, %v5488
        %v5490 = vpop.f32.mrb[0].mxu0
        %v5491 = vadd.f32 %v5094, %v5490
        %5492 = vmatprep.mubr.f32.mxu0 0.0
        %5493 = vmatmul.mubr.f32.gmra.mrb[0].mxu0 %v4993
        %v5494 = vpop.f32.mrb[0].mxu0
        %v5495 = vadd.f32 %v5090, %v5494
        %v5496 = vpop.f32.mrb[0].mxu0
        %v5497 = vadd.f32 %v5094, %v5496
        %5498 = vmatprep.mubr.f32.mxu0 0.0
        %5499 = vmatmul.mubr.f32.gmra.mrb[0].mxu0 %v4994
        %v5500 = vpop.f32.mrb[0].mxu0
        %v5501 = vadd.f32 %v5090, %v5500
        %v5502 = vpop.f32.mrb[0].mxu0
        %v5503 = vadd.f32 %v5094, %v5502
        %5504 = vmatprep.mubr.f32.mxu0 0.0
        %5505 = vmatmul.mubr.f32.gmra.mrb[0].mxu0 %v4995
        %v5506 = vpop.f32.mrb[0].mxu0
        %v5507 = vadd.f32 %v5090, %v5506
        %v5508 = vpop.f32.mrb[0].mxu0
        %v5509 = vadd.f32 %v5094, %v5508
        %5510 = vmatprep.mubr.f32.mxu0 0.0
        %5511 = vmatmul.mubr.f32.gmra.mrb[0].mxu0 %v4996
        %v5512 = vpop.f32.mrb[0].mxu0
        %v5513 = vadd.f32 %v5090, %v5512
        %v5514 = vpop.f32.mrb[0].mxu0
        %v5515 = vadd.f32 %v5094, %v5514
        %5516 = vmatprep.mubr.f32.mxu0 0.0
        %5517 = vmatmul.mubr.f32.gmra.mrb[0].mxu0 %v4997
        %v5518 = vpop.f32.mrb[0].mxu0
        %v5519 = vadd.f32 %v5090, %v5518
        %v5520 = vpop.f32.mrb[0].mxu0
        %v5521 = vadd.f32 %v5094, %v5520
        %5522 = vmatprep.mubr.f32.mxu0 0.0
        %5523 = vmatmul.mubr.f32.gmra.mrb[0].mxu0 %v4998
        %v5524 = vpop.f32.mrb[0].mxu0
        %v5525 = vadd.f32 %v5090, %v5524
        %v5526 = vpop.f32.mrb[0].mxu0
        %v5527 = vadd.f32 %v5094, %v5526
        %5528 = vmatprep.mubr.f32.mxu0 0.0
        %5529 = vmatmul.mubr.f32.gmra.mrb[0].mxu0 %v4999
        %v5530 = vpop.f32.mrb[0].mxu0
        %v5531 = vadd.f32 %v5090, %v5530
        %v5532 = vpop.f32.mrb[0].mxu0
        %v5533 = vadd.f32 %v5094, %v5532
        %5534 = vmatprep.mubr.f32.mxu0 0.0
        %5535 = vmatmul.mubr.f32.gmra.mrb[0].mxu0 %v5000
        %v5536 = vpop.f32.mrb[0].mxu0
        %v5537 = vadd.f32 %v5090, %v5536
        %v5538 = vpop.f32.mrb[0].mxu0
        %v5539 = vadd.f32 %v5094, %v5538
        %5540 = vmatprep.mubr.f32.mxu0 0.0
        %5541 = vmatmul.mubr.f32.gmra.mrb[0].mxu0 %v5001
        %v5542 = vpop.f32.mrb[0].mxu0
        %v5543 = vadd.f32 %v5090, %v5542
        %v5544 = vpop.f32.mrb[0].mxu0
        %v5545 = vadd.f32 %v5094, %v5544
        %5546 = vmatprep.mubr.f32.mxu0 0.0
        %5547 = vmatmul.mubr.f32.gmra.mrb[0].mxu0 %v5002
        %v5548 = vpop.f32.mrb[0].mxu0
        %v5549 = vadd.f32 %v5090, %v5548
        %v5550 = vpop.f32.mrb[0].mxu0
        %v5551 = vadd.f32 %v5094, %v5550
        %5552 = vmatprep.mubr.f32.mxu0 0.0
        %5553 = vmatmul.mubr.f32.gmra.mrb[0].mxu0 %v5003
        %v5554 = vpop.f32.mrb[0].mxu0
        %v5555 = vadd.f32 %v5090, %v5554
        %v5556 = vpop.f32.mrb[0].mxu0
        %v5557 = vadd.f32 %v5094, %v5556
        %5558 = vmatprep.mubr.f32.mxu0 0.0
        %5559 = vmatmul.mubr.f32.gmra.mrb[0].mxu0 %v5004
        %v5560 = vpop.f32.mrb[0].mxu0
        %v5561 = vadd.f32 %v5090, %v5560
        %v5562 = vpop.f32.mrb[0].mxu0
        %v5563 = vadd.f32 %v5094, %v5562
        %5564 = vmatprep.mubr.f32.mxu0 0.0
        %5565 = vmatmul.mubr.f32.gmra.mrb[0].mxu0 %v5005
        %v5566 = vpop.f32.mrb[0].mxu0
        %v5567 = vadd.f32 %v5090, %v5566
        %v5568 = vpop.f32.mrb[0].mxu0
        %v5569 = vadd.f32 %v5094, %v5568
        %5570 = vmatprep.mubr.f32.mxu0 0.0
        %5571 = vmatmul.mubr.f32.gmra.mrb[0].mxu0 %v5006
        %v5572 = vpop.f32.mrb[0].mxu0
        %v5573 = vadd.f32 %v5090, %v5572
        %v5574 = vpop.f32.mrb[0].mxu0
        %v5575 = vadd.f32 %v5094, %v5574
        %5576 = vmatprep.mubr.f32.mxu0 0.0
        %5577 = vmatmul.mubr.f32.gmra.mrb[0].mxu0 %v5007
        %v5578 = vpop.f32.mrb[0].mxu0
        %v5579 = vadd.f32 %v5090, %v5578
        %v5580 = vpop.f32.mrb[0].mxu0
        %v5581 = vadd.f32 %v5094, %v5580
        %5582 = vmatprep.mubr.f32.mxu0 0.0
        %5583 = vmatmul.mubr.f32.gmra.mrb[0].mxu0 %v5008
        %v5584 = vpop.f32.mrb[0].mxu0
        %v5585 = vadd.f32 %v5090, %v5584
        %v5586 = vpop.f32.mrb[0].mxu0
        %v5587 = vadd.f32 %v5094, %v5586
        %5588 = vmatprep.mubr.f32.mxu0 0.0
        %5589 = vmatmul.mubr.f32.gmra.mrb[0].mxu0 %v5009
        %v5590 = vpop.f32.mrb[0].mxu0
        %v5591 = vadd.f32 %v5090, %v5590
        %v5592 = vpop.f32.mrb[0].mxu0
        %v5593 = vadd.f32 %v5094, %v5592
        %5594 = vmatprep.mubr.f32.mxu0 0.0
        %5595 = vmatmul.mubr.f32.gmra.mrb[0].mxu0 %v5010
        %v5596 = vpop.f32.mrb[0].mxu0
        %v5597 = vadd.f32 %v5090, %v5596
        %v5598 = vpop.f32.mrb[0].mxu0
        %v5599 = vadd.f32 %v5094, %v5598
        %5600 = vmatprep.mubr.f32.mxu0 0.0
        %5601 = vmatmul.mubr.f32.gmra.mrb[0].mxu0 %v5011
        %v5602 = vpop.f32.mrb[0].mxu0
        %v5603 = vadd.f32 %v5090, %v5602
        %v5604 = vpop.f32.mrb[0].mxu0
        %v5605 = vadd.f32 %v5094, %v5604
        %5606 = vmatprep.mubr.f32.mxu0 0.0
        %5607 = vmatmul.mubr.f32.gmra.mrb[0].mxu0 %v5012
        %v5608 = vpop.f32.mrb[0].mxu0
        %v5609 = vadd.f32 %v5090, %v5608
        %v5610 = vpop.f32.mrb[0].mxu0
        %v5611 = vadd.f32 %v5094, %v5610
        %5612 = vdwg.mxu0
        %v5613 = vmul.f32 %v5166, 0.5
        %v5614 = vmul.f32 %v5168, 0.5
        %v5615 = vmul.f32 %v5423, 0.5
        %v5616 = vmul.f32 %v5425, 0.5
        %v5617 = vmul.f32 %v5172, 0.5
        %v5618 = vmul.f32 %v5174, 0.5
        %v5619 = vmul.f32 %v5429, 0.5
        %v5620 = vmul.f32 %v5431, 0.5
        %v5621 = vmul.f32 %v5178, 0.5
        %v5622 = vmul.f32 %v5180, 0.5
        %v5623 = vmul.f32 %v5435, 0.5
        %v5624 = vmul.f32 %v5437, 0.5
        %v5625 = vmul.f32 %v5184, 0.5
        %v5626 = vmul.f32 %v5186, 0.5
        %v5627 = vmul.f32 %v5441, 0.5
        %v5628 = vmul.f32 %v5443, 0.5
        %v5629 = vmul.f32 %v5190, 0.5
        %v5630 = vmul.f32 %v5192, 0.5
        %v5631 = vmul.f32 %v5447, 0.5
        %v5632 = vmul.f32 %v5449, 0.5
        %v5633 = vmul.f32 %v5196, 0.5
        %v5634 = vmul.f32 %v5198, 0.5
        %v5635 = vmul.f32 %v5453, 0.5
        %v5636 = vmul.f32 %v5455, 0.5
        %v5637 = vmul.f32 %v5202, 0.5
        %v5638 = vmul.f32 %v5204, 0.5
        %v5639 = vmul.f32 %v5459, 0.5
        %v5640 = vmul.f32 %v5461, 0.5
        %v5641 = vmul.f32 %v5208, 0.5
        %v5642 = vmul.f32 %v5210, 0.5
        %v5643 = vmul.f32 %v5465, 0.5
        %v5644 = vmul.f32 %v5467, 0.5
        %v5645 = vmul.f32 %v5214, 0.5
        %v5646 = vmul.f32 %v5216, 0.5
        %v5647 = vmul.f32 %v5471, 0.5
        %v5648 = vmul.f32 %v5473, 0.5
        %v5649 = vmul.f32 %v5220, 0.5
        %v5650 = vmul.f32 %v5222, 0.5
        %v5651 = vmul.f32 %v5477, 0.5
        %v5652 = vmul.f32 %v5479, 0.5
        %v5653 = vmul.f32 %v5226, 0.5
        %v5654 = vmul.f32 %v5228, 0.5
        %v5655 = vmul.f32 %v5483, 0.5
        %v5656 = vmul.f32 %v5485, 0.5
        %v5657 = vmul.f32 %v5232, 0.5
        %v5658 = vmul.f32 %v5234, 0.5
        %v5659 = vmul.f32 %v5489, 0.5
        %v5660 = vmul.f32 %v5491, 0.5
        %v5661 = vmul.f32 %v5238, 0.5
        %v5662 = vmul.f32 %v5240, 0.5
        %v5663 = vmul.f32 %v5495, 0.5
        %v5664 = vmul.f32 %v5497, 0.5
        %v5665 = vmul.f32 %v5244, 0.5
        %v5666 = vmul.f32 %v5246, 0.5
        %v5667 = vmul.f32 %v5501, 0.5
        %v5668 = vmul.f32 %v5503, 0.5
        %v5669 = vmul.f32 %v5250, 0.5
        %v5670 = vmul.f32 %v5252, 0.5
        %v5671 = vmul.f32 %v5507, 0.5
        %v5672 = vmul.f32 %v5509, 0.5
        %v5673 = vmul.f32 %v5256, 0.5
        %v5674 = vmul.f32 %v5258, 0.5
        %v5675 = vmul.f32 %v5513, 0.5
        %v5676 = vmul.f32 %v5515, 0.5
        %v5677 = vmul.f32 %v5262, 0.5
        %v5678 = vmul.f32 %v5264, 0.5
        %v5679 = vmul.f32 %v5519, 0.5
        %v5680 = vmul.f32 %v5521, 0.5
        %v5681 = vmul.f32 %v5268, 0.5
        %v5682 = vmul.f32 %v5270, 0.5
        %v5683 = vmul.f32 %v5525, 0.5
        %v5684 = vmul.f32 %v5527, 0.5
        %v5685 = vmul.f32 %v5274, 0.5
        %v5686 = vmul.f32 %v5276, 0.5
        %v5687 = vmul.f32 %v5531, 0.5
        %v5688 = vmul.f32 %v5533, 0.5
        %v5689 = vmul.f32 %v5280, 0.5
        %v5690 = vmul.f32 %v5282, 0.5
        %v5691 = vmul.f32 %v5537, 0.5
        %v5692 = vmul.f32 %v5539, 0.5
        %v5693 = vmul.f32 %v5286, 0.5
        %v5694 = vmul.f32 %v5288, 0.5
        %v5695 = vmul.f32 %v5543, 0.5
        %v5696 = vmul.f32 %v5545, 0.5
        %v5697 = vmul.f32 %v5292, 0.5
        %v5698 = vmul.f32 %v5294, 0.5
        %v5699 = vmul.f32 %v5549, 0.5
        %v5700 = vmul.f32 %v5551, 0.5
        %v5701 = vmul.f32 %v5298, 0.5
        %v5702 = vmul.f32 %v5300, 0.5
        %v5703 = vmul.f32 %v5555, 0.5
        %v5704 = vmul.f32 %v5557, 0.5
        %v5705 = vmul.f32 %v5304, 0.5
        %v5706 = vmul.f32 %v5306, 0.5
        %v5707 = vmul.f32 %v5561, 0.5
        %v5708 = vmul.f32 %v5563, 0.5
        %v5709 = vmul.f32 %v5310, 0.5
        %v5710 = vmul.f32 %v5312, 0.5
        %v5711 = vmul.f32 %v5567, 0.5
        %v5712 = vmul.f32 %v5569, 0.5
        %v5713 = vmul.f32 %v5316, 0.5
        %v5714 = vmul.f32 %v5318, 0.5
        %v5715 = vmul.f32 %v5573, 0.5
        %v5716 = vmul.f32 %v5575, 0.5
        %v5717 = vmul.f32 %v5322, 0.5
        %v5718 = vmul.f32 %v5324, 0.5
        %v5719 = vmul.f32 %v5579, 0.5
        %v5720 = vmul.f32 %v5581, 0.5
        %v5721 = vmul.f32 %v5328, 0.5
        %v5722 = vmul.f32 %v5330, 0.5
        %v5723 = vmul.f32 %v5585, 0.5
        %v5724 = vmul.f32 %v5587, 0.5
        %v5725 = vmul.f32 %v5334, 0.5
        %v5726 = vmul.f32 %v5336, 0.5
        %v5727 = vmul.f32 %v5591, 0.5
        %v5728 = vmul.f32 %v5593, 0.5
        %v5729 = vmul.f32 %v5340, 0.5
        %v5730 = vmul.f32 %v5342, 0.5
        %v5731 = vmul.f32 %v5597, 0.5
        %v5732 = vmul.f32 %v5599, 0.5
        %v5733 = vmul.f32 %v5346, 0.5
        %v5734 = vmul.f32 %v5348, 0.5
        %v5735 = vmul.f32 %v5603, 0.5
        %v5736 = vmul.f32 %v5605, 0.5
        %v5737 = vmul.f32 %v5352, 0.5
        %v5738 = vmul.f32 %v5354, 0.5
        %v5739 = vmul.f32 %v5609, 0.5
        %v5740 = vmul.f32 %v5611, 0.5
        %v5741 = vmul.f32 %v5166, 0.70710677
        %v5742 = vmul.f32 %v5168, 0.70710677
        %v5743 = vmul.f32 %v5423, 0.70710677
        %v5744 = vmul.f32 %v5425, 0.70710677
        %v5745 = vmul.f32 %v5172, 0.70710677
        %v5746 = vmul.f32 %v5174, 0.70710677
        %v5747 = vmul.f32 %v5429, 0.70710677
        %v5748 = vmul.f32 %v5431, 0.70710677
        %v5749 = vmul.f32 %v5178, 0.70710677
        %v5750 = vmul.f32 %v5180, 0.70710677
        %v5751 = vmul.f32 %v5435, 0.70710677
        %v5752 = vmul.f32 %v5437, 0.70710677
        %v5753 = vmul.f32 %v5184, 0.70710677
        %v5754 = vmul.f32 %v5186, 0.70710677
        %v5755 = vmul.f32 %v5441, 0.70710677
        %v5756 = vmul.f32 %v5443, 0.70710677
        %v5757 = vmul.f32 %v5190, 0.70710677
        %v5758 = vmul.f32 %v5192, 0.70710677
        %v5759 = vmul.f32 %v5447, 0.70710677
        %v5760 = vmul.f32 %v5449, 0.70710677
        %v5761 = vmul.f32 %v5196, 0.70710677
        %v5762 = vmul.f32 %v5198, 0.70710677
        %v5763 = vmul.f32 %v5453, 0.70710677
        %v5764 = vmul.f32 %v5455, 0.70710677
        %v5765 = vmul.f32 %v5202, 0.70710677
        %v5766 = vmul.f32 %v5204, 0.70710677
        %v5767 = vmul.f32 %v5459, 0.70710677
        %v5768 = vmul.f32 %v5461, 0.70710677
        %v5769 = vmul.f32 %v5208, 0.70710677
        %v5770 = vmul.f32 %v5210, 0.70710677
        %v5771 = vmul.f32 %v5465, 0.70710677
        %v5772 = vmul.f32 %v5467, 0.70710677
        %v5773 = vmul.f32 %v5214, 0.70710677
        %v5774 = vmul.f32 %v5216, 0.70710677
        %v5775 = vmul.f32 %v5471, 0.70710677
        %v5776 = vmul.f32 %v5473, 0.70710677
        %v5777 = vmul.f32 %v5220, 0.70710677
        %v5778 = vmul.f32 %v5222, 0.70710677
        %v5779 = vmul.f32 %v5477, 0.70710677
        %v5780 = vmul.f32 %v5479, 0.70710677
        %v5781 = vmul.f32 %v5226, 0.70710677
        %v5782 = vmul.f32 %v5228, 0.70710677
        %v5783 = vmul.f32 %v5483, 0.70710677
        %v5784 = vmul.f32 %v5485, 0.70710677
        %v5785 = vmul.f32 %v5232, 0.70710677
        %v5786 = vmul.f32 %v5234, 0.70710677
        %v5787 = vmul.f32 %v5489, 0.70710677
        %v5788 = vmul.f32 %v5491, 0.70710677
        %v5789 = vmul.f32 %v5238, 0.70710677
        %v5790 = vmul.f32 %v5240, 0.70710677
        %v5791 = vmul.f32 %v5495, 0.70710677
        %v5792 = vmul.f32 %v5497, 0.70710677
        %v5793 = vmul.f32 %v5244, 0.70710677
        %v5794 = vmul.f32 %v5246, 0.70710677
        %v5795 = vmul.f32 %v5501, 0.70710677
        %v5796 = vmul.f32 %v5503, 0.70710677
        %v5797 = vmul.f32 %v5250, 0.70710677
        %v5798 = vmul.f32 %v5252, 0.70710677
        %v5799 = vmul.f32 %v5507, 0.70710677
        %v5800 = vmul.f32 %v5509, 0.70710677
        %v5801 = vmul.f32 %v5256, 0.70710677
        %v5802 = vmul.f32 %v5258, 0.70710677
        %v5803 = vmul.f32 %v5513, 0.70710677
        %v5804 = vmul.f32 %v5515, 0.70710677
        %v5805 = vmul.f32 %v5262, 0.70710677
        %v5806 = vmul.f32 %v5264, 0.70710677
        %v5807 = vmul.f32 %v5519, 0.70710677
        %v5808 = vmul.f32 %v5521, 0.70710677
        %v5809 = vmul.f32 %v5268, 0.70710677
        %v5810 = vmul.f32 %v5270, 0.70710677
        %v5811 = vmul.f32 %v5525, 0.70710677
        %v5812 = vmul.f32 %v5527, 0.70710677
        %v5813 = vmul.f32 %v5274, 0.70710677
        %v5814 = vmul.f32 %v5276, 0.70710677
        %v5815 = vmul.f32 %v5531, 0.70710677
        %v5816 = vmul.f32 %v5533, 0.70710677
        %v5817 = vmul.f32 %v5280, 0.70710677
        %v5818 = vmul.f32 %v5282, 0.70710677
        %v5819 = vmul.f32 %v5537, 0.70710677
        %v5820 = vmul.f32 %v5539, 0.70710677
        %v5821 = vmul.f32 %v5286, 0.70710677
        %v5822 = vmul.f32 %v5288, 0.70710677
        %v5823 = vmul.f32 %v5543, 0.70710677
        %v5824 = vmul.f32 %v5545, 0.70710677
        %v5825 = vmul.f32 %v5292, 0.70710677
        %v5826 = vmul.f32 %v5294, 0.70710677
        %v5827 = vmul.f32 %v5549, 0.70710677
        %v5828 = vmul.f32 %v5551, 0.70710677
        %v5829 = vmul.f32 %v5298, 0.70710677
        %v5830 = vmul.f32 %v5300, 0.70710677
        %v5831 = vmul.f32 %v5555, 0.70710677
        %v5832 = vmul.f32 %v5557, 0.70710677
        %v5833 = vmul.f32 %v5304, 0.70710677
        %v5834 = vmul.f32 %v5306, 0.70710677
        %v5835 = vmul.f32 %v5561, 0.70710677
        %v5836 = vmul.f32 %v5563, 0.70710677
        %v5837 = vmul.f32 %v5310, 0.70710677
        %v5838 = vmul.f32 %v5312, 0.70710677
        %v5839 = vmul.f32 %v5567, 0.70710677
        %v5840 = vmul.f32 %v5569, 0.70710677
        %v5841 = vmul.f32 %v5316, 0.70710677
        %v5842 = vmul.f32 %v5318, 0.70710677
        %v5843 = vmul.f32 %v5573, 0.70710677
        %v5844 = vmul.f32 %v5575, 0.70710677
        %v5845 = vmul.f32 %v5322, 0.70710677
        %v5846 = vmul.f32 %v5324, 0.70710677
        %v5847 = vmul.f32 %v5579, 0.70710677
        %v5848 = vmul.f32 %v5581, 0.70710677
        %v5849 = vmul.f32 %v5328, 0.70710677
        %v5850 = vmul.f32 %v5330, 0.70710677
        %v5851 = vmul.f32 %v5585, 0.70710677
        %v5852 = vmul.f32 %v5587, 0.70710677
        %v5853 = vmul.f32 %v5334, 0.70710677
        %v5854 = vmul.f32 %v5336, 0.70710677
        %v5855 = vmul.f32 %v5591, 0.70710677
        %v5856 = vmul.f32 %v5593, 0.70710677
        %v5857 = vmul.f32 %v5340, 0.70710677
        %v5858 = vmul.f32 %v5342, 0.70710677
        %v5859 = vmul.f32 %v5597, 0.70710677
        %v5860 = vmul.f32 %v5599, 0.70710677
        %v5861 = vmul.f32 %v5346, 0.70710677
        %v5862 = vmul.f32 %v5348, 0.70710677
        %v5863 = vmul.f32 %v5603, 0.70710677
        %v5864 = vmul.f32 %v5605, 0.70710677
        %v5865 = vmul.f32 %v5352, 0.70710677
        %v5866 = vmul.f32 %v5354, 0.70710677
        %v5867 = vmul.f32 %v5609, 0.70710677
        %v5868 = vmul.f32 %v5611, 0.70710677
        %v5869 = vand.u32 2147483647, %v5741
        %v5870 = vand.u32 2147483647, %v5742
        %v5871 = vand.u32 2147483647, %v5743
        %v5872 = vand.u32 2147483647, %v5744
        %v5873 = vand.u32 2147483647, %v5745
        %v5874 = vand.u32 2147483647, %v5746
        %v5875 = vand.u32 2147483647, %v5747
        %v5876 = vand.u32 2147483647, %v5748
        %v5877 = vand.u32 2147483647, %v5749
        %v5878 = vand.u32 2147483647, %v5750
        %v5879 = vand.u32 2147483647, %v5751
        %v5880 = vand.u32 2147483647, %v5752
        %v5881 = vand.u32 2147483647, %v5753
        %v5882 = vand.u32 2147483647, %v5754
        %v5883 = vand.u32 2147483647, %v5755
        %v5884 = vand.u32 2147483647, %v5756
        %v5885 = vand.u32 2147483647, %v5757
        %v5886 = vand.u32 2147483647, %v5758
        %v5887 = vand.u32 2147483647, %v5759
        %v5888 = vand.u32 2147483647, %v5760
        %v5889 = vand.u32 2147483647, %v5761
        %v5890 = vand.u32 2147483647, %v5762
        %v5891 = vand.u32 2147483647, %v5763
        %v5892 = vand.u32 2147483647, %v5764
        %v5893 = vand.u32 2147483647, %v5765
        %v5894 = vand.u32 2147483647, %v5766
        %v5895 = vand.u32 2147483647, %v5767
        %v5896 = vand.u32 2147483647, %v5768
        %v5897 = vand.u32 2147483647, %v5769
        %v5898 = vand.u32 2147483647, %v5770
        %v5899 = vand.u32 2147483647, %v5771
        %v5900 = vand.u32 2147483647, %v5772
        %v5901 = vand.u32 2147483647, %v5773
        %v5902 = vand.u32 2147483647, %v5774
        %v5903 = vand.u32 2147483647, %v5775
        %v5904 = vand.u32 2147483647, %v5776
        %v5905 = vand.u32 2147483647, %v5777
        %v5906 = vand.u32 2147483647, %v5778
        %v5907 = vand.u32 2147483647, %v5779
        %v5908 = vand.u32 2147483647, %v5780
        %v5909 = vand.u32 2147483647, %v5781
        %v5910 = vand.u32 2147483647, %v5782
        %v5911 = vand.u32 2147483647, %v5783
        %v5912 = vand.u32 2147483647, %v5784
        %v5913 = vand.u32 2147483647, %v5785
        %v5914 = vand.u32 2147483647, %v5786
        %v5915 = vand.u32 2147483647, %v5787
        %v5916 = vand.u32 2147483647, %v5788
        %v5917 = vand.u32 2147483647, %v5789
        %v5918 = vand.u32 2147483647, %v5790
        %v5919 = vand.u32 2147483647, %v5791
        %v5920 = vand.u32 2147483647, %v5792
        %v5921 = vand.u32 2147483647, %v5793
        %v5922 = vand.u32 2147483647, %v5794
        %v5923 = vand.u32 2147483647, %v5795
        %v5924 = vand.u32 2147483647, %v5796
        %v5925 = vand.u32 2147483647, %v5797
        %v5926 = vand.u32 2147483647, %v5798
        %v5927 = vand.u32 2147483647, %v5799
        %v5928 = vand.u32 2147483647, %v5800
        %v5929 = vand.u32 2147483647, %v5801
        %v5930 = vand.u32 2147483647, %v5802
        %v5931 = vand.u32 2147483647, %v5803
        %v5932 = vand.u32 2147483647, %v5804
        %v5933 = vand.u32 2147483647, %v5805
        %v5934 = vand.u32 2147483647, %v5806
        %v5935 = vand.u32 2147483647, %v5807
        %v5936 = vand.u32 2147483647, %v5808
        %v5937 = vand.u32 2147483647, %v5809
        %v5938 = vand.u32 2147483647, %v5810
        %v5939 = vand.u32 2147483647, %v5811
        %v5940 = vand.u32 2147483647, %v5812
        %v5941 = vand.u32 2147483647, %v5813
        %v5942 = vand.u32 2147483647, %v5814
        %v5943 = vand.u32 2147483647, %v5815
        %v5944 = vand.u32 2147483647, %v5816
        %v5945 = vand.u32 2147483647, %v5817
        %v5946 = vand.u32 2147483647, %v5818
        %v5947 = vand.u32 2147483647, %v5819
        %v5948 = vand.u32 2147483647, %v5820
        %v5949 = vand.u32 2147483647, %v5821
        %v5950 = vand.u32 2147483647, %v5822
        %v5951 = vand.u32 2147483647, %v5823
        %v5952 = vand.u32 2147483647, %v5824
        %v5953 = vand.u32 2147483647, %v5825
        %v5954 = vand.u32 2147483647, %v5826
        %v5955 = vand.u32 2147483647, %v5827
        %v5956 = vand.u32 2147483647, %v5828
        %v5957 = vand.u32 2147483647, %v5829
        %v5958 = vand.u32 2147483647, %v5830
        %v5959 = vand.u32 2147483647, %v5831
        %v5960 = vand.u32 2147483647, %v5832
        %v5961 = vand.u32 2147483647, %v5833
        %v5962 = vand.u32 2147483647, %v5834
        %v5963 = vand.u32 2147483647, %v5835
        %v5964 = vand.u32 2147483647, %v5836
        %v5965 = vand.u32 2147483647, %v5837
        %v5966 = vand.u32 2147483647, %v5838
        %v5967 = vand.u32 2147483647, %v5839
        %v5968 = vand.u32 2147483647, %v5840
        %v5969 = vand.u32 2147483647, %v5841
        %v5970 = vand.u32 2147483647, %v5842
        %v5971 = vand.u32 2147483647, %v5843
        %v5972 = vand.u32 2147483647, %v5844
        %v5973 = vand.u32 2147483647, %v5845
        %v5974 = vand.u32 2147483647, %v5846
        %v5975 = vand.u32 2147483647, %v5847
        %v5976 = vand.u32 2147483647, %v5848
        %v5977 = vand.u32 2147483647, %v5849
        %v5978 = vand.u32 2147483647, %v5850
        %v5979 = vand.u32 2147483647, %v5851
        %v5980 = vand.u32 2147483647, %v5852
        %v5981 = vand.u32 2147483647, %v5853
        %v5982 = vand.u32 2147483647, %v5854
        %v5983 = vand.u32 2147483647, %v5855
        %v5984 = vand.u32 2147483647, %v5856
        %v5985 = vand.u32 2147483647, %v5857
        %v5986 = vand.u32 2147483647, %v5858
        %v5987 = vand.u32 2147483647, %v5859
        %v5988 = vand.u32 2147483647, %v5860
        %v5989 = vand.u32 2147483647, %v5861
        %v5990 = vand.u32 2147483647, %v5862
        %v5991 = vand.u32 2147483647, %v5863
        %v5992 = vand.u32 2147483647, %v5864
        %v5993 = vand.u32 2147483647, %v5865
        %v5994 = vand.u32 2147483647, %v5866
        %v5995 = vand.u32 2147483647, %v5867
        %v5996 = vand.u32 2147483647, %v5868
        %v5997 = vmul.f32 %v5869, 0.3275911
        %v5998 = vmul.f32 %v5870, 0.3275911
        %v5999 = vmul.f32 %v5871, 0.3275911
        %v6000 = vmul.f32 %v5872, 0.3275911
        %v6001 = vmul.f32 %v5873, 0.3275911
        %v6002 = vmul.f32 %v5874, 0.3275911
        %v6003 = vmul.f32 %v5875, 0.3275911
        %v6004 = vmul.f32 %v5876, 0.3275911
        %v6005 = vmul.f32 %v5877, 0.3275911
        %v6006 = vmul.f32 %v5878, 0.3275911
        %v6007 = vmul.f32 %v5879, 0.3275911
        %v6008 = vmul.f32 %v5880, 0.3275911
        %v6009 = vmul.f32 %v5881, 0.3275911
        %v6010 = vmul.f32 %v5882, 0.3275911
        %v6011 = vmul.f32 %v5883, 0.3275911
        %v6012 = vmul.f32 %v5884, 0.3275911
        %v6013 = vmul.f32 %v5885, 0.3275911
        %v6014 = vmul.f32 %v5886, 0.3275911
        %v6015 = vmul.f32 %v5887, 0.3275911
        %v6016 = vmul.f32 %v5888, 0.3275911
        %v6017 = vmul.f32 %v5889, 0.3275911
        %v6018 = vmul.f32 %v5890, 0.3275911
        %v6019 = vmul.f32 %v5891, 0.3275911
        %v6020 = vmul.f32 %v5892, 0.3275911
        %v6021 = vmul.f32 %v5893, 0.3275911
        %v6022 = vmul.f32 %v5894, 0.3275911
        %v6023 = vmul.f32 %v5895, 0.3275911
        %v6024 = vmul.f32 %v5896, 0.3275911
        %v6025 = vmul.f32 %v5897, 0.3275911
        %v6026 = vmul.f32 %v5898, 0.3275911
        %v6027 = vmul.f32 %v5899, 0.3275911
        %v6028 = vmul.f32 %v5900, 0.3275911
        %v6029 = vmul.f32 %v5901, 0.3275911
        %v6030 = vmul.f32 %v5902, 0.3275911
        %v6031 = vmul.f32 %v5903, 0.3275911
        %v6032 = vmul.f32 %v5904, 0.3275911
        %v6033 = vmul.f32 %v5905, 0.3275911
        %v6034 = vmul.f32 %v5906, 0.3275911
        %v6035 = vmul.f32 %v5907, 0.3275911
        %v6036 = vmul.f32 %v5908, 0.3275911
        %v6037 = vmul.f32 %v5909, 0.3275911
        %v6038 = vmul.f32 %v5910, 0.3275911
        %v6039 = vmul.f32 %v5911, 0.3275911
        %v6040 = vmul.f32 %v5912, 0.3275911
        %v6041 = vmul.f32 %v5913, 0.3275911
        %v6042 = vmul.f32 %v5914, 0.3275911
        %v6043 = vmul.f32 %v5915, 0.3275911
        %v6044 = vmul.f32 %v5916, 0.3275911
        %v6045 = vmul.f32 %v5917, 0.3275911
        %v6046 = vmul.f32 %v5918, 0.3275911
        %v6047 = vmul.f32 %v5919, 0.3275911
        %v6048 = vmul.f32 %v5920, 0.3275911
        %v6049 = vmul.f32 %v5921, 0.3275911
        %v6050 = vmul.f32 %v5922, 0.3275911
        %v6051 = vmul.f32 %v5923, 0.3275911
        %v6052 = vmul.f32 %v5924, 0.3275911
        %v6053 = vmul.f32 %v5925, 0.3275911
        %v6054 = vmul.f32 %v5926, 0.3275911
        %v6055 = vmul.f32 %v5927, 0.3275911
        %v6056 = vmul.f32 %v5928, 0.3275911
        %v6057 = vmul.f32 %v5929, 0.3275911
        %v6058 = vmul.f32 %v5930, 0.3275911
        %v6059 = vmul.f32 %v5931, 0.3275911
        %v6060 = vmul.f32 %v5932, 0.3275911
        %v6061 = vmul.f32 %v5933, 0.3275911
        %v6062 = vmul.f32 %v5934, 0.3275911
        %v6063 = vmul.f32 %v5935, 0.3275911
        %v6064 = vmul.f32 %v5936, 0.3275911
        %v6065 = vmul.f32 %v5937, 0.3275911
        %v6066 = vmul.f32 %v5938, 0.3275911
        %v6067 = vmul.f32 %v5939, 0.3275911
        %v6068 = vmul.f32 %v5940, 0.3275911
        %v6069 = vmul.f32 %v5941, 0.3275911
        %v6070 = vmul.f32 %v5942, 0.3275911
        %v6071 = vmul.f32 %v5943, 0.3275911
        %v6072 = vmul.f32 %v5944, 0.3275911
        %v6073 = vmul.f32 %v5945, 0.3275911
        %v6074 = vmul.f32 %v5946, 0.3275911
        %v6075 = vmul.f32 %v5947, 0.3275911
        %v6076 = vmul.f32 %v5948, 0.3275911
        %v6077 = vmul.f32 %v5949, 0.3275911
        %v6078 = vmul.f32 %v5950, 0.3275911
        %v6079 = vmul.f32 %v5951, 0.3275911
        %v6080 = vmul.f32 %v5952, 0.3275911
        %v6081 = vmul.f32 %v5953, 0.3275911
        %v6082 = vmul.f32 %v5954, 0.3275911
        %v6083 = vmul.f32 %v5955, 0.3275911
        %v6084 = vmul.f32 %v5956, 0.3275911
        %v6085 = vmul.f32 %v5957, 0.3275911
        %v6086 = vmul.f32 %v5958, 0.3275911
        %v6087 = vmul.f32 %v5959, 0.3275911
        %v6088 = vmul.f32 %v5960, 0.3275911
        %v6089 = vmul.f32 %v5961, 0.3275911
        %v6090 = vmul.f32 %v5962, 0.3275911
        %v6091 = vmul.f32 %v5963, 0.3275911
        %v6092 = vmul.f32 %v5964, 0.3275911
        %v6093 = vmul.f32 %v5965, 0.3275911
        %v6094 = vmul.f32 %v5966, 0.3275911
        %v6095 = vmul.f32 %v5967, 0.3275911
        %v6096 = vmul.f32 %v5968, 0.3275911
        %v6097 = vmul.f32 %v5969, 0.3275911
        %v6098 = vmul.f32 %v5970, 0.3275911
        %v6099 = vmul.f32 %v5971, 0.3275911
        %v6100 = vmul.f32 %v5972, 0.3275911
        %v6101 = vmul.f32 %v5973, 0.3275911
        %v6102 = vmul.f32 %v5974, 0.3275911
        %v6103 = vmul.f32 %v5975, 0.3275911
        %v6104 = vmul.f32 %v5976, 0.3275911
        %v6105 = vmul.f32 %v5977, 0.3275911
        %v6106 = vmul.f32 %v5978, 0.3275911
        %v6107 = vmul.f32 %v5979, 0.3275911
        %v6108 = vmul.f32 %v5980, 0.3275911
        %v6109 = vmul.f32 %v5981, 0.3275911
        %v6110 = vmul.f32 %v5982, 0.3275911
        %v6111 = vmul.f32 %v5983, 0.3275911
        %v6112 = vmul.f32 %v5984, 0.3275911
        %v6113 = vmul.f32 %v5985, 0.3275911
        %v6114 = vmul.f32 %v5986, 0.3275911
        %v6115 = vmul.f32 %v5987, 0.3275911
        %v6116 = vmul.f32 %v5988, 0.3275911
        %v6117 = vmul.f32 %v5989, 0.3275911
        %v6118 = vmul.f32 %v5990, 0.3275911
        %v6119 = vmul.f32 %v5991, 0.3275911
        %v6120 = vmul.f32 %v5992, 0.3275911
        %v6121 = vmul.f32 %v5993, 0.3275911
        %v6122 = vmul.f32 %v5994, 0.3275911
        %v6123 = vmul.f32 %v5995, 0.3275911
        %v6124 = vmul.f32 %v5996, 0.3275911
        %v6125 = vadd.f32 %v5997, 1.0
        %v6126 = vadd.f32 %v5998, 1.0
        %v6127 = vadd.f32 %v5999, 1.0
        %v6128 = vadd.f32 %v6000, 1.0
        %v6129 = vadd.f32 %v6001, 1.0
        %v6130 = vadd.f32 %v6002, 1.0
        %v6131 = vadd.f32 %v6003, 1.0
        %v6132 = vadd.f32 %v6004, 1.0
        %v6133 = vadd.f32 %v6005, 1.0
        %v6134 = vadd.f32 %v6006, 1.0
        %v6135 = vadd.f32 %v6007, 1.0
        %v6136 = vadd.f32 %v6008, 1.0
        %v6137 = vadd.f32 %v6009, 1.0
        %v6138 = vadd.f32 %v6010, 1.0
        %v6139 = vadd.f32 %v6011, 1.0
        %v6140 = vadd.f32 %v6012, 1.0
        %v6141 = vadd.f32 %v6013, 1.0
        %v6142 = vadd.f32 %v6014, 1.0
        %v6143 = vadd.f32 %v6015, 1.0
        %v6144 = vadd.f32 %v6016, 1.0
        %v6145 = vadd.f32 %v6017, 1.0
        %v6146 = vadd.f32 %v6018, 1.0
        %v6147 = vadd.f32 %v6019, 1.0
        %v6148 = vadd.f32 %v6020, 1.0
        %v6149 = vadd.f32 %v6021, 1.0
        %v6150 = vadd.f32 %v6022, 1.0
        %v6151 = vadd.f32 %v6023, 1.0
        %v6152 = vadd.f32 %v6024, 1.0
        %v6153 = vadd.f32 %v6025, 1.0
        %v6154 = vadd.f32 %v6026, 1.0
        %v6155 = vadd.f32 %v6027, 1.0
        %v6156 = vadd.f32 %v6028, 1.0
        %v6157 = vadd.f32 %v6029, 1.0
        %v6158 = vadd.f32 %v6030, 1.0
        %v6159 = vadd.f32 %v6031, 1.0
        %v6160 = vadd.f32 %v6032, 1.0
        %v6161 = vadd.f32 %v6033, 1.0
        %v6162 = vadd.f32 %v6034, 1.0
        %v6163 = vadd.f32 %v6035, 1.0
        %v6164 = vadd.f32 %v6036, 1.0
        %v6165 = vadd.f32 %v6037, 1.0
        %v6166 = vadd.f32 %v6038, 1.0
        %v6167 = vadd.f32 %v6039, 1.0
        %v6168 = vadd.f32 %v6040, 1.0
        %v6169 = vadd.f32 %v6041, 1.0
        %v6170 = vadd.f32 %v6042, 1.0
        %v6171 = vadd.f32 %v6043, 1.0
        %v6172 = vadd.f32 %v6044, 1.0
        %v6173 = vadd.f32 %v6045, 1.0
        %v6174 = vadd.f32 %v6046, 1.0
        %v6175 = vadd.f32 %v6047, 1.0
        %v6176 = vadd.f32 %v6048, 1.0
        %v6177 = vadd.f32 %v6049, 1.0
        %v6178 = vadd.f32 %v6050, 1.0
        %v6179 = vadd.f32 %v6051, 1.0
        %v6180 = vadd.f32 %v6052, 1.0
        %v6181 = vadd.f32 %v6053, 1.0
        %v6182 = vadd.f32 %v6054, 1.0
        %v6183 = vadd.f32 %v6055, 1.0
        %v6184 = vadd.f32 %v6056, 1.0
        %v6185 = vadd.f32 %v6057, 1.0
        %v6186 = vadd.f32 %v6058, 1.0
        %v6187 = vadd.f32 %v6059, 1.0
        %v6188 = vadd.f32 %v6060, 1.0
        %v6189 = vadd.f32 %v6061, 1.0
        %v6190 = vadd.f32 %v6062, 1.0
        %v6191 = vadd.f32 %v6063, 1.0
        %v6192 = vadd.f32 %v6064, 1.0
        %v6193 = vadd.f32 %v6065, 1.0
        %v6194 = vadd.f32 %v6066, 1.0
        %v6195 = vadd.f32 %v6067, 1.0
        %v6196 = vadd.f32 %v6068, 1.0
        %v6197 = vadd.f32 %v6069, 1.0
        %v6198 = vadd.f32 %v6070, 1.0
        %v6199 = vadd.f32 %v6071, 1.0
        %v6200 = vadd.f32 %v6072, 1.0
        %v6201 = vadd.f32 %v6073, 1.0
        %v6202 = vadd.f32 %v6074, 1.0
        %v6203 = vadd.f32 %v6075, 1.0
        %v6204 = vadd.f32 %v6076, 1.0
        %v6205 = vadd.f32 %v6077, 1.0
        %v6206 = vadd.f32 %v6078, 1.0
        %v6207 = vadd.f32 %v6079, 1.0
        %v6208 = vadd.f32 %v6080, 1.0
        %v6209 = vadd.f32 %v6081, 1.0
        %v6210 = vadd.f32 %v6082, 1.0
        %v6211 = vadd.f32 %v6083, 1.0
        %v6212 = vadd.f32 %v6084, 1.0
        %v6213 = vadd.f32 %v6085, 1.0
        %v6214 = vadd.f32 %v6086, 1.0
        %v6215 = vadd.f32 %v6087, 1.0
        %v6216 = vadd.f32 %v6088, 1.0
        %v6217 = vadd.f32 %v6089, 1.0
        %v6218 = vadd.f32 %v6090, 1.0
        %v6219 = vadd.f32 %v6091, 1.0
        %v6220 = vadd.f32 %v6092, 1.0
        %v6221 = vadd.f32 %v6093, 1.0
        %v6222 = vadd.f32 %v6094, 1.0
        %v6223 = vadd.f32 %v6095, 1.0
        %v6224 = vadd.f32 %v6096, 1.0
        %v6225 = vadd.f32 %v6097, 1.0
        %v6226 = vadd.f32 %v6098, 1.0
        %v6227 = vadd.f32 %v6099, 1.0
        %v6228 = vadd.f32 %v6100, 1.0
        %v6229 = vadd.f32 %v6101, 1.0
        %v6230 = vadd.f32 %v6102, 1.0
        %v6231 = vadd.f32 %v6103, 1.0
        %v6232 = vadd.f32 %v6104, 1.0
        %v6233 = vadd.f32 %v6105, 1.0
        %v6234 = vadd.f32 %v6106, 1.0
        %v6235 = vadd.f32 %v6107, 1.0
        %v6236 = vadd.f32 %v6108, 1.0
        %v6237 = vadd.f32 %v6109, 1.0
        %v6238 = vadd.f32 %v6110, 1.0
        %v6239 = vadd.f32 %v6111, 1.0
        %v6240 = vadd.f32 %v6112, 1.0
        %v6241 = vadd.f32 %v6113, 1.0
        %v6242 = vadd.f32 %v6114, 1.0
        %v6243 = vadd.f32 %v6115, 1.0
        %v6244 = vadd.f32 %v6116, 1.0
        %v6245 = vadd.f32 %v6117, 1.0
        %v6246 = vadd.f32 %v6118, 1.0
        %v6247 = vadd.f32 %v6119, 1.0
        %v6248 = vadd.f32 %v6120, 1.0
        %v6249 = vadd.f32 %v6121, 1.0
        %v6250 = vadd.f32 %v6122, 1.0
        %v6251 = vadd.f32 %v6123, 1.0
        %v6252 = vadd.f32 %v6124, 1.0
        %v6253 = vrcp.pop %v6125
        %v6254 = vmul.f32 1.0, %v6253
        %v6255 = vrcp.pop %v6126
        %v6256 = vmul.f32 1.0, %v6255
        %v6257 = vrcp.pop %v6127
        %v6258 = vmul.f32 1.0, %v6257
        %v6259 = vrcp.pop %v6128
        %v6260 = vmul.f32 1.0, %v6259
        %v6261 = vrcp.pop %v6129
        %v6262 = vmul.f32 1.0, %v6261
        %v6263 = vrcp.pop %v6130
        %v6264 = vmul.f32 1.0, %v6263
        %v6265 = vrcp.pop %v6131
        %v6266 = vmul.f32 1.0, %v6265
        %v6267 = vrcp.pop %v6132
        %v6268 = vmul.f32 1.0, %v6267
        %v6269 = vrcp.pop %v6133
        %v6270 = vmul.f32 1.0, %v6269
        %v6271 = vrcp.pop %v6134
        %v6272 = vmul.f32 1.0, %v6271
        %v6273 = vrcp.pop %v6135
        %v6274 = vmul.f32 1.0, %v6273
        %v6275 = vrcp.pop %v6136
        %v6276 = vmul.f32 1.0, %v6275
        %v6277 = vrcp.pop %v6137
        %v6278 = vmul.f32 1.0, %v6277
        %v6279 = vrcp.pop %v6138
        %v6280 = vmul.f32 1.0, %v6279
        %v6281 = vrcp.pop %v6139
        %v6282 = vmul.f32 1.0, %v6281
        %v6283 = vrcp.pop %v6140
        %v6284 = vmul.f32 1.0, %v6283
        %v6285 = vrcp.pop %v6141
        %v6286 = vmul.f32 1.0, %v6285
        %v6287 = vrcp.pop %v6142
        %v6288 = vmul.f32 1.0, %v6287
        %v6289 = vrcp.pop %v6143
        %v6290 = vmul.f32 1.0, %v6289
        %v6291 = vrcp.pop %v6144
        %v6292 = vmul.f32 1.0, %v6291
        %v6293 = vrcp.pop %v6145
        %v6294 = vmul.f32 1.0, %v6293
        %v6295 = vrcp.pop %v6146
        %v6296 = vmul.f32 1.0, %v6295
        %v6297 = vrcp.pop %v6147
        %v6298 = vmul.f32 1.0, %v6297
        %v6299 = vrcp.pop %v6148
        %v6300 = vmul.f32 1.0, %v6299
        %v6301 = vrcp.pop %v6149
        %v6302 = vmul.f32 1.0, %v6301
        %v6303 = vrcp.pop %v6150
        %v6304 = vmul.f32 1.0, %v6303
        %v6305 = vrcp.pop %v6151
        %v6306 = vmul.f32 1.0, %v6305
        %v6307 = vrcp.pop %v6152
        %v6308 = vmul.f32 1.0, %v6307
        %v6309 = vrcp.pop %v6153
        %v6310 = vmul.f32 1.0, %v6309
        %v6311 = vrcp.pop %v6154
        %v6312 = vmul.f32 1.0, %v6311
        %v6313 = vrcp.pop %v6155
        %v6314 = vmul.f32 1.0, %v6313
        %v6315 = vrcp.pop %v6156
        %v6316 = vmul.f32 1.0, %v6315
        %v6317 = vrcp.pop %v6157
        %v6318 = vmul.f32 1.0, %v6317
        %v6319 = vrcp.pop %v6158
        %v6320 = vmul.f32 1.0, %v6319
        %v6321 = vrcp.pop %v6159
        %v6322 = vmul.f32 1.0, %v6321
        %v6323 = vrcp.pop %v6160
        %v6324 = vmul.f32 1.0, %v6323
        %v6325 = vrcp.pop %v6161
        %v6326 = vmul.f32 1.0, %v6325
        %v6327 = vrcp.pop %v6162
        %v6328 = vmul.f32 1.0, %v6327
        %v6329 = vrcp.pop %v6163
        %v6330 = vmul.f32 1.0, %v6329
        %v6331 = vrcp.pop %v6164
        %v6332 = vmul.f32 1.0, %v6331
        %v6333 = vrcp.pop %v6165
        %v6334 = vmul.f32 1.0, %v6333
        %v6335 = vrcp.pop %v6166
        %v6336 = vmul.f32 1.0, %v6335
        %v6337 = vrcp.pop %v6167
        %v6338 = vmul.f32 1.0, %v6337
        %v6339 = vrcp.pop %v6168
        %v6340 = vmul.f32 1.0, %v6339
        %v6341 = vrcp.pop %v6169
        %v6342 = vmul.f32 1.0, %v6341
        %v6343 = vrcp.pop %v6170
        %v6344 = vmul.f32 1.0, %v6343
        %v6345 = vrcp.pop %v6171
        %v6346 = vmul.f32 1.0, %v6345
        %v6347 = vrcp.pop %v6172
        %v6348 = vmul.f32 1.0, %v6347
        %v6349 = vrcp.pop %v6173
        %v6350 = vmul.f32 1.0, %v6349
        %v6351 = vrcp.pop %v6174
        %v6352 = vmul.f32 1.0, %v6351
        %v6353 = vrcp.pop %v6175
        %v6354 = vmul.f32 1.0, %v6353
        %v6355 = vrcp.pop %v6176
        %v6356 = vmul.f32 1.0, %v6355
        %v6357 = vrcp.pop %v6177
        %v6358 = vmul.f32 1.0, %v6357
        %v6359 = vrcp.pop %v6178
        %v6360 = vmul.f32 1.0, %v6359
        %v6361 = vrcp.pop %v6179
        %v6362 = vmul.f32 1.0, %v6361
        %v6363 = vrcp.pop %v6180
        %v6364 = vmul.f32 1.0, %v6363
        %v6365 = vrcp.pop %v6181
        %v6366 = vmul.f32 1.0, %v6365
        %v6367 = vrcp.pop %v6182
        %v6368 = vmul.f32 1.0, %v6367
        %v6369 = vrcp.pop %v6183
        %v6370 = vmul.f32 1.0, %v6369
        %v6371 = vrcp.pop %v6184
        %v6372 = vmul.f32 1.0, %v6371
        %v6373 = vrcp.pop %v6185
        %v6374 = vmul.f32 1.0, %v6373
        %v6375 = vrcp.pop %v6186
        %v6376 = vmul.f32 1.0, %v6375
        %v6377 = vrcp.pop %v6187
        %v6378 = vmul.f32 1.0, %v6377
        %v6379 = vrcp.pop %v6188
        %v6380 = vmul.f32 1.0, %v6379
        %v6381 = vrcp.pop %v6189
        %v6382 = vmul.f32 1.0, %v6381
        %v6383 = vrcp.pop %v6190
        %v6384 = vmul.f32 1.0, %v6383
        %v6385 = vrcp.pop %v6191
        %v6386 = vmul.f32 1.0, %v6385
        %v6387 = vrcp.pop %v6192
        %v6388 = vmul.f32 1.0, %v6387
        %v6389 = vrcp.pop %v6193
        %v6390 = vmul.f32 1.0, %v6389
        %v6391 = vrcp.pop %v6194
        %v6392 = vmul.f32 1.0, %v6391
        %v6393 = vrcp.pop %v6195
        %v6394 = vmul.f32 1.0, %v6393
        %v6395 = vrcp.pop %v6196
        %v6396 = vmul.f32 1.0, %v6395
        %v6397 = vrcp.pop %v6197
        %v6398 = vmul.f32 1.0, %v6397
        %v6399 = vrcp.pop %v6198
        %v6400 = vmul.f32 1.0, %v6399
        %v6401 = vrcp.pop %v6199
        %v6402 = vmul.f32 1.0, %v6401
        %v6403 = vrcp.pop %v6200
        %v6404 = vmul.f32 1.0, %v6403
        %v6405 = vrcp.pop %v6201
        %v6406 = vmul.f32 1.0, %v6405
        %v6407 = vrcp.pop %v6202
        %v6408 = vmul.f32 1.0, %v6407
        %v6409 = vrcp.pop %v6203
        %v6410 = vmul.f32 1.0, %v6409
        %v6411 = vrcp.pop %v6204
        %v6412 = vmul.f32 1.0, %v6411
        %v6413 = vrcp.pop %v6205
        %v6414 = vmul.f32 1.0, %v6413
        %v6415 = vrcp.pop %v6206
        %v6416 = vmul.f32 1.0, %v6415
        %v6417 = vrcp.pop %v6207
        %v6418 = vmul.f32 1.0, %v6417
        %v6419 = vrcp.pop %v6208
        %v6420 = vmul.f32 1.0, %v6419
        %v6421 = vrcp.pop %v6209
        %v6422 = vmul.f32 1.0, %v6421
        %v6423 = vrcp.pop %v6210
        %v6424 = vmul.f32 1.0, %v6423
        %v6425 = vrcp.pop %v6211
        %v6426 = vmul.f32 1.0, %v6425
        %v6427 = vrcp.pop %v6212
        %v6428 = vmul.f32 1.0, %v6427
        %v6429 = vrcp.pop %v6213
        %v6430 = vmul.f32 1.0, %v6429
        %v6431 = vrcp.pop %v6214
        %v6432 = vmul.f32 1.0, %v6431
        %v6433 = vrcp.pop %v6215
        %v6434 = vmul.f32 1.0, %v6433
        %v6435 = vrcp.pop %v6216
        %v6436 = vmul.f32 1.0, %v6435
        %v6437 = vrcp.pop %v6217
        %v6438 = vmul.f32 1.0, %v6437
        %v6439 = vrcp.pop %v6218
        %v6440 = vmul.f32 1.0, %v6439
        %v6441 = vrcp.pop %v6219
        %v6442 = vmul.f32 1.0, %v6441
        %v6443 = vrcp.pop %v6220
        %v6444 = vmul.f32 1.0, %v6443
        %v6445 = vrcp.pop %v6221
        %v6446 = vmul.f32 1.0, %v6445
        %v6447 = vrcp.pop %v6222
        %v6448 = vmul.f32 1.0, %v6447
        %v6449 = vrcp.pop %v6223
        %v6450 = vmul.f32 1.0, %v6449
        %v6451 = vrcp.pop %v6224
        %v6452 = vmul.f32 1.0, %v6451
        %v6453 = vrcp.pop %v6225
        %v6454 = vmul.f32 1.0, %v6453
        %v6455 = vrcp.pop %v6226
        %v6456 = vmul.f32 1.0, %v6455
        %v6457 = vrcp.pop %v6227
        %v6458 = vmul.f32 1.0, %v6457
        %v6459 = vrcp.pop %v6228
        %v6460 = vmul.f32 1.0, %v6459
        %v6461 = vrcp.pop %v6229
        %v6462 = vmul.f32 1.0, %v6461
        %v6463 = vrcp.pop %v6230
        %v6464 = vmul.f32 1.0, %v6463
        %v6465 = vrcp.pop %v6231
        %v6466 = vmul.f32 1.0, %v6465
        %v6467 = vrcp.pop %v6232
        %v6468 = vmul.f32 1.0, %v6467
        %v6469 = vrcp.pop %v6233
        %v6470 = vmul.f32 1.0, %v6469
        %v6471 = vrcp.pop %v6234
        %v6472 = vmul.f32 1.0, %v6471
        %v6473 = vrcp.pop %v6235
        %v6474 = vmul.f32 1.0, %v6473
        %v6475 = vrcp.pop %v6236
        %v6476 = vmul.f32 1.0, %v6475
        %v6477 = vrcp.pop %v6237
        %v6478 = vmul.f32 1.0, %v6477
        %v6479 = vrcp.pop %v6238
        %v6480 = vmul.f32 1.0, %v6479
        %v6481 = vrcp.pop %v6239
        %v6482 = vmul.f32 1.0, %v6481
        %v6483 = vrcp.pop %v6240
        %v6484 = vmul.f32 1.0, %v6483
        %v6485 = vrcp.pop %v6241
        %v6486 = vmul.f32 1.0, %v6485
        %v6487 = vrcp.pop %v6242
        %v6488 = vmul.f32 1.0, %v6487
        %v6489 = vrcp.pop %v6243
        %v6490 = vmul.f32 1.0, %v6489
        %v6491 = vrcp.pop %v6244
        %v6492 = vmul.f32 1.0, %v6491
        %v6493 = vrcp.pop %v6245
        %v6494 = vmul.f32 1.0, %v6493
        %v6495 = vrcp.pop %v6246
        %v6496 = vmul.f32 1.0, %v6495
        %v6497 = vrcp.pop %v6247
        %v6498 = vmul.f32 1.0, %v6497
        %v6499 = vrcp.pop %v6248
        %v6500 = vmul.f32 1.0, %v6499
        %v6501 = vrcp.pop %v6249
        %v6502 = vmul.f32 1.0, %v6501
        %v6503 = vrcp.pop %v6250
        %v6504 = vmul.f32 1.0, %v6503
        %v6505 = vrcp.pop %v6251
        %v6506 = vmul.f32 1.0, %v6505
        %v6507 = vrcp.pop %v6252
        %v6508 = vmul.f32 1.0, %v6507
        %v6509 = vmul.f32 %v6254, 1.0614054
        %v6510 = vmul.f32 %v6256, 1.0614054
        %v6511 = vmul.f32 %v6258, 1.0614054
        %v6512 = vmul.f32 %v6260, 1.0614054
        %v6513 = vmul.f32 %v6262, 1.0614054
        %v6514 = vmul.f32 %v6264, 1.0614054
        %v6515 = vmul.f32 %v6266, 1.0614054
        %v6516 = vmul.f32 %v6268, 1.0614054
        %v6517 = vmul.f32 %v6270, 1.0614054
        %v6518 = vmul.f32 %v6272, 1.0614054
        %v6519 = vmul.f32 %v6274, 1.0614054
        %v6520 = vmul.f32 %v6276, 1.0614054
        %v6521 = vmul.f32 %v6278, 1.0614054
        %v6522 = vmul.f32 %v6280, 1.0614054
        %v6523 = vmul.f32 %v6282, 1.0614054
        %v6524 = vmul.f32 %v6284, 1.0614054
        %v6525 = vmul.f32 %v6286, 1.0614054
        %v6526 = vmul.f32 %v6288, 1.0614054
        %v6527 = vmul.f32 %v6290, 1.0614054
        %v6528 = vmul.f32 %v6292, 1.0614054
        %v6529 = vmul.f32 %v6294, 1.0614054
        %v6530 = vmul.f32 %v6296, 1.0614054
        %v6531 = vmul.f32 %v6298, 1.0614054
        %v6532 = vmul.f32 %v6300, 1.0614054
        %v6533 = vmul.f32 %v6302, 1.0614054
        %v6534 = vmul.f32 %v6304, 1.0614054
        %v6535 = vmul.f32 %v6306, 1.0614054
        %v6536 = vmul.f32 %v6308, 1.0614054
        %v6537 = vmul.f32 %v6310, 1.0614054
        %v6538 = vmul.f32 %v6312, 1.0614054
        %v6539 = vmul.f32 %v6314, 1.0614054
        %v6540 = vmul.f32 %v6316, 1.0614054
        %v6541 = vmul.f32 %v6318, 1.0614054
        %v6542 = vmul.f32 %v6320, 1.0614054
        %v6543 = vmul.f32 %v6322, 1.0614054
        %v6544 = vmul.f32 %v6324, 1.0614054
        %v6545 = vmul.f32 %v6326, 1.0614054
        %v6546 = vmul.f32 %v6328, 1.0614054
        %v6547 = vmul.f32 %v6330, 1.0614054
        %v6548 = vmul.f32 %v6332, 1.0614054
        %v6549 = vmul.f32 %v6334, 1.0614054
        %v6550 = vmul.f32 %v6336, 1.0614054
        %v6551 = vmul.f32 %v6338, 1.0614054
        %v6552 = vmul.f32 %v6340, 1.0614054
        %v6553 = vmul.f32 %v6342, 1.0614054
        %v6554 = vmul.f32 %v6344, 1.0614054
        %v6555 = vmul.f32 %v6346, 1.0614054
        %v6556 = vmul.f32 %v6348, 1.0614054
        %v6557 = vmul.f32 %v6350, 1.0614054
        %v6558 = vmul.f32 %v6352, 1.0614054
        %v6559 = vmul.f32 %v6354, 1.0614054
        %v6560 = vmul.f32 %v6356, 1.0614054
        %v6561 = vmul.f32 %v6358, 1.0614054
        %v6562 = vmul.f32 %v6360, 1.0614054
        %v6563 = vmul.f32 %v6362, 1.0614054
        %v6564 = vmul.f32 %v6364, 1.0614054
        %v6565 = vmul.f32 %v6366, 1.0614054
        %v6566 = vmul.f32 %v6368, 1.0614054
        %v6567 = vmul.f32 %v6370, 1.0614054
        %v6568 = vmul.f32 %v6372, 1.0614054
        %v6569 = vmul.f32 %v6374, 1.0614054
        %v6570 = vmul.f32 %v6376, 1.0614054
        %v6571 = vmul.f32 %v6378, 1.0614054
        %v6572 = vmul.f32 %v6380, 1.0614054
        %v6573 = vmul.f32 %v6382, 1.0614054
        %v6574 = vmul.f32 %v6384, 1.0614054
        %v6575 = vmul.f32 %v6386, 1.0614054
        %v6576 = vmul.f32 %v6388, 1.0614054
        %v6577 = vmul.f32 %v6390, 1.0614054
        %v6578 = vmul.f32 %v6392, 1.0614054
        %v6579 = vmul.f32 %v6394, 1.0614054
        %v6580 = vmul.f32 %v6396, 1.0614054
        %v6581 = vmul.f32 %v6398, 1.0614054
        %v6582 = vmul.f32 %v6400, 1.0614054
        %v6583 = vmul.f32 %v6402, 1.0614054
        %v6584 = vmul.f32 %v6404, 1.0614054
        %v6585 = vmul.f32 %v6406, 1.0614054
        %v6586 = vmul.f32 %v6408, 1.0614054
        %v6587 = vmul.f32 %v6410, 1.0614054
        %v6588 = vmul.f32 %v6412, 1.0614054
        %v6589 = vmul.f32 %v6414, 1.0614054
        %v6590 = vmul.f32 %v6416, 1.0614054
        %v6591 = vmul.f32 %v6418, 1.0614054
        %v6592 = vmul.f32 %v6420, 1.0614054
        %v6593 = vmul.f32 %v6422, 1.0614054
        %v6594 = vmul.f32 %v6424, 1.0614054
        %v6595 = vmul.f32 %v6426, 1.0614054
        %v6596 = vmul.f32 %v6428, 1.0614054
        %v6597 = vmul.f32 %v6430, 1.0614054
        %v6598 = vmul.f32 %v6432, 1.0614054
        %v6599 = vmul.f32 %v6434, 1.0614054
        %v6600 = vmul.f32 %v6436, 1.0614054
        %v6601 = vmul.f32 %v6438, 1.0614054
        %v6602 = vmul.f32 %v6440, 1.0614054
        %v6603 = vmul.f32 %v6442, 1.0614054
        %v6604 = vmul.f32 %v6444, 1.0614054
        %v6605 = vmul.f32 %v6446, 1.0614054
        %v6606 = vmul.f32 %v6448, 1.0614054
        %v6607 = vmul.f32 %v6450, 1.0614054
        %v6608 = vmul.f32 %v6452, 1.0614054
        %v6609 = vmul.f32 %v6454, 1.0614054
        %v6610 = vmul.f32 %v6456, 1.0614054
        %v6611 = vmul.f32 %v6458, 1.0614054
        %v6612 = vmul.f32 %v6460, 1.0614054
        %v6613 = vmul.f32 %v6462, 1.0614054
        %v6614 = vmul.f32 %v6464, 1.0614054
        %v6615 = vmul.f32 %v6466, 1.0614054
        %v6616 = vmul.f32 %v6468, 1.0614054
        %v6617 = vmul.f32 %v6470, 1.0614054
        %v6618 = vmul.f32 %v6472, 1.0614054
        %v6619 = vmul.f32 %v6474, 1.0614054
        %v6620 = vmul.f32 %v6476, 1.0614054
        %v6621 = vmul.f32 %v6478, 1.0614054
        %v6622 = vmul.f32 %v6480, 1.0614054
        %v6623 = vmul.f32 %v6482, 1.0614054
        %v6624 = vmul.f32 %v6484, 1.0614054
        %v6625 = vmul.f32 %v6486, 1.0614054
        %v6626 = vmul.f32 %v6488, 1.0614054
        %v6627 = vmul.f32 %v6490, 1.0614054
        %v6628 = vmul.f32 %v6492, 1.0614054
        %v6629 = vmul.f32 %v6494, 1.0614054
        %v6630 = vmul.f32 %v6496, 1.0614054
        %v6631 = vmul.f32 %v6498, 1.0614054
        %v6632 = vmul.f32 %v6500, 1.0614054
        %v6633 = vmul.f32 %v6502, 1.0614054
        %v6634 = vmul.f32 %v6504, 1.0614054
        %v6635 = vmul.f32 %v6506, 1.0614054
        %v6636 = vmul.f32 %v6508, 1.0614054
        %v6637 = vadd.f32 %v6509, -1.4531521
        %v6638 = vadd.f32 %v6510, -1.4531521
        %v6639 = vadd.f32 %v6511, -1.4531521
        %v6640 = vadd.f32 %v6512, -1.4531521
        %v6641 = vadd.f32 %v6513, -1.4531521
        %v6642 = vadd.f32 %v6514, -1.4531521
        %v6643 = vadd.f32 %v6515, -1.4531521
        %v6644 = vadd.f32 %v6516, -1.4531521
        %v6645 = vadd.f32 %v6517, -1.4531521
        %v6646 = vadd.f32 %v6518, -1.4531521
        %v6647 = vadd.f32 %v6519, -1.4531521
        %v6648 = vadd.f32 %v6520, -1.4531521
        %v6649 = vadd.f32 %v6521, -1.4531521
        %v6650 = vadd.f32 %v6522, -1.4531521
        %v6651 = vadd.f32 %v6523, -1.4531521
        %v6652 = vadd.f32 %v6524, -1.4531521
        %v6653 = vadd.f32 %v6525, -1.4531521
        %v6654 = vadd.f32 %v6526, -1.4531521
        %v6655 = vadd.f32 %v6527, -1.4531521
        %v6656 = vadd.f32 %v6528, -1.4531521
        %v6657 = vadd.f32 %v6529, -1.4531521
        %v6658 = vadd.f32 %v6530, -1.4531521
        %v6659 = vadd.f32 %v6531, -1.4531521
        %v6660 = vadd.f32 %v6532, -1.4531521
        %v6661 = vadd.f32 %v6533, -1.4531521
        %v6662 = vadd.f32 %v6534, -1.4531521
        %v6663 = vadd.f32 %v6535, -1.4531521
        %v6664 = vadd.f32 %v6536, -1.4531521
        %v6665 = vadd.f32 %v6537, -1.4531521
        %v6666 = vadd.f32 %v6538, -1.4531521
        %v6667 = vadd.f32 %v6539, -1.4531521
        %v6668 = vadd.f32 %v6540, -1.4531521
        %v6669 = vadd.f32 %v6541, -1.4531521
        %v6670 = vadd.f32 %v6542, -1.4531521
        %v6671 = vadd.f32 %v6543, -1.4531521
        %v6672 = vadd.f32 %v6544, -1.4531521
        %v6673 = vadd.f32 %v6545, -1.4531521
        %v6674 = vadd.f32 %v6546, -1.4531521
        %v6675 = vadd.f32 %v6547, -1.4531521
        %v6676 = vadd.f32 %v6548, -1.4531521
        %v6677 = vadd.f32 %v6549, -1.4531521
        %v6678 = vadd.f32 %v6550, -1.4531521
        %v6679 = vadd.f32 %v6551, -1.4531521
        %v6680 = vadd.f32 %v6552, -1.4531521
        %v6681 = vadd.f32 %v6553, -1.4531521
        %v6682 = vadd.f32 %v6554, -1.4531521
        %v6683 = vadd.f32 %v6555, -1.4531521
        %v6684 = vadd.f32 %v6556, -1.4531521
        %v6685 = vadd.f32 %v6557, -1.4531521
        %v6686 = vadd.f32 %v6558, -1.4531521
        %v6687 = vadd.f32 %v6559, -1.4531521
        %v6688 = vadd.f32 %v6560, -1.4531521
        %v6689 = vadd.f32 %v6561, -1.4531521
        %v6690 = vadd.f32 %v6562, -1.4531521
        %v6691 = vadd.f32 %v6563, -1.4531521
        %v6692 = vadd.f32 %v6564, -1.4531521
        %v6693 = vadd.f32 %v6565, -1.4531521
        %v6694 = vadd.f32 %v6566, -1.4531521
        %v6695 = vadd.f32 %v6567, -1.4531521
        %v6696 = vadd.f32 %v6568, -1.4531521
        %v6697 = vadd.f32 %v6569, -1.4531521
        %v6698 = vadd.f32 %v6570, -1.4531521
        %v6699 = vadd.f32 %v6571, -1.4531521
        %v6700 = vadd.f32 %v6572, -1.4531521
        %v6701 = vadd.f32 %v6573, -1.4531521
        %v6702 = vadd.f32 %v6574, -1.4531521
        %v6703 = vadd.f32 %v6575, -1.4531521
        %v6704 = vadd.f32 %v6576, -1.4531521
        %v6705 = vadd.f32 %v6577, -1.4531521
        %v6706 = vadd.f32 %v6578, -1.4531521
        %v6707 = vadd.f32 %v6579, -1.4531521
        %v6708 = vadd.f32 %v6580, -1.4531521
        %v6709 = vadd.f32 %v6581, -1.4531521
        %v6710 = vadd.f32 %v6582, -1.4531521
        %v6711 = vadd.f32 %v6583, -1.4531521
        %v6712 = vadd.f32 %v6584, -1.4531521
        %v6713 = vadd.f32 %v6585, -1.4531521
        %v6714 = vadd.f32 %v6586, -1.4531521
        %v6715 = vadd.f32 %v6587, -1.4531521
        %v6716 = vadd.f32 %v6588, -1.4531521
        %v6717 = vadd.f32 %v6589, -1.4531521
        %v6718 = vadd.f32 %v6590, -1.4531521
        %v6719 = vadd.f32 %v6591, -1.4531521
        %v6720 = vadd.f32 %v6592, -1.4531521
        %v6721 = vadd.f32 %v6593, -1.4531521
        %v6722 = vadd.f32 %v6594, -1.4531521
        %v6723 = vadd.f32 %v6595, -1.4531521
        %v6724 = vadd.f32 %v6596, -1.4531521
        %v6725 = vadd.f32 %v6597, -1.4531521
        %v6726 = vadd.f32 %v6598, -1.4531521
        %v6727 = vadd.f32 %v6599, -1.4531521
        %v6728 = vadd.f32 %v6600, -1.4531521
        %v6729 = vadd.f32 %v6601, -1.4531521
        %v6730 = vadd.f32 %v6602, -1.4531521
        %v6731 = vadd.f32 %v6603, -1.4531521
        %v6732 = vadd.f32 %v6604, -1.4531521
        %v6733 = vadd.f32 %v6605, -1.4531521
        %v6734 = vadd.f32 %v6606, -1.4531521
        %v6735 = vadd.f32 %v6607, -1.4531521
        %v6736 = vadd.f32 %v6608, -1.4531521
        %v6737 = vadd.f32 %v6609, -1.4531521
        %v6738 = vadd.f32 %v6610, -1.4531521
        %v6739 = vadd.f32 %v6611, -1.4531521
        %v6740 = vadd.f32 %v6612, -1.4531521
        %v6741 = vadd.f32 %v6613, -1.4531521
        %v6742 = vadd.f32 %v6614, -1.4531521
        %v6743 = vadd.f32 %v6615, -1.4531521
        %v6744 = vadd.f32 %v6616, -1.4531521
        %v6745 = vadd.f32 %v6617, -1.4531521
        %v6746 = vadd.f32 %v6618, -1.4531521
        %v6747 = vadd.f32 %v6619, -1.4531521
        %v6748 = vadd.f32 %v6620, -1.4531521
        %v6749 = vadd.f32 %v6621, -1.4531521
        %v6750 = vadd.f32 %v6622, -1.4531521
        %v6751 = vadd.f32 %v6623, -1.4531521
        %v6752 = vadd.f32 %v6624, -1.4531521
        %v6753 = vadd.f32 %v6625, -1.4531521
        %v6754 = vadd.f32 %v6626, -1.4531521
        %v6755 = vadd.f32 %v6627, -1.4531521
        %v6756 = vadd.f32 %v6628, -1.4531521
        %v6757 = vadd.f32 %v6629, -1.4531521
        %v6758 = vadd.f32 %v6630, -1.4531521
        %v6759 = vadd.f32 %v6631, -1.4531521
        %v6760 = vadd.f32 %v6632, -1.4531521
        %v6761 = vadd.f32 %v6633, -1.4531521
        %v6762 = vadd.f32 %v6634, -1.4531521
        %v6763 = vadd.f32 %v6635, -1.4531521
        %v6764 = vadd.f32 %v6636, -1.4531521
        %v6765 = vmul.f32 %v6637, %v6254
        %v6766 = vmul.f32 %v6638, %v6256
        %v6767 = vmul.f32 %v6639, %v6258
        %v6768 = vmul.f32 %v6640, %v6260
        %v6769 = vmul.f32 %v6641, %v6262
        %v6770 = vmul.f32 %v6642, %v6264
        %v6771 = vmul.f32 %v6643, %v6266
        %v6772 = vmul.f32 %v6644, %v6268
        %v6773 = vmul.f32 %v6645, %v6270
        %v6774 = vmul.f32 %v6646, %v6272
        %v6775 = vmul.f32 %v6647, %v6274
        %v6776 = vmul.f32 %v6648, %v6276
        %v6777 = vmul.f32 %v6649, %v6278
        %v6778 = vmul.f32 %v6650, %v6280
        %v6779 = vmul.f32 %v6651, %v6282
        %v6780 = vmul.f32 %v6652, %v6284
        %v6781 = vmul.f32 %v6653, %v6286
        %v6782 = vmul.f32 %v6654, %v6288
        %v6783 = vmul.f32 %v6655, %v6290
        %v6784 = vmul.f32 %v6656, %v6292
        %v6785 = vmul.f32 %v6657, %v6294
        %v6786 = vmul.f32 %v6658, %v6296
        %v6787 = vmul.f32 %v6659, %v6298
        %v6788 = vmul.f32 %v6660, %v6300
        %v6789 = vmul.f32 %v6661, %v6302
        %v6790 = vmul.f32 %v6662, %v6304
        %v6791 = vmul.f32 %v6663, %v6306
        %v6792 = vmul.f32 %v6664, %v6308
        %v6793 = vmul.f32 %v6665, %v6310
        %v6794 = vmul.f32 %v6666, %v6312
        %v6795 = vmul.f32 %v6667, %v6314
        %v6796 = vmul.f32 %v6668, %v6316
        %v6797 = vmul.f32 %v6669, %v6318
        %v6798 = vmul.f32 %v6670, %v6320
        %v6799 = vmul.f32 %v6671, %v6322
        %v6800 = vmul.f32 %v6672, %v6324
        %v6801 = vmul.f32 %v6673, %v6326
        %v6802 = vmul.f32 %v6674, %v6328
        %v6803 = vmul.f32 %v6675, %v6330
        %v6804 = vmul.f32 %v6676, %v6332
        %v6805 = vmul.f32 %v6677, %v6334
        %v6806 = vmul.f32 %v6678, %v6336
        %v6807 = vmul.f32 %v6679, %v6338
        %v6808 = vmul.f32 %v6680, %v6340
        %v6809 = vmul.f32 %v6681, %v6342
        %v6810 = vmul.f32 %v6682, %v6344
        %v6811 = vmul.f32 %v6683, %v6346
        %v6812 = vmul.f32 %v6684, %v6348
        %v6813 = vmul.f32 %v6685, %v6350
        %v6814 = vmul.f32 %v6686, %v6352
        %v6815 = vmul.f32 %v6687, %v6354
        %v6816 = vmul.f32 %v6688, %v6356
        %v6817 = vmul.f32 %v6689, %v6358
        %v6818 = vmul.f32 %v6690, %v6360
        %v6819 = vmul.f32 %v6691, %v6362
        %v6820 = vmul.f32 %v6692, %v6364
        %v6821 = vmul.f32 %v6693, %v6366
        %v6822 = vmul.f32 %v6694, %v6368
        %v6823 = vmul.f32 %v6695, %v6370
        %v6824 = vmul.f32 %v6696, %v6372
        %v6825 = vmul.f32 %v6697, %v6374
        %v6826 = vmul.f32 %v6698, %v6376
        %v6827 = vmul.f32 %v6699, %v6378
        %v6828 = vmul.f32 %v6700, %v6380
        %v6829 = vmul.f32 %v6701, %v6382
        %v6830 = vmul.f32 %v6702, %v6384
        %v6831 = vmul.f32 %v6703, %v6386
        %v6832 = vmul.f32 %v6704, %v6388
        %v6833 = vmul.f32 %v6705, %v6390
        %v6834 = vmul.f32 %v6706, %v6392
        %v6835 = vmul.f32 %v6707, %v6394
        %v6836 = vmul.f32 %v6708, %v6396
        %v6837 = vmul.f32 %v6709, %v6398
        %v6838 = vmul.f32 %v6710, %v6400
        %v6839 = vmul.f32 %v6711, %v6402
        %v6840 = vmul.f32 %v6712, %v6404
        %v6841 = vmul.f32 %v6713, %v6406
        %v6842 = vmul.f32 %v6714, %v6408
        %v6843 = vmul.f32 %v6715, %v6410
        %v6844 = vmul.f32 %v6716, %v6412
        %v6845 = vmul.f32 %v6717, %v6414
        %v6846 = vmul.f32 %v6718, %v6416
        %v6847 = vmul.f32 %v6719, %v6418
        %v6848 = vmul.f32 %v6720, %v6420
        %v6849 = vmul.f32 %v6721, %v6422
        %v6850 = vmul.f32 %v6722, %v6424
        %v6851 = vmul.f32 %v6723, %v6426
        %v6852 = vmul.f32 %v6724, %v6428
        %v6853 = vmul.f32 %v6725, %v6430
        %v6854 = vmul.f32 %v6726, %v6432
        %v6855 = vmul.f32 %v6727, %v6434
        %v6856 = vmul.f32 %v6728, %v6436
        %v6857 = vmul.f32 %v6729, %v6438
        %v6858 = vmul.f32 %v6730, %v6440
        %v6859 = vmul.f32 %v6731, %v6442
        %v6860 = vmul.f32 %v6732, %v6444
        %v6861 = vmul.f32 %v6733, %v6446
        %v6862 = vmul.f32 %v6734, %v6448
        %v6863 = vmul.f32 %v6735, %v6450
        %v6864 = vmul.f32 %v6736, %v6452
        %v6865 = vmul.f32 %v6737, %v6454
        %v6866 = vmul.f32 %v6738, %v6456
        %v6867 = vmul.f32 %v6739, %v6458
        %v6868 = vmul.f32 %v6740, %v6460
        %v6869 = vmul.f32 %v6741, %v6462
        %v6870 = vmul.f32 %v6742, %v6464
        %v6871 = vmul.f32 %v6743, %v6466
        %v6872 = vmul.f32 %v6744, %v6468
        %v6873 = vmul.f32 %v6745, %v6470
        %v6874 = vmul.f32 %v6746, %v6472
        %v6875 = vmul.f32 %v6747, %v6474
        %v6876 = vmul.f32 %v6748, %v6476
        %v6877 = vmul.f32 %v6749, %v6478
        %v6878 = vmul.f32 %v6750, %v6480
        %v6879 = vmul.f32 %v6751, %v6482
        %v6880 = vmul.f32 %v6752, %v6484
        %v6881 = vmul.f32 %v6753, %v6486
        %v6882 = vmul.f32 %v6754, %v6488
        %v6883 = vmul.f32 %v6755, %v6490
        %v6884 = vmul.f32 %v6756, %v6492
        %v6885 = vmul.f32 %v6757, %v6494
        %v6886 = vmul.f32 %v6758, %v6496
        %v6887 = vmul.f32 %v6759, %v6498
        %v6888 = vmul.f32 %v6760, %v6500
        %v6889 = vmul.f32 %v6761, %v6502
        %v6890 = vmul.f32 %v6762, %v6504
        %v6891 = vmul.f32 %v6763, %v6506
        %v6892 = vmul.f32 %v6764, %v6508
        %v6893 = vadd.f32 %v6765, 1.4214138
        %v6894 = vadd.f32 %v6766, 1.4214138
        %v6895 = vadd.f32 %v6767, 1.4214138
        %v6896 = vadd.f32 %v6768, 1.4214138
        %v6897 = vadd.f32 %v6769, 1.4214138
        %v6898 = vadd.f32 %v6770, 1.4214138
        %v6899 = vadd.f32 %v6771, 1.4214138
        %v6900 = vadd.f32 %v6772, 1.4214138
        %v6901 = vadd.f32 %v6773, 1.4214138
        %v6902 = vadd.f32 %v6774, 1.4214138
        %v6903 = vadd.f32 %v6775, 1.4214138
        %v6904 = vadd.f32 %v6776, 1.4214138
        %v6905 = vadd.f32 %v6777, 1.4214138
        %v6906 = vadd.f32 %v6778, 1.4214138
        %v6907 = vadd.f32 %v6779, 1.4214138
        %v6908 = vadd.f32 %v6780, 1.4214138
        %v6909 = vadd.f32 %v6781, 1.4214138
        %v6910 = vadd.f32 %v6782, 1.4214138
        %v6911 = vadd.f32 %v6783, 1.4214138
        %v6912 = vadd.f32 %v6784, 1.4214138
        %v6913 = vadd.f32 %v6785, 1.4214138
        %v6914 = vadd.f32 %v6786, 1.4214138
        %v6915 = vadd.f32 %v6787, 1.4214138
        %v6916 = vadd.f32 %v6788, 1.4214138
        %v6917 = vadd.f32 %v6789, 1.4214138
        %v6918 = vadd.f32 %v6790, 1.4214138
        %v6919 = vadd.f32 %v6791, 1.4214138
        %v6920 = vadd.f32 %v6792, 1.4214138
        %v6921 = vadd.f32 %v6793, 1.4214138
        %v6922 = vadd.f32 %v6794, 1.4214138
        %v6923 = vadd.f32 %v6795, 1.4214138
        %v6924 = vadd.f32 %v6796, 1.4214138
        %v6925 = vadd.f32 %v6797, 1.4214138
        %v6926 = vadd.f32 %v6798, 1.4214138
        %v6927 = vadd.f32 %v6799, 1.4214138
        %v6928 = vadd.f32 %v6800, 1.4214138
        %v6929 = vadd.f32 %v6801, 1.4214138
        %v6930 = vadd.f32 %v6802, 1.4214138
        %v6931 = vadd.f32 %v6803, 1.4214138
        %v6932 = vadd.f32 %v6804, 1.4214138
        %v6933 = vadd.f32 %v6805, 1.4214138
        %v6934 = vadd.f32 %v6806, 1.4214138
        %v6935 = vadd.f32 %v6807, 1.4214138
        %v6936 = vadd.f32 %v6808, 1.4214138
        %v6937 = vadd.f32 %v6809, 1.4214138
        %v6938 = vadd.f32 %v6810, 1.4214138
        %v6939 = vadd.f32 %v6811, 1.4214138
        %v6940 = vadd.f32 %v6812, 1.4214138
        %v6941 = vadd.f32 %v6813, 1.4214138
        %v6942 = vadd.f32 %v6814, 1.4214138
        %v6943 = vadd.f32 %v6815, 1.4214138
        %v6944 = vadd.f32 %v6816, 1.4214138
        %v6945 = vadd.f32 %v6817, 1.4214138
        %v6946 = vadd.f32 %v6818, 1.4214138
        %v6947 = vadd.f32 %v6819, 1.4214138
        %v6948 = vadd.f32 %v6820, 1.4214138
        %v6949 = vadd.f32 %v6821, 1.4214138
        %v6950 = vadd.f32 %v6822, 1.4214138
        %v6951 = vadd.f32 %v6823, 1.4214138
        %v6952 = vadd.f32 %v6824, 1.4214138
        %v6953 = vadd.f32 %v6825, 1.4214138
        %v6954 = vadd.f32 %v6826, 1.4214138
        %v6955 = vadd.f32 %v6827, 1.4214138
        %v6956 = vadd.f32 %v6828, 1.4214138
        %v6957 = vadd.f32 %v6829, 1.4214138
        %v6958 = vadd.f32 %v6830, 1.4214138
        %v6959 = vadd.f32 %v6831, 1.4214138
        %v6960 = vadd.f32 %v6832, 1.4214138
        %v6961 = vadd.f32 %v6833, 1.4214138
        %v6962 = vadd.f32 %v6834, 1.4214138
        %v6963 = vadd.f32 %v6835, 1.4214138
        %v6964 = vadd.f32 %v6836, 1.4214138
        %v6965 = vadd.f32 %v6837, 1.4214138
        %v6966 = vadd.f32 %v6838, 1.4214138
        %v6967 = vadd.f32 %v6839, 1.4214138
        %v6968 = vadd.f32 %v6840, 1.4214138
        %v6969 = vadd.f32 %v6841, 1.4214138
        %v6970 = vadd.f32 %v6842, 1.4214138
        %v6971 = vadd.f32 %v6843, 1.4214138
        %v6972 = vadd.f32 %v6844, 1.4214138
        %v6973 = vadd.f32 %v6845, 1.4214138
        %v6974 = vadd.f32 %v6846, 1.4214138
        %v6975 = vadd.f32 %v6847, 1.4214138
        %v6976 = vadd.f32 %v6848, 1.4214138
        %v6977 = vadd.f32 %v6849, 1.4214138
        %v6978 = vadd.f32 %v6850, 1.4214138
        %v6979 = vadd.f32 %v6851, 1.4214138
        %v6980 = vadd.f32 %v6852, 1.4214138
        %v6981 = vadd.f32 %v6853, 1.4214138
        %v6982 = vadd.f32 %v6854, 1.4214138
        %v6983 = vadd.f32 %v6855, 1.4214138
        %v6984 = vadd.f32 %v6856, 1.4214138
        %v6985 = vadd.f32 %v6857, 1.4214138
        %v6986 = vadd.f32 %v6858, 1.4214138
        %v6987 = vadd.f32 %v6859, 1.4214138
        %v6988 = vadd.f32 %v6860, 1.4214138
        %v6989 = vadd.f32 %v6861, 1.4214138
        %v6990 = vadd.f32 %v6862, 1.4214138
        %v6991 = vadd.f32 %v6863, 1.4214138
        %v6992 = vadd.f32 %v6864, 1.4214138
        %v6993 = vadd.f32 %v6865, 1.4214138
        %v6994 = vadd.f32 %v6866, 1.4214138
        %v6995 = vadd.f32 %v6867, 1.4214138
        %v6996 = vadd.f32 %v6868, 1.4214138
        %v6997 = vadd.f32 %v6869, 1.4214138
        %v6998 = vadd.f32 %v6870, 1.4214138
        %v6999 = vadd.f32 %v6871, 1.4214138
        %v7000 = vadd.f32 %v6872, 1.4214138
        %v7001 = vadd.f32 %v6873, 1.4214138
        %v7002 = vadd.f32 %v6874, 1.4214138
        %v7003 = vadd.f32 %v6875, 1.4214138
        %v7004 = vadd.f32 %v6876, 1.4214138
        %v7005 = vadd.f32 %v6877, 1.4214138
        %v7006 = vadd.f32 %v6878, 1.4214138
        %v7007 = vadd.f32 %v6879, 1.4214138
        %v7008 = vadd.f32 %v6880, 1.4214138
        %v7009 = vadd.f32 %v6881, 1.4214138
        %v7010 = vadd.f32 %v6882, 1.4214138
        %v7011 = vadd.f32 %v6883, 1.4214138
        %v7012 = vadd.f32 %v6884, 1.4214138
        %v7013 = vadd.f32 %v6885, 1.4214138
        %v7014 = vadd.f32 %v6886, 1.4214138
        %v7015 = vadd.f32 %v6887, 1.4214138
        %v7016 = vadd.f32 %v6888, 1.4214138
        %v7017 = vadd.f32 %v6889, 1.4214138
        %v7018 = vadd.f32 %v6890, 1.4214138
        %v7019 = vadd.f32 %v6891, 1.4214138
        %v7020 = vadd.f32 %v6892, 1.4214138
        %v7021 = vmul.f32 %v6893, %v6254
        %v7022 = vmul.f32 %v6894, %v6256
        %v7023 = vmul.f32 %v6895, %v6258
        %v7024 = vmul.f32 %v6896, %v6260
        %v7025 = vmul.f32 %v6897, %v6262
        %v7026 = vmul.f32 %v6898, %v6264
        %v7027 = vmul.f32 %v6899, %v6266
        %v7028 = vmul.f32 %v6900, %v6268
        %v7029 = vmul.f32 %v6901, %v6270
        %v7030 = vmul.f32 %v6902, %v6272
        %v7031 = vmul.f32 %v6903, %v6274
        %v7032 = vmul.f32 %v6904, %v6276
        %v7033 = vmul.f32 %v6905, %v6278
        %v7034 = vmul.f32 %v6906, %v6280
        %v7035 = vmul.f32 %v6907, %v6282
        %v7036 = vmul.f32 %v6908, %v6284
        %v7037 = vmul.f32 %v6909, %v6286
        %v7038 = vmul.f32 %v6910, %v6288
        %v7039 = vmul.f32 %v6911, %v6290
        %v7040 = vmul.f32 %v6912, %v6292
        %v7041 = vmul.f32 %v6913, %v6294
        %v7042 = vmul.f32 %v6914, %v6296
        %v7043 = vmul.f32 %v6915, %v6298
        %v7044 = vmul.f32 %v6916, %v6300
        %v7045 = vmul.f32 %v6917, %v6302
        %v7046 = vmul.f32 %v6918, %v6304
        %v7047 = vmul.f32 %v6919, %v6306
        %v7048 = vmul.f32 %v6920, %v6308
        %v7049 = vmul.f32 %v6921, %v6310
        %v7050 = vmul.f32 %v6922, %v6312
        %v7051 = vmul.f32 %v6923, %v6314
        %v7052 = vmul.f32 %v6924, %v6316
        %v7053 = vmul.f32 %v6925, %v6318
        %v7054 = vmul.f32 %v6926, %v6320
        %v7055 = vmul.f32 %v6927, %v6322
        %v7056 = vmul.f32 %v6928, %v6324
        %v7057 = vmul.f32 %v6929, %v6326
        %v7058 = vmul.f32 %v6930, %v6328
        %v7059 = vmul.f32 %v6931, %v6330
        %v7060 = vmul.f32 %v6932, %v6332
        %v7061 = vmul.f32 %v6933, %v6334
        %v7062 = vmul.f32 %v6934, %v6336
        %v7063 = vmul.f32 %v6935, %v6338
        %v7064 = vmul.f32 %v6936, %v6340
        %v7065 = vmul.f32 %v6937, %v6342
        %v7066 = vmul.f32 %v6938, %v6344
        %v7067 = vmul.f32 %v6939, %v6346
        %v7068 = vmul.f32 %v6940, %v6348
        %v7069 = vmul.f32 %v6941, %v6350
        %v7070 = vmul.f32 %v6942, %v6352
        %v7071 = vmul.f32 %v6943, %v6354
        %v7072 = vmul.f32 %v6944, %v6356
        %v7073 = vmul.f32 %v6945, %v6358
        %v7074 = vmul.f32 %v6946, %v6360
        %v7075 = vmul.f32 %v6947, %v6362
        %v7076 = vmul.f32 %v6948, %v6364
        %v7077 = vmul.f32 %v6949, %v6366
        %v7078 = vmul.f32 %v6950, %v6368
        %v7079 = vmul.f32 %v6951, %v6370
        %v7080 = vmul.f32 %v6952, %v6372
        %v7081 = vmul.f32 %v6953, %v6374
        %v7082 = vmul.f32 %v6954, %v6376
        %v7083 = vmul.f32 %v6955, %v6378
        %v7084 = vmul.f32 %v6956, %v6380
        %v7085 = vmul.f32 %v6957, %v6382
        %v7086 = vmul.f32 %v6958, %v6384
        %v7087 = vmul.f32 %v6959, %v6386
        %v7088 = vmul.f32 %v6960, %v6388
        %v7089 = vmul.f32 %v6961, %v6390
        %v7090 = vmul.f32 %v6962, %v6392
        %v7091 = vmul.f32 %v6963, %v6394
        %v7092 = vmul.f32 %v6964, %v6396
        %v7093 = vmul.f32 %v6965, %v6398
        %v7094 = vmul.f32 %v6966, %v6400
        %v7095 = vmul.f32 %v6967, %v6402
        %v7096 = vmul.f32 %v6968, %v6404
        %v7097 = vmul.f32 %v6969, %v6406
        %v7098 = vmul.f32 %v6970, %v6408
        %v7099 = vmul.f32 %v6971, %v6410
        %v7100 = vmul.f32 %v6972, %v6412
        %v7101 = vmul.f32 %v6973, %v6414
        %v7102 = vmul.f32 %v6974, %v6416
        %v7103 = vmul.f32 %v6975, %v6418
        %v7104 = vmul.f32 %v6976, %v6420
        %v7105 = vmul.f32 %v6977, %v6422
        %v7106 = vmul.f32 %v6978, %v6424
        %v7107 = vmul.f32 %v6979, %v6426
        %v7108 = vmul.f32 %v6980, %v6428
        %v7109 = vmul.f32 %v6981, %v6430
        %v7110 = vmul.f32 %v6982, %v6432
        %v7111 = vmul.f32 %v6983, %v6434
        %v7112 = vmul.f32 %v6984, %v6436
        %v7113 = vmul.f32 %v6985, %v6438
        %v7114 = vmul.f32 %v6986, %v6440
        %v7115 = vmul.f32 %v6987, %v6442
        %v7116 = vmul.f32 %v6988, %v6444
        %v7117 = vmul.f32 %v6989, %v6446
        %v7118 = vmul.f32 %v6990, %v6448
        %v7119 = vmul.f32 %v6991, %v6450
        %v7120 = vmul.f32 %v6992, %v6452
        %v7121 = vmul.f32 %v6993, %v6454
        %v7122 = vmul.f32 %v6994, %v6456
        %v7123 = vmul.f32 %v6995, %v6458
        %v7124 = vmul.f32 %v6996, %v6460
        %v7125 = vmul.f32 %v6997, %v6462
        %v7126 = vmul.f32 %v6998, %v6464
        %v7127 = vmul.f32 %v6999, %v6466
        %v7128 = vmul.f32 %v7000, %v6468
        %v7129 = vmul.f32 %v7001, %v6470
        %v7130 = vmul.f32 %v7002, %v6472
        %v7131 = vmul.f32 %v7003, %v6474
        %v7132 = vmul.f32 %v7004, %v6476
        %v7133 = vmul.f32 %v7005, %v6478
        %v7134 = vmul.f32 %v7006, %v6480
        %v7135 = vmul.f32 %v7007, %v6482
        %v7136 = vmul.f32 %v7008, %v6484
        %v7137 = vmul.f32 %v7009, %v6486
        %v7138 = vmul.f32 %v7010, %v6488
        %v7139 = vmul.f32 %v7011, %v6490
        %v7140 = vmul.f32 %v7012, %v6492
        %v7141 = vmul.f32 %v7013, %v6494
        %v7142 = vmul.f32 %v7014, %v6496
        %v7143 = vmul.f32 %v7015, %v6498
        %v7144 = vmul.f32 %v7016, %v6500
        %v7145 = vmul.f32 %v7017, %v6502
        %v7146 = vmul.f32 %v7018, %v6504
        %v7147 = vmul.f32 %v7019, %v6506
        %v7148 = vmul.f32 %v7020, %v6508
        %v7149 = vadd.f32 %v7021, -0.28449672
        %v7150 = vadd.f32 %v7022, -0.28449672
        %v7151 = vadd.f32 %v7023, -0.28449672
        %v7152 = vadd.f32 %v7024, -0.28449672
        %v7153 = vadd.f32 %v7025, -0.28449672
        %v7154 = vadd.f32 %v7026, -0.28449672
        %v7155 = vadd.f32 %v7027, -0.28449672
        %v7156 = vadd.f32 %v7028, -0.28449672
        %v7157 = vadd.f32 %v7029, -0.28449672
        %v7158 = vadd.f32 %v7030, -0.28449672
        %v7159 = vadd.f32 %v7031, -0.28449672
        %v7160 = vadd.f32 %v7032, -0.28449672
        %v7161 = vadd.f32 %v7033, -0.28449672
        %v7162 = vadd.f32 %v7034, -0.28449672
        %v7163 = vadd.f32 %v7035, -0.28449672
        %v7164 = vadd.f32 %v7036, -0.28449672
        %v7165 = vadd.f32 %v7037, -0.28449672
        %v7166 = vadd.f32 %v7038, -0.28449672
        %v7167 = vadd.f32 %v7039, -0.28449672
        %v7168 = vadd.f32 %v7040, -0.28449672
        %v7169 = vadd.f32 %v7041, -0.28449672
        %v7170 = vadd.f32 %v7042, -0.28449672
        %v7171 = vadd.f32 %v7043, -0.28449672
        %v7172 = vadd.f32 %v7044, -0.28449672
        %v7173 = vadd.f32 %v7045, -0.28449672
        %v7174 = vadd.f32 %v7046, -0.28449672
        %v7175 = vadd.f32 %v7047, -0.28449672
        %v7176 = vadd.f32 %v7048, -0.28449672
        %v7177 = vadd.f32 %v7049, -0.28449672
        %v7178 = vadd.f32 %v7050, -0.28449672
        %v7179 = vadd.f32 %v7051, -0.28449672
        %v7180 = vadd.f32 %v7052, -0.28449672
        %v7181 = vadd.f32 %v7053, -0.28449672
        %v7182 = vadd.f32 %v7054, -0.28449672
        %v7183 = vadd.f32 %v7055, -0.28449672
        %v7184 = vadd.f32 %v7056, -0.28449672
        %v7185 = vadd.f32 %v7057, -0.28449672
        %v7186 = vadd.f32 %v7058, -0.28449672
        %v7187 = vadd.f32 %v7059, -0.28449672
        %v7188 = vadd.f32 %v7060, -0.28449672
        %v7189 = vadd.f32 %v7061, -0.28449672
        %v7190 = vadd.f32 %v7062, -0.28449672
        %v7191 = vadd.f32 %v7063, -0.28449672
        %v7192 = vadd.f32 %v7064, -0.28449672
        %v7193 = vadd.f32 %v7065, -0.28449672
        %v7194 = vadd.f32 %v7066, -0.28449672
        %v7195 = vadd.f32 %v7067, -0.28449672
        %v7196 = vadd.f32 %v7068, -0.28449672
        %v7197 = vadd.f32 %v7069, -0.28449672
        %v7198 = vadd.f32 %v7070, -0.28449672
        %v7199 = vadd.f32 %v7071, -0.28449672
        %v7200 = vadd.f32 %v7072, -0.28449672
        %v7201 = vadd.f32 %v7073, -0.28449672
        %v7202 = vadd.f32 %v7074, -0.28449672
        %v7203 = vadd.f32 %v7075, -0.28449672
        %v7204 = vadd.f32 %v7076, -0.28449672
        %v7205 = vadd.f32 %v7077, -0.28449672
        %v7206 = vadd.f32 %v7078, -0.28449672
        %v7207 = vadd.f32 %v7079, -0.28449672
        %v7208 = vadd.f32 %v7080, -0.28449672
        %v7209 = vadd.f32 %v7081, -0.28449672
        %v7210 = vadd.f32 %v7082, -0.28449672
        %v7211 = vadd.f32 %v7083, -0.28449672
        %v7212 = vadd.f32 %v7084, -0.28449672
        %v7213 = vadd.f32 %v7085, -0.28449672
        %v7214 = vadd.f32 %v7086, -0.28449672
        %v7215 = vadd.f32 %v7087, -0.28449672
        %v7216 = vadd.f32 %v7088, -0.28449672
        %v7217 = vadd.f32 %v7089, -0.28449672
        %v7218 = vadd.f32 %v7090, -0.28449672
        %v7219 = vadd.f32 %v7091, -0.28449672
        %v7220 = vadd.f32 %v7092, -0.28449672
        %v7221 = vadd.f32 %v7093, -0.28449672
        %v7222 = vadd.f32 %v7094, -0.28449672
        %v7223 = vadd.f32 %v7095, -0.28449672
        %v7224 = vadd.f32 %v7096, -0.28449672
        %v7225 = vadd.f32 %v7097, -0.28449672
        %v7226 = vadd.f32 %v7098, -0.28449672
        %v7227 = vadd.f32 %v7099, -0.28449672
        %v7228 = vadd.f32 %v7100, -0.28449672
        %v7229 = vadd.f32 %v7101, -0.28449672
        %v7230 = vadd.f32 %v7102, -0.28449672
        %v7231 = vadd.f32 %v7103, -0.28449672
        %v7232 = vadd.f32 %v7104, -0.28449672
        %v7233 = vadd.f32 %v7105, -0.28449672
        %v7234 = vadd.f32 %v7106, -0.28449672
        %v7235 = vadd.f32 %v7107, -0.28449672
        %v7236 = vadd.f32 %v7108, -0.28449672
        %v7237 = vadd.f32 %v7109, -0.28449672
        %v7238 = vadd.f32 %v7110, -0.28449672
        %v7239 = vadd.f32 %v7111, -0.28449672
        %v7240 = vadd.f32 %v7112, -0.28449672
        %v7241 = vadd.f32 %v7113, -0.28449672
        %v7242 = vadd.f32 %v7114, -0.28449672
        %v7243 = vadd.f32 %v7115, -0.28449672
        %v7244 = vadd.f32 %v7116, -0.28449672
        %v7245 = vadd.f32 %v7117, -0.28449672
        %v7246 = vadd.f32 %v7118, -0.28449672
        %v7247 = vadd.f32 %v7119, -0.28449672
        %v7248 = vadd.f32 %v7120, -0.28449672
        %v7249 = vadd.f32 %v7121, -0.28449672
        %v7250 = vadd.f32 %v7122, -0.28449672
        %v7251 = vadd.f32 %v7123, -0.28449672
        %v7252 = vadd.f32 %v7124, -0.28449672
        %v7253 = vadd.f32 %v7125, -0.28449672
        %v7254 = vadd.f32 %v7126, -0.28449672
        %v7255 = vadd.f32 %v7127, -0.28449672
        %v7256 = vadd.f32 %v7128, -0.28449672
        %v7257 = vadd.f32 %v7129, -0.28449672
        %v7258 = vadd.f32 %v7130, -0.28449672
        %v7259 = vadd.f32 %v7131, -0.28449672
        %v7260 = vadd.f32 %v7132, -0.28449672
        %v7261 = vadd.f32 %v7133, -0.28449672
        %v7262 = vadd.f32 %v7134, -0.28449672
        %v7263 = vadd.f32 %v7135, -0.28449672
        %v7264 = vadd.f32 %v7136, -0.28449672
        %v7265 = vadd.f32 %v7137, -0.28449672
        %v7266 = vadd.f32 %v7138, -0.28449672
        %v7267 = vadd.f32 %v7139, -0.28449672
        %v7268 = vadd.f32 %v7140, -0.28449672
        %v7269 = vadd.f32 %v7141, -0.28449672
        %v7270 = vadd.f32 %v7142, -0.28449672
        %v7271 = vadd.f32 %v7143, -0.28449672
        %v7272 = vadd.f32 %v7144, -0.28449672
        %v7273 = vadd.f32 %v7145, -0.28449672
        %v7274 = vadd.f32 %v7146, -0.28449672
        %v7275 = vadd.f32 %v7147, -0.28449672
        %v7276 = vadd.f32 %v7148, -0.28449672
        %v7277 = vmul.f32 %v7149, %v6254
        %v7278 = vmul.f32 %v7150, %v6256
        %v7279 = vmul.f32 %v7151, %v6258
        %v7280 = vmul.f32 %v7152, %v6260
        %v7281 = vmul.f32 %v7153, %v6262
        %v7282 = vmul.f32 %v7154, %v6264
        %v7283 = vmul.f32 %v7155, %v6266
        %v7284 = vmul.f32 %v7156, %v6268
        %v7285 = vmul.f32 %v7157, %v6270
        %v7286 = vmul.f32 %v7158, %v6272
        %v7287 = vmul.f32 %v7159, %v6274
        %v7288 = vmul.f32 %v7160, %v6276
        %v7289 = vmul.f32 %v7161, %v6278
        %v7290 = vmul.f32 %v7162, %v6280
        %v7291 = vmul.f32 %v7163, %v6282
        %v7292 = vmul.f32 %v7164, %v6284
        %v7293 = vmul.f32 %v7165, %v6286
        %v7294 = vmul.f32 %v7166, %v6288
        %v7295 = vmul.f32 %v7167, %v6290
        %v7296 = vmul.f32 %v7168, %v6292
        %v7297 = vmul.f32 %v7169, %v6294
        %v7298 = vmul.f32 %v7170, %v6296
        %v7299 = vmul.f32 %v7171, %v6298
        %v7300 = vmul.f32 %v7172, %v6300
        %v7301 = vmul.f32 %v7173, %v6302
        %v7302 = vmul.f32 %v7174, %v6304
        %v7303 = vmul.f32 %v7175, %v6306
        %v7304 = vmul.f32 %v7176, %v6308
        %v7305 = vmul.f32 %v7177, %v6310
        %v7306 = vmul.f32 %v7178, %v6312
        %v7307 = vmul.f32 %v7179, %v6314
        %v7308 = vmul.f32 %v7180, %v6316
        %v7309 = vmul.f32 %v7181, %v6318
        %v7310 = vmul.f32 %v7182, %v6320
        %v7311 = vmul.f32 %v7183, %v6322
        %v7312 = vmul.f32 %v7184, %v6324
        %v7313 = vmul.f32 %v7185, %v6326
        %v7314 = vmul.f32 %v7186, %v6328
        %v7315 = vmul.f32 %v7187, %v6330
        %v7316 = vmul.f32 %v7188, %v6332
        %v7317 = vmul.f32 %v7189, %v6334
        %v7318 = vmul.f32 %v7190, %v6336
        %v7319 = vmul.f32 %v7191, %v6338
        %v7320 = vmul.f32 %v7192, %v6340
        %v7321 = vmul.f32 %v7193, %v6342
        %v7322 = vmul.f32 %v7194, %v6344
        %v7323 = vmul.f32 %v7195, %v6346
        %v7324 = vmul.f32 %v7196, %v6348
        %v7325 = vmul.f32 %v7197, %v6350
        %v7326 = vmul.f32 %v7198, %v6352
        %v7327 = vmul.f32 %v7199, %v6354
        %v7328 = vmul.f32 %v7200, %v6356
        %v7329 = vmul.f32 %v7201, %v6358
        %v7330 = vmul.f32 %v7202, %v6360
        %v7331 = vmul.f32 %v7203, %v6362
        %v7332 = vmul.f32 %v7204, %v6364
        %v7333 = vmul.f32 %v7205, %v6366
        %v7334 = vmul.f32 %v7206, %v6368
        %v7335 = vmul.f32 %v7207, %v6370
        %v7336 = vmul.f32 %v7208, %v6372
        %v7337 = vmul.f32 %v7209, %v6374
        %v7338 = vmul.f32 %v7210, %v6376
        %v7339 = vmul.f32 %v7211, %v6378
        %v7340 = vmul.f32 %v7212, %v6380
        %v7341 = vmul.f32 %v7213, %v6382
        %v7342 = vmul.f32 %v7214, %v6384
        %v7343 = vmul.f32 %v7215, %v6386
        %v7344 = vmul.f32 %v7216, %v6388
        %v7345 = vmul.f32 %v7217, %v6390
        %v7346 = vmul.f32 %v7218, %v6392
        %v7347 = vmul.f32 %v7219, %v6394
        %v7348 = vmul.f32 %v7220, %v6396
        %v7349 = vmul.f32 %v7221, %v6398
        %v7350 = vmul.f32 %v7222, %v6400
        %v7351 = vmul.f32 %v7223, %v6402
        %v7352 = vmul.f32 %v7224, %v6404
        %v7353 = vmul.f32 %v7225, %v6406
        %v7354 = vmul.f32 %v7226, %v6408
        %v7355 = vmul.f32 %v7227, %v6410
        %v7356 = vmul.f32 %v7228, %v6412
        %v7357 = vmul.f32 %v7229, %v6414
        %v7358 = vmul.f32 %v7230, %v6416
        %v7359 = vmul.f32 %v7231, %v6418
        %v7360 = vmul.f32 %v7232, %v6420
        %v7361 = vmul.f32 %v7233, %v6422
        %v7362 = vmul.f32 %v7234, %v6424
        %v7363 = vmul.f32 %v7235, %v6426
        %v7364 = vmul.f32 %v7236, %v6428
        %v7365 = vmul.f32 %v7237, %v6430
        %v7366 = vmul.f32 %v7238, %v6432
        %v7367 = vmul.f32 %v7239, %v6434
        %v7368 = vmul.f32 %v7240, %v6436
        %v7369 = vmul.f32 %v7241, %v6438
        %v7370 = vmul.f32 %v7242, %v6440
        %v7371 = vmul.f32 %v7243, %v6442
        %v7372 = vmul.f32 %v7244, %v6444
        %v7373 = vmul.f32 %v7245, %v6446
        %v7374 = vmul.f32 %v7246, %v6448
        %v7375 = vmul.f32 %v7247, %v6450
        %v7376 = vmul.f32 %v7248, %v6452
        %v7377 = vmul.f32 %v7249, %v6454
        %v7378 = vmul.f32 %v7250, %v6456
        %v7379 = vmul.f32 %v7251, %v6458
        %v7380 = vmul.f32 %v7252, %v6460
        %v7381 = vmul.f32 %v7253, %v6462
        %v7382 = vmul.f32 %v7254, %v6464
        %v7383 = vmul.f32 %v7255, %v6466
        %v7384 = vmul.f32 %v7256, %v6468
        %v7385 = vmul.f32 %v7257, %v6470
        %v7386 = vmul.f32 %v7258, %v6472
        %v7387 = vmul.f32 %v7259, %v6474
        %v7388 = vmul.f32 %v7260, %v6476
        %v7389 = vmul.f32 %v7261, %v6478
        %v7390 = vmul.f32 %v7262, %v6480
        %v7391 = vmul.f32 %v7263, %v6482
        %v7392 = vmul.f32 %v7264, %v6484
        %v7393 = vmul.f32 %v7265, %v6486
        %v7394 = vmul.f32 %v7266, %v6488
        %v7395 = vmul.f32 %v7267, %v6490
        %v7396 = vmul.f32 %v7268, %v6492
        %v7397 = vmul.f32 %v7269, %v6494
        %v7398 = vmul.f32 %v7270, %v6496
        %v7399 = vmul.f32 %v7271, %v6498
        %v7400 = vmul.f32 %v7272, %v6500
        %v7401 = vmul.f32 %v7273, %v6502
        %v7402 = vmul.f32 %v7274, %v6504
        %v7403 = vmul.f32 %v7275, %v6506
        %v7404 = vmul.f32 %v7276, %v6508
        %v7405 = vadd.f32 %v7277, 0.2548296
        %v7406 = vadd.f32 %v7278, 0.2548296
        %v7407 = vadd.f32 %v7279, 0.2548296
        %v7408 = vadd.f32 %v7280, 0.2548296
        %v7409 = vadd.f32 %v7281, 0.2548296
        %v7410 = vadd.f32 %v7282, 0.2548296
        %v7411 = vadd.f32 %v7283, 0.2548296
        %v7412 = vadd.f32 %v7284, 0.2548296
        %v7413 = vadd.f32 %v7285, 0.2548296
        %v7414 = vadd.f32 %v7286, 0.2548296
        %v7415 = vadd.f32 %v7287, 0.2548296
        %v7416 = vadd.f32 %v7288, 0.2548296
        %v7417 = vadd.f32 %v7289, 0.2548296
        %v7418 = vadd.f32 %v7290, 0.2548296
        %v7419 = vadd.f32 %v7291, 0.2548296
        %v7420 = vadd.f32 %v7292, 0.2548296
        %v7421 = vadd.f32 %v7293, 0.2548296
        %v7422 = vadd.f32 %v7294, 0.2548296
        %v7423 = vadd.f32 %v7295, 0.2548296
        %v7424 = vadd.f32 %v7296, 0.2548296
        %v7425 = vadd.f32 %v7297, 0.2548296
        %v7426 = vadd.f32 %v7298, 0.2548296
        %v7427 = vadd.f32 %v7299, 0.2548296
        %v7428 = vadd.f32 %v7300, 0.2548296
        %v7429 = vadd.f32 %v7301, 0.2548296
        %v7430 = vadd.f32 %v7302, 0.2548296
        %v7431 = vadd.f32 %v7303, 0.2548296
        %v7432 = vadd.f32 %v7304, 0.2548296
        %v7433 = vadd.f32 %v7305, 0.2548296
        %v7434 = vadd.f32 %v7306, 0.2548296
        %v7435 = vadd.f32 %v7307, 0.2548296
        %v7436 = vadd.f32 %v7308, 0.2548296
        %v7437 = vadd.f32 %v7309, 0.2548296
        %v7438 = vadd.f32 %v7310, 0.2548296
        %v7439 = vadd.f32 %v7311, 0.2548296
        %v7440 = vadd.f32 %v7312, 0.2548296
        %v7441 = vadd.f32 %v7313, 0.2548296
        %v7442 = vadd.f32 %v7314, 0.2548296
        %v7443 = vadd.f32 %v7315, 0.2548296
        %v7444 = vadd.f32 %v7316, 0.2548296
        %v7445 = vadd.f32 %v7317, 0.2548296
        %v7446 = vadd.f32 %v7318, 0.2548296
        %v7447 = vadd.f32 %v7319, 0.2548296
        %v7448 = vadd.f32 %v7320, 0.2548296
        %v7449 = vadd.f32 %v7321, 0.2548296
        %v7450 = vadd.f32 %v7322, 0.2548296
        %v7451 = vadd.f32 %v7323, 0.2548296
        %v7452 = vadd.f32 %v7324, 0.2548296
        %v7453 = vadd.f32 %v7325, 0.2548296
        %v7454 = vadd.f32 %v7326, 0.2548296
        %v7455 = vadd.f32 %v7327, 0.2548296
        %v7456 = vadd.f32 %v7328, 0.2548296
        %v7457 = vadd.f32 %v7329, 0.2548296
        %v7458 = vadd.f32 %v7330, 0.2548296
        %v7459 = vadd.f32 %v7331, 0.2548296
        %v7460 = vadd.f32 %v7332, 0.2548296
        %v7461 = vadd.f32 %v7333, 0.2548296
        %v7462 = vadd.f32 %v7334, 0.2548296
        %v7463 = vadd.f32 %v7335, 0.2548296
        %v7464 = vadd.f32 %v7336, 0.2548296
        %v7465 = vadd.f32 %v7337, 0.2548296
        %v7466 = vadd.f32 %v7338, 0.2548296
        %v7467 = vadd.f32 %v7339, 0.2548296
        %v7468 = vadd.f32 %v7340, 0.2548296
        %v7469 = vadd.f32 %v7341, 0.2548296
        %v7470 = vadd.f32 %v7342, 0.2548296
        %v7471 = vadd.f32 %v7343, 0.2548296
        %v7472 = vadd.f32 %v7344, 0.2548296
        %v7473 = vadd.f32 %v7345, 0.2548296
        %v7474 = vadd.f32 %v7346, 0.2548296
        %v7475 = vadd.f32 %v7347, 0.2548296
        %v7476 = vadd.f32 %v7348, 0.2548296
        %v7477 = vadd.f32 %v7349, 0.2548296
        %v7478 = vadd.f32 %v7350, 0.2548296
        %v7479 = vadd.f32 %v7351, 0.2548296
        %v7480 = vadd.f32 %v7352, 0.2548296
        %v7481 = vadd.f32 %v7353, 0.2548296
        %v7482 = vadd.f32 %v7354, 0.2548296
        %v7483 = vadd.f32 %v7355, 0.2548296
        %v7484 = vadd.f32 %v7356, 0.2548296
        %v7485 = vadd.f32 %v7357, 0.2548296
        %v7486 = vadd.f32 %v7358, 0.2548296
        %v7487 = vadd.f32 %v7359, 0.2548296
        %v7488 = vadd.f32 %v7360, 0.2548296
        %v7489 = vadd.f32 %v7361, 0.2548296
        %v7490 = vadd.f32 %v7362, 0.2548296
        %v7491 = vadd.f32 %v7363, 0.2548296
        %v7492 = vadd.f32 %v7364, 0.2548296
        %v7493 = vadd.f32 %v7365, 0.2548296
        %v7494 = vadd.f32 %v7366, 0.2548296
        %v7495 = vadd.f32 %v7367, 0.2548296
        %v7496 = vadd.f32 %v7368, 0.2548296
        %v7497 = vadd.f32 %v7369, 0.2548296
        %v7498 = vadd.f32 %v7370, 0.2548296
        %v7499 = vadd.f32 %v7371, 0.2548296
        %v7500 = vadd.f32 %v7372, 0.2548296
        %v7501 = vadd.f32 %v7373, 0.2548296
        %v7502 = vadd.f32 %v7374, 0.2548296
        %v7503 = vadd.f32 %v7375, 0.2548296
        %v7504 = vadd.f32 %v7376, 0.2548296
        %v7505 = vadd.f32 %v7377, 0.2548296
        %v7506 = vadd.f32 %v7378, 0.2548296
        %v7507 = vadd.f32 %v7379, 0.2548296
        %v7508 = vadd.f32 %v7380, 0.2548296
        %v7509 = vadd.f32 %v7381, 0.2548296
        %v7510 = vadd.f32 %v7382, 0.2548296
        %v7511 = vadd.f32 %v7383, 0.2548296
        %v7512 = vadd.f32 %v7384, 0.2548296
        %v7513 = vadd.f32 %v7385, 0.2548296
        %v7514 = vadd.f32 %v7386, 0.2548296
        %v7515 = vadd.f32 %v7387, 0.2548296
        %v7516 = vadd.f32 %v7388, 0.2548296
        %v7517 = vadd.f32 %v7389, 0.2548296
        %v7518 = vadd.f32 %v7390, 0.2548296
        %v7519 = vadd.f32 %v7391, 0.2548296
        %v7520 = vadd.f32 %v7392, 0.2548296
        %v7521 = vadd.f32 %v7393, 0.2548296
        %v7522 = vadd.f32 %v7394, 0.2548296
        %v7523 = vadd.f32 %v7395, 0.2548296
        %v7524 = vadd.f32 %v7396, 0.2548296
        %v7525 = vadd.f32 %v7397, 0.2548296
        %v7526 = vadd.f32 %v7398, 0.2548296
        %v7527 = vadd.f32 %v7399, 0.2548296
        %v7528 = vadd.f32 %v7400, 0.2548296
        %v7529 = vadd.f32 %v7401, 0.2548296
        %v7530 = vadd.f32 %v7402, 0.2548296
        %v7531 = vadd.f32 %v7403, 0.2548296
        %v7532 = vadd.f32 %v7404, 0.2548296
        %v7533 = vmul.f32 %v7405, %v6254
        %v7534 = vmul.f32 %v7406, %v6256
        %v7535 = vmul.f32 %v7407, %v6258
        %v7536 = vmul.f32 %v7408, %v6260
        %v7537 = vmul.f32 %v7409, %v6262
        %v7538 = vmul.f32 %v7410, %v6264
        %v7539 = vmul.f32 %v7411, %v6266
        %v7540 = vmul.f32 %v7412, %v6268
        %v7541 = vmul.f32 %v7413, %v6270
        %v7542 = vmul.f32 %v7414, %v6272
        %v7543 = vmul.f32 %v7415, %v6274
        %v7544 = vmul.f32 %v7416, %v6276
        %v7545 = vmul.f32 %v7417, %v6278
        %v7546 = vmul.f32 %v7418, %v6280
        %v7547 = vmul.f32 %v7419, %v6282
        %v7548 = vmul.f32 %v7420, %v6284
        %v7549 = vmul.f32 %v7421, %v6286
        %v7550 = vmul.f32 %v7422, %v6288
        %v7551 = vmul.f32 %v7423, %v6290
        %v7552 = vmul.f32 %v7424, %v6292
        %v7553 = vmul.f32 %v7425, %v6294
        %v7554 = vmul.f32 %v7426, %v6296
        %v7555 = vmul.f32 %v7427, %v6298
        %v7556 = vmul.f32 %v7428, %v6300
        %v7557 = vmul.f32 %v7429, %v6302
        %v7558 = vmul.f32 %v7430, %v6304
        %v7559 = vmul.f32 %v7431, %v6306
        %v7560 = vmul.f32 %v7432, %v6308
        %v7561 = vmul.f32 %v7433, %v6310
        %v7562 = vmul.f32 %v7434, %v6312
        %v7563 = vmul.f32 %v7435, %v6314
        %v7564 = vmul.f32 %v7436, %v6316
        %v7565 = vmul.f32 %v7437, %v6318
        %v7566 = vmul.f32 %v7438, %v6320
        %v7567 = vmul.f32 %v7439, %v6322
        %v7568 = vmul.f32 %v7440, %v6324
        %v7569 = vmul.f32 %v7441, %v6326
        %v7570 = vmul.f32 %v7442, %v6328
        %v7571 = vmul.f32 %v7443, %v6330
        %v7572 = vmul.f32 %v7444, %v6332
        %v7573 = vmul.f32 %v7445, %v6334
        %v7574 = vmul.f32 %v7446, %v6336
        %v7575 = vmul.f32 %v7447, %v6338
        %v7576 = vmul.f32 %v7448, %v6340
        %v7577 = vmul.f32 %v7449, %v6342
        %v7578 = vmul.f32 %v7450, %v6344
        %v7579 = vmul.f32 %v7451, %v6346
        %v7580 = vmul.f32 %v7452, %v6348
        %v7581 = vmul.f32 %v7453, %v6350
        %v7582 = vmul.f32 %v7454, %v6352
        %v7583 = vmul.f32 %v7455, %v6354
        %v7584 = vmul.f32 %v7456, %v6356
        %v7585 = vmul.f32 %v7457, %v6358
        %v7586 = vmul.f32 %v7458, %v6360
        %v7587 = vmul.f32 %v7459, %v6362
        %v7588 = vmul.f32 %v7460, %v6364
        %v7589 = vmul.f32 %v7461, %v6366
        %v7590 = vmul.f32 %v7462, %v6368
        %v7591 = vmul.f32 %v7463, %v6370
        %v7592 = vmul.f32 %v7464, %v6372
        %v7593 = vmul.f32 %v7465, %v6374
        %v7594 = vmul.f32 %v7466, %v6376
        %v7595 = vmul.f32 %v7467, %v6378
        %v7596 = vmul.f32 %v7468, %v6380
        %v7597 = vmul.f32 %v7469, %v6382
        %v7598 = vmul.f32 %v7470, %v6384
        %v7599 = vmul.f32 %v7471, %v6386
        %v7600 = vmul.f32 %v7472, %v6388
        %v7601 = vmul.f32 %v7473, %v6390
        %v7602 = vmul.f32 %v7474, %v6392
        %v7603 = vmul.f32 %v7475, %v6394
        %v7604 = vmul.f32 %v7476, %v6396
        %v7605 = vmul.f32 %v7477, %v6398
        %v7606 = vmul.f32 %v7478, %v6400
        %v7607 = vmul.f32 %v7479, %v6402
        %v7608 = vmul.f32 %v7480, %v6404
        %v7609 = vmul.f32 %v7481, %v6406
        %v7610 = vmul.f32 %v7482, %v6408
        %v7611 = vmul.f32 %v7483, %v6410
        %v7612 = vmul.f32 %v7484, %v6412
        %v7613 = vmul.f32 %v7485, %v6414
        %v7614 = vmul.f32 %v7486, %v6416
        %v7615 = vmul.f32 %v7487, %v6418
        %v7616 = vmul.f32 %v7488, %v6420
        %v7617 = vmul.f32 %v7489, %v6422
        %v7618 = vmul.f32 %v7490, %v6424
        %v7619 = vmul.f32 %v7491, %v6426
        %v7620 = vmul.f32 %v7492, %v6428
        %v7621 = vmul.f32 %v7493, %v6430
        %v7622 = vmul.f32 %v7494, %v6432
        %v7623 = vmul.f32 %v7495, %v6434
        %v7624 = vmul.f32 %v7496, %v6436
        %v7625 = vmul.f32 %v7497, %v6438
        %v7626 = vmul.f32 %v7498, %v6440
        %v7627 = vmul.f32 %v7499, %v6442
        %v7628 = vmul.f32 %v7500, %v6444
        %v7629 = vmul.f32 %v7501, %v6446
        %v7630 = vmul.f32 %v7502, %v6448
        %v7631 = vmul.f32 %v7503, %v6450
        %v7632 = vmul.f32 %v7504, %v6452
        %v7633 = vmul.f32 %v7505, %v6454
        %v7634 = vmul.f32 %v7506, %v6456
        %v7635 = vmul.f32 %v7507, %v6458
        %v7636 = vmul.f32 %v7508, %v6460
        %v7637 = vmul.f32 %v7509, %v6462
        %v7638 = vmul.f32 %v7510, %v6464
        %v7639 = vmul.f32 %v7511, %v6466
        %v7640 = vmul.f32 %v7512, %v6468
        %v7641 = vmul.f32 %v7513, %v6470
        %v7642 = vmul.f32 %v7514, %v6472
        %v7643 = vmul.f32 %v7515, %v6474
        %v7644 = vmul.f32 %v7516, %v6476
        %v7645 = vmul.f32 %v7517, %v6478
        %v7646 = vmul.f32 %v7518, %v6480
        %v7647 = vmul.f32 %v7519, %v6482
        %v7648 = vmul.f32 %v7520, %v6484
        %v7649 = vmul.f32 %v7521, %v6486
        %v7650 = vmul.f32 %v7522, %v6488
        %v7651 = vmul.f32 %v7523, %v6490
        %v7652 = vmul.f32 %v7524, %v6492
        %v7653 = vmul.f32 %v7525, %v6494
        %v7654 = vmul.f32 %v7526, %v6496
        %v7655 = vmul.f32 %v7527, %v6498
        %v7656 = vmul.f32 %v7528, %v6500
        %v7657 = vmul.f32 %v7529, %v6502
        %v7658 = vmul.f32 %v7530, %v6504
        %v7659 = vmul.f32 %v7531, %v6506
        %v7660 = vmul.f32 %v7532, %v6508
        %v7661 = vsub.f32 0.0, %v5869
        %v7662 = vsub.f32 0.0, %v5870
        %v7663 = vsub.f32 0.0, %v5871
        %v7664 = vsub.f32 0.0, %v5872
        %v7665 = vsub.f32 0.0, %v5873
        %v7666 = vsub.f32 0.0, %v5874
        %v7667 = vsub.f32 0.0, %v5875
        %v7668 = vsub.f32 0.0, %v5876
        %v7669 = vsub.f32 0.0, %v5877
        %v7670 = vsub.f32 0.0, %v5878
        %v7671 = vsub.f32 0.0, %v5879
        %v7672 = vsub.f32 0.0, %v5880
        %v7673 = vsub.f32 0.0, %v5881
        %v7674 = vsub.f32 0.0, %v5882
        %v7675 = vsub.f32 0.0, %v5883
        %v7676 = vsub.f32 0.0, %v5884
        %v7677 = vsub.f32 0.0, %v5885
        %v7678 = vsub.f32 0.0, %v5886
        %v7679 = vsub.f32 0.0, %v5887
        %v7680 = vsub.f32 0.0, %v5888
        %v7681 = vsub.f32 0.0, %v5889
        %v7682 = vsub.f32 0.0, %v5890
        %v7683 = vsub.f32 0.0, %v5891
        %v7684 = vsub.f32 0.0, %v5892
        %v7685 = vsub.f32 0.0, %v5893
        %v7686 = vsub.f32 0.0, %v5894
        %v7687 = vsub.f32 0.0, %v5895
        %v7688 = vsub.f32 0.0, %v5896
        %v7689 = vsub.f32 0.0, %v5897
        %v7690 = vsub.f32 0.0, %v5898
        %v7691 = vsub.f32 0.0, %v5899
        %v7692 = vsub.f32 0.0, %v5900
        %v7693 = vsub.f32 0.0, %v5901
        %v7694 = vsub.f32 0.0, %v5902
        %v7695 = vsub.f32 0.0, %v5903
        %v7696 = vsub.f32 0.0, %v5904
        %v7697 = vsub.f32 0.0, %v5905
        %v7698 = vsub.f32 0.0, %v5906
        %v7699 = vsub.f32 0.0, %v5907
        %v7700 = vsub.f32 0.0, %v5908
        %v7701 = vsub.f32 0.0, %v5909
        %v7702 = vsub.f32 0.0, %v5910
        %v7703 = vsub.f32 0.0, %v5911
        %v7704 = vsub.f32 0.0, %v5912
        %v7705 = vsub.f32 0.0, %v5913
        %v7706 = vsub.f32 0.0, %v5914
        %v7707 = vsub.f32 0.0, %v5915
        %v7708 = vsub.f32 0.0, %v5916
        %v7709 = vsub.f32 0.0, %v5917
        %v7710 = vsub.f32 0.0, %v5918
        %v7711 = vsub.f32 0.0, %v5919
        %v7712 = vsub.f32 0.0, %v5920
        %v7713 = vsub.f32 0.0, %v5921
        %v7714 = vsub.f32 0.0, %v5922
        %v7715 = vsub.f32 0.0, %v5923
        %v7716 = vsub.f32 0.0, %v5924
        %v7717 = vsub.f32 0.0, %v5925
        %v7718 = vsub.f32 0.0, %v5926
        %v7719 = vsub.f32 0.0, %v5927
        %v7720 = vsub.f32 0.0, %v5928
        %v7721 = vsub.f32 0.0, %v5929
        %v7722 = vsub.f32 0.0, %v5930
        %v7723 = vsub.f32 0.0, %v5931
        %v7724 = vsub.f32 0.0, %v5932
        %v7725 = vsub.f32 0.0, %v5933
        %v7726 = vsub.f32 0.0, %v5934
        %v7727 = vsub.f32 0.0, %v5935
        %v7728 = vsub.f32 0.0, %v5936
        %v7729 = vsub.f32 0.0, %v5937
        %v7730 = vsub.f32 0.0, %v5938
        %v7731 = vsub.f32 0.0, %v5939
        %v7732 = vsub.f32 0.0, %v5940
        %v7733 = vsub.f32 0.0, %v5941
        %v7734 = vsub.f32 0.0, %v5942
        %v7735 = vsub.f32 0.0, %v5943
        %v7736 = vsub.f32 0.0, %v5944
        %v7737 = vsub.f32 0.0, %v5945
        %v7738 = vsub.f32 0.0, %v5946
        %v7739 = vsub.f32 0.0, %v5947
        %v7740 = vsub.f32 0.0, %v5948
        %v7741 = vsub.f32 0.0, %v5949
        %v7742 = vsub.f32 0.0, %v5950
        %v7743 = vsub.f32 0.0, %v5951
        %v7744 = vsub.f32 0.0, %v5952
        %v7745 = vsub.f32 0.0, %v5953
        %v7746 = vsub.f32 0.0, %v5954
        %v7747 = vsub.f32 0.0, %v5955
        %v7748 = vsub.f32 0.0, %v5956
        %v7749 = vsub.f32 0.0, %v5957
        %v7750 = vsub.f32 0.0, %v5958
        %v7751 = vsub.f32 0.0, %v5959
        %v7752 = vsub.f32 0.0, %v5960
        %v7753 = vsub.f32 0.0, %v5961
        %v7754 = vsub.f32 0.0, %v5962
        %v7755 = vsub.f32 0.0, %v5963
        %v7756 = vsub.f32 0.0, %v5964
        %v7757 = vsub.f32 0.0, %v5965
        %v7758 = vsub.f32 0.0, %v5966
        %v7759 = vsub.f32 0.0, %v5967
        %v7760 = vsub.f32 0.0, %v5968
        %v7761 = vsub.f32 0.0, %v5969
        %v7762 = vsub.f32 0.0, %v5970
        %v7763 = vsub.f32 0.0, %v5971
        %v7764 = vsub.f32 0.0, %v5972
        %v7765 = vsub.f32 0.0, %v5973
        %v7766 = vsub.f32 0.0, %v5974
        %v7767 = vsub.f32 0.0, %v5975
        %v7768 = vsub.f32 0.0, %v5976
        %v7769 = vsub.f32 0.0, %v5977
        %v7770 = vsub.f32 0.0, %v5978
        %v7771 = vsub.f32 0.0, %v5979
        %v7772 = vsub.f32 0.0, %v5980
        %v7773 = vsub.f32 0.0, %v5981
        %v7774 = vsub.f32 0.0, %v5982
        %v7775 = vsub.f32 0.0, %v5983
        %v7776 = vsub.f32 0.0, %v5984
        %v7777 = vsub.f32 0.0, %v5985
        %v7778 = vsub.f32 0.0, %v5986
        %v7779 = vsub.f32 0.0, %v5987
        %v7780 = vsub.f32 0.0, %v5988
        %v7781 = vsub.f32 0.0, %v5989
        %v7782 = vsub.f32 0.0, %v5990
        %v7783 = vsub.f32 0.0, %v5991
        %v7784 = vsub.f32 0.0, %v5992
        %v7785 = vsub.f32 0.0, %v5993
        %v7786 = vsub.f32 0.0, %v5994
        %v7787 = vsub.f32 0.0, %v5995
        %v7788 = vsub.f32 0.0, %v5996
        %v7789 = vmul.f32 %v7661, %v5869
        %v7790 = vmul.f32 %v7662, %v5870
        %v7791 = vmul.f32 %v7663, %v5871
        %v7792 = vmul.f32 %v7664, %v5872
        %v7793 = vmul.f32 %v7665, %v5873
        %v7794 = vmul.f32 %v7666, %v5874
        %v7795 = vmul.f32 %v7667, %v5875
        %v7796 = vmul.f32 %v7668, %v5876
        %v7797 = vmul.f32 %v7669, %v5877
        %v7798 = vmul.f32 %v7670, %v5878
        %v7799 = vmul.f32 %v7671, %v5879
        %v7800 = vmul.f32 %v7672, %v5880
        %v7801 = vmul.f32 %v7673, %v5881
        %v7802 = vmul.f32 %v7674, %v5882
        %v7803 = vmul.f32 %v7675, %v5883
        %v7804 = vmul.f32 %v7676, %v5884
        %v7805 = vmul.f32 %v7677, %v5885
        %v7806 = vmul.f32 %v7678, %v5886
        %v7807 = vmul.f32 %v7679, %v5887
        %v7808 = vmul.f32 %v7680, %v5888
        %v7809 = vmul.f32 %v7681, %v5889
        %v7810 = vmul.f32 %v7682, %v5890
        %v7811 = vmul.f32 %v7683, %v5891
        %v7812 = vmul.f32 %v7684, %v5892
        %v7813 = vmul.f32 %v7685, %v5893
        %v7814 = vmul.f32 %v7686, %v5894
        %v7815 = vmul.f32 %v7687, %v5895
        %v7816 = vmul.f32 %v7688, %v5896
        %v7817 = vmul.f32 %v7689, %v5897
        %v7818 = vmul.f32 %v7690, %v5898
        %v7819 = vmul.f32 %v7691, %v5899
        %v7820 = vmul.f32 %v7692, %v5900
        %v7821 = vmul.f32 %v7693, %v5901
        %v7822 = vmul.f32 %v7694, %v5902
        %v7823 = vmul.f32 %v7695, %v5903
        %v7824 = vmul.f32 %v7696, %v5904
        %v7825 = vmul.f32 %v7697, %v5905
        %v7826 = vmul.f32 %v7698, %v5906
        %v7827 = vmul.f32 %v7699, %v5907
        %v7828 = vmul.f32 %v7700, %v5908
        %v7829 = vmul.f32 %v7701, %v5909
        %v7830 = vmul.f32 %v7702, %v5910
        %v7831 = vmul.f32 %v7703, %v5911
        %v7832 = vmul.f32 %v7704, %v5912
        %v7833 = vmul.f32 %v7705, %v5913
        %v7834 = vmul.f32 %v7706, %v5914
        %v7835 = vmul.f32 %v7707, %v5915
        %v7836 = vmul.f32 %v7708, %v5916
        %v7837 = vmul.f32 %v7709, %v5917
        %v7838 = vmul.f32 %v7710, %v5918
        %v7839 = vmul.f32 %v7711, %v5919
        %v7840 = vmul.f32 %v7712, %v5920
        %v7841 = vmul.f32 %v7713, %v5921
        %v7842 = vmul.f32 %v7714, %v5922
        %v7843 = vmul.f32 %v7715, %v5923
        %v7844 = vmul.f32 %v7716, %v5924
        %v7845 = vmul.f32 %v7717, %v5925
        %v7846 = vmul.f32 %v7718, %v5926
        %v7847 = vmul.f32 %v7719, %v5927
        %v7848 = vmul.f32 %v7720, %v5928
        %v7849 = vmul.f32 %v7721, %v5929
        %v7850 = vmul.f32 %v7722, %v5930
        %v7851 = vmul.f32 %v7723, %v5931
        %v7852 = vmul.f32 %v7724, %v5932
        %v7853 = vmul.f32 %v7725, %v5933
        %v7854 = vmul.f32 %v7726, %v5934
        %v7855 = vmul.f32 %v7727, %v5935
        %v7856 = vmul.f32 %v7728, %v5936
        %v7857 = vmul.f32 %v7729, %v5937
        %v7858 = vmul.f32 %v7730, %v5938
        %v7859 = vmul.f32 %v7731, %v5939
        %v7860 = vmul.f32 %v7732, %v5940
        %v7861 = vmul.f32 %v7733, %v5941
        %v7862 = vmul.f32 %v7734, %v5942
        %v7863 = vmul.f32 %v7735, %v5943
        %v7864 = vmul.f32 %v7736, %v5944
        %v7865 = vmul.f32 %v7737, %v5945
        %v7866 = vmul.f32 %v7738, %v5946
        %v7867 = vmul.f32 %v7739, %v5947
        %v7868 = vmul.f32 %v7740, %v5948
        %v7869 = vmul.f32 %v7741, %v5949
        %v7870 = vmul.f32 %v7742, %v5950
        %v7871 = vmul.f32 %v7743, %v5951
        %v7872 = vmul.f32 %v7744, %v5952
        %v7873 = vmul.f32 %v7745, %v5953
        %v7874 = vmul.f32 %v7746, %v5954
        %v7875 = vmul.f32 %v7747, %v5955
        %v7876 = vmul.f32 %v7748, %v5956
        %v7877 = vmul.f32 %v7749, %v5957
        %v7878 = vmul.f32 %v7750, %v5958
        %v7879 = vmul.f32 %v7751, %v5959
        %v7880 = vmul.f32 %v7752, %v5960
        %v7881 = vmul.f32 %v7753, %v5961
        %v7882 = vmul.f32 %v7754, %v5962
        %v7883 = vmul.f32 %v7755, %v5963
        %v7884 = vmul.f32 %v7756, %v5964
        %v7885 = vmul.f32 %v7757, %v5965
        %v7886 = vmul.f32 %v7758, %v5966
        %v7887 = vmul.f32 %v7759, %v5967
        %v7888 = vmul.f32 %v7760, %v5968
        %v7889 = vmul.f32 %v7761, %v5969
        %v7890 = vmul.f32 %v7762, %v5970
        %v7891 = vmul.f32 %v7763, %v5971
        %v7892 = vmul.f32 %v7764, %v5972
        %v7893 = vmul.f32 %v7765, %v5973
        %v7894 = vmul.f32 %v7766, %v5974
        %v7895 = vmul.f32 %v7767, %v5975
        %v7896 = vmul.f32 %v7768, %v5976
        %v7897 = vmul.f32 %v7769, %v5977
        %v7898 = vmul.f32 %v7770, %v5978
        %v7899 = vmul.f32 %v7771, %v5979
        %v7900 = vmul.f32 %v7772, %v5980
        %v7901 = vmul.f32 %v7773, %v5981
        %v7902 = vmul.f32 %v7774, %v5982
        %v7903 = vmul.f32 %v7775, %v5983
        %v7904 = vmul.f32 %v7776, %v5984
        %v7905 = vmul.f32 %v7777, %v5985
        %v7906 = vmul.f32 %v7778, %v5986
        %v7907 = vmul.f32 %v7779, %v5987
        %v7908 = vmul.f32 %v7780, %v5988
        %v7909 = vmul.f32 %v7781, %v5989
        %v7910 = vmul.f32 %v7782, %v5990
        %v7911 = vmul.f32 %v7783, %v5991
        %v7912 = vmul.f32 %v7784, %v5992
        %v7913 = vmul.f32 %v7785, %v5993
        %v7914 = vmul.f32 %v7786, %v5994
        %v7915 = vmul.f32 %v7787, %v5995
        %v7916 = vmul.f32 %v7788, %v5996
        %v7917 = vmul.f32 %v7789, 1.442695
        %v7918 = vpow.pop %v7917
        %v7919 = vmul.f32 %v7790, 1.442695
        %v7920 = vpow.pop %v7919
        %v7921 = vmul.f32 %v7791, 1.442695
        %v7922 = vpow.pop %v7921
        %v7923 = vmul.f32 %v7792, 1.442695
        %v7924 = vpow.pop %v7923
        %v7925 = vmul.f32 %v7793, 1.442695
        %v7926 = vpow.pop %v7925
        %v7927 = vmul.f32 %v7794, 1.442695
        %v7928 = vpow.pop %v7927
        %v7929 = vmul.f32 %v7795, 1.442695
        %v7930 = vpow.pop %v7929
        %v7931 = vmul.f32 %v7796, 1.442695
        %v7932 = vpow.pop %v7931
        %v7933 = vmul.f32 %v7797, 1.442695
        %v7934 = vpow.pop %v7933
        %v7935 = vmul.f32 %v7798, 1.442695
        %v7936 = vpow.pop %v7935
        %v7937 = vmul.f32 %v7799, 1.442695
        %v7938 = vpow.pop %v7937
        %v7939 = vmul.f32 %v7800, 1.442695
        %v7940 = vpow.pop %v7939
        %v7941 = vmul.f32 %v7801, 1.442695
        %v7942 = vpow.pop %v7941
        %v7943 = vmul.f32 %v7802, 1.442695
        %v7944 = vpow.pop %v7943
        %v7945 = vmul.f32 %v7803, 1.442695
        %v7946 = vpow.pop %v7945
        %v7947 = vmul.f32 %v7804, 1.442695
        %v7948 = vpow.pop %v7947
        %v7949 = vmul.f32 %v7805, 1.442695
        %v7950 = vpow.pop %v7949
        %v7951 = vmul.f32 %v7806, 1.442695
        %v7952 = vpow.pop %v7951
        %v7953 = vmul.f32 %v7807, 1.442695
        %v7954 = vpow.pop %v7953
        %v7955 = vmul.f32 %v7808, 1.442695
        %v7956 = vpow.pop %v7955
        %v7957 = vmul.f32 %v7809, 1.442695
        %v7958 = vpow.pop %v7957
        %v7959 = vmul.f32 %v7810, 1.442695
        %v7960 = vpow.pop %v7959
        %v7961 = vmul.f32 %v7811, 1.442695
        %v7962 = vpow.pop %v7961
        %v7963 = vmul.f32 %v7812, 1.442695
        %v7964 = vpow.pop %v7963
        %v7965 = vmul.f32 %v7813, 1.442695
        %v7966 = vpow.pop %v7965
        %v7967 = vmul.f32 %v7814, 1.442695
        %v7968 = vpow.pop %v7967
        %v7969 = vmul.f32 %v7815, 1.442695
        %v7970 = vpow.pop %v7969
        %v7971 = vmul.f32 %v7816, 1.442695
        %v7972 = vpow.pop %v7971
        %v7973 = vmul.f32 %v7817, 1.442695
        %v7974 = vpow.pop %v7973
        %v7975 = vmul.f32 %v7818, 1.442695
        %v7976 = vpow.pop %v7975
        %v7977 = vmul.f32 %v7819, 1.442695
        %v7978 = vpow.pop %v7977
        %v7979 = vmul.f32 %v7820, 1.442695
        %v7980 = vpow.pop %v7979
        %v7981 = vmul.f32 %v7821, 1.442695
        %v7982 = vpow.pop %v7981
        %v7983 = vmul.f32 %v7822, 1.442695
        %v7984 = vpow.pop %v7983
        %v7985 = vmul.f32 %v7823, 1.442695
        %v7986 = vpow.pop %v7985
        %v7987 = vmul.f32 %v7824, 1.442695
        %v7988 = vpow.pop %v7987
        %v7989 = vmul.f32 %v7825, 1.442695
        %v7990 = vpow.pop %v7989
        %v7991 = vmul.f32 %v7826, 1.442695
        %v7992 = vpow.pop %v7991
        %v7993 = vmul.f32 %v7827, 1.442695
        %v7994 = vpow.pop %v7993
        %v7995 = vmul.f32 %v7828, 1.442695
        %v7996 = vpow.pop %v7995
        %v7997 = vmul.f32 %v7829, 1.442695
        %v7998 = vpow.pop %v7997
        %v7999 = vmul.f32 %v7830, 1.442695
        %v8000 = vpow.pop %v7999
        %v8001 = vmul.f32 %v7831, 1.442695
        %v8002 = vpow.pop %v8001
        %v8003 = vmul.f32 %v7832, 1.442695
        %v8004 = vpow.pop %v8003
        %v8005 = vmul.f32 %v7833, 1.442695
        %v8006 = vpow.pop %v8005
        %v8007 = vmul.f32 %v7834, 1.442695
        %v8008 = vpow.pop %v8007
        %v8009 = vmul.f32 %v7835, 1.442695
        %v8010 = vpow.pop %v8009
        %v8011 = vmul.f32 %v7836, 1.442695
        %v8012 = vpow.pop %v8011
        %v8013 = vmul.f32 %v7837, 1.442695
        %v8014 = vpow.pop %v8013
        %v8015 = vmul.f32 %v7838, 1.442695
        %v8016 = vpow.pop %v8015
        %v8017 = vmul.f32 %v7839, 1.442695
        %v8018 = vpow.pop %v8017
        %v8019 = vmul.f32 %v7840, 1.442695
        %v8020 = vpow.pop %v8019
        %v8021 = vmul.f32 %v7841, 1.442695
        %v8022 = vpow.pop %v8021
        %v8023 = vmul.f32 %v7842, 1.442695
        %v8024 = vpow.pop %v8023
        %v8025 = vmul.f32 %v7843, 1.442695
        %v8026 = vpow.pop %v8025
        %v8027 = vmul.f32 %v7844, 1.442695
        %v8028 = vpow.pop %v8027
        %v8029 = vmul.f32 %v7845, 1.442695
        %v8030 = vpow.pop %v8029
        %v8031 = vmul.f32 %v7846, 1.442695
        %v8032 = vpow.pop %v8031
        %v8033 = vmul.f32 %v7847, 1.442695
        %v8034 = vpow.pop %v8033
        %v8035 = vmul.f32 %v7848, 1.442695
        %v8036 = vpow.pop %v8035
        %v8037 = vmul.f32 %v7849, 1.442695
        %v8038 = vpow.pop %v8037
        %v8039 = vmul.f32 %v7850, 1.442695
        %v8040 = vpow.pop %v8039
        %v8041 = vmul.f32 %v7851, 1.442695
        %v8042 = vpow.pop %v8041
        %v8043 = vmul.f32 %v7852, 1.442695
        %v8044 = vpow.pop %v8043
        %v8045 = vmul.f32 %v7853, 1.442695
        %v8046 = vpow.pop %v8045
        %v8047 = vmul.f32 %v7854, 1.442695
        %v8048 = vpow.pop %v8047
        %v8049 = vmul.f32 %v7855, 1.442695
        %v8050 = vpow.pop %v8049
        %v8051 = vmul.f32 %v7856, 1.442695
        %v8052 = vpow.pop %v8051
        %v8053 = vmul.f32 %v7857, 1.442695
        %v8054 = vpow.pop %v8053
        %v8055 = vmul.f32 %v7858, 1.442695
        %v8056 = vpow.pop %v8055
        %v8057 = vmul.f32 %v7859, 1.442695
        %v8058 = vpow.pop %v8057
        %v8059 = vmul.f32 %v7860, 1.442695
        %v8060 = vpow.pop %v8059
        %v8061 = vmul.f32 %v7861, 1.442695
        %v8062 = vpow.pop %v8061
        %v8063 = vmul.f32 %v7862, 1.442695
        %v8064 = vpow.pop %v8063
        %v8065 = vmul.f32 %v7863, 1.442695
        %v8066 = vpow.pop %v8065
        %v8067 = vmul.f32 %v7864, 1.442695
        %v8068 = vpow.pop %v8067
        %v8069 = vmul.f32 %v7865, 1.442695
        %v8070 = vpow.pop %v8069
        %v8071 = vmul.f32 %v7866, 1.442695
        %v8072 = vpow.pop %v8071
        %v8073 = vmul.f32 %v7867, 1.442695
        %v8074 = vpow.pop %v8073
        %v8075 = vmul.f32 %v7868, 1.442695
        %v8076 = vpow.pop %v8075
        %v8077 = vmul.f32 %v7869, 1.442695
        %v8078 = vpow.pop %v8077
        %v8079 = vmul.f32 %v7870, 1.442695
        %v8080 = vpow.pop %v8079
        %v8081 = vmul.f32 %v7871, 1.442695
        %v8082 = vpow.pop %v8081
        %v8083 = vmul.f32 %v7872, 1.442695
        %v8084 = vpow.pop %v8083
        %v8085 = vmul.f32 %v7873, 1.442695
        %v8086 = vpow.pop %v8085
        %v8087 = vmul.f32 %v7874, 1.442695
        %v8088 = vpow.pop %v8087
        %v8089 = vmul.f32 %v7875, 1.442695
        %v8090 = vpow.pop %v8089
        %v8091 = vmul.f32 %v7876, 1.442695
        %v8092 = vpow.pop %v8091
        %v8093 = vmul.f32 %v7877, 1.442695
        %v8094 = vpow.pop %v8093
        %v8095 = vmul.f32 %v7878, 1.442695
        %v8096 = vpow.pop %v8095
        %v8097 = vmul.f32 %v7879, 1.442695
        %v8098 = vpow.pop %v8097
        %v8099 = vmul.f32 %v7880, 1.442695
        %v8100 = vpow.pop %v8099
        %v8101 = vmul.f32 %v7881, 1.442695
        %v8102 = vpow.pop %v8101
        %v8103 = vmul.f32 %v7882, 1.442695
        %v8104 = vpow.pop %v8103
        %v8105 = vmul.f32 %v7883, 1.442695
        %v8106 = vpow.pop %v8105
        %v8107 = vmul.f32 %v7884, 1.442695
        %v8108 = vpow.pop %v8107
        %v8109 = vmul.f32 %v7885, 1.442695
        %v8110 = vpow.pop %v8109
        %v8111 = vmul.f32 %v7886, 1.442695
        %v8112 = vpow.pop %v8111
        %v8113 = vmul.f32 %v7887, 1.442695
        %v8114 = vpow.pop %v8113
        %v8115 = vmul.f32 %v7888, 1.442695
        %v8116 = vpow.pop %v8115
        %v8117 = vmul.f32 %v7889, 1.442695
        %v8118 = vpow.pop %v8117
        %v8119 = vmul.f32 %v7890, 1.442695
        %v8120 = vpow.pop %v8119
        %v8121 = vmul.f32 %v7891, 1.442695
        %v8122 = vpow.pop %v8121
        %v8123 = vmul.f32 %v7892, 1.442695
        %v8124 = vpow.pop %v8123
        %v8125 = vmul.f32 %v7893, 1.442695
        %v8126 = vpow.pop %v8125
        %v8127 = vmul.f32 %v7894, 1.442695
        %v8128 = vpow.pop %v8127
        %v8129 = vmul.f32 %v7895, 1.442695
        %v8130 = vpow.pop %v8129
        %v8131 = vmul.f32 %v7896, 1.442695
        %v8132 = vpow.pop %v8131
        %v8133 = vmul.f32 %v7897, 1.442695
        %v8134 = vpow.pop %v8133
        %v8135 = vmul.f32 %v7898, 1.442695
        %v8136 = vpow.pop %v8135
        %v8137 = vmul.f32 %v7899, 1.442695
        %v8138 = vpow.pop %v8137
        %v8139 = vmul.f32 %v7900, 1.442695
        %v8140 = vpow.pop %v8139
        %v8141 = vmul.f32 %v7901, 1.442695
        %v8142 = vpow.pop %v8141
        %v8143 = vmul.f32 %v7902, 1.442695
        %v8144 = vpow.pop %v8143
        %v8145 = vmul.f32 %v7903, 1.442695
        %v8146 = vpow.pop %v8145
        %v8147 = vmul.f32 %v7904, 1.442695
        %v8148 = vpow.pop %v8147
        %v8149 = vmul.f32 %v7905, 1.442695
        %v8150 = vpow.pop %v8149
        %v8151 = vmul.f32 %v7906, 1.442695
        %v8152 = vpow.pop %v8151
        %v8153 = vmul.f32 %v7907, 1.442695
        %v8154 = vpow.pop %v8153
        %v8155 = vmul.f32 %v7908, 1.442695
        %v8156 = vpow.pop %v8155
        %v8157 = vmul.f32 %v7909, 1.442695
        %v8158 = vpow.pop %v8157
        %v8159 = vmul.f32 %v7910, 1.442695
        %v8160 = vpow.pop %v8159
        %v8161 = vmul.f32 %v7911, 1.442695
        %v8162 = vpow.pop %v8161
        %v8163 = vmul.f32 %v7912, 1.442695
        %v8164 = vpow.pop %v8163
        %v8165 = vmul.f32 %v7913, 1.442695
        %v8166 = vpow.pop %v8165
        %v8167 = vmul.f32 %v7914, 1.442695
        %v8168 = vpow.pop %v8167
        %v8169 = vmul.f32 %v7915, 1.442695
        %v8170 = vpow.pop %v8169
        %v8171 = vmul.f32 %v7916, 1.442695
        %v8172 = vpow.pop %v8171
        %v8173 = vmul.f32 %v7533, %v7918
        %v8174 = vmul.f32 %v7534, %v7920
        %v8175 = vmul.f32 %v7535, %v7922
        %v8176 = vmul.f32 %v7536, %v7924
        %v8177 = vmul.f32 %v7537, %v7926
        %v8178 = vmul.f32 %v7538, %v7928
        %v8179 = vmul.f32 %v7539, %v7930
        %v8180 = vmul.f32 %v7540, %v7932
        %v8181 = vmul.f32 %v7541, %v7934
        %v8182 = vmul.f32 %v7542, %v7936
        %v8183 = vmul.f32 %v7543, %v7938
        %v8184 = vmul.f32 %v7544, %v7940
        %v8185 = vmul.f32 %v7545, %v7942
        %v8186 = vmul.f32 %v7546, %v7944
        %v8187 = vmul.f32 %v7547, %v7946
        %v8188 = vmul.f32 %v7548, %v7948
        %v8189 = vmul.f32 %v7549, %v7950
        %v8190 = vmul.f32 %v7550, %v7952
        %v8191 = vmul.f32 %v7551, %v7954
        %v8192 = vmul.f32 %v7552, %v7956
        %v8193 = vmul.f32 %v7553, %v7958
        %v8194 = vmul.f32 %v7554, %v7960
        %v8195 = vmul.f32 %v7555, %v7962
        %v8196 = vmul.f32 %v7556, %v7964
        %v8197 = vmul.f32 %v7557, %v7966
        %v8198 = vmul.f32 %v7558, %v7968
        %v8199 = vmul.f32 %v7559, %v7970
        %v8200 = vmul.f32 %v7560, %v7972
        %v8201 = vmul.f32 %v7561, %v7974
        %v8202 = vmul.f32 %v7562, %v7976
        %v8203 = vmul.f32 %v7563, %v7978
        %v8204 = vmul.f32 %v7564, %v7980
        %v8205 = vmul.f32 %v7565, %v7982
        %v8206 = vmul.f32 %v7566, %v7984
        %v8207 = vmul.f32 %v7567, %v7986
        %v8208 = vmul.f32 %v7568, %v7988
        %v8209 = vmul.f32 %v7569, %v7990
        %v8210 = vmul.f32 %v7570, %v7992
        %v8211 = vmul.f32 %v7571, %v7994
        %v8212 = vmul.f32 %v7572, %v7996
        %v8213 = vmul.f32 %v7573, %v7998
        %v8214 = vmul.f32 %v7574, %v8000
        %v8215 = vmul.f32 %v7575, %v8002
        %v8216 = vmul.f32 %v7576, %v8004
        %v8217 = vmul.f32 %v7577, %v8006
        %v8218 = vmul.f32 %v7578, %v8008
        %v8219 = vmul.f32 %v7579, %v8010
        %v8220 = vmul.f32 %v7580, %v8012
        %v8221 = vmul.f32 %v7581, %v8014
        %v8222 = vmul.f32 %v7582, %v8016
        %v8223 = vmul.f32 %v7583, %v8018
        %v8224 = vmul.f32 %v7584, %v8020
        %v8225 = vmul.f32 %v7585, %v8022
        %v8226 = vmul.f32 %v7586, %v8024
        %v8227 = vmul.f32 %v7587, %v8026
        %v8228 = vmul.f32 %v7588, %v8028
        %v8229 = vmul.f32 %v7589, %v8030
        %v8230 = vmul.f32 %v7590, %v8032
        %v8231 = vmul.f32 %v7591, %v8034
        %v8232 = vmul.f32 %v7592, %v8036
        %v8233 = vmul.f32 %v7593, %v8038
        %v8234 = vmul.f32 %v7594, %v8040
        %v8235 = vmul.f32 %v7595, %v8042
        %v8236 = vmul.f32 %v7596, %v8044
        %v8237 = vmul.f32 %v7597, %v8046
        %v8238 = vmul.f32 %v7598, %v8048
        %v8239 = vmul.f32 %v7599, %v8050
        %v8240 = vmul.f32 %v7600, %v8052
        %v8241 = vmul.f32 %v7601, %v8054
        %v8242 = vmul.f32 %v7602, %v8056
        %v8243 = vmul.f32 %v7603, %v8058
        %v8244 = vmul.f32 %v7604, %v8060
        %v8245 = vmul.f32 %v7605, %v8062
        %v8246 = vmul.f32 %v7606, %v8064
        %v8247 = vmul.f32 %v7607, %v8066
        %v8248 = vmul.f32 %v7608, %v8068
        %v8249 = vmul.f32 %v7609, %v8070
        %v8250 = vmul.f32 %v7610, %v8072
        %v8251 = vmul.f32 %v7611, %v8074
        %v8252 = vmul.f32 %v7612, %v8076
        %v8253 = vmul.f32 %v7613, %v8078
        %v8254 = vmul.f32 %v7614, %v8080
        %v8255 = vmul.f32 %v7615, %v8082
        %v8256 = vmul.f32 %v7616, %v8084
        %v8257 = vmul.f32 %v7617, %v8086
        %v8258 = vmul.f32 %v7618, %v8088
        %v8259 = vmul.f32 %v7619, %v8090
        %v8260 = vmul.f32 %v7620, %v8092
        %v8261 = vmul.f32 %v7621, %v8094
        %v8262 = vmul.f32 %v7622, %v8096
        %v8263 = vmul.f32 %v7623, %v8098
        %v8264 = vmul.f32 %v7624, %v8100
        %v8265 = vmul.f32 %v7625, %v8102
        %v8266 = vmul.f32 %v7626, %v8104
        %v8267 = vmul.f32 %v7627, %v8106
        %v8268 = vmul.f32 %v7628, %v8108
        %v8269 = vmul.f32 %v7629, %v8110
        %v8270 = vmul.f32 %v7630, %v8112
        %v8271 = vmul.f32 %v7631, %v8114
        %v8272 = vmul.f32 %v7632, %v8116
        %v8273 = vmul.f32 %v7633, %v8118
        %v8274 = vmul.f32 %v7634, %v8120
        %v8275 = vmul.f32 %v7635, %v8122
        %v8276 = vmul.f32 %v7636, %v8124
        %v8277 = vmul.f32 %v7637, %v8126
        %v8278 = vmul.f32 %v7638, %v8128
        %v8279 = vmul.f32 %v7639, %v8130
        %v8280 = vmul.f32 %v7640, %v8132
        %v8281 = vmul.f32 %v7641, %v8134
        %v8282 = vmul.f32 %v7642, %v8136
        %v8283 = vmul.f32 %v7643, %v8138
        %v8284 = vmul.f32 %v7644, %v8140
        %v8285 = vmul.f32 %v7645, %v8142
        %v8286 = vmul.f32 %v7646, %v8144
        %v8287 = vmul.f32 %v7647, %v8146
        %v8288 = vmul.f32 %v7648, %v8148
        %v8289 = vmul.f32 %v7649, %v8150
        %v8290 = vmul.f32 %v7650, %v8152
        %v8291 = vmul.f32 %v7651, %v8154
        %v8292 = vmul.f32 %v7652, %v8156
        %v8293 = vmul.f32 %v7653, %v8158
        %v8294 = vmul.f32 %v7654, %v8160
        %v8295 = vmul.f32 %v7655, %v8162
        %v8296 = vmul.f32 %v7656, %v8164
        %v8297 = vmul.f32 %v7657, %v8166
        %v8298 = vmul.f32 %v7658, %v8168
        %v8299 = vmul.f32 %v7659, %v8170
        %v8300 = vmul.f32 %v7660, %v8172
        %v8301 = vsub.f32 1.0, %v8173
        %v8302 = vsub.f32 1.0, %v8174
        %v8303 = vsub.f32 1.0, %v8175
        %v8304 = vsub.f32 1.0, %v8176
        %v8305 = vsub.f32 1.0, %v8177
        %v8306 = vsub.f32 1.0, %v8178
        %v8307 = vsub.f32 1.0, %v8179
        %v8308 = vsub.f32 1.0, %v8180
        %v8309 = vsub.f32 1.0, %v8181
        %v8310 = vsub.f32 1.0, %v8182
        %v8311 = vsub.f32 1.0, %v8183
        %v8312 = vsub.f32 1.0, %v8184
        %v8313 = vsub.f32 1.0, %v8185
        %v8314 = vsub.f32 1.0, %v8186
        %v8315 = vsub.f32 1.0, %v8187
        %v8316 = vsub.f32 1.0, %v8188
        %v8317 = vsub.f32 1.0, %v8189
        %v8318 = vsub.f32 1.0, %v8190
        %v8319 = vsub.f32 1.0, %v8191
        %v8320 = vsub.f32 1.0, %v8192
        %v8321 = vsub.f32 1.0, %v8193
        %v8322 = vsub.f32 1.0, %v8194
        %v8323 = vsub.f32 1.0, %v8195
        %v8324 = vsub.f32 1.0, %v8196
        %v8325 = vsub.f32 1.0, %v8197
        %v8326 = vsub.f32 1.0, %v8198
        %v8327 = vsub.f32 1.0, %v8199
        %v8328 = vsub.f32 1.0, %v8200
        %v8329 = vsub.f32 1.0, %v8201
        %v8330 = vsub.f32 1.0, %v8202
        %v8331 = vsub.f32 1.0, %v8203
        %v8332 = vsub.f32 1.0, %v8204
        %v8333 = vsub.f32 1.0, %v8205
        %v8334 = vsub.f32 1.0, %v8206
        %v8335 = vsub.f32 1.0, %v8207
        %v8336 = vsub.f32 1.0, %v8208
        %v8337 = vsub.f32 1.0, %v8209
        %v8338 = vsub.f32 1.0, %v8210
        %v8339 = vsub.f32 1.0, %v8211
        %v8340 = vsub.f32 1.0, %v8212
        %v8341 = vsub.f32 1.0, %v8213
        %v8342 = vsub.f32 1.0, %v8214
        %v8343 = vsub.f32 1.0, %v8215
        %v8344 = vsub.f32 1.0, %v8216
        %v8345 = vsub.f32 1.0, %v8217
        %v8346 = vsub.f32 1.0, %v8218
        %v8347 = vsub.f32 1.0, %v8219
        %v8348 = vsub.f32 1.0, %v8220
        %v8349 = vsub.f32 1.0, %v8221
        %v8350 = vsub.f32 1.0, %v8222
        %v8351 = vsub.f32 1.0, %v8223
        %v8352 = vsub.f32 1.0, %v8224
        %v8353 = vsub.f32 1.0, %v8225
        %v8354 = vsub.f32 1.0, %v8226
        %v8355 = vsub.f32 1.0, %v8227
        %v8356 = vsub.f32 1.0, %v8228
        %v8357 = vsub.f32 1.0, %v8229
        %v8358 = vsub.f32 1.0, %v8230
        %v8359 = vsub.f32 1.0, %v8231
        %v8360 = vsub.f32 1.0, %v8232
        %v8361 = vsub.f32 1.0, %v8233
        %v8362 = vsub.f32 1.0, %v8234
        %v8363 = vsub.f32 1.0, %v8235
        %v8364 = vsub.f32 1.0, %v8236
        %v8365 = vsub.f32 1.0, %v8237
        %v8366 = vsub.f32 1.0, %v8238
        %v8367 = vsub.f32 1.0, %v8239
        %v8368 = vsub.f32 1.0, %v8240
        %v8369 = vsub.f32 1.0, %v8241
        %v8370 = vsub.f32 1.0, %v8242
        %v8371 = vsub.f32 1.0, %v8243
        %v8372 = vsub.f32 1.0, %v8244
        %v8373 = vsub.f32 1.0, %v8245
        %v8374 = vsub.f32 1.0, %v8246
        %v8375 = vsub.f32 1.0, %v8247
        %v8376 = vsub.f32 1.0, %v8248
        %v8377 = vsub.f32 1.0, %v8249
        %v8378 = vsub.f32 1.0, %v8250
        %v8379 = vsub.f32 1.0, %v8251
        %v8380 = vsub.f32 1.0, %v8252
        %v8381 = vsub.f32 1.0, %v8253
        %v8382 = vsub.f32 1.0, %v8254
        %v8383 = vsub.f32 1.0, %v8255
        %v8384 = vsub.f32 1.0, %v8256
        %v8385 = vsub.f32 1.0, %v8257
        %v8386 = vsub.f32 1.0, %v8258
        %v8387 = vsub.f32 1.0, %v8259
        %v8388 = vsub.f32 1.0, %v8260
        %v8389 = vsub.f32 1.0, %v8261
        %v8390 = vsub.f32 1.0, %v8262
        %v8391 = vsub.f32 1.0, %v8263
        %v8392 = vsub.f32 1.0, %v8264
        %v8393 = vsub.f32 1.0, %v8265
        %v8394 = vsub.f32 1.0, %v8266
        %v8395 = vsub.f32 1.0, %v8267
        %v8396 = vsub.f32 1.0, %v8268
        %v8397 = vsub.f32 1.0, %v8269
        %v8398 = vsub.f32 1.0, %v8270
        %v8399 = vsub.f32 1.0, %v8271
        %v8400 = vsub.f32 1.0, %v8272
        %v8401 = vsub.f32 1.0, %v8273
        %v8402 = vsub.f32 1.0, %v8274
        %v8403 = vsub.f32 1.0, %v8275
        %v8404 = vsub.f32 1.0, %v8276
        %v8405 = vsub.f32 1.0, %v8277
        %v8406 = vsub.f32 1.0, %v8278
        %v8407 = vsub.f32 1.0, %v8279
        %v8408 = vsub.f32 1.0, %v8280
        %v8409 = vsub.f32 1.0, %v8281
        %v8410 = vsub.f32 1.0, %v8282
        %v8411 = vsub.f32 1.0, %v8283
        %v8412 = vsub.f32 1.0, %v8284
        %v8413 = vsub.f32 1.0, %v8285
        %v8414 = vsub.f32 1.0, %v8286
        %v8415 = vsub.f32 1.0, %v8287
        %v8416 = vsub.f32 1.0, %v8288
        %v8417 = vsub.f32 1.0, %v8289
        %v8418 = vsub.f32 1.0, %v8290
        %v8419 = vsub.f32 1.0, %v8291
        %v8420 = vsub.f32 1.0, %v8292
        %v8421 = vsub.f32 1.0, %v8293
        %v8422 = vsub.f32 1.0, %v8294
        %v8423 = vsub.f32 1.0, %v8295
        %v8424 = vsub.f32 1.0, %v8296
        %v8425 = vsub.f32 1.0, %v8297
        %v8426 = vsub.f32 1.0, %v8298
        %v8427 = vsub.f32 1.0, %v8299
        %v8428 = vsub.f32 1.0, %v8300
        %vm8429 = vcmp.ge.f32.partialorder %v5741, 0.0
        %vm8430 = vcmp.ge.f32.partialorder %v5742, 0.0
        %vm8431 = vcmp.ge.f32.partialorder %v5743, 0.0
        %vm8432 = vcmp.ge.f32.partialorder %v5744, 0.0
        %vm8433 = vcmp.ge.f32.partialorder %v5745, 0.0
        %vm8434 = vcmp.ge.f32.partialorder %v5746, 0.0
        %vm8435 = vcmp.ge.f32.partialorder %v5747, 0.0
        %vm8436 = vcmp.ge.f32.partialorder %v5748, 0.0
        %vm8437 = vcmp.ge.f32.partialorder %v5749, 0.0
        %vm8438 = vcmp.ge.f32.partialorder %v5750, 0.0
        %vm8439 = vcmp.ge.f32.partialorder %v5751, 0.0
        %vm8440 = vcmp.ge.f32.partialorder %v5752, 0.0
        %vm8441 = vcmp.ge.f32.partialorder %v5753, 0.0
        %vm8442 = vcmp.ge.f32.partialorder %v5754, 0.0
        %vm8443 = vcmp.ge.f32.partialorder %v5755, 0.0
        %vm8444 = vcmp.ge.f32.partialorder %v5756, 0.0
        %vm8445 = vcmp.ge.f32.partialorder %v5757, 0.0
        %vm8446 = vcmp.ge.f32.partialorder %v5758, 0.0
        %vm8447 = vcmp.ge.f32.partialorder %v5759, 0.0
        %vm8448 = vcmp.ge.f32.partialorder %v5760, 0.0
        %vm8449 = vcmp.ge.f32.partialorder %v5761, 0.0
        %vm8450 = vcmp.ge.f32.partialorder %v5762, 0.0
        %vm8451 = vcmp.ge.f32.partialorder %v5763, 0.0
        %vm8452 = vcmp.ge.f32.partialorder %v5764, 0.0
        %vm8453 = vcmp.ge.f32.partialorder %v5765, 0.0
        %vm8454 = vcmp.ge.f32.partialorder %v5766, 0.0
        %vm8455 = vcmp.ge.f32.partialorder %v5767, 0.0
        %vm8456 = vcmp.ge.f32.partialorder %v5768, 0.0
        %vm8457 = vcmp.ge.f32.partialorder %v5769, 0.0
        %vm8458 = vcmp.ge.f32.partialorder %v5770, 0.0
        %vm8459 = vcmp.ge.f32.partialorder %v5771, 0.0
        %vm8460 = vcmp.ge.f32.partialorder %v5772, 0.0
        %vm8461 = vcmp.ge.f32.partialorder %v5773, 0.0
        %vm8462 = vcmp.ge.f32.partialorder %v5774, 0.0
        %vm8463 = vcmp.ge.f32.partialorder %v5775, 0.0
        %vm8464 = vcmp.ge.f32.partialorder %v5776, 0.0
        %vm8465 = vcmp.ge.f32.partialorder %v5777, 0.0
        %vm8466 = vcmp.ge.f32.partialorder %v5778, 0.0
        %vm8467 = vcmp.ge.f32.partialorder %v5779, 0.0
        %vm8468 = vcmp.ge.f32.partialorder %v5780, 0.0
        %vm8469 = vcmp.ge.f32.partialorder %v5781, 0.0
        %vm8470 = vcmp.ge.f32.partialorder %v5782, 0.0
        %vm8471 = vcmp.ge.f32.partialorder %v5783, 0.0
        %vm8472 = vcmp.ge.f32.partialorder %v5784, 0.0
        %vm8473 = vcmp.ge.f32.partialorder %v5785, 0.0
        %vm8474 = vcmp.ge.f32.partialorder %v5786, 0.0
        %vm8475 = vcmp.ge.f32.partialorder %v5787, 0.0
        %vm8476 = vcmp.ge.f32.partialorder %v5788, 0.0
        %vm8477 = vcmp.ge.f32.partialorder %v5789, 0.0
        %vm8478 = vcmp.ge.f32.partialorder %v5790, 0.0
        %vm8479 = vcmp.ge.f32.partialorder %v5791, 0.0
        %vm8480 = vcmp.ge.f32.partialorder %v5792, 0.0
        %vm8481 = vcmp.ge.f32.partialorder %v5793, 0.0
        %vm8482 = vcmp.ge.f32.partialorder %v5794, 0.0
        %vm8483 = vcmp.ge.f32.partialorder %v5795, 0.0
        %vm8484 = vcmp.ge.f32.partialorder %v5796, 0.0
        %vm8485 = vcmp.ge.f32.partialorder %v5797, 0.0
        %vm8486 = vcmp.ge.f32.partialorder %v5798, 0.0
        %vm8487 = vcmp.ge.f32.partialorder %v5799, 0.0
        %vm8488 = vcmp.ge.f32.partialorder %v5800, 0.0
        %vm8489 = vcmp.ge.f32.partialorder %v5801, 0.0
        %vm8490 = vcmp.ge.f32.partialorder %v5802, 0.0
        %vm8491 = vcmp.ge.f32.partialorder %v5803, 0.0
        %vm8492 = vcmp.ge.f32.partialorder %v5804, 0.0
        %vm8493 = vcmp.ge.f32.partialorder %v5805, 0.0
        %vm8494 = vcmp.ge.f32.partialorder %v5806, 0.0
        %vm8495 = vcmp.ge.f32.partialorder %v5807, 0.0
        %vm8496 = vcmp.ge.f32.partialorder %v5808, 0.0
        %vm8497 = vcmp.ge.f32.partialorder %v5809, 0.0
        %vm8498 = vcmp.ge.f32.partialorder %v5810, 0.0
        %vm8499 = vcmp.ge.f32.partialorder %v5811, 0.0
        %vm8500 = vcmp.ge.f32.partialorder %v5812, 0.0
        %vm8501 = vcmp.ge.f32.partialorder %v5813, 0.0
        %vm8502 = vcmp.ge.f32.partialorder %v5814, 0.0
        %vm8503 = vcmp.ge.f32.partialorder %v5815, 0.0
        %vm8504 = vcmp.ge.f32.partialorder %v5816, 0.0
        %vm8505 = vcmp.ge.f32.partialorder %v5817, 0.0
        %vm8506 = vcmp.ge.f32.partialorder %v5818, 0.0
        %vm8507 = vcmp.ge.f32.partialorder %v5819, 0.0
        %vm8508 = vcmp.ge.f32.partialorder %v5820, 0.0
        %vm8509 = vcmp.ge.f32.partialorder %v5821, 0.0
        %vm8510 = vcmp.ge.f32.partialorder %v5822, 0.0
        %vm8511 = vcmp.ge.f32.partialorder %v5823, 0.0
        %vm8512 = vcmp.ge.f32.partialorder %v5824, 0.0
        %vm8513 = vcmp.ge.f32.partialorder %v5825, 0.0
        %vm8514 = vcmp.ge.f32.partialorder %v5826, 0.0
        %vm8515 = vcmp.ge.f32.partialorder %v5827, 0.0
        %vm8516 = vcmp.ge.f32.partialorder %v5828, 0.0
        %vm8517 = vcmp.ge.f32.partialorder %v5829, 0.0
        %vm8518 = vcmp.ge.f32.partialorder %v5830, 0.0
        %vm8519 = vcmp.ge.f32.partialorder %v5831, 0.0
        %vm8520 = vcmp.ge.f32.partialorder %v5832, 0.0
        %vm8521 = vcmp.ge.f32.partialorder %v5833, 0.0
        %vm8522 = vcmp.ge.f32.partialorder %v5834, 0.0
        %vm8523 = vcmp.ge.f32.partialorder %v5835, 0.0
        %vm8524 = vcmp.ge.f32.partialorder %v5836, 0.0
        %vm8525 = vcmp.ge.f32.partialorder %v5837, 0.0
        %vm8526 = vcmp.ge.f32.partialorder %v5838, 0.0
        %vm8527 = vcmp.ge.f32.partialorder %v5839, 0.0
        %vm8528 = vcmp.ge.f32.partialorder %v5840, 0.0
        %vm8529 = vcmp.ge.f32.partialorder %v5841, 0.0
        %vm8530 = vcmp.ge.f32.partialorder %v5842, 0.0
        %vm8531 = vcmp.ge.f32.partialorder %v5843, 0.0
        %vm8532 = vcmp.ge.f32.partialorder %v5844, 0.0
        %vm8533 = vcmp.ge.f32.partialorder %v5845, 0.0
        %vm8534 = vcmp.ge.f32.partialorder %v5846, 0.0
        %vm8535 = vcmp.ge.f32.partialorder %v5847, 0.0
        %vm8536 = vcmp.ge.f32.partialorder %v5848, 0.0
        %vm8537 = vcmp.ge.f32.partialorder %v5849, 0.0
        %vm8538 = vcmp.ge.f32.partialorder %v5850, 0.0
        %vm8539 = vcmp.ge.f32.partialorder %v5851, 0.0
        %vm8540 = vcmp.ge.f32.partialorder %v5852, 0.0
        %vm8541 = vcmp.ge.f32.partialorder %v5853, 0.0
        %vm8542 = vcmp.ge.f32.partialorder %v5854, 0.0
        %vm8543 = vcmp.ge.f32.partialorder %v5855, 0.0
        %vm8544 = vcmp.ge.f32.partialorder %v5856, 0.0
        %vm8545 = vcmp.ge.f32.partialorder %v5857, 0.0
        %vm8546 = vcmp.ge.f32.partialorder %v5858, 0.0
        %vm8547 = vcmp.ge.f32.partialorder %v5859, 0.0
        %vm8548 = vcmp.ge.f32.partialorder %v5860, 0.0
        %vm8549 = vcmp.ge.f32.partialorder %v5861, 0.0
        %vm8550 = vcmp.ge.f32.partialorder %v5862, 0.0
        %vm8551 = vcmp.ge.f32.partialorder %v5863, 0.0
        %vm8552 = vcmp.ge.f32.partialorder %v5864, 0.0
        %vm8553 = vcmp.ge.f32.partialorder %v5865, 0.0
        %vm8554 = vcmp.ge.f32.partialorder %v5866, 0.0
        %vm8555 = vcmp.ge.f32.partialorder %v5867, 0.0
        %vm8556 = vcmp.ge.f32.partialorder %v5868, 0.0
        %v8557 = vsub.f32 0.0, %v8301
        %v8558 = vsub.f32 0.0, %v8302
        %v8559 = vsub.f32 0.0, %v8303
        %v8560 = vsub.f32 0.0, %v8304
        %v8561 = vsub.f32 0.0, %v8305
        %v8562 = vsub.f32 0.0, %v8306
        %v8563 = vsub.f32 0.0, %v8307
        %v8564 = vsub.f32 0.0, %v8308
        %v8565 = vsub.f32 0.0, %v8309
        %v8566 = vsub.f32 0.0, %v8310
        %v8567 = vsub.f32 0.0, %v8311
        %v8568 = vsub.f32 0.0, %v8312
        %v8569 = vsub.f32 0.0, %v8313
        %v8570 = vsub.f32 0.0, %v8314
        %v8571 = vsub.f32 0.0, %v8315
        %v8572 = vsub.f32 0.0, %v8316
        %v8573 = vsub.f32 0.0, %v8317
        %v8574 = vsub.f32 0.0, %v8318
        %v8575 = vsub.f32 0.0, %v8319
        %v8576 = vsub.f32 0.0, %v8320
        %v8577 = vsub.f32 0.0, %v8321
        %v8578 = vsub.f32 0.0, %v8322
        %v8579 = vsub.f32 0.0, %v8323
        %v8580 = vsub.f32 0.0, %v8324
        %v8581 = vsub.f32 0.0, %v8325
        %v8582 = vsub.f32 0.0, %v8326
        %v8583 = vsub.f32 0.0, %v8327
        %v8584 = vsub.f32 0.0, %v8328
        %v8585 = vsub.f32 0.0, %v8329
        %v8586 = vsub.f32 0.0, %v8330
        %v8587 = vsub.f32 0.0, %v8331
        %v8588 = vsub.f32 0.0, %v8332
        %v8589 = vsub.f32 0.0, %v8333
        %v8590 = vsub.f32 0.0, %v8334
        %v8591 = vsub.f32 0.0, %v8335
        %v8592 = vsub.f32 0.0, %v8336
        %v8593 = vsub.f32 0.0, %v8337
        %v8594 = vsub.f32 0.0, %v8338
        %v8595 = vsub.f32 0.0, %v8339
        %v8596 = vsub.f32 0.0, %v8340
        %v8597 = vsub.f32 0.0, %v8341
        %v8598 = vsub.f32 0.0, %v8342
        %v8599 = vsub.f32 0.0, %v8343
        %v8600 = vsub.f32 0.0, %v8344
        %v8601 = vsub.f32 0.0, %v8345
        %v8602 = vsub.f32 0.0, %v8346
        %v8603 = vsub.f32 0.0, %v8347
        %v8604 = vsub.f32 0.0, %v8348
        %v8605 = vsub.f32 0.0, %v8349
        %v8606 = vsub.f32 0.0, %v8350
        %v8607 = vsub.f32 0.0, %v8351
        %v8608 = vsub.f32 0.0, %v8352
        %v8609 = vsub.f32 0.0, %v8353
        %v8610 = vsub.f32 0.0, %v8354
        %v8611 = vsub.f32 0.0, %v8355
        %v8612 = vsub.f32 0.0, %v8356
        %v8613 = vsub.f32 0.0, %v8357
        %v8614 = vsub.f32 0.0, %v8358
        %v8615 = vsub.f32 0.0, %v8359
        %v8616 = vsub.f32 0.0, %v8360
        %v8617 = vsub.f32 0.0, %v8361
        %v8618 = vsub.f32 0.0, %v8362
        %v8619 = vsub.f32 0.0, %v8363
        %v8620 = vsub.f32 0.0, %v8364
        %v8621 = vsub.f32 0.0, %v8365
        %v8622 = vsub.f32 0.0, %v8366
        %v8623 = vsub.f32 0.0, %v8367
        %v8624 = vsub.f32 0.0, %v8368
        %v8625 = vsub.f32 0.0, %v8369
        %v8626 = vsub.f32 0.0, %v8370
        %v8627 = vsub.f32 0.0, %v8371
        %v8628 = vsub.f32 0.0, %v8372
        %v8629 = vsub.f32 0.0, %v8373
        %v8630 = vsub.f32 0.0, %v8374
        %v8631 = vsub.f32 0.0, %v8375
        %v8632 = vsub.f32 0.0, %v8376
        %v8633 = vsub.f32 0.0, %v8377
        %v8634 = vsub.f32 0.0, %v8378
        %v8635 = vsub.f32 0.0, %v8379
        %v8636 = vsub.f32 0.0, %v8380
        %v8637 = vsub.f32 0.0, %v8381
        %v8638 = vsub.f32 0.0, %v8382
        %v8639 = vsub.f32 0.0, %v8383
        %v8640 = vsub.f32 0.0, %v8384
        %v8641 = vsub.f32 0.0, %v8385
        %v8642 = vsub.f32 0.0, %v8386
        %v8643 = vsub.f32 0.0, %v8387
        %v8644 = vsub.f32 0.0, %v8388
        %v8645 = vsub.f32 0.0, %v8389
        %v8646 = vsub.f32 0.0, %v8390
        %v8647 = vsub.f32 0.0, %v8391
        %v8648 = vsub.f32 0.0, %v8392
        %v8649 = vsub.f32 0.0, %v8393
        %v8650 = vsub.f32 0.0, %v8394
        %v8651 = vsub.f32 0.0, %v8395
        %v8652 = vsub.f32 0.0, %v8396
        %v8653 = vsub.f32 0.0, %v8397
        %v8654 = vsub.f32 0.0, %v8398
        %v8655 = vsub.f32 0.0, %v8399
        %v8656 = vsub.f32 0.0, %v8400
        %v8657 = vsub.f32 0.0, %v8401
        %v8658 = vsub.f32 0.0, %v8402
        %v8659 = vsub.f32 0.0, %v8403
        %v8660 = vsub.f32 0.0, %v8404
        %v8661 = vsub.f32 0.0, %v8405
        %v8662 = vsub.f32 0.0, %v8406
        %v8663 = vsub.f32 0.0, %v8407
        %v8664 = vsub.f32 0.0, %v8408
        %v8665 = vsub.f32 0.0, %v8409
        %v8666 = vsub.f32 0.0, %v8410
        %v8667 = vsub.f32 0.0, %v8411
        %v8668 = vsub.f32 0.0, %v8412
        %v8669 = vsub.f32 0.0, %v8413
        %v8670 = vsub.f32 0.0, %v8414
        %v8671 = vsub.f32 0.0, %v8415
        %v8672 = vsub.f32 0.0, %v8416
        %v8673 = vsub.f32 0.0, %v8417
        %v8674 = vsub.f32 0.0, %v8418
        %v8675 = vsub.f32 0.0, %v8419
        %v8676 = vsub.f32 0.0, %v8420
        %v8677 = vsub.f32 0.0, %v8421
        %v8678 = vsub.f32 0.0, %v8422
        %v8679 = vsub.f32 0.0, %v8423
        %v8680 = vsub.f32 0.0, %v8424
        %v8681 = vsub.f32 0.0, %v8425
        %v8682 = vsub.f32 0.0, %v8426
        %v8683 = vsub.f32 0.0, %v8427
        %v8684 = vsub.f32 0.0, %v8428
        %v8685 = vsel %vm8429, %v8301, %v8557
        %v8686 = vsel %vm8430, %v8302, %v8558
        %v8687 = vsel %vm8431, %v8303, %v8559
        %v8688 = vsel %vm8432, %v8304, %v8560
        %v8689 = vsel %vm8433, %v8305, %v8561
        %v8690 = vsel %vm8434, %v8306, %v8562
        %v8691 = vsel %vm8435, %v8307, %v8563
        %v8692 = vsel %vm8436, %v8308, %v8564
        %v8693 = vsel %vm8437, %v8309, %v8565
        %v8694 = vsel %vm8438, %v8310, %v8566
        %v8695 = vsel %vm8439, %v8311, %v8567
        %v8696 = vsel %vm8440, %v8312, %v8568
        %v8697 = vsel %vm8441, %v8313, %v8569
        %v8698 = vsel %vm8442, %v8314, %v8570
        %v8699 = vsel %vm8443, %v8315, %v8571
        %v8700 = vsel %vm8444, %v8316, %v8572
        %v8701 = vsel %vm8445, %v8317, %v8573
        %v8702 = vsel %vm8446, %v8318, %v8574
        %v8703 = vsel %vm8447, %v8319, %v8575
        %v8704 = vsel %vm8448, %v8320, %v8576
        %v8705 = vsel %vm8449, %v8321, %v8577
        %v8706 = vsel %vm8450, %v8322, %v8578
        %v8707 = vsel %vm8451, %v8323, %v8579
        %v8708 = vsel %vm8452, %v8324, %v8580
        %v8709 = vsel %vm8453, %v8325, %v8581
        %v8710 = vsel %vm8454, %v8326, %v8582
        %v8711 = vsel %vm8455, %v8327, %v8583
        %v8712 = vsel %vm8456, %v8328, %v8584
        %v8713 = vsel %vm8457, %v8329, %v8585
        %v8714 = vsel %vm8458, %v8330, %v8586
        %v8715 = vsel %vm8459, %v8331, %v8587
        %v8716 = vsel %vm8460, %v8332, %v8588
        %v8717 = vsel %vm8461, %v8333, %v8589
        %v8718 = vsel %vm8462, %v8334, %v8590
        %v8719 = vsel %vm8463, %v8335, %v8591
        %v8720 = vsel %vm8464, %v8336, %v8592
        %v8721 = vsel %vm8465, %v8337, %v8593
        %v8722 = vsel %vm8466, %v8338, %v8594
        %v8723 = vsel %vm8467, %v8339, %v8595
        %v8724 = vsel %vm8468, %v8340, %v8596
        %v8725 = vsel %vm8469, %v8341, %v8597
        %v8726 = vsel %vm8470, %v8342, %v8598
        %v8727 = vsel %vm8471, %v8343, %v8599
        %v8728 = vsel %vm8472, %v8344, %v8600
        %v8729 = vsel %vm8473, %v8345, %v8601
        %v8730 = vsel %vm8474, %v8346, %v8602
        %v8731 = vsel %vm8475, %v8347, %v8603
        %v8732 = vsel %vm8476, %v8348, %v8604
        %v8733 = vsel %vm8477, %v8349, %v8605
        %v8734 = vsel %vm8478, %v8350, %v8606
        %v8735 = vsel %vm8479, %v8351, %v8607
        %v8736 = vsel %vm8480, %v8352, %v8608
        %v8737 = vsel %vm8481, %v8353, %v8609
        %v8738 = vsel %vm8482, %v8354, %v8610
        %v8739 = vsel %vm8483, %v8355, %v8611
        %v8740 = vsel %vm8484, %v8356, %v8612
        %v8741 = vsel %vm8485, %v8357, %v8613
        %v8742 = vsel %vm8486, %v8358, %v8614
        %v8743 = vsel %vm8487, %v8359, %v8615
        %v8744 = vsel %vm8488, %v8360, %v8616
        %v8745 = vsel %vm8489, %v8361, %v8617
        %v8746 = vsel %vm8490, %v8362, %v8618
        %v8747 = vsel %vm8491, %v8363, %v8619
        %v8748 = vsel %vm8492, %v8364, %v8620
        %v8749 = vsel %vm8493, %v8365, %v8621
        %v8750 = vsel %vm8494, %v8366, %v8622
        %v8751 = vsel %vm8495, %v8367, %v8623
        %v8752 = vsel %vm8496, %v8368, %v8624
        %v8753 = vsel %vm8497, %v8369, %v8625
        %v8754 = vsel %vm8498, %v8370, %v8626
        %v8755 = vsel %vm8499, %v8371, %v8627
        %v8756 = vsel %vm8500, %v8372, %v8628
        %v8757 = vsel %vm8501, %v8373, %v8629
        %v8758 = vsel %vm8502, %v8374, %v8630
        %v8759 = vsel %vm8503, %v8375, %v8631
        %v8760 = vsel %vm8504, %v8376, %v8632
        %v8761 = vsel %vm8505, %v8377, %v8633
        %v8762 = vsel %vm8506, %v8378, %v8634
        %v8763 = vsel %vm8507, %v8379, %v8635
        %v8764 = vsel %vm8508, %v8380, %v8636
        %v8765 = vsel %vm8509, %v8381, %v8637
        %v8766 = vsel %vm8510, %v8382, %v8638
        %v8767 = vsel %vm8511, %v8383, %v8639
        %v8768 = vsel %vm8512, %v8384, %v8640
        %v8769 = vsel %vm8513, %v8385, %v8641
        %v8770 = vsel %vm8514, %v8386, %v8642
        %v8771 = vsel %vm8515, %v8387, %v8643
        %v8772 = vsel %vm8516, %v8388, %v8644
        %v8773 = vsel %vm8517, %v8389, %v8645
        %v8774 = vsel %vm8518, %v8390, %v8646
        %v8775 = vsel %vm8519, %v8391, %v8647
        %v8776 = vsel %vm8520, %v8392, %v8648
        %v8777 = vsel %vm8521, %v8393, %v8649
        %v8778 = vsel %vm8522, %v8394, %v8650
        %v8779 = vsel %vm8523, %v8395, %v8651
        %v8780 = vsel %vm8524, %v8396, %v8652
        %v8781 = vsel %vm8525, %v8397, %v8653
        %v8782 = vsel %vm8526, %v8398, %v8654
        %v8783 = vsel %vm8527, %v8399, %v8655
        %v8784 = vsel %vm8528, %v8400, %v8656
        %v8785 = vsel %vm8529, %v8401, %v8657
        %v8786 = vsel %vm8530, %v8402, %v8658
        %v8787 = vsel %vm8531, %v8403, %v8659
        %v8788 = vsel %vm8532, %v8404, %v8660
        %v8789 = vsel %vm8533, %v8405, %v8661
        %v8790 = vsel %vm8534, %v8406, %v8662
        %v8791 = vsel %vm8535, %v8407, %v8663
        %v8792 = vsel %vm8536, %v8408, %v8664
        %v8793 = vsel %vm8537, %v8409, %v8665
        %v8794 = vsel %vm8538, %v8410, %v8666
        %v8795 = vsel %vm8539, %v8411, %v8667
        %v8796 = vsel %vm8540, %v8412, %v8668
        %v8797 = vsel %vm8541, %v8413, %v8669
        %v8798 = vsel %vm8542, %v8414, %v8670
        %v8799 = vsel %vm8543, %v8415, %v8671
        %v8800 = vsel %vm8544, %v8416, %v8672
        %v8801 = vsel %vm8545, %v8417, %v8673
        %v8802 = vsel %vm8546, %v8418, %v8674
        %v8803 = vsel %vm8547, %v8419, %v8675
        %v8804 = vsel %vm8548, %v8420, %v8676
        %v8805 = vsel %vm8549, %v8421, %v8677
        %v8806 = vsel %vm8550, %v8422, %v8678
        %v8807 = vsel %vm8551, %v8423, %v8679
        %v8808 = vsel %vm8552, %v8424, %v8680
        %v8809 = vsel %vm8553, %v8425, %v8681
        %v8810 = vsel %vm8554, %v8426, %v8682
        %v8811 = vsel %vm8555, %v8427, %v8683
        %v8812 = vsel %vm8556, %v8428, %v8684
        %v8813 = vadd.f32 %v8685, 1.0
        %v8814 = vadd.f32 %v8686, 1.0
        %v8815 = vadd.f32 %v8687, 1.0
        %v8816 = vadd.f32 %v8688, 1.0
        %v8817 = vadd.f32 %v8689, 1.0
        %v8818 = vadd.f32 %v8690, 1.0
        %v8819 = vadd.f32 %v8691, 1.0
        %v8820 = vadd.f32 %v8692, 1.0
        %v8821 = vadd.f32 %v8693, 1.0
        %v8822 = vadd.f32 %v8694, 1.0
        %v8823 = vadd.f32 %v8695, 1.0
        %v8824 = vadd.f32 %v8696, 1.0
        %v8825 = vadd.f32 %v8697, 1.0
        %v8826 = vadd.f32 %v8698, 1.0
        %v8827 = vadd.f32 %v8699, 1.0
        %v8828 = vadd.f32 %v8700, 1.0
        %v8829 = vadd.f32 %v8701, 1.0
        %v8830 = vadd.f32 %v8702, 1.0
        %v8831 = vadd.f32 %v8703, 1.0
        %v8832 = vadd.f32 %v8704, 1.0
        %v8833 = vadd.f32 %v8705, 1.0
        %v8834 = vadd.f32 %v8706, 1.0
        %v8835 = vadd.f32 %v8707, 1.0
        %v8836 = vadd.f32 %v8708, 1.0
        %v8837 = vadd.f32 %v8709, 1.0
        %v8838 = vadd.f32 %v8710, 1.0
        %v8839 = vadd.f32 %v8711, 1.0
        %v8840 = vadd.f32 %v8712, 1.0
        %v8841 = vadd.f32 %v8713, 1.0
        %v8842 = vadd.f32 %v8714, 1.0
        %v8843 = vadd.f32 %v8715, 1.0
        %v8844 = vadd.f32 %v8716, 1.0
        %v8845 = vadd.f32 %v8717, 1.0
        %v8846 = vadd.f32 %v8718, 1.0
        %v8847 = vadd.f32 %v8719, 1.0
        %v8848 = vadd.f32 %v8720, 1.0
        %v8849 = vadd.f32 %v8721, 1.0
        %v8850 = vadd.f32 %v8722, 1.0
        %v8851 = vadd.f32 %v8723, 1.0
        %v8852 = vadd.f32 %v8724, 1.0
        %v8853 = vadd.f32 %v8725, 1.0
        %v8854 = vadd.f32 %v8726, 1.0
        %v8855 = vadd.f32 %v8727, 1.0
        %v8856 = vadd.f32 %v8728, 1.0
        %v8857 = vadd.f32 %v8729, 1.0
        %v8858 = vadd.f32 %v8730, 1.0
        %v8859 = vadd.f32 %v8731, 1.0
        %v8860 = vadd.f32 %v8732, 1.0
        %v8861 = vadd.f32 %v8733, 1.0
        %v8862 = vadd.f32 %v8734, 1.0
        %v8863 = vadd.f32 %v8735, 1.0
        %v8864 = vadd.f32 %v8736, 1.0
        %v8865 = vadd.f32 %v8737, 1.0
        %v8866 = vadd.f32 %v8738, 1.0
        %v8867 = vadd.f32 %v8739, 1.0
        %v8868 = vadd.f32 %v8740, 1.0
        %v8869 = vadd.f32 %v8741, 1.0
        %v8870 = vadd.f32 %v8742, 1.0
        %v8871 = vadd.f32 %v8743, 1.0
        %v8872 = vadd.f32 %v8744, 1.0
        %v8873 = vadd.f32 %v8745, 1.0
        %v8874 = vadd.f32 %v8746, 1.0
        %v8875 = vadd.f32 %v8747, 1.0
        %v8876 = vadd.f32 %v8748, 1.0
        %v8877 = vadd.f32 %v8749, 1.0
        %v8878 = vadd.f32 %v8750, 1.0
        %v8879 = vadd.f32 %v8751, 1.0
        %v8880 = vadd.f32 %v8752, 1.0
        %v8881 = vadd.f32 %v8753, 1.0
        %v8882 = vadd.f32 %v8754, 1.0
        %v8883 = vadd.f32 %v8755, 1.0
        %v8884 = vadd.f32 %v8756, 1.0
        %v8885 = vadd.f32 %v8757, 1.0
        %v8886 = vadd.f32 %v8758, 1.0
        %v8887 = vadd.f32 %v8759, 1.0
        %v8888 = vadd.f32 %v8760, 1.0
        %v8889 = vadd.f32 %v8761, 1.0
        %v8890 = vadd.f32 %v8762, 1.0
        %v8891 = vadd.f32 %v8763, 1.0
        %v8892 = vadd.f32 %v8764, 1.0
        %v8893 = vadd.f32 %v8765, 1.0
        %v8894 = vadd.f32 %v8766, 1.0
        %v8895 = vadd.f32 %v8767, 1.0
        %v8896 = vadd.f32 %v8768, 1.0
        %v8897 = vadd.f32 %v8769, 1.0
        %v8898 = vadd.f32 %v8770, 1.0
        %v8899 = vadd.f32 %v8771, 1.0
        %v8900 = vadd.f32 %v8772, 1.0
        %v8901 = vadd.f32 %v8773, 1.0
        %v8902 = vadd.f32 %v8774, 1.0
        %v8903 = vadd.f32 %v8775, 1.0
        %v8904 = vadd.f32 %v8776, 1.0
        %v8905 = vadd.f32 %v8777, 1.0
        %v8906 = vadd.f32 %v8778, 1.0
        %v8907 = vadd.f32 %v8779, 1.0
        %v8908 = vadd.f32 %v8780, 1.0
        %v8909 = vadd.f32 %v8781, 1.0
        %v8910 = vadd.f32 %v8782, 1.0
        %v8911 = vadd.f32 %v8783, 1.0
        %v8912 = vadd.f32 %v8784, 1.0
        %v8913 = vadd.f32 %v8785, 1.0
        %v8914 = vadd.f32 %v8786, 1.0
        %v8915 = vadd.f32 %v8787, 1.0
        %v8916 = vadd.f32 %v8788, 1.0
        %v8917 = vadd.f32 %v8789, 1.0
        %v8918 = vadd.f32 %v8790, 1.0
        %v8919 = vadd.f32 %v8791, 1.0
        %v8920 = vadd.f32 %v8792, 1.0
        %v8921 = vadd.f32 %v8793, 1.0
        %v8922 = vadd.f32 %v8794, 1.0
        %v8923 = vadd.f32 %v8795, 1.0
        %v8924 = vadd.f32 %v8796, 1.0
        %v8925 = vadd.f32 %v8797, 1.0
        %v8926 = vadd.f32 %v8798, 1.0
        %v8927 = vadd.f32 %v8799, 1.0
        %v8928 = vadd.f32 %v8800, 1.0
        %v8929 = vadd.f32 %v8801, 1.0
        %v8930 = vadd.f32 %v8802, 1.0
        %v8931 = vadd.f32 %v8803, 1.0
        %v8932 = vadd.f32 %v8804, 1.0
        %v8933 = vadd.f32 %v8805, 1.0
        %v8934 = vadd.f32 %v8806, 1.0
        %v8935 = vadd.f32 %v8807, 1.0
        %v8936 = vadd.f32 %v8808, 1.0
        %v8937 = vadd.f32 %v8809, 1.0
        %v8938 = vadd.f32 %v8810, 1.0
        %v8939 = vadd.f32 %v8811, 1.0
        %v8940 = vadd.f32 %v8812, 1.0
        %v8941 = vmul.f32 %v5613, %v8813
        %v8942 = vmul.f32 %v5614, %v8814
        %v8943 = vmul.f32 %v5615, %v8815
        %v8944 = vmul.f32 %v5616, %v8816
        %v8945 = vmul.f32 %v5617, %v8817
        %v8946 = vmul.f32 %v5618, %v8818
        %v8947 = vmul.f32 %v5619, %v8819
        %v8948 = vmul.f32 %v5620, %v8820
        %v8949 = vmul.f32 %v5621, %v8821
        %v8950 = vmul.f32 %v5622, %v8822
        %v8951 = vmul.f32 %v5623, %v8823
        %v8952 = vmul.f32 %v5624, %v8824
        %v8953 = vmul.f32 %v5625, %v8825
        %v8954 = vmul.f32 %v5626, %v8826
        %v8955 = vmul.f32 %v5627, %v8827
        %v8956 = vmul.f32 %v5628, %v8828
        %v8957 = vmul.f32 %v5629, %v8829
        %v8958 = vmul.f32 %v5630, %v8830
        %v8959 = vmul.f32 %v5631, %v8831
        %v8960 = vmul.f32 %v5632, %v8832
        %v8961 = vmul.f32 %v5633, %v8833
        %v8962 = vmul.f32 %v5634, %v8834
        %v8963 = vmul.f32 %v5635, %v8835
        %v8964 = vmul.f32 %v5636, %v8836
        %v8965 = vmul.f32 %v5637, %v8837
        %v8966 = vmul.f32 %v5638, %v8838
        %v8967 = vmul.f32 %v5639, %v8839
        %v8968 = vmul.f32 %v5640, %v8840
        %v8969 = vmul.f32 %v5641, %v8841
        %v8970 = vmul.f32 %v5642, %v8842
        %v8971 = vmul.f32 %v5643, %v8843
        %v8972 = vmul.f32 %v5644, %v8844
        %v8973 = vmul.f32 %v5645, %v8845
        %v8974 = vmul.f32 %v5646, %v8846
        %v8975 = vmul.f32 %v5647, %v8847
        %v8976 = vmul.f32 %v5648, %v8848
        %v8977 = vmul.f32 %v5649, %v8849
        %v8978 = vmul.f32 %v5650, %v8850
        %v8979 = vmul.f32 %v5651, %v8851
        %v8980 = vmul.f32 %v5652, %v8852
        %v8981 = vmul.f32 %v5653, %v8853
        %v8982 = vmul.f32 %v5654, %v8854
        %v8983 = vmul.f32 %v5655, %v8855
        %v8984 = vmul.f32 %v5656, %v8856
        %v8985 = vmul.f32 %v5657, %v8857
        %v8986 = vmul.f32 %v5658, %v8858
        %v8987 = vmul.f32 %v5659, %v8859
        %v8988 = vmul.f32 %v5660, %v8860
        %v8989 = vmul.f32 %v5661, %v8861
        %v8990 = vmul.f32 %v5662, %v8862
        %v8991 = vmul.f32 %v5663, %v8863
        %v8992 = vmul.f32 %v5664, %v8864
        %v8993 = vmul.f32 %v5665, %v8865
        %v8994 = vmul.f32 %v5666, %v8866
        %v8995 = vmul.f32 %v5667, %v8867
        %v8996 = vmul.f32 %v5668, %v8868
        %v8997 = vmul.f32 %v5669, %v8869
        %v8998 = vmul.f32 %v5670, %v8870
        %v8999 = vmul.f32 %v5671, %v8871
        %v9000 = vmul.f32 %v5672, %v8872
        %v9001 = vmul.f32 %v5673, %v8873
        %v9002 = vmul.f32 %v5674, %v8874
        %v9003 = vmul.f32 %v5675, %v8875
        %v9004 = vmul.f32 %v5676, %v8876
        %v9005 = vmul.f32 %v5677, %v8877
        %v9006 = vmul.f32 %v5678, %v8878
        %v9007 = vmul.f32 %v5679, %v8879
        %v9008 = vmul.f32 %v5680, %v8880
        %v9009 = vmul.f32 %v5681, %v8881
        %v9010 = vmul.f32 %v5682, %v8882
        %v9011 = vmul.f32 %v5683, %v8883
        %v9012 = vmul.f32 %v5684, %v8884
        %v9013 = vmul.f32 %v5685, %v8885
        %v9014 = vmul.f32 %v5686, %v8886
        %v9015 = vmul.f32 %v5687, %v8887
        %v9016 = vmul.f32 %v5688, %v8888
        %v9017 = vmul.f32 %v5689, %v8889
        %v9018 = vmul.f32 %v5690, %v8890
        %v9019 = vmul.f32 %v5691, %v8891
        %v9020 = vmul.f32 %v5692, %v8892
        %v9021 = vmul.f32 %v5693, %v8893
        %v9022 = vmul.f32 %v5694, %v8894
        %v9023 = vmul.f32 %v5695, %v8895
        %v9024 = vmul.f32 %v5696, %v8896
        %v9025 = vmul.f32 %v5697, %v8897
        %v9026 = vmul.f32 %v5698, %v8898
        %v9027 = vmul.f32 %v5699, %v8899
        %v9028 = vmul.f32 %v5700, %v8900
        %v9029 = vmul.f32 %v5701, %v8901
        %v9030 = vmul.f32 %v5702, %v8902
        %v9031 = vmul.f32 %v5703, %v8903
        %v9032 = vmul.f32 %v5704, %v8904
        %v9033 = vmul.f32 %v5705, %v8905
        %v9034 = vmul.f32 %v5706, %v8906
        %v9035 = vmul.f32 %v5707, %v8907
        %v9036 = vmul.f32 %v5708, %v8908
        %v9037 = vmul.f32 %v5709, %v8909
        %v9038 = vmul.f32 %v5710, %v8910
        %v9039 = vmul.f32 %v5711, %v8911
        %v9040 = vmul.f32 %v5712, %v8912
        %v9041 = vmul.f32 %v5713, %v8913
        %v9042 = vmul.f32 %v5714, %v8914
        %v9043 = vmul.f32 %v5715, %v8915
        %v9044 = vmul.f32 %v5716, %v8916
        %v9045 = vmul.f32 %v5717, %v8917
        %v9046 = vmul.f32 %v5718, %v8918
        %v9047 = vmul.f32 %v5719, %v8919
        %v9048 = vmul.f32 %v5720, %v8920
        %v9049 = vmul.f32 %v5721, %v8921
        %v9050 = vmul.f32 %v5722, %v8922
        %v9051 = vmul.f32 %v5723, %v8923
        %v9052 = vmul.f32 %v5724, %v8924
        %v9053 = vmul.f32 %v5725, %v8925
        %v9054 = vmul.f32 %v5726, %v8926
        %v9055 = vmul.f32 %v5727, %v8927
        %v9056 = vmul.f32 %v5728, %v8928
        %v9057 = vmul.f32 %v5729, %v8929
        %v9058 = vmul.f32 %v5730, %v8930
        %v9059 = vmul.f32 %v5731, %v8931
        %v9060 = vmul.f32 %v5732, %v8932
        %v9061 = vmul.f32 %v5733, %v8933
        %v9062 = vmul.f32 %v5734, %v8934
        %v9063 = vmul.f32 %v5735, %v8935
        %v9064 = vmul.f32 %v5736, %v8936
        %v9065 = vmul.f32 %v5737, %v8937
        %v9066 = vmul.f32 %v5738, %v8938
        %v9067 = vmul.f32 %v5739, %v8939
        %v9068 = vmul.f32 %v5740, %v8940
        %v9069 = vld [vmem:[#allocation8] sm:$0xff]
        %v9070 = vld [vmem:[#allocation8 + $0x8] sm:$0xff]
        %v9071 = vld [vmem:[#allocation8 + $0x10] sm:$0xff]
        %v9072 = vld [vmem:[#allocation8 + $0x18] sm:$0xff]
        %v9073 = vld [vmem:[#allocation8 + $0x20] sm:$0xff]
        %v9074 = vld [vmem:[#allocation8 + $0x28] sm:$0xff]
        %v9075 = vld [vmem:[#allocation8 + $0x30] sm:$0xff]
        %v9076 = vld [vmem:[#allocation8 + $0x38] sm:$0xff]
        %v9077 = vld [vmem:[#allocation8 + $0x40] sm:$0xff]
        %v9078 = vld [vmem:[#allocation8 + $0x48] sm:$0xff]
        %v9079 = vld [vmem:[#allocation8 + $0x50] sm:$0xff]
        %v9080 = vld [vmem:[#allocation8 + $0x58] sm:$0xff]
        %v9081 = vld [vmem:[#allocation8 + $0x60] sm:$0xff]
        %v9082 = vld [vmem:[#allocation8 + $0x68] sm:$0xff]
        %v9083 = vld [vmem:[#allocation8 + $0x70] sm:$0xff]
        %v9084 = vld [vmem:[#allocation8 + $0x78] sm:$0xff]
        %v9085 = vld [vmem:[#allocation8 + $0x80] sm:$0xff]
        %v9086 = vld [vmem:[#allocation8 + $0x88] sm:$0xff]
        %v9087 = vld [vmem:[#allocation8 + $0x90] sm:$0xff]
        %v9088 = vld [vmem:[#allocation8 + $0x98] sm:$0xff]
        %v9089 = vld [vmem:[#allocation8 + $0xa0] sm:$0xff]
        %v9090 = vld [vmem:[#allocation8 + $0xa8] sm:$0xff]
        %v9091 = vld [vmem:[#allocation8 + $0xb0] sm:$0xff]
        %v9092 = vld [vmem:[#allocation8 + $0xb8] sm:$0xff]
        %v9093 = vld [vmem:[#allocation8 + $0xc0] sm:$0xff]
        %v9094 = vld [vmem:[#allocation8 + $0xc8] sm:$0xff]
        %v9095 = vld [vmem:[#allocation8 + $0xd0] sm:$0xff]
        %v9096 = vld [vmem:[#allocation8 + $0xd8] sm:$0xff]
        %v9097 = vld [vmem:[#allocation8 + $0xe0] sm:$0xff]
        %v9098 = vld [vmem:[#allocation8 + $0xe8] sm:$0xff]
        %v9099 = vld [vmem:[#allocation8 + $0xf0] sm:$0xff]
        %v9100 = vld [vmem:[#allocation8 + $0xf8] sm:$0xff]
        %v9101 = vld [vmem:[#allocation8 + $0x100] sm:$0xff]
        %v9102 = vld [vmem:[#allocation8 + $0x108] sm:$0xff]
        %v9103 = vld [vmem:[#allocation8 + $0x110] sm:$0xff]
        %v9104 = vld [vmem:[#allocation8 + $0x118] sm:$0xff]
        %v9105 = vld [vmem:[#allocation8 + $0x120] sm:$0xff]
        %v9106 = vld [vmem:[#allocation8 + $0x128] sm:$0xff]
        %v9107 = vld [vmem:[#allocation8 + $0x130] sm:$0xff]
        %v9108 = vld [vmem:[#allocation8 + $0x138] sm:$0xff]
        %v9109 = vld [vmem:[#allocation8 + $0x140] sm:$0xff]
        %v9110 = vld [vmem:[#allocation8 + $0x148] sm:$0xff]
        %v9111 = vld [vmem:[#allocation8 + $0x150] sm:$0xff]
        %v9112 = vld [vmem:[#allocation8 + $0x158] sm:$0xff]
        %v9113 = vld [vmem:[#allocation8 + $0x160] sm:$0xff]
        %v9114 = vld [vmem:[#allocation8 + $0x168] sm:$0xff]
        %v9115 = vld [vmem:[#allocation8 + $0x170] sm:$0xff]
        %v9116 = vld [vmem:[#allocation8 + $0x178] sm:$0xff]
        %v9117 = vld [vmem:[#allocation8 + $0x180] sm:$0xff]
        %v9118 = vld [vmem:[#allocation8 + $0x188] sm:$0xff]
        %v9119 = vld [vmem:[#allocation8 + $0x190] sm:$0xff]
        %v9120 = vld [vmem:[#allocation8 + $0x198] sm:$0xff]
        %v9121 = vld [vmem:[#allocation8 + $0x1a0] sm:$0xff]
        %v9122 = vld [vmem:[#allocation8 + $0x1a8] sm:$0xff]
        %v9123 = vld [vmem:[#allocation8 + $0x1b0] sm:$0xff]
        %v9124 = vld [vmem:[#allocation8 + $0x1b8] sm:$0xff]
        %v9125 = vld [vmem:[#allocation8 + $0x1c0] sm:$0xff]
        %v9126 = vld [vmem:[#allocation8 + $0x1c8] sm:$0xff]
        %v9127 = vld [vmem:[#allocation8 + $0x1d0] sm:$0xff]
        %v9128 = vld [vmem:[#allocation8 + $0x1d8] sm:$0xff]
        %v9129 = vld [vmem:[#allocation8 + $0x1e0] sm:$0xff]
        %v9130 = vld [vmem:[#allocation8 + $0x1e8] sm:$0xff]
        %v9131 = vld [vmem:[#allocation8 + $0x1f0] sm:$0xff]
        %v9132 = vld [vmem:[#allocation8 + $0x1f8] sm:$0xff]
        %v9133 = vld [vmem:[%s8] sm:$0x1]
        %v9135 = vlaneseq
        %v9136 = vshrl.u32 %v9135, 7
        %v9137 = vsub.s32 0, %v9136
        %v9138 = vrot.slane %v9133, %v9137
        %9140 = vmatprep.subr.mxu0 0.0
        %9141 = vmatpush1.msra.mxu0 %v9069
        %9142 = vmatprep.subr.mxu0 0.0
        %9143 = vmatpush1.msra.mxu0 %v9070
        %9144 = vmatprep.subr.mxu0 0.0
        %9145 = vmatpush1.msra.mxu0 %v9071
        %9146 = vmatprep.subr.mxu0 0.0
        %9147 = vmatpush1.msra.mxu0 %v9072
        %9148 = vmatprep.subr.mxu0 0.0
        %9149 = vmatpush1.msra.mxu0 %v9073
        %9150 = vmatprep.subr.mxu0 0.0
        %9151 = vmatpush1.msra.mxu0 %v9074
        %9152 = vmatprep.subr.mxu0 0.0
        %9153 = vmatpush1.msra.mxu0 %v9075
        %9154 = vmatprep.subr.mxu0 0.0
        %9155 = vmatpush1.msra.mxu0 %v9076
        %9156 = vmatprep.subr.mxu0 0.0
        %9157 = vmatpush1.msra.mxu0 %v9077
        %9158 = vmatprep.subr.mxu0 0.0
        %9159 = vmatpush1.msra.mxu0 %v9078
        %9160 = vmatprep.subr.mxu0 0.0
        %9161 = vmatpush1.msra.mxu0 %v9079
        %9162 = vmatprep.subr.mxu0 0.0
        %9163 = vmatpush1.msra.mxu0 %v9080
        %9164 = vmatprep.subr.mxu0 0.0
        %9165 = vmatpush1.msra.mxu0 %v9081
        %9166 = vmatprep.subr.mxu0 0.0
        %9167 = vmatpush1.msra.mxu0 %v9082
        %9168 = vmatprep.subr.mxu0 0.0
        %9169 = vmatpush1.msra.mxu0 %v9083
        %9170 = vmatprep.subr.mxu0 0.0
        %9171 = vmatpush1.msra.mxu0 %v9084
        %9172 = vmatprep.subr.mxu0 0.0
        %9173 = vmatpush1.msra.mxu0 %v9085
        %9174 = vmatprep.subr.mxu0 0.0
        %9175 = vmatpush1.msra.mxu0 %v9086
        %9176 = vmatprep.subr.mxu0 0.0
        %9177 = vmatpush1.msra.mxu0 %v9087
        %9178 = vmatprep.subr.mxu0 0.0
        %9179 = vmatpush1.msra.mxu0 %v9088
        %9180 = vmatprep.subr.mxu0 0.0
        %9181 = vmatpush1.msra.mxu0 %v9089
        %9182 = vmatprep.subr.mxu0 0.0
        %9183 = vmatpush1.msra.mxu0 %v9090
        %9184 = vmatprep.subr.mxu0 0.0
        %9185 = vmatpush1.msra.mxu0 %v9091
        %9186 = vmatprep.subr.mxu0 0.0
        %9187 = vmatpush1.msra.mxu0 %v9092
        %9188 = vmatprep.subr.mxu0 0.0
        %9189 = vmatpush1.msra.mxu0 %v9093
        %9190 = vmatprep.subr.mxu0 0.0
        %9191 = vmatpush1.msra.mxu0 %v9094
        %9192 = vmatprep.subr.mxu0 0.0
        %9193 = vmatpush1.msra.mxu0 %v9095
        %9194 = vmatprep.subr.mxu0 0.0
        %9195 = vmatpush1.msra.mxu0 %v9096
        %9196 = vmatprep.subr.mxu0 0.0
        %9197 = vmatpush1.msra.mxu0 %v9097
        %9198 = vmatprep.subr.mxu0 0.0
        %9199 = vmatpush1.msra.mxu0 %v9098
        %9200 = vmatprep.subr.mxu0 0.0
        %9201 = vmatpush1.msra.mxu0 %v9099
        %9202 = vmatprep.subr.mxu0 0.0
        %9203 = vmatpush1.msra.mxu0 %v9100
        %9204 = vmatprep.mubr.f32.mxu0 %v8942
        %9205 = vmatmul.mubr.f32.gmra.mrb[0].mxu0 %v8941
        %v9206 = vpop.f32.mrb[0].mxu0
        %v9207 = vadd.f32 %v9138, %v9206
        %v9208 = vpop.f32.mrb[0].mxu0
        %9209 = vmatprep.mubr.f32.mxu0 %v8946
        %9210 = vmatmul.mubr.f32.gmra.mrb[0].mxu0 %v8945
        %v9211 = vpop.f32.mrb[0].mxu0
        %v9212 = vadd.f32 %v9138, %v9211
        %v9213 = vpop.f32.mrb[0].mxu0
        %9214 = vmatprep.mubr.f32.mxu0 %v8950
        %9215 = vmatmul.mubr.f32.gmra.mrb[0].mxu0 %v8949
        %v9216 = vpop.f32.mrb[0].mxu0
        %v9217 = vadd.f32 %v9138, %v9216
        %v9218 = vpop.f32.mrb[0].mxu0
        %9219 = vmatprep.mubr.f32.mxu0 %v8954
        %9220 = vmatmul.mubr.f32.gmra.mrb[0].mxu0 %v8953
        %v9221 = vpop.f32.mrb[0].mxu0
        %v9222 = vadd.f32 %v9138, %v9221
        %v9223 = vpop.f32.mrb[0].mxu0
        %9224 = vmatprep.mubr.f32.mxu0 %v8958
        %9225 = vmatmul.mubr.f32.gmra.mrb[0].mxu0 %v8957
        %v9226 = vpop.f32.mrb[0].mxu0
        %v9227 = vadd.f32 %v9138, %v9226
        %v9228 = vpop.f32.mrb[0].mxu0
        %9229 = vmatprep.mubr.f32.mxu0 %v8962
        %9230 = vmatmul.mubr.f32.gmra.mrb[0].mxu0 %v8961
        %v9231 = vpop.f32.mrb[0].mxu0
        %v9232 = vadd.f32 %v9138, %v9231
        %v9233 = vpop.f32.mrb[0].mxu0
        %9234 = vmatprep.mubr.f32.mxu0 %v8966
        %9235 = vmatmul.mubr.f32.gmra.mrb[0].mxu0 %v8965
        %v9236 = vpop.f32.mrb[0].mxu0
        %v9237 = vadd.f32 %v9138, %v9236
        %v9238 = vpop.f32.mrb[0].mxu0
        %9239 = vmatprep.mubr.f32.mxu0 %v8970
        %9240 = vmatmul.mubr.f32.gmra.mrb[0].mxu0 %v8969
        %v9241 = vpop.f32.mrb[0].mxu0
        %v9242 = vadd.f32 %v9138, %v9241
        %v9243 = vpop.f32.mrb[0].mxu0
        %9244 = vmatprep.mubr.f32.mxu0 %v8974
        %9245 = vmatmul.mubr.f32.gmra.mrb[0].mxu0 %v8973
        %v9246 = vpop.f32.mrb[0].mxu0
        %v9247 = vadd.f32 %v9138, %v9246
        %v9248 = vpop.f32.mrb[0].mxu0
        %9249 = vmatprep.mubr.f32.mxu0 %v8978
        %9250 = vmatmul.mubr.f32.gmra.mrb[0].mxu0 %v8977
        %v9251 = vpop.f32.mrb[0].mxu0
        %v9252 = vadd.f32 %v9138, %v9251
        %v9253 = vpop.f32.mrb[0].mxu0
        %9254 = vmatprep.mubr.f32.mxu0 %v8982
        %9255 = vmatmul.mubr.f32.gmra.mrb[0].mxu0 %v8981
        %v9256 = vpop.f32.mrb[0].mxu0
        %v9257 = vadd.f32 %v9138, %v9256
        %v9258 = vpop.f32.mrb[0].mxu0
        %9259 = vmatprep.mubr.f32.mxu0 %v8986
        %9260 = vmatmul.mubr.f32.gmra.mrb[0].mxu0 %v8985
        %v9261 = vpop.f32.mrb[0].mxu0
        %v9262 = vadd.f32 %v9138, %v9261
        %v9263 = vpop.f32.mrb[0].mxu0
        %9264 = vmatprep.mubr.f32.mxu0 %v8990
        %9265 = vmatmul.mubr.f32.gmra.mrb[0].mxu0 %v8989
        %v9266 = vpop.f32.mrb[0].mxu0
        %v9267 = vadd.f32 %v9138, %v9266
        %v9268 = vpop.f32.mrb[0].mxu0
        %9269 = vmatprep.mubr.f32.mxu0 %v8994
        %9270 = vmatmul.mubr.f32.gmra.mrb[0].mxu0 %v8993
        %v9271 = vpop.f32.mrb[0].mxu0
        %v9272 = vadd.f32 %v9138, %v9271
        %v9273 = vpop.f32.mrb[0].mxu0
        %9274 = vmatprep.mubr.f32.mxu0 %v8998
        %9275 = vmatmul.mubr.f32.gmra.mrb[0].mxu0 %v8997
        %v9276 = vpop.f32.mrb[0].mxu0
        %v9277 = vadd.f32 %v9138, %v9276
        %v9278 = vpop.f32.mrb[0].mxu0
        %9279 = vmatprep.mubr.f32.mxu0 %v9002
        %9280 = vmatmul.mubr.f32.gmra.mrb[0].mxu0 %v9001
        %v9281 = vpop.f32.mrb[0].mxu0
        %v9282 = vadd.f32 %v9138, %v9281
        %v9283 = vpop.f32.mrb[0].mxu0
        %9284 = vmatprep.mubr.f32.mxu0 %v9006
        %9285 = vmatmul.mubr.f32.gmra.mrb[0].mxu0 %v9005
        %v9286 = vpop.f32.mrb[0].mxu0
        %v9287 = vadd.f32 %v9138, %v9286
        %v9288 = vpop.f32.mrb[0].mxu0
        %9289 = vmatprep.mubr.f32.mxu0 %v9010
        %9290 = vmatmul.mubr.f32.gmra.mrb[0].mxu0 %v9009
        %v9291 = vpop.f32.mrb[0].mxu0
        %v9292 = vadd.f32 %v9138, %v9291
        %v9293 = vpop.f32.mrb[0].mxu0
        %9294 = vmatprep.mubr.f32.mxu0 %v9014
        %9295 = vmatmul.mubr.f32.gmra.mrb[0].mxu0 %v9013
        %v9296 = vpop.f32.mrb[0].mxu0
        %v9297 = vadd.f32 %v9138, %v9296
        %v9298 = vpop.f32.mrb[0].mxu0
        %9299 = vmatprep.mubr.f32.mxu0 %v9018
        %9300 = vmatmul.mubr.f32.gmra.mrb[0].mxu0 %v9017
        %v9301 = vpop.f32.mrb[0].mxu0
        %v9302 = vadd.f32 %v9138, %v9301
        %v9303 = vpop.f32.mrb[0].mxu0
        %9304 = vmatprep.mubr.f32.mxu0 %v9022
        %9305 = vmatmul.mubr.f32.gmra.mrb[0].mxu0 %v9021
        %v9306 = vpop.f32.mrb[0].mxu0
        %v9307 = vadd.f32 %v9138, %v9306
        %v9308 = vpop.f32.mrb[0].mxu0
        %9309 = vmatprep.mubr.f32.mxu0 %v9026
        %9310 = vmatmul.mubr.f32.gmra.mrb[0].mxu0 %v9025
        %v9311 = vpop.f32.mrb[0].mxu0
        %v9312 = vadd.f32 %v9138, %v9311
        %v9313 = vpop.f32.mrb[0].mxu0
        %9314 = vmatprep.mubr.f32.mxu0 %v9030
        %9315 = vmatmul.mubr.f32.gmra.mrb[0].mxu0 %v9029
        %v9316 = vpop.f32.mrb[0].mxu0
        %v9317 = vadd.f32 %v9138, %v9316
        %v9318 = vpop.f32.mrb[0].mxu0
        %9319 = vmatprep.mubr.f32.mxu0 %v9034
        %9320 = vmatmul.mubr.f32.gmra.mrb[0].mxu0 %v9033
        %v9321 = vpop.f32.mrb[0].mxu0
        %v9322 = vadd.f32 %v9138, %v9321
        %v9323 = vpop.f32.mrb[0].mxu0
        %9324 = vmatprep.mubr.f32.mxu0 %v9038
        %9325 = vmatmul.mubr.f32.gmra.mrb[0].mxu0 %v9037
        %v9326 = vpop.f32.mrb[0].mxu0
        %v9327 = vadd.f32 %v9138, %v9326
        %v9328 = vpop.f32.mrb[0].mxu0
        %9329 = vmatprep.mubr.f32.mxu0 %v9042
        %9330 = vmatmul.mubr.f32.gmra.mrb[0].mxu0 %v9041
        %v9331 = vpop.f32.mrb[0].mxu0
        %v9332 = vadd.f32 %v9138, %v9331
        %v9333 = vpop.f32.mrb[0].mxu0
        %9334 = vmatprep.mubr.f32.mxu0 %v9046
        %9335 = vmatmul.mubr.f32.gmra.mrb[0].mxu0 %v9045
        %v9336 = vpop.f32.mrb[0].mxu0
        %v9337 = vadd.f32 %v9138, %v9336
        %v9338 = vpop.f32.mrb[0].mxu0
        %9339 = vmatprep.mubr.f32.mxu0 %v9050
        %9340 = vmatmul.mubr.f32.gmra.mrb[0].mxu0 %v9049
        %v9341 = vpop.f32.mrb[0].mxu0
        %v9342 = vadd.f32 %v9138, %v9341
        %v9343 = vpop.f32.mrb[0].mxu0
        %9344 = vmatprep.mubr.f32.mxu0 %v9054
        %9345 = vmatmul.mubr.f32.gmra.mrb[0].mxu0 %v9053
        %v9346 = vpop.f32.mrb[0].mxu0
        %v9347 = vadd.f32 %v9138, %v9346
        %v9348 = vpop.f32.mrb[0].mxu0
        %9349 = vmatprep.mubr.f32.mxu0 %v9058
        %9350 = vmatmul.mubr.f32.gmra.mrb[0].mxu0 %v9057
        %v9351 = vpop.f32.mrb[0].mxu0
        %v9352 = vadd.f32 %v9138, %v9351
        %v9353 = vpop.f32.mrb[0].mxu0
        %9354 = vmatprep.mubr.f32.mxu0 %v9062
        %9355 = vmatmul.mubr.f32.gmra.mrb[0].mxu0 %v9061
        %v9356 = vpop.f32.mrb[0].mxu0
        %v9357 = vadd.f32 %v9138, %v9356
        %v9358 = vpop.f32.mrb[0].mxu0
        %9359 = vmatprep.mubr.f32.mxu0 %v9066
        %9360 = vmatmul.mubr.f32.gmra.mrb[0].mxu0 %v9065
        %v9361 = vpop.f32.mrb[0].mxu0
        %v9362 = vadd.f32 %v9138, %v9361
        %v9363 = vpop.f32.mrb[0].mxu0
        %9364 = vdwg.mxu0
        %9365 = vmatprep.subr.mxu0 0.0
        %9366 = vmatpush1.msra.mxu0 %v9101
        %9367 = vmatprep.subr.mxu0 0.0
        %9368 = vmatpush1.msra.mxu0 %v9102
        %9369 = vmatprep.subr.mxu0 0.0
        %9370 = vmatpush1.msra.mxu0 %v9103
        %9371 = vmatprep.subr.mxu0 0.0
        %9372 = vmatpush1.msra.mxu0 %v9104
        %9373 = vmatprep.subr.mxu0 0.0
        %9374 = vmatpush1.msra.mxu0 %v9105
        %9375 = vmatprep.subr.mxu0 0.0
        %9376 = vmatpush1.msra.mxu0 %v9106
        %9377 = vmatprep.subr.mxu0 0.0
        %9378 = vmatpush1.msra.mxu0 %v9107
        %9379 = vmatprep.subr.mxu0 0.0
        %9380 = vmatpush1.msra.mxu0 %v9108
        %9381 = vmatprep.subr.mxu0 0.0
        %9382 = vmatpush1.msra.mxu0 %v9109
        %9383 = vmatprep.subr.mxu0 0.0
        %9384 = vmatpush1.msra.mxu0 %v9110
        %9385 = vmatprep.subr.mxu0 0.0
        %9386 = vmatpush1.msra.mxu0 %v9111
        %9387 = vmatprep.subr.mxu0 0.0
        %9388 = vmatpush1.msra.mxu0 %v9112
        %9389 = vmatprep.subr.mxu0 0.0
        %9390 = vmatpush1.msra.mxu0 %v9113
        %9391 = vmatprep.subr.mxu0 0.0
        %9392 = vmatpush1.msra.mxu0 %v9114
        %9393 = vmatprep.subr.mxu0 0.0
        %9394 = vmatpush1.msra.mxu0 %v9115
        %9395 = vmatprep.subr.mxu0 0.0
        %9396 = vmatpush1.msra.mxu0 %v9116
        %9397 = vmatprep.subr.mxu0 0.0
        %9398 = vmatpush1.msra.mxu0 %v9117
        %9399 = vmatprep.subr.mxu0 0.0
        %9400 = vmatpush1.msra.mxu0 %v9118
        %9401 = vmatprep.subr.mxu0 0.0
        %9402 = vmatpush1.msra.mxu0 %v9119
        %9403 = vmatprep.subr.mxu0 0.0
        %9404 = vmatpush1.msra.mxu0 %v9120
        %9405 = vmatprep.subr.mxu0 0.0
        %9406 = vmatpush1.msra.mxu0 %v9121
        %9407 = vmatprep.subr.mxu0 0.0
        %9408 = vmatpush1.msra.mxu0 %v9122
        %9409 = vmatprep.subr.mxu0 0.0
        %9410 = vmatpush1.msra.mxu0 %v9123
        %9411 = vmatprep.subr.mxu0 0.0
        %9412 = vmatpush1.msra.mxu0 %v9124
        %9413 = vmatprep.subr.mxu0 0.0
        %9414 = vmatpush1.msra.mxu0 %v9125
        %9415 = vmatprep.subr.mxu0 0.0
        %9416 = vmatpush1.msra.mxu0 %v9126
        %9417 = vmatprep.subr.mxu0 0.0
        %9418 = vmatpush1.msra.mxu0 %v9127
        %9419 = vmatprep.subr.mxu0 0.0
        %9420 = vmatpush1.msra.mxu0 %v9128
        %9421 = vmatprep.subr.mxu0 0.0
        %9422 = vmatpush1.msra.mxu0 %v9129
        %9423 = vmatprep.subr.mxu0 0.0
        %9424 = vmatpush1.msra.mxu0 %v9130
        %9425 = vmatprep.subr.mxu0 0.0
        %9426 = vmatpush1.msra.mxu0 %v9131
        %9427 = vmatprep.subr.mxu0 0.0
        %9428 = vmatpush1.msra.mxu0 %v9132
        %9429 = vmatprep.mubr.f32.mxu0 %v8944
        %9430 = vmatmul.mubr.f32.gmra.mrb[0].mxu0 %v8943
        %v9431 = vpop.f32.mrb[0].mxu0
        %v9432 = vadd.f32 %v9207, %v9431
        %v9433 = vpop.f32.mrb[0].mxu0
        %9434 = vmatprep.mubr.f32.mxu0 %v8948
        %9435 = vmatmul.mubr.f32.gmra.mrb[0].mxu0 %v8947
        %v9436 = vpop.f32.mrb[0].mxu0
        %v9437 = vadd.f32 %v9212, %v9436
        %v9438 = vpop.f32.mrb[0].mxu0
        %9439 = vmatprep.mubr.f32.mxu0 %v8952
        %9440 = vmatmul.mubr.f32.gmra.mrb[0].mxu0 %v8951
        %v9441 = vpop.f32.mrb[0].mxu0
        %v9442 = vadd.f32 %v9217, %v9441
        %v9443 = vpop.f32.mrb[0].mxu0
        %9444 = vmatprep.mubr.f32.mxu0 %v8956
        %9445 = vmatmul.mubr.f32.gmra.mrb[0].mxu0 %v8955
        %v9446 = vpop.f32.mrb[0].mxu0
        %v9447 = vadd.f32 %v9222, %v9446
        %v9448 = vpop.f32.mrb[0].mxu0
        %9449 = vmatprep.mubr.f32.mxu0 %v8960
        %9450 = vmatmul.mubr.f32.gmra.mrb[0].mxu0 %v8959
        %v9451 = vpop.f32.mrb[0].mxu0
        %v9452 = vadd.f32 %v9227, %v9451
        %v9453 = vpop.f32.mrb[0].mxu0
        %9454 = vmatprep.mubr.f32.mxu0 %v8964
        %9455 = vmatmul.mubr.f32.gmra.mrb[0].mxu0 %v8963
        %v9456 = vpop.f32.mrb[0].mxu0
        %v9457 = vadd.f32 %v9232, %v9456
        %v9458 = vpop.f32.mrb[0].mxu0
        %9459 = vmatprep.mubr.f32.mxu0 %v8968
        %9460 = vmatmul.mubr.f32.gmra.mrb[0].mxu0 %v8967
        %v9461 = vpop.f32.mrb[0].mxu0
        %v9462 = vadd.f32 %v9237, %v9461
        %v9463 = vpop.f32.mrb[0].mxu0
        %9464 = vmatprep.mubr.f32.mxu0 %v8972
        %9465 = vmatmul.mubr.f32.gmra.mrb[0].mxu0 %v8971
        %v9466 = vpop.f32.mrb[0].mxu0
        %v9467 = vadd.f32 %v9242, %v9466
        %v9468 = vpop.f32.mrb[0].mxu0
        %9469 = vmatprep.mubr.f32.mxu0 %v8976
        %9470 = vmatmul.mubr.f32.gmra.mrb[0].mxu0 %v8975
        %v9471 = vpop.f32.mrb[0].mxu0
        %v9472 = vadd.f32 %v9247, %v9471
        %v9473 = vpop.f32.mrb[0].mxu0
        %9474 = vmatprep.mubr.f32.mxu0 %v8980
        %9475 = vmatmul.mubr.f32.gmra.mrb[0].mxu0 %v8979
        %v9476 = vpop.f32.mrb[0].mxu0
        %v9477 = vadd.f32 %v9252, %v9476
        %v9478 = vpop.f32.mrb[0].mxu0
        %9479 = vmatprep.mubr.f32.mxu0 %v8984
        %9480 = vmatmul.mubr.f32.gmra.mrb[0].mxu0 %v8983
        %v9481 = vpop.f32.mrb[0].mxu0
        %v9482 = vadd.f32 %v9257, %v9481
        %v9483 = vpop.f32.mrb[0].mxu0
        %9484 = vmatprep.mubr.f32.mxu0 %v8988
        %9485 = vmatmul.mubr.f32.gmra.mrb[0].mxu0 %v8987
        %v9486 = vpop.f32.mrb[0].mxu0
        %v9487 = vadd.f32 %v9262, %v9486
        %v9488 = vpop.f32.mrb[0].mxu0
        %9489 = vmatprep.mubr.f32.mxu0 %v8992
        %9490 = vmatmul.mubr.f32.gmra.mrb[0].mxu0 %v8991
        %v9491 = vpop.f32.mrb[0].mxu0
        %v9492 = vadd.f32 %v9267, %v9491
        %v9493 = vpop.f32.mrb[0].mxu0
        %9494 = vmatprep.mubr.f32.mxu0 %v8996
        %9495 = vmatmul.mubr.f32.gmra.mrb[0].mxu0 %v8995
        %v9496 = vpop.f32.mrb[0].mxu0
        %v9497 = vadd.f32 %v9272, %v9496
        %v9498 = vpop.f32.mrb[0].mxu0
        %9499 = vmatprep.mubr.f32.mxu0 %v9000
        %9500 = vmatmul.mubr.f32.gmra.mrb[0].mxu0 %v8999
        %v9501 = vpop.f32.mrb[0].mxu0
        %v9502 = vadd.f32 %v9277, %v9501
        %v9503 = vpop.f32.mrb[0].mxu0
        %9504 = vmatprep.mubr.f32.mxu0 %v9004
        %9505 = vmatmul.mubr.f32.gmra.mrb[0].mxu0 %v9003
        %v9506 = vpop.f32.mrb[0].mxu0
        %v9507 = vadd.f32 %v9282, %v9506
        %v9508 = vpop.f32.mrb[0].mxu0
        %9509 = vmatprep.mubr.f32.mxu0 %v9008
        %9510 = vmatmul.mubr.f32.gmra.mrb[0].mxu0 %v9007
        %v9511 = vpop.f32.mrb[0].mxu0
        %v9512 = vadd.f32 %v9287, %v9511
        %v9513 = vpop.f32.mrb[0].mxu0
        %9514 = vmatprep.mubr.f32.mxu0 %v9012
        %9515 = vmatmul.mubr.f32.gmra.mrb[0].mxu0 %v9011
        %v9516 = vpop.f32.mrb[0].mxu0
        %v9517 = vadd.f32 %v9292, %v9516
        %v9518 = vpop.f32.mrb[0].mxu0
        %9519 = vmatprep.mubr.f32.mxu0 %v9016
        %9520 = vmatmul.mubr.f32.gmra.mrb[0].mxu0 %v9015
        %v9521 = vpop.f32.mrb[0].mxu0
        %v9522 = vadd.f32 %v9297, %v9521
        %v9523 = vpop.f32.mrb[0].mxu0
        %9524 = vmatprep.mubr.f32.mxu0 %v9020
        %9525 = vmatmul.mubr.f32.gmra.mrb[0].mxu0 %v9019
        %v9526 = vpop.f32.mrb[0].mxu0
        %v9527 = vadd.f32 %v9302, %v9526
        %v9528 = vpop.f32.mrb[0].mxu0
        %9529 = vmatprep.mubr.f32.mxu0 %v9024
        %9530 = vmatmul.mubr.f32.gmra.mrb[0].mxu0 %v9023
        %v9531 = vpop.f32.mrb[0].mxu0
        %v9532 = vadd.f32 %v9307, %v9531
        %v9533 = vpop.f32.mrb[0].mxu0
        %9534 = vmatprep.mubr.f32.mxu0 %v9028
        %9535 = vmatmul.mubr.f32.gmra.mrb[0].mxu0 %v9027
        %v9536 = vpop.f32.mrb[0].mxu0
        %v9537 = vadd.f32 %v9312, %v9536
        %v9538 = vpop.f32.mrb[0].mxu0
        %9539 = vmatprep.mubr.f32.mxu0 %v9032
        %9540 = vmatmul.mubr.f32.gmra.mrb[0].mxu0 %v9031
        %v9541 = vpop.f32.mrb[0].mxu0
        %v9542 = vadd.f32 %v9317, %v9541
        %v9543 = vpop.f32.mrb[0].mxu0
        %9544 = vmatprep.mubr.f32.mxu0 %v9036
        %9545 = vmatmul.mubr.f32.gmra.mrb[0].mxu0 %v9035
        %v9546 = vpop.f32.mrb[0].mxu0
        %v9547 = vadd.f32 %v9322, %v9546
        %v9548 = vpop.f32.mrb[0].mxu0
        %9549 = vmatprep.mubr.f32.mxu0 %v9040
        %9550 = vmatmul.mubr.f32.gmra.mrb[0].mxu0 %v9039
        %v9551 = vpop.f32.mrb[0].mxu0
        %v9552 = vadd.f32 %v9327, %v9551
        %v9553 = vpop.f32.mrb[0].mxu0
        %9554 = vmatprep.mubr.f32.mxu0 %v9044
        %9555 = vmatmul.mubr.f32.gmra.mrb[0].mxu0 %v9043
        %v9556 = vpop.f32.mrb[0].mxu0
        %v9557 = vadd.f32 %v9332, %v9556
        %v9558 = vpop.f32.mrb[0].mxu0
        %9559 = vmatprep.mubr.f32.mxu0 %v9048
        %9560 = vmatmul.mubr.f32.gmra.mrb[0].mxu0 %v9047
        %v9561 = vpop.f32.mrb[0].mxu0
        %v9562 = vadd.f32 %v9337, %v9561
        %v9563 = vpop.f32.mrb[0].mxu0
        %9564 = vmatprep.mubr.f32.mxu0 %v9052
        %9565 = vmatmul.mubr.f32.gmra.mrb[0].mxu0 %v9051
        %v9566 = vpop.f32.mrb[0].mxu0
        %v9567 = vadd.f32 %v9342, %v9566
        %v9568 = vpop.f32.mrb[0].mxu0
        %9569 = vmatprep.mubr.f32.mxu0 %v9056
        %9570 = vmatmul.mubr.f32.gmra.mrb[0].mxu0 %v9055
        %v9571 = vpop.f32.mrb[0].mxu0
        %v9572 = vadd.f32 %v9347, %v9571
        %v9573 = vpop.f32.mrb[0].mxu0
        %9574 = vmatprep.mubr.f32.mxu0 %v9060
        %9575 = vmatmul.mubr.f32.gmra.mrb[0].mxu0 %v9059
        %v9576 = vpop.f32.mrb[0].mxu0
        %v9577 = vadd.f32 %v9352, %v9576
        %v9578 = vpop.f32.mrb[0].mxu0
        %9579 = vmatprep.mubr.f32.mxu0 %v9064
        %9580 = vmatmul.mubr.f32.gmra.mrb[0].mxu0 %v9063
        %v9581 = vpop.f32.mrb[0].mxu0
        %v9582 = vadd.f32 %v9357, %v9581
        %v9583 = vpop.f32.mrb[0].mxu0
        %9584 = vmatprep.mubr.f32.mxu0 %v9068
        %9585 = vmatmul.mubr.f32.gmra.mrb[0].mxu0 %v9067
        %v9586 = vpop.f32.mrb[0].mxu0
        %v9587 = vadd.f32 %v9362, %v9586
        %v9588 = vpop.f32.mrb[0].mxu0
        %9589 = vdwg.mxu0
        %v9590 = vadd.f32 %v395, %v9432
        %v9591 = vadd.f32 %v396, %v9437
        %v9592 = vadd.f32 %v397, %v9442
        %v9593 = vadd.f32 %v398, %v9447
        %v9594 = vadd.f32 %v399, %v9452
        %v9595 = vadd.f32 %v400, %v9457
        %v9596 = vadd.f32 %v401, %v9462
        %v9597 = vadd.f32 %v402, %v9467
        %v9598 = vadd.f32 %v403, %v9472
        %v9599 = vadd.f32 %v404, %v9477
        %v9600 = vadd.f32 %v405, %v9482
        %v9601 = vadd.f32 %v406, %v9487
        %v9602 = vadd.f32 %v407, %v9492
        %v9603 = vadd.f32 %v408, %v9497
        %v9604 = vadd.f32 %v409, %v9502
        %v9605 = vadd.f32 %v410, %v9507
        %v9606 = vadd.f32 %v411, %v9512
        %v9607 = vadd.f32 %v412, %v9517
        %v9608 = vadd.f32 %v413, %v9522
        %v9609 = vadd.f32 %v414, %v9527
        %v9610 = vadd.f32 %v415, %v9532
        %v9611 = vadd.f32 %v416, %v9537
        %v9612 = vadd.f32 %v417, %v9542
        %v9613 = vadd.f32 %v418, %v9547
        %v9614 = vadd.f32 %v419, %v9552
        %v9615 = vadd.f32 %v420, %v9557
        %v9616 = vadd.f32 %v421, %v9562
        %v9617 = vadd.f32 %v422, %v9567
        %v9618 = vadd.f32 %v423, %v9572
        %v9619 = vadd.f32 %v424, %v9577
        %v9620 = vadd.f32 %v425, %v9582
        %v9621 = vadd.f32 %v426, %v9587
        %9622 = vst [vmem:[%s394] sm:$0xff] %v9590
        %9623 = vst [vmem:[%s394 + $0x8] sm:$0xff] %v9591
        %9624 = vst [vmem:[%s394 + $0x10] sm:$0xff] %v9592
        %9625 = vst [vmem:[%s394 + $0x18] sm:$0xff] %v9593
        %9626 = vst [vmem:[%s394 + $0x20] sm:$0xff] %v9594
        %9627 = vst [vmem:[%s394 + $0x28] sm:$0xff] %v9595
        %9628 = vst [vmem:[%s394 + $0x30] sm:$0xff] %v9596
        %9629 = vst [vmem:[%s394 + $0x38] sm:$0xff] %v9597
        %9630 = vst [vmem:[%s394 + $0x40] sm:$0xff] %v9598
        %9631 = vst [vmem:[%s394 + $0x48] sm:$0xff] %v9599
        %9632 = vst [vmem:[%s394 + $0x50] sm:$0xff] %v9600
        %9633 = vst [vmem:[%s394 + $0x58] sm:$0xff] %v9601
        %9634 = vst [vmem:[%s394 + $0x60] sm:$0xff] %v9602
        %9635 = vst [vmem:[%s394 + $0x68] sm:$0xff] %v9603
        %9636 = vst [vmem:[%s394 + $0x70] sm:$0xff] %v9604
        %9637 = vst [vmem:[%s394 + $0x78] sm:$0xff] %v9605
        %9638 = vst [vmem:[%s394 + $0x80] sm:$0xff] %v9606
        %9639 = vst [vmem:[%s394 + $0x88] sm:$0xff] %v9607
        %9640 = vst [vmem:[%s394 + $0x90] sm:$0xff] %v9608
        %9641 = vst [vmem:[%s394 + $0x98] sm:$0xff] %v9609
        %9642 = vst [vmem:[%s394 + $0xa0] sm:$0xff] %v9610
        %9643 = vst [vmem:[%s394 + $0xa8] sm:$0xff] %v9611
        %9644 = vst [vmem:[%s394 + $0xb0] sm:$0xff] %v9612
        %9645 = vst [vmem:[%s394 + $0xb8] sm:$0xff] %v9613
        %9646 = vst [vmem:[%s394 + $0xc0] sm:$0xff] %v9614
        %9647 = vst [vmem:[%s394 + $0xc8] sm:$0xff] %v9615
        %9648 = vst [vmem:[%s394 + $0xd0] sm:$0xff] %v9616
        %9649 = vst [vmem:[%s394 + $0xd8] sm:$0xff] %v9617
        %9650 = vst [vmem:[%s394 + $0xe0] sm:$0xff] %v9618
        %9651 = vst [vmem:[%s394 + $0xe8] sm:$0xff] %v9619
        %9652 = vst [vmem:[%s394 + $0xf0] sm:$0xff] %v9620
        %9653 = vst [vmem:[%s394 + $0xf8] sm:$0xff] %v9621
        %s9654 = sand.u32 %s230, 1
        %s9655 = scalar_lea.sflag [#allocation4], %s9654
        %s9656 = sand.u32 %s230, 1
        %s9657 = smul.addr %s9656, 256
        %s9658 = scalar_lea.vmem [#allocation10], %s9657
        // Predicated region
        $region73: #{tpu_custom_call.1} parent=55 // pred_check
          %p9659 = pneg %p240
        $region74: #{tpu_custom_call.1} parent=55 // pred_check_branch
          %9661 = sbr.rel (%p9659) target = $region76
        $region75: #{tpu_custom_call.1} parent=55 // pred_region
          %s9663 = ssub.s32 4096, 4096
          %9664 = vsyncadd %s9655, %s9663
          %s9665 = smul.addr %s28, 32
          %s9666 = smul.addr %s9665, 128
          %s9667 = scalar_lea.hbm %s9, %s9666
          %s9668 = sshll.u32 %s9658, 4
          %s9669 = int_to_ptr.vmem [resolvable:$true] %s9668
          %9674 = dma.vmem_to_hbm [thread:$0]  %s9669, 4096, %s9667, %s9655, 128, 128, 8
        $region76: #{tpu_custom_call.1} parent=55 // pred_fallthru
          _
      $region56: #{tpu_custom_call.1} parent=5 // pred_fallthru
        _
      %p9675 = scmp.le.s32.totalorder 2, %s23
      // Predicated region
      $region77: #{tpu_custom_call.1} parent=5 // pred_check
        %p9676 = pneg %p9675
      $region78: #{tpu_custom_call.1} parent=5 // pred_check_branch
        %9678 = sbr.rel (%p9676) target = $region80
      $region79: #{tpu_custom_call.1} parent=5 // pred_region
        %s9679 = ssub.s32 %s23, 2
        // Predicated region
        $region81: #{tpu_custom_call.1} parent=79 // pred_check
          %p9680 = pneg %p246
        $region82: #{tpu_custom_call.1} parent=79 // pred_check_branch
          %9682 = sbr.rel (%p9680) target = $region84
        $region83: #{tpu_custom_call.1} parent=79 // pred_region
          %s9683 = sand.u32 %s231, 1
          %s9684 = scalar_lea.sflag [#allocation4], %s9683
          %s9685 = sand.u32 %s231, 1
          %s9686 = smul.addr %s9685, 256
          %s9687 = scalar_lea.vmem [#allocation10], %s9686
          %9688 = dma.done %s9684, 4096
        $region84: #{tpu_custom_call.1} parent=79 // pred_fallthru
          _
      $region80: #{tpu_custom_call.1} parent=5 // pred_fallthru
        _
    $region6: #{tpu_custom_call.1} parent=1 // loop_footer
      %s27 = sadd.s32 1, %s23
    $region7: #{tpu_custom_call.1} parent=1 // loop_footer_branch
      %22 = sbr.rel target = $region3
    $region8: #{tpu_custom_call.1} parent=1 // loop_exit
      _
    %9689 = vsyncpa [#allocation3], 1
    %s9690 = scalar_lea.sflag [#allocation3], 1
    %9691 = vsyncpa %s9690, 1
    %9692 = vsyncpa [#allocation6], 1
    %9693 = vsyncpa [#allocation9], 1
    %9694 = vsyncpa [#allocation4], 1
    %s9695 = scalar_lea.sflag [#allocation4], 1
    %9696 = vsyncpa %s9695, 1

</llo_original>
